<compile_context>
chip_gen: v7x
topology: tpu7x:2x2x1
jax: 0.10.0
libtpu: 0.0.40
codegen_flags: <defaults>
</compile_context>

<pallas_src>
import functools

import jax
import jax.numpy as jnp
from jax import lax
from jax.experimental import pallas as pl
from jax.experimental.pallas import tpu as pltpu

VMEM_SPEC = pl.BlockSpec(memory_space=pltpu.MemorySpace.VMEM)

LANE = 128      # lane width of a vreg
SUBLANE = 8     # sublane count of a vreg


def _round_up(x, m):
    return (x + m - 1) // m * m


# ----------------------------------------------------------------------------
# Fused kernel: multi-layer masked (packed-sequence) LSTM recurrence.
# ----------------------------------------------------------------------------
def encoder_lstm_kernel(x_ref, lens_ref, wih_ref, whh_ref, b_ref,
                        out_ref, h_ref, c_ref, *, num_layers):
    """
    Padded shapes:
      x_ref   : (S, Bp, Hp)    embedded input (layer-0 input dim padded to Hp)
      lens_ref: (Bp, 1) int32  valid length per batch row
      wih_ref : (L, Hp, 4*Hp)  input->gate weights, per-gate column padding
      whh_ref : (L, Hp, 4*Hp)  hidden->gate weights
      b_ref   : (L, 1, 4*Hp)   combined bias (b_ih + b_hh)
      out_ref : (S, Bp, Hp)    top-layer outputs (zero past each row's length)
      h_ref   : (L, Bp, Hp)    final hidden state per layer
      c_ref   : (L, Bp, Hp)    final cell state per layer
    """
    S, Bp, Hp = out_ref.shape
    lens = lens_ref[...]                                   # (Bp, 1) int32

    for layer in range(num_layers):                        # small L -> unrolled
        wih = wih_ref[layer]                               # (Hp, 4Hp)
        whh = whh_ref[layer]                               # (Hp, 4Hp)
        b = b_ref[layer]                                   # (1, 4Hp)

        def step(t, carry, _layer=layer, _wih=wih, _whh=whh, _b=b):
            h, c = carry
            # layer 0 reads the embedded input; deeper layers read the previous
            # layer's output in place (read happens before the write below).
            x_t = x_ref[t] if _layer == 0 else out_ref[t]  # (Bp, Hp)
            gates = (jnp.dot(x_t, _wih, preferred_element_type=jnp.float32)
                     + jnp.dot(h, _whh, preferred_element_type=jnp.float32)
                     + _b)                                 # (Bp, 4Hp)
            # PyTorch gate order i, f, g, o; slices lane-aligned (Hp == 128).
            i = jax.nn.sigmoid(gates[:, 0 * Hp:1 * Hp])
            f = jax.nn.sigmoid(gates[:, 1 * Hp:2 * Hp])
            g = jnp.tanh(gates[:, 2 * Hp:3 * Hp])
            o = jax.nn.sigmoid(gates[:, 3 * Hp:4 * Hp])
            c_cand = f * c + i * g
            h_cand = o * jnp.tanh(c_cand)

            valid = t < lens                               # (Bp, 1) bool
            out_ref[t] = jnp.where(valid, h_cand, 0.0)     # packed: 0 past len
            return (jnp.where(valid, h_cand, h),           # freeze carry past len
                    jnp.where(valid, c_cand, c))

        h0 = jnp.zeros((Bp, Hp), jnp.float32)
        c0 = jnp.zeros((Bp, Hp), jnp.float32)
        h_fin, c_fin = lax.fori_loop(0, S, step, (h0, c0), unroll=True)
        h_ref[layer] = h_fin
        c_ref[layer] = c_fin


# ----------------------------------------------------------------------------
# Weight padding helpers (gate-wise lane padding + row padding).
# ----------------------------------------------------------------------------
def _pad_gate_cols(w, Hp):
    """(in_dim, 4*H) -> (in_dim, 4*Hp): each gate's H columns placed at g*Hp."""
    in_dim, four_h = w.shape
    H = four_h // 4
    out = jnp.zeros((in_dim, 4, Hp), w.dtype)
    out = out.at[:, :, :H].set(w.reshape(in_dim, 4, H))
    return out.reshape(in_dim, 4 * Hp)


def _pad_rows(w, in_pad):
    return jnp.zeros((in_pad,) + w.shape[1:], w.dtype).at[:w.shape[0]].set(w)


# ----------------------------------------------------------------------------
# Wrapper: Encoder.forward
# ----------------------------------------------------------------------------
def encoder_forward(params, encoder_input):
    embed = params["embedding"]              # (vocab, E), row 0 == 0 (padding_idx)
    wihs, whhs, bs = params["wih"], params["whh"], params["b"]

    B, S = encoder_input.shape
    H = whhs[0].shape[0]
    L = len(wihs)
    E = embed.shape[1]

    Hp = _round_up(max(H, E), LANE)          # lane-aligned hidden / input width
    Bp = _round_up(B, SUBLANE)               # sublane-aligned batch

    # Embedding lookup (gather) is cheap JAX glue.
    x = jnp.take(embed, jnp.transpose(encoder_input), axis=0)       # (S, B, E)
    x_pad = jnp.zeros((S, Bp, Hp), jnp.float32).at[:, :B, :E].set(
        x.astype(jnp.float32))

    # Packed-sequence lengths: count of nonzero tokens per row.
    lens = jnp.sum(encoder_input != 0, axis=1).astype(jnp.int32)    # (B,)
    lens_pad = jnp.zeros((Bp, 1), jnp.int32).at[:B, 0].set(lens)

    wih_p = jnp.stack([_pad_rows(_pad_gate_cols(w, Hp), Hp) for w in wihs])
    whh_p = jnp.stack([_pad_rows(_pad_gate_cols(w, Hp), Hp) for w in whhs])
    b_p = jnp.stack([_pad_gate_cols(b, Hp) for b in bs])            # (L, 1, 4Hp)

    out, h_n, c_n = pl.pallas_call(
        functools.partial(encoder_lstm_kernel, num_layers=L),
        out_shape=(jax.ShapeDtypeStruct((S, Bp, Hp), jnp.float32),
                   jax.ShapeDtypeStruct((L, Bp, Hp), jnp.float32),
                   jax.ShapeDtypeStruct((L, Bp, Hp), jnp.float32)),
        in_specs=[VMEM_SPEC] * 5,
        out_specs=(VMEM_SPEC,) * 3,
        compiler_params=pltpu.CompilerParams(
            vmem_limit_bytes=32 * 1024 * 1024),   # explicit, ample headroom
    )(x_pad, lens_pad, wih_p, whh_p, b_p)

    # TODO(synk): pad_packed_sequence trims to max(seq_len); with static Pallas
    # shapes we return all S steps (positions past a row's length are zero).
    return out[:, :B, :H], (h_n[:, :B, :H], c_n[:, :B, :H])


# ----------------------------------------------------------------------------
# Deterministic synthetic parameters (no checkpoint loading).
# ----------------------------------------------------------------------------
def init_params(key, vocab, E, H, L):
    ks = jax.random.split(key, 1 + 3 * L)
    w = lambda k, shape, s=0.1: (s * jax.random.normal(k, shape)).astype(jnp.float32)
    embed = w(ks[0], (vocab, E)).at[0].set(0.0)       # padding_idx=0 row is zero
    wih, whh, b = [], [], []
    for l in range(L):
        in_dim = E if l == 0 else H
        wih.append(w(ks[1 + 3 * l], (in_dim, 4 * H)))
        whh.append(w(ks[2 + 3 * l], (H, 4 * H)))
        b.append(w(ks[3 + 3 * l], (1, 4 * H)))        # == b_ih + b_hh combined
    return dict(embedding=embed, wih=wih, whh=whh, b=b)


if __name__ == "__main__":
    B, S = 2, 8
    VOCAB, E, H, L = 20, 16, 32, 2

    key = jax.random.PRNGKey(0)
    k_tok, k_par = jax.random.split(key)

    # Zeros only at the tail (pack_padded_sequence convention); row 0 is
    # full-length so the padded output length equals S, matching PyTorch.
    toks = jax.random.randint(k_tok, (B, S), 1, VOCAB, dtype=jnp.int32)
    seq_lens = jnp.array([S, S - 3], jnp.int32)
    pos = jnp.arange(S)[None, :]
    encoder_input = jnp.where(pos < seq_lens[:, None], toks, 0).astype(jnp.int32)

    params = init_params(k_par, VOCAB, E, H, L)

    enc_out, (h_n, c_n) = encoder_forward(params, encoder_input)
    jax.block_until_ready((enc_out, h_n, c_n))

    assert enc_out.shape == (S, B, H) and enc_out.dtype == jnp.float32
    assert h_n.shape == (L, B, H) and h_n.dtype == jnp.float32
    assert c_n.shape == (L, B, H) and c_n.dtype == jnp.float32
    # packed-sequence semantics: outputs past a row's length are exactly zero
    assert bool(jnp.all(enc_out[S - 3:, 1, :] == 0.0))
    print("KERNEL_OK")
</pallas_src>

<mosaic_0001>
module attributes {stable_mosaic.version = 11 : i64} {
  func.func @encoder_lstm_kernel(%arg0: memref<8x8x128xf32, #tpu.memory_space<vmem>>, %arg1: memref<8x1xi32, #tpu.memory_space<vmem>>, %arg2: memref<2x128x512xf32, #tpu.memory_space<vmem>>, %arg3: memref<2x128x512xf32, #tpu.memory_space<vmem>>, %arg4: memref<2x1x512xf32, #tpu.memory_space<vmem>>, %arg5: memref<8x8x128xf32, #tpu.memory_space<vmem>>, %arg6: memref<2x8x128xf32, #tpu.memory_space<vmem>>, %arg7: memref<2x8x128xf32, #tpu.memory_space<vmem>>) attributes {dimension_semantics = [], scalar_prefetch = 0 : i64, scratch_operands = 0 : i64, tpu.core_type = #tpu.core_type<tc>} {
    %c0 = arith.constant 0 : index
    %c0_0 = arith.constant 0 : index
    %0 = vector.load %arg1[%c0, %c0_0] : memref<8x1xi32, #tpu.memory_space<vmem>>, vector<8x1xi32>
    %c0_1 = arith.constant 0 : index
    %c0_2 = arith.constant 0 : index
    %c0_3 = arith.constant 0 : index
    %1 = vector.load %arg2[%c0_1, %c0_2, %c0_3] : memref<2x128x512xf32, #tpu.memory_space<vmem>>, vector<1x128x512xf32>
    %2 = vector.shape_cast %1 : vector<1x128x512xf32> to vector<128x512xf32>
    %c0_4 = arith.constant 0 : index
    %c0_5 = arith.constant 0 : index
    %c0_6 = arith.constant 0 : index
    %3 = vector.load %arg3[%c0_4, %c0_5, %c0_6] : memref<2x128x512xf32, #tpu.memory_space<vmem>>, vector<1x128x512xf32>
    %4 = vector.shape_cast %3 : vector<1x128x512xf32> to vector<128x512xf32>
    %c0_7 = arith.constant 0 : index
    %c0_8 = arith.constant 0 : index
    %c0_9 = arith.constant 0 : index
    %5 = vector.load %arg4[%c0_7, %c0_8, %c0_9] : memref<2x1x512xf32, #tpu.memory_space<vmem>>, vector<1x1x512xf32>
    %6 = vector.shape_cast %5 : vector<1x1x512xf32> to vector<1x512xf32>
    %cst = arith.constant 0.000000e+00 : f32
    %7 = vector.broadcast %cst : f32 to vector<8x128xf32>
    %cst_10 = arith.constant 0.000000e+00 : f32
    %8 = vector.broadcast %cst_10 : f32 to vector<8x128xf32>
    %c0_i32 = arith.constant 0 : i32
    %9 = arith.index_cast %c0_i32 : i32 to index
    %c0_11 = arith.constant 0 : index
    %c0_12 = arith.constant 0 : index
    %10 = vector.load %arg0[%9, %c0_11, %c0_12] : memref<8x8x128xf32, #tpu.memory_space<vmem>>, vector<1x8x128xf32>
    %11 = vector.shape_cast %10 : vector<1x8x128xf32> to vector<8x128xf32>
    %cst_13 = arith.constant dense<0.000000e+00> : vector<8x512xf32>
    %12 = tpu.matmul %11, %2, %cst_13 {dimension_numbers = #tpu.dot_dimension_numbers<[1], [0], [0], [1], [0, 0, 1, 1], [], []>} : vector<8x128xf32>, vector<128x512xf32>, vector<8x512xf32> -> vector<8x512xf32>
    %cst_14 = arith.constant dense<0.000000e+00> : vector<8x512xf32>
    %13 = tpu.matmul %7, %4, %cst_14 {dimension_numbers = #tpu.dot_dimension_numbers<[1], [0], [0], [1], [0, 0, 1, 1], [], []>} : vector<8x128xf32>, vector<128x512xf32>, vector<8x512xf32> -> vector<8x512xf32>
    %14 = arith.addf %12, %13 : vector<8x512xf32>
    %15 = vector.broadcast %6 : vector<1x512xf32> to vector<8x512xf32>
    %16 = arith.addf %14, %15 : vector<8x512xf32>
    %17 = vector.extract_strided_slice %16 {offsets = [0, 0], sizes = [8, 128], strides = [1, 1]} : vector<8x512xf32> to vector<8x128xf32>
    %18 = arith.negf %17 : vector<8x128xf32>
    %19 = math.exp %18 : vector<8x128xf32>
    %cst_15 = arith.constant 1.000000e+00 : f32
    %20 = vector.broadcast %cst_15 : f32 to vector<8x128xf32>
    %21 = arith.addf %20, %19 : vector<8x128xf32>
    %22 = arith.divf %20, %21 : vector<8x128xf32>
    %23 = vector.extract_strided_slice %16 {offsets = [0, 128], sizes = [8, 128], strides = [1, 1]} : vector<8x512xf32> to vector<8x128xf32>
    %24 = arith.negf %23 : vector<8x128xf32>
    %25 = math.exp %24 : vector<8x128xf32>
    %cst_16 = arith.constant 1.000000e+00 : f32
    %26 = vector.broadcast %cst_16 : f32 to vector<8x128xf32>
    %27 = arith.addf %26, %25 : vector<8x128xf32>
    %28 = arith.divf %26, %27 : vector<8x128xf32>
    %29 = vector.extract_strided_slice %16 {offsets = [0, 256], sizes = [8, 128], strides = [1, 1]} : vector<8x512xf32> to vector<8x128xf32>
    %30 = math.tanh %29 : vector<8x128xf32>
    %31 = vector.extract_strided_slice %16 {offsets = [0, 384], sizes = [8, 128], strides = [1, 1]} : vector<8x512xf32> to vector<8x128xf32>
    %32 = arith.negf %31 : vector<8x128xf32>
    %33 = math.exp %32 : vector<8x128xf32>
    %cst_17 = arith.constant 1.000000e+00 : f32
    %34 = vector.broadcast %cst_17 : f32 to vector<8x128xf32>
    %35 = arith.addf %34, %33 : vector<8x128xf32>
    %36 = arith.divf %34, %35 : vector<8x128xf32>
    %37 = arith.mulf %28, %8 : vector<8x128xf32>
    %38 = arith.mulf %22, %30 : vector<8x128xf32>
    %39 = arith.addf %37, %38 : vector<8x128xf32>
    %40 = math.tanh %39 : vector<8x128xf32>
    %41 = arith.mulf %36, %40 : vector<8x128xf32>
    %42 = vector.broadcast %c0_i32 : i32 to vector<8x1xi32>
    %43 = arith.cmpi slt, %42, %0 : vector<8x1xi32>
    %cst_18 = arith.constant 0.000000e+00 : f32
    %44 = vector.shape_cast %43 : vector<8x1xi1> to vector<8x1xi1>
    %45 = vector.broadcast %44 : vector<8x1xi1> to vector<8x128xi1>
    %46 = vector.broadcast %cst_18 : f32 to vector<8x128xf32>
    %47 = arith.select %45, %41, %46 : vector<8x128xi1>, vector<8x128xf32>
    %48 = arith.index_cast %c0_i32 : i32 to index
    %c0_19 = arith.constant 0 : index
    %c0_20 = arith.constant 0 : index
    %49 = vector.load %arg5[%48, %c0_19, %c0_20] : memref<8x8x128xf32, #tpu.memory_space<vmem>>, vector<1x8x128xf32>
    %50 = vector.shape_cast %49 : vector<1x8x128xf32> to vector<8x128xf32>
    %51 = vector.shape_cast %47 : vector<8x128xf32> to vector<1x8x128xf32>
    tpu.vector_store %arg5[%48, %c0_19, %c0_20], %51 {strides = array<i32>} : memref<8x8x128xf32, #tpu.memory_space<vmem>>, vector<1x8x128xf32>,
    %52 = vector.shape_cast %43 : vector<8x1xi1> to vector<8x1xi1>
    %53 = vector.broadcast %52 : vector<8x1xi1> to vector<8x128xi1>
    %54 = arith.select %53, %41, %7 : vector<8x128xi1>, vector<8x128xf32>
    %55 = vector.shape_cast %43 : vector<8x1xi1> to vector<8x1xi1>
    %56 = vector.broadcast %55 : vector<8x1xi1> to vector<8x128xi1>
    %57 = arith.select %56, %39, %8 : vector<8x128xi1>, vector<8x128xf32>
    %c1_i32 = arith.constant 1 : i32
    %58 = arith.index_cast %c1_i32 : i32 to index
    %c0_21 = arith.constant 0 : index
    %c0_22 = arith.constant 0 : index
    %59 = vector.load %arg0[%58, %c0_21, %c0_22] : memref<8x8x128xf32, #tpu.memory_space<vmem>>, vector<1x8x128xf32>
    %60 = vector.shape_cast %59 : vector<1x8x128xf32> to vector<8x128xf32>
    %cst_23 = arith.constant dense<0.000000e+00> : vector<8x512xf32>
    %61 = tpu.matmul %60, %2, %cst_23 {dimension_numbers = #tpu.dot_dimension_numbers<[1], [0], [0], [1], [0, 0, 1, 1], [], []>} : vector<8x128xf32>, vector<128x512xf32>, vector<8x512xf32> -> vector<8x512xf32>
    %cst_24 = arith.constant dense<0.000000e+00> : vector<8x512xf32>
    %62 = tpu.matmul %54, %4, %cst_24 {dimension_numbers = #tpu.dot_dimension_numbers<[1], [0], [0], [1], [0, 0, 1, 1], [], []>} : vector<8x128xf32>, vector<128x512xf32>, vector<8x512xf32> -> vector<8x512xf32>
    %63 = arith.addf %61, %62 : vector<8x512xf32>
    %64 = vector.broadcast %6 : vector<1x512xf32> to vector<8x512xf32>
    %65 = arith.addf %63, %64 : vector<8x512xf32>
    %66 = vector.extract_strided_slice %65 {offsets = [0, 0], sizes = [8, 128], strides = [1, 1]} : vector<8x512xf32> to vector<8x128xf32>
    %67 = arith.negf %66 : vector<8x128xf32>
    %68 = math.exp %67 : vector<8x128xf32>
    %cst_25 = arith.constant 1.000000e+00 : f32
    %69 = vector.broadcast %cst_25 : f32 to vector<8x128xf32>
    %70 = arith.addf %69, %68 : vector<8x128xf32>
    %71 = arith.divf %69, %70 : vector<8x128xf32>
    %72 = vector.extract_strided_slice %65 {offsets = [0, 128], sizes = [8, 128], strides = [1, 1]} : vector<8x512xf32> to vector<8x128xf32>
    %73 = arith.negf %72 : vector<8x128xf32>
    %74 = math.exp %73 : vector<8x128xf32>
    %cst_26 = arith.constant 1.000000e+00 : f32
    %75 = vector.broadcast %cst_26 : f32 to vector<8x128xf32>
    %76 = arith.addf %75, %74 : vector<8x128xf32>
    %77 = arith.divf %75, %76 : vector<8x128xf32>
    %78 = vector.extract_strided_slice %65 {offsets = [0, 256], sizes = [8, 128], strides = [1, 1]} : vector<8x512xf32> to vector<8x128xf32>
    %79 = math.tanh %78 : vector<8x128xf32>
    %80 = vector.extract_strided_slice %65 {offsets = [0, 384], sizes = [8, 128], strides = [1, 1]} : vector<8x512xf32> to vector<8x128xf32>
    %81 = arith.negf %80 : vector<8x128xf32>
    %82 = math.exp %81 : vector<8x128xf32>
    %cst_27 = arith.constant 1.000000e+00 : f32
    %83 = vector.broadcast %cst_27 : f32 to vector<8x128xf32>
    %84 = arith.addf %83, %82 : vector<8x128xf32>
    %85 = arith.divf %83, %84 : vector<8x128xf32>
    %86 = arith.mulf %77, %57 : vector<8x128xf32>
    %87 = arith.mulf %71, %79 : vector<8x128xf32>
    %88 = arith.addf %86, %87 : vector<8x128xf32>
    %89 = math.tanh %88 : vector<8x128xf32>
    %90 = arith.mulf %85, %89 : vector<8x128xf32>
    %91 = vector.broadcast %c1_i32 : i32 to vector<8x1xi32>
    %92 = arith.cmpi slt, %91, %0 : vector<8x1xi32>
    %cst_28 = arith.constant 0.000000e+00 : f32
    %93 = vector.shape_cast %92 : vector<8x1xi1> to vector<8x1xi1>
    %94 = vector.broadcast %93 : vector<8x1xi1> to vector<8x128xi1>
    %95 = vector.broadcast %cst_28 : f32 to vector<8x128xf32>
    %96 = arith.select %94, %90, %95 : vector<8x128xi1>, vector<8x128xf32>
    %97 = arith.index_cast %c1_i32 : i32 to index
    %c0_29 = arith.constant 0 : index
    %c0_30 = arith.constant 0 : index
    %98 = vector.load %arg5[%97, %c0_29, %c0_30] : memref<8x8x128xf32, #tpu.memory_space<vmem>>, vector<1x8x128xf32>
    %99 = vector.shape_cast %98 : vector<1x8x128xf32> to vector<8x128xf32>
    %100 = vector.shape_cast %96 : vector<8x128xf32> to vector<1x8x128xf32>
    tpu.vector_store %arg5[%97, %c0_29, %c0_30], %100 {strides = array<i32>} : memref<8x8x128xf32, #tpu.memory_space<vmem>>, vector<1x8x128xf32>,
    %101 = vector.shape_cast %92 : vector<8x1xi1> to vector<8x1xi1>
    %102 = vector.broadcast %101 : vector<8x1xi1> to vector<8x128xi1>
    %103 = arith.select %102, %90, %54 : vector<8x128xi1>, vector<8x128xf32>
    %104 = vector.shape_cast %92 : vector<8x1xi1> to vector<8x1xi1>
    %105 = vector.broadcast %104 : vector<8x1xi1> to vector<8x128xi1>
    %106 = arith.select %105, %88, %57 : vector<8x128xi1>, vector<8x128xf32>
    %c2_i32 = arith.constant 2 : i32
    %107 = arith.index_cast %c2_i32 : i32 to index
    %c0_31 = arith.constant 0 : index
    %c0_32 = arith.constant 0 : index
    %108 = vector.load %arg0[%107, %c0_31, %c0_32] : memref<8x8x128xf32, #tpu.memory_space<vmem>>, vector<1x8x128xf32>
    %109 = vector.shape_cast %108 : vector<1x8x128xf32> to vector<8x128xf32>
    %cst_33 = arith.constant dense<0.000000e+00> : vector<8x512xf32>
    %110 = tpu.matmul %109, %2, %cst_33 {dimension_numbers = #tpu.dot_dimension_numbers<[1], [0], [0], [1], [0, 0, 1, 1], [], []>} : vector<8x128xf32>, vector<128x512xf32>, vector<8x512xf32> -> vector<8x512xf32>
    %cst_34 = arith.constant dense<0.000000e+00> : vector<8x512xf32>
    %111 = tpu.matmul %103, %4, %cst_34 {dimension_numbers = #tpu.dot_dimension_numbers<[1], [0], [0], [1], [0, 0, 1, 1], [], []>} : vector<8x128xf32>, vector<128x512xf32>, vector<8x512xf32> -> vector<8x512xf32>
    %112 = arith.addf %110, %111 : vector<8x512xf32>
    %113 = vector.broadcast %6 : vector<1x512xf32> to vector<8x512xf32>
    %114 = arith.addf %112, %113 : vector<8x512xf32>
    %115 = vector.extract_strided_slice %114 {offsets = [0, 0], sizes = [8, 128], strides = [1, 1]} : vector<8x512xf32> to vector<8x128xf32>
    %116 = arith.negf %115 : vector<8x128xf32>
    %117 = math.exp %116 : vector<8x128xf32>
    %cst_35 = arith.constant 1.000000e+00 : f32
    %118 = vector.broadcast %cst_35 : f32 to vector<8x128xf32>
    %119 = arith.addf %118, %117 : vector<8x128xf32>
    %120 = arith.divf %118, %119 : vector<8x128xf32>
    %121 = vector.extract_strided_slice %114 {offsets = [0, 128], sizes = [8, 128], strides = [1, 1]} : vector<8x512xf32> to vector<8x128xf32>
    %122 = arith.negf %121 : vector<8x128xf32>
    %123 = math.exp %122 : vector<8x128xf32>
    %cst_36 = arith.constant 1.000000e+00 : f32
    %124 = vector.broadcast %cst_36 : f32 to vector<8x128xf32>
    %125 = arith.addf %124, %123 : vector<8x128xf32>
    %126 = arith.divf %124, %125 : vector<8x128xf32>
    %127 = vector.extract_strided_slice %114 {offsets = [0, 256], sizes = [8, 128], strides = [1, 1]} : vector<8x512xf32> to vector<8x128xf32>
    %128 = math.tanh %127 : vector<8x128xf32>
    %129 = vector.extract_strided_slice %114 {offsets = [0, 384], sizes = [8, 128], strides = [1, 1]} : vector<8x512xf32> to vector<8x128xf32>
    %130 = arith.negf %129 : vector<8x128xf32>
    %131 = math.exp %130 : vector<8x128xf32>
    %cst_37 = arith.constant 1.000000e+00 : f32
    %132 = vector.broadcast %cst_37 : f32 to vector<8x128xf32>
    %133 = arith.addf %132, %131 : vector<8x128xf32>
    %134 = arith.divf %132, %133 : vector<8x128xf32>
    %135 = arith.mulf %126, %106 : vector<8x128xf32>
    %136 = arith.mulf %120, %128 : vector<8x128xf32>
    %137 = arith.addf %135, %136 : vector<8x128xf32>
    %138 = math.tanh %137 : vector<8x128xf32>
    %139 = arith.mulf %134, %138 : vector<8x128xf32>
    %140 = vector.broadcast %c2_i32 : i32 to vector<8x1xi32>
    %141 = arith.cmpi slt, %140, %0 : vector<8x1xi32>
    %cst_38 = arith.constant 0.000000e+00 : f32
    %142 = vector.shape_cast %141 : vector<8x1xi1> to vector<8x1xi1>
    %143 = vector.broadcast %142 : vector<8x1xi1> to vector<8x128xi1>
    %144 = vector.broadcast %cst_38 : f32 to vector<8x128xf32>
    %145 = arith.select %143, %139, %144 : vector<8x128xi1>, vector<8x128xf32>
    %146 = arith.index_cast %c2_i32 : i32 to index
    %c0_39 = arith.constant 0 : index
    %c0_40 = arith.constant 0 : index
    %147 = vector.load %arg5[%146, %c0_39, %c0_40] : memref<8x8x128xf32, #tpu.memory_space<vmem>>, vector<1x8x128xf32>
    %148 = vector.shape_cast %147 : vector<1x8x128xf32> to vector<8x128xf32>
    %149 = vector.shape_cast %145 : vector<8x128xf32> to vector<1x8x128xf32>
    tpu.vector_store %arg5[%146, %c0_39, %c0_40], %149 {strides = array<i32>} : memref<8x8x128xf32, #tpu.memory_space<vmem>>, vector<1x8x128xf32>,
    %150 = vector.shape_cast %141 : vector<8x1xi1> to vector<8x1xi1>
    %151 = vector.broadcast %150 : vector<8x1xi1> to vector<8x128xi1>
    %152 = arith.select %151, %139, %103 : vector<8x128xi1>, vector<8x128xf32>
    %153 = vector.shape_cast %141 : vector<8x1xi1> to vector<8x1xi1>
    %154 = vector.broadcast %153 : vector<8x1xi1> to vector<8x128xi1>
    %155 = arith.select %154, %137, %106 : vector<8x128xi1>, vector<8x128xf32>
    %c3_i32 = arith.constant 3 : i32
    %156 = arith.index_cast %c3_i32 : i32 to index
    %c0_41 = arith.constant 0 : index
    %c0_42 = arith.constant 0 : index
    %157 = vector.load %arg0[%156, %c0_41, %c0_42] : memref<8x8x128xf32, #tpu.memory_space<vmem>>, vector<1x8x128xf32>
    %158 = vector.shape_cast %157 : vector<1x8x128xf32> to vector<8x128xf32>
    %cst_43 = arith.constant dense<0.000000e+00> : vector<8x512xf32>
    %159 = tpu.matmul %158, %2, %cst_43 {dimension_numbers = #tpu.dot_dimension_numbers<[1], [0], [0], [1], [0, 0, 1, 1], [], []>} : vector<8x128xf32>, vector<128x512xf32>, vector<8x512xf32> -> vector<8x512xf32>
    %cst_44 = arith.constant dense<0.000000e+00> : vector<8x512xf32>
    %160 = tpu.matmul %152, %4, %cst_44 {dimension_numbers = #tpu.dot_dimension_numbers<[1], [0], [0], [1], [0, 0, 1, 1], [], []>} : vector<8x128xf32>, vector<128x512xf32>, vector<8x512xf32> -> vector<8x512xf32>
    %161 = arith.addf %159, %160 : vector<8x512xf32>
    %162 = vector.broadcast %6 : vector<1x512xf32> to vector<8x512xf32>
    %163 = arith.addf %161, %162 : vector<8x512xf32>
    %164 = vector.extract_strided_slice %163 {offsets = [0, 0], sizes = [8, 128], strides = [1, 1]} : vector<8x512xf32> to vector<8x128xf32>
    %165 = arith.negf %164 : vector<8x128xf32>
    %166 = math.exp %165 : vector<8x128xf32>
    %cst_45 = arith.constant 1.000000e+00 : f32
    %167 = vector.broadcast %cst_45 : f32 to vector<8x128xf32>
    %168 = arith.addf %167, %166 : vector<8x128xf32>
    %169 = arith.divf %167, %168 : vector<8x128xf32>
    %170 = vector.extract_strided_slice %163 {offsets = [0, 128], sizes = [8, 128], strides = [1, 1]} : vector<8x512xf32> to vector<8x128xf32>
    %171 = arith.negf %170 : vector<8x128xf32>
    %172 = math.exp %171 : vector<8x128xf32>
    %cst_46 = arith.constant 1.000000e+00 : f32
    %173 = vector.broadcast %cst_46 : f32 to vector<8x128xf32>
    %174 = arith.addf %173, %172 : vector<8x128xf32>
    %175 = arith.divf %173, %174 : vector<8x128xf32>
    %176 = vector.extract_strided_slice %163 {offsets = [0, 256], sizes = [8, 128], strides = [1, 1]} : vector<8x512xf32> to vector<8x128xf32>
    %177 = math.tanh %176 : vector<8x128xf32>
    %178 = vector.extract_strided_slice %163 {offsets = [0, 384], sizes = [8, 128], strides = [1, 1]} : vector<8x512xf32> to vector<8x128xf32>
    %179 = arith.negf %178 : vector<8x128xf32>
    %180 = math.exp %179 : vector<8x128xf32>
    %cst_47 = arith.constant 1.000000e+00 : f32
    %181 = vector.broadcast %cst_47 : f32 to vector<8x128xf32>
    %182 = arith.addf %181, %180 : vector<8x128xf32>
    %183 = arith.divf %181, %182 : vector<8x128xf32>
    %184 = arith.mulf %175, %155 : vector<8x128xf32>
    %185 = arith.mulf %169, %177 : vector<8x128xf32>
    %186 = arith.addf %184, %185 : vector<8x128xf32>
    %187 = math.tanh %186 : vector<8x128xf32>
    %188 = arith.mulf %183, %187 : vector<8x128xf32>
    %189 = vector.broadcast %c3_i32 : i32 to vector<8x1xi32>
    %190 = arith.cmpi slt, %189, %0 : vector<8x1xi32>
    %cst_48 = arith.constant 0.000000e+00 : f32
    %191 = vector.shape_cast %190 : vector<8x1xi1> to vector<8x1xi1>
    %192 = vector.broadcast %191 : vector<8x1xi1> to vector<8x128xi1>
    %193 = vector.broadcast %cst_48 : f32 to vector<8x128xf32>
    %194 = arith.select %192, %188, %193 : vector<8x128xi1>, vector<8x128xf32>
    %195 = arith.index_cast %c3_i32 : i32 to index
    %c0_49 = arith.constant 0 : index
    %c0_50 = arith.constant 0 : index
    %196 = vector.load %arg5[%195, %c0_49, %c0_50] : memref<8x8x128xf32, #tpu.memory_space<vmem>>, vector<1x8x128xf32>
    %197 = vector.shape_cast %196 : vector<1x8x128xf32> to vector<8x128xf32>
    %198 = vector.shape_cast %194 : vector<8x128xf32> to vector<1x8x128xf32>
    tpu.vector_store %arg5[%195, %c0_49, %c0_50], %198 {strides = array<i32>} : memref<8x8x128xf32, #tpu.memory_space<vmem>>, vector<1x8x128xf32>,
    %199 = vector.shape_cast %190 : vector<8x1xi1> to vector<8x1xi1>
    %200 = vector.broadcast %199 : vector<8x1xi1> to vector<8x128xi1>
    %201 = arith.select %200, %188, %152 : vector<8x128xi1>, vector<8x128xf32>
    %202 = vector.shape_cast %190 : vector<8x1xi1> to vector<8x1xi1>
    %203 = vector.broadcast %202 : vector<8x1xi1> to vector<8x128xi1>
    %204 = arith.select %203, %186, %155 : vector<8x128xi1>, vector<8x128xf32>
    %c4_i32 = arith.constant 4 : i32
    %205 = arith.index_cast %c4_i32 : i32 to index
    %c0_51 = arith.constant 0 : index
    %c0_52 = arith.constant 0 : index
    %206 = vector.load %arg0[%205, %c0_51, %c0_52] : memref<8x8x128xf32, #tpu.memory_space<vmem>>, vector<1x8x128xf32>
    %207 = vector.shape_cast %206 : vector<1x8x128xf32> to vector<8x128xf32>
    %cst_53 = arith.constant dense<0.000000e+00> : vector<8x512xf32>
    %208 = tpu.matmul %207, %2, %cst_53 {dimension_numbers = #tpu.dot_dimension_numbers<[1], [0], [0], [1], [0, 0, 1, 1], [], []>} : vector<8x128xf32>, vector<128x512xf32>, vector<8x512xf32> -> vector<8x512xf32>
    %cst_54 = arith.constant dense<0.000000e+00> : vector<8x512xf32>
    %209 = tpu.matmul %201, %4, %cst_54 {dimension_numbers = #tpu.dot_dimension_numbers<[1], [0], [0], [1], [0, 0, 1, 1], [], []>} : vector<8x128xf32>, vector<128x512xf32>, vector<8x512xf32> -> vector<8x512xf32>
    %210 = arith.addf %208, %209 : vector<8x512xf32>
    %211 = vector.broadcast %6 : vector<1x512xf32> to vector<8x512xf32>
    %212 = arith.addf %210, %211 : vector<8x512xf32>
    %213 = vector.extract_strided_slice %212 {offsets = [0, 0], sizes = [8, 128], strides = [1, 1]} : vector<8x512xf32> to vector<8x128xf32>
    %214 = arith.negf %213 : vector<8x128xf32>
    %215 = math.exp %214 : vector<8x128xf32>
    %cst_55 = arith.constant 1.000000e+00 : f32
    %216 = vector.broadcast %cst_55 : f32 to vector<8x128xf32>
    %217 = arith.addf %216, %215 : vector<8x128xf32>
    %218 = arith.divf %216, %217 : vector<8x128xf32>
    %219 = vector.extract_strided_slice %212 {offsets = [0, 128], sizes = [8, 128], strides = [1, 1]} : vector<8x512xf32> to vector<8x128xf32>
    %220 = arith.negf %219 : vector<8x128xf32>
    %221 = math.exp %220 : vector<8x128xf32>
    %cst_56 = arith.constant 1.000000e+00 : f32
    %222 = vector.broadcast %cst_56 : f32 to vector<8x128xf32>
    %223 = arith.addf %222, %221 : vector<8x128xf32>
    %224 = arith.divf %222, %223 : vector<8x128xf32>
    %225 = vector.extract_strided_slice %212 {offsets = [0, 256], sizes = [8, 128], strides = [1, 1]} : vector<8x512xf32> to vector<8x128xf32>
    %226 = math.tanh %225 : vector<8x128xf32>
    %227 = vector.extract_strided_slice %212 {offsets = [0, 384], sizes = [8, 128], strides = [1, 1]} : vector<8x512xf32> to vector<8x128xf32>
    %228 = arith.negf %227 : vector<8x128xf32>
    %229 = math.exp %228 : vector<8x128xf32>
    %cst_57 = arith.constant 1.000000e+00 : f32
    %230 = vector.broadcast %cst_57 : f32 to vector<8x128xf32>
    %231 = arith.addf %230, %229 : vector<8x128xf32>
    %232 = arith.divf %230, %231 : vector<8x128xf32>
    %233 = arith.mulf %224, %204 : vector<8x128xf32>
    %234 = arith.mulf %218, %226 : vector<8x128xf32>
    %235 = arith.addf %233, %234 : vector<8x128xf32>
    %236 = math.tanh %235 : vector<8x128xf32>
    %237 = arith.mulf %232, %236 : vector<8x128xf32>
    %238 = vector.broadcast %c4_i32 : i32 to vector<8x1xi32>
    %239 = arith.cmpi slt, %238, %0 : vector<8x1xi32>
    %cst_58 = arith.constant 0.000000e+00 : f32
    %240 = vector.shape_cast %239 : vector<8x1xi1> to vector<8x1xi1>
    %241 = vector.broadcast %240 : vector<8x1xi1> to vector<8x128xi1>
    %242 = vector.broadcast %cst_58 : f32 to vector<8x128xf32>
    %243 = arith.select %241, %237, %242 : vector<8x128xi1>, vector<8x128xf32>
    %244 = arith.index_cast %c4_i32 : i32 to index
    %c0_59 = arith.constant 0 : index
    %c0_60 = arith.constant 0 : index
    %245 = vector.load %arg5[%244, %c0_59, %c0_60] : memref<8x8x128xf32, #tpu.memory_space<vmem>>, vector<1x8x128xf32>
    %246 = vector.shape_cast %245 : vector<1x8x128xf32> to vector<8x128xf32>
    %247 = vector.shape_cast %243 : vector<8x128xf32> to vector<1x8x128xf32>
    tpu.vector_store %arg5[%244, %c0_59, %c0_60], %247 {strides = array<i32>} : memref<8x8x128xf32, #tpu.memory_space<vmem>>, vector<1x8x128xf32>,
    %248 = vector.shape_cast %239 : vector<8x1xi1> to vector<8x1xi1>
    %249 = vector.broadcast %248 : vector<8x1xi1> to vector<8x128xi1>
    %250 = arith.select %249, %237, %201 : vector<8x128xi1>, vector<8x128xf32>
    %251 = vector.shape_cast %239 : vector<8x1xi1> to vector<8x1xi1>
    %252 = vector.broadcast %251 : vector<8x1xi1> to vector<8x128xi1>
    %253 = arith.select %252, %235, %204 : vector<8x128xi1>, vector<8x128xf32>
    %c5_i32 = arith.constant 5 : i32
    %254 = arith.index_cast %c5_i32 : i32 to index
    %c0_61 = arith.constant 0 : index
    %c0_62 = arith.constant 0 : index
    %255 = vector.load %arg0[%254, %c0_61, %c0_62] : memref<8x8x128xf32, #tpu.memory_space<vmem>>, vector<1x8x128xf32>
    %256 = vector.shape_cast %255 : vector<1x8x128xf32> to vector<8x128xf32>
    %cst_63 = arith.constant dense<0.000000e+00> : vector<8x512xf32>
    %257 = tpu.matmul %256, %2, %cst_63 {dimension_numbers = #tpu.dot_dimension_numbers<[1], [0], [0], [1], [0, 0, 1, 1], [], []>} : vector<8x128xf32>, vector<128x512xf32>, vector<8x512xf32> -> vector<8x512xf32>
    %cst_64 = arith.constant dense<0.000000e+00> : vector<8x512xf32>
    %258 = tpu.matmul %250, %4, %cst_64 {dimension_numbers = #tpu.dot_dimension_numbers<[1], [0], [0], [1], [0, 0, 1, 1], [], []>} : vector<8x128xf32>, vector<128x512xf32>, vector<8x512xf32> -> vector<8x512xf32>
    %259 = arith.addf %257, %258 : vector<8x512xf32>
    %260 = vector.broadcast %6 : vector<1x512xf32> to vector<8x512xf32>
    %261 = arith.addf %259, %260 : vector<8x512xf32>
    %262 = vector.extract_strided_slice %261 {offsets = [0, 0], sizes = [8, 128], strides = [1, 1]} : vector<8x512xf32> to vector<8x128xf32>
    %263 = arith.negf %262 : vector<8x128xf32>
    %264 = math.exp %263 : vector<8x128xf32>
    %cst_65 = arith.constant 1.000000e+00 : f32
    %265 = vector.broadcast %cst_65 : f32 to vector<8x128xf32>
    %266 = arith.addf %265, %264 : vector<8x128xf32>
    %267 = arith.divf %265, %266 : vector<8x128xf32>
    %268 = vector.extract_strided_slice %261 {offsets = [0, 128], sizes = [8, 128], strides = [1, 1]} : vector<8x512xf32> to vector<8x128xf32>
    %269 = arith.negf %268 : vector<8x128xf32>
    %270 = math.exp %269 : vector<8x128xf32>
    %cst_66 = arith.constant 1.000000e+00 : f32
    %271 = vector.broadcast %cst_66 : f32 to vector<8x128xf32>
    %272 = arith.addf %271, %270 : vector<8x128xf32>
    %273 = arith.divf %271, %272 : vector<8x128xf32>
    %274 = vector.extract_strided_slice %261 {offsets = [0, 256], sizes = [8, 128], strides = [1, 1]} : vector<8x512xf32> to vector<8x128xf32>
    %275 = math.tanh %274 : vector<8x128xf32>
    %276 = vector.extract_strided_slice %261 {offsets = [0, 384], sizes = [8, 128], strides = [1, 1]} : vector<8x512xf32> to vector<8x128xf32>
    %277 = arith.negf %276 : vector<8x128xf32>
    %278 = math.exp %277 : vector<8x128xf32>
    %cst_67 = arith.constant 1.000000e+00 : f32
    %279 = vector.broadcast %cst_67 : f32 to vector<8x128xf32>
    %280 = arith.addf %279, %278 : vector<8x128xf32>
    %281 = arith.divf %279, %280 : vector<8x128xf32>
    %282 = arith.mulf %273, %253 : vector<8x128xf32>
    %283 = arith.mulf %267, %275 : vector<8x128xf32>
    %284 = arith.addf %282, %283 : vector<8x128xf32>
    %285 = math.tanh %284 : vector<8x128xf32>
    %286 = arith.mulf %281, %285 : vector<8x128xf32>
    %287 = vector.broadcast %c5_i32 : i32 to vector<8x1xi32>
    %288 = arith.cmpi slt, %287, %0 : vector<8x1xi32>
    %cst_68 = arith.constant 0.000000e+00 : f32
    %289 = vector.shape_cast %288 : vector<8x1xi1> to vector<8x1xi1>
    %290 = vector.broadcast %289 : vector<8x1xi1> to vector<8x128xi1>
    %291 = vector.broadcast %cst_68 : f32 to vector<8x128xf32>
    %292 = arith.select %290, %286, %291 : vector<8x128xi1>, vector<8x128xf32>
    %293 = arith.index_cast %c5_i32 : i32 to index
    %c0_69 = arith.constant 0 : index
    %c0_70 = arith.constant 0 : index
    %294 = vector.load %arg5[%293, %c0_69, %c0_70] : memref<8x8x128xf32, #tpu.memory_space<vmem>>, vector<1x8x128xf32>
    %295 = vector.shape_cast %294 : vector<1x8x128xf32> to vector<8x128xf32>
    %296 = vector.shape_cast %292 : vector<8x128xf32> to vector<1x8x128xf32>
    tpu.vector_store %arg5[%293, %c0_69, %c0_70], %296 {strides = array<i32>} : memref<8x8x128xf32, #tpu.memory_space<vmem>>, vector<1x8x128xf32>,
    %297 = vector.shape_cast %288 : vector<8x1xi1> to vector<8x1xi1>
    %298 = vector.broadcast %297 : vector<8x1xi1> to vector<8x128xi1>
    %299 = arith.select %298, %286, %250 : vector<8x128xi1>, vector<8x128xf32>
    %300 = vector.shape_cast %288 : vector<8x1xi1> to vector<8x1xi1>
    %301 = vector.broadcast %300 : vector<8x1xi1> to vector<8x128xi1>
    %302 = arith.select %301, %284, %253 : vector<8x128xi1>, vector<8x128xf32>
    %c6_i32 = arith.constant 6 : i32
    %303 = arith.index_cast %c6_i32 : i32 to index
    %c0_71 = arith.constant 0 : index
    %c0_72 = arith.constant 0 : index
    %304 = vector.load %arg0[%303, %c0_71, %c0_72] : memref<8x8x128xf32, #tpu.memory_space<vmem>>, vector<1x8x128xf32>
    %305 = vector.shape_cast %304 : vector<1x8x128xf32> to vector<8x128xf32>
    %cst_73 = arith.constant dense<0.000000e+00> : vector<8x512xf32>
    %306 = tpu.matmul %305, %2, %cst_73 {dimension_numbers = #tpu.dot_dimension_numbers<[1], [0], [0], [1], [0, 0, 1, 1], [], []>} : vector<8x128xf32>, vector<128x512xf32>, vector<8x512xf32> -> vector<8x512xf32>
    %cst_74 = arith.constant dense<0.000000e+00> : vector<8x512xf32>
    %307 = tpu.matmul %299, %4, %cst_74 {dimension_numbers = #tpu.dot_dimension_numbers<[1], [0], [0], [1], [0, 0, 1, 1], [], []>} : vector<8x128xf32>, vector<128x512xf32>, vector<8x512xf32> -> vector<8x512xf32>
    %308 = arith.addf %306, %307 : vector<8x512xf32>
    %309 = vector.broadcast %6 : vector<1x512xf32> to vector<8x512xf32>
    %310 = arith.addf %308, %309 : vector<8x512xf32>
    %311 = vector.extract_strided_slice %310 {offsets = [0, 0], sizes = [8, 128], strides = [1, 1]} : vector<8x512xf32> to vector<8x128xf32>
    %312 = arith.negf %311 : vector<8x128xf32>
    %313 = math.exp %312 : vector<8x128xf32>
    %cst_75 = arith.constant 1.000000e+00 : f32
    %314 = vector.broadcast %cst_75 : f32 to vector<8x128xf32>
    %315 = arith.addf %314, %313 : vector<8x128xf32>
    %316 = arith.divf %314, %315 : vector<8x128xf32>
    %317 = vector.extract_strided_slice %310 {offsets = [0, 128], sizes = [8, 128], strides = [1, 1]} : vector<8x512xf32> to vector<8x128xf32>
    %318 = arith.negf %317 : vector<8x128xf32>
    %319 = math.exp %318 : vector<8x128xf32>
    %cst_76 = arith.constant 1.000000e+00 : f32
    %320 = vector.broadcast %cst_76 : f32 to vector<8x128xf32>
    %321 = arith.addf %320, %319 : vector<8x128xf32>
    %322 = arith.divf %320, %321 : vector<8x128xf32>
    %323 = vector.extract_strided_slice %310 {offsets = [0, 256], sizes = [8, 128], strides = [1, 1]} : vector<8x512xf32> to vector<8x128xf32>
    %324 = math.tanh %323 : vector<8x128xf32>
    %325 = vector.extract_strided_slice %310 {offsets = [0, 384], sizes = [8, 128], strides = [1, 1]} : vector<8x512xf32> to vector<8x128xf32>
    %326 = arith.negf %325 : vector<8x128xf32>
    %327 = math.exp %326 : vector<8x128xf32>
    %cst_77 = arith.constant 1.000000e+00 : f32
    %328 = vector.broadcast %cst_77 : f32 to vector<8x128xf32>
    %329 = arith.addf %328, %327 : vector<8x128xf32>
    %330 = arith.divf %328, %329 : vector<8x128xf32>
    %331 = arith.mulf %322, %302 : vector<8x128xf32>
    %332 = arith.mulf %316, %324 : vector<8x128xf32>
    %333 = arith.addf %331, %332 : vector<8x128xf32>
    %334 = math.tanh %333 : vector<8x128xf32>
    %335 = arith.mulf %330, %334 : vector<8x128xf32>
    %336 = vector.broadcast %c6_i32 : i32 to vector<8x1xi32>
    %337 = arith.cmpi slt, %336, %0 : vector<8x1xi32>
    %cst_78 = arith.constant 0.000000e+00 : f32
    %338 = vector.shape_cast %337 : vector<8x1xi1> to vector<8x1xi1>
    %339 = vector.broadcast %338 : vector<8x1xi1> to vector<8x128xi1>
    %340 = vector.broadcast %cst_78 : f32 to vector<8x128xf32>
    %341 = arith.select %339, %335, %340 : vector<8x128xi1>, vector<8x128xf32>
    %342 = arith.index_cast %c6_i32 : i32 to index
    %c0_79 = arith.constant 0 : index
    %c0_80 = arith.constant 0 : index
    %343 = vector.load %arg5[%342, %c0_79, %c0_80] : memref<8x8x128xf32, #tpu.memory_space<vmem>>, vector<1x8x128xf32>
    %344 = vector.shape_cast %343 : vector<1x8x128xf32> to vector<8x128xf32>
    %345 = vector.shape_cast %341 : vector<8x128xf32> to vector<1x8x128xf32>
    tpu.vector_store %arg5[%342, %c0_79, %c0_80], %345 {strides = array<i32>} : memref<8x8x128xf32, #tpu.memory_space<vmem>>, vector<1x8x128xf32>,
    %346 = vector.shape_cast %337 : vector<8x1xi1> to vector<8x1xi1>
    %347 = vector.broadcast %346 : vector<8x1xi1> to vector<8x128xi1>
    %348 = arith.select %347, %335, %299 : vector<8x128xi1>, vector<8x128xf32>
    %349 = vector.shape_cast %337 : vector<8x1xi1> to vector<8x1xi1>
    %350 = vector.broadcast %349 : vector<8x1xi1> to vector<8x128xi1>
    %351 = arith.select %350, %333, %302 : vector<8x128xi1>, vector<8x128xf32>
    %c7_i32 = arith.constant 7 : i32
    %352 = arith.index_cast %c7_i32 : i32 to index
    %c0_81 = arith.constant 0 : index
    %c0_82 = arith.constant 0 : index
    %353 = vector.load %arg0[%352, %c0_81, %c0_82] : memref<8x8x128xf32, #tpu.memory_space<vmem>>, vector<1x8x128xf32>
    %354 = vector.shape_cast %353 : vector<1x8x128xf32> to vector<8x128xf32>
    %cst_83 = arith.constant dense<0.000000e+00> : vector<8x512xf32>
    %355 = tpu.matmul %354, %2, %cst_83 {dimension_numbers = #tpu.dot_dimension_numbers<[1], [0], [0], [1], [0, 0, 1, 1], [], []>} : vector<8x128xf32>, vector<128x512xf32>, vector<8x512xf32> -> vector<8x512xf32>
    %cst_84 = arith.constant dense<0.000000e+00> : vector<8x512xf32>
    %356 = tpu.matmul %348, %4, %cst_84 {dimension_numbers = #tpu.dot_dimension_numbers<[1], [0], [0], [1], [0, 0, 1, 1], [], []>} : vector<8x128xf32>, vector<128x512xf32>, vector<8x512xf32> -> vector<8x512xf32>
    %357 = arith.addf %355, %356 : vector<8x512xf32>
    %358 = vector.broadcast %6 : vector<1x512xf32> to vector<8x512xf32>
    %359 = arith.addf %357, %358 : vector<8x512xf32>
    %360 = vector.extract_strided_slice %359 {offsets = [0, 0], sizes = [8, 128], strides = [1, 1]} : vector<8x512xf32> to vector<8x128xf32>
    %361 = arith.negf %360 : vector<8x128xf32>
    %362 = math.exp %361 : vector<8x128xf32>
    %cst_85 = arith.constant 1.000000e+00 : f32
    %363 = vector.broadcast %cst_85 : f32 to vector<8x128xf32>
    %364 = arith.addf %363, %362 : vector<8x128xf32>
    %365 = arith.divf %363, %364 : vector<8x128xf32>
    %366 = vector.extract_strided_slice %359 {offsets = [0, 128], sizes = [8, 128], strides = [1, 1]} : vector<8x512xf32> to vector<8x128xf32>
    %367 = arith.negf %366 : vector<8x128xf32>
    %368 = math.exp %367 : vector<8x128xf32>
    %cst_86 = arith.constant 1.000000e+00 : f32
    %369 = vector.broadcast %cst_86 : f32 to vector<8x128xf32>
    %370 = arith.addf %369, %368 : vector<8x128xf32>
    %371 = arith.divf %369, %370 : vector<8x128xf32>
    %372 = vector.extract_strided_slice %359 {offsets = [0, 256], sizes = [8, 128], strides = [1, 1]} : vector<8x512xf32> to vector<8x128xf32>
    %373 = math.tanh %372 : vector<8x128xf32>
    %374 = vector.extract_strided_slice %359 {offsets = [0, 384], sizes = [8, 128], strides = [1, 1]} : vector<8x512xf32> to vector<8x128xf32>
    %375 = arith.negf %374 : vector<8x128xf32>
    %376 = math.exp %375 : vector<8x128xf32>
    %cst_87 = arith.constant 1.000000e+00 : f32
    %377 = vector.broadcast %cst_87 : f32 to vector<8x128xf32>
    %378 = arith.addf %377, %376 : vector<8x128xf32>
    %379 = arith.divf %377, %378 : vector<8x128xf32>
    %380 = arith.mulf %371, %351 : vector<8x128xf32>
    %381 = arith.mulf %365, %373 : vector<8x128xf32>
    %382 = arith.addf %380, %381 : vector<8x128xf32>
    %383 = math.tanh %382 : vector<8x128xf32>
    %384 = arith.mulf %379, %383 : vector<8x128xf32>
    %385 = vector.broadcast %c7_i32 : i32 to vector<8x1xi32>
    %386 = arith.cmpi slt, %385, %0 : vector<8x1xi32>
    %cst_88 = arith.constant 0.000000e+00 : f32
    %387 = vector.shape_cast %386 : vector<8x1xi1> to vector<8x1xi1>
    %388 = vector.broadcast %387 : vector<8x1xi1> to vector<8x128xi1>
    %389 = vector.broadcast %cst_88 : f32 to vector<8x128xf32>
    %390 = arith.select %388, %384, %389 : vector<8x128xi1>, vector<8x128xf32>
    %391 = arith.index_cast %c7_i32 : i32 to index
    %c0_89 = arith.constant 0 : index
    %c0_90 = arith.constant 0 : index
    %392 = vector.load %arg5[%391, %c0_89, %c0_90] : memref<8x8x128xf32, #tpu.memory_space<vmem>>, vector<1x8x128xf32>
    %393 = vector.shape_cast %392 : vector<1x8x128xf32> to vector<8x128xf32>
    %394 = vector.shape_cast %390 : vector<8x128xf32> to vector<1x8x128xf32>
    tpu.vector_store %arg5[%391, %c0_89, %c0_90], %394 {strides = array<i32>} : memref<8x8x128xf32, #tpu.memory_space<vmem>>, vector<1x8x128xf32>,
    %395 = vector.shape_cast %386 : vector<8x1xi1> to vector<8x1xi1>
    %396 = vector.broadcast %395 : vector<8x1xi1> to vector<8x128xi1>
    %397 = arith.select %396, %384, %348 : vector<8x128xi1>, vector<8x128xf32>
    %398 = vector.shape_cast %386 : vector<8x1xi1> to vector<8x1xi1>
    %399 = vector.broadcast %398 : vector<8x1xi1> to vector<8x128xi1>
    %400 = arith.select %399, %382, %351 : vector<8x128xi1>, vector<8x128xf32>
    %c8_i32 = arith.constant 8 : i32
    %c0_91 = arith.constant 0 : index
    %c0_92 = arith.constant 0 : index
    %c0_93 = arith.constant 0 : index
    %401 = vector.load %arg6[%c0_91, %c0_92, %c0_93] : memref<2x8x128xf32, #tpu.memory_space<vmem>>, vector<1x8x128xf32>
    %402 = vector.shape_cast %401 : vector<1x8x128xf32> to vector<8x128xf32>
    %403 = vector.shape_cast %397 : vector<8x128xf32> to vector<1x8x128xf32>
    tpu.vector_store %arg6[%c0_91, %c0_92, %c0_93], %403 {strides = array<i32>} : memref<2x8x128xf32, #tpu.memory_space<vmem>>, vector<1x8x128xf32>,
    %c0_94 = arith.constant 0 : index
    %c0_95 = arith.constant 0 : index
    %c0_96 = arith.constant 0 : index
    %404 = vector.load %arg7[%c0_94, %c0_95, %c0_96] : memref<2x8x128xf32, #tpu.memory_space<vmem>>, vector<1x8x128xf32>
    %405 = vector.shape_cast %404 : vector<1x8x128xf32> to vector<8x128xf32>
    %406 = vector.shape_cast %400 : vector<8x128xf32> to vector<1x8x128xf32>
    tpu.vector_store %arg7[%c0_94, %c0_95, %c0_96], %406 {strides = array<i32>} : memref<2x8x128xf32, #tpu.memory_space<vmem>>, vector<1x8x128xf32>,
    %c1 = arith.constant 1 : index
    %c0_97 = arith.constant 0 : index
    %c0_98 = arith.constant 0 : index
    %407 = vector.load %arg2[%c1, %c0_97, %c0_98] : memref<2x128x512xf32, #tpu.memory_space<vmem>>, vector<1x128x512xf32>
    %408 = vector.shape_cast %407 : vector<1x128x512xf32> to vector<128x512xf32>
    %c1_99 = arith.constant 1 : index
    %c0_100 = arith.constant 0 : index
    %c0_101 = arith.constant 0 : index
    %409 = vector.load %arg3[%c1_99, %c0_100, %c0_101] : memref<2x128x512xf32, #tpu.memory_space<vmem>>, vector<1x128x512xf32>
    %410 = vector.shape_cast %409 : vector<1x128x512xf32> to vector<128x512xf32>
    %c1_102 = arith.constant 1 : index
    %c0_103 = arith.constant 0 : index
    %c0_104 = arith.constant 0 : index
    %411 = vector.load %arg4[%c1_102, %c0_103, %c0_104] : memref<2x1x512xf32, #tpu.memory_space<vmem>>, vector<1x1x512xf32>
    %412 = vector.shape_cast %411 : vector<1x1x512xf32> to vector<1x512xf32>
    %cst_105 = arith.constant 0.000000e+00 : f32
    %413 = vector.broadcast %cst_105 : f32 to vector<8x128xf32>
    %cst_106 = arith.constant 0.000000e+00 : f32
    %414 = vector.broadcast %cst_106 : f32 to vector<8x128xf32>
    %c0_i32_107 = arith.constant 0 : i32
    %415 = arith.index_cast %c0_i32_107 : i32 to index
    %c0_108 = arith.constant 0 : index
    %c0_109 = arith.constant 0 : index
    %416 = vector.load %arg5[%415, %c0_108, %c0_109] : memref<8x8x128xf32, #tpu.memory_space<vmem>>, vector<1x8x128xf32>
    %417 = vector.shape_cast %416 : vector<1x8x128xf32> to vector<8x128xf32>
    %cst_110 = arith.constant dense<0.000000e+00> : vector<8x512xf32>
    %418 = tpu.matmul %417, %408, %cst_110 {dimension_numbers = #tpu.dot_dimension_numbers<[1], [0], [0], [1], [0, 0, 1, 1], [], []>} : vector<8x128xf32>, vector<128x512xf32>, vector<8x512xf32> -> vector<8x512xf32>
    %cst_111 = arith.constant dense<0.000000e+00> : vector<8x512xf32>
    %419 = tpu.matmul %413, %410, %cst_111 {dimension_numbers = #tpu.dot_dimension_numbers<[1], [0], [0], [1], [0, 0, 1, 1], [], []>} : vector<8x128xf32>, vector<128x512xf32>, vector<8x512xf32> -> vector<8x512xf32>
    %420 = arith.addf %418, %419 : vector<8x512xf32>
    %421 = vector.broadcast %412 : vector<1x512xf32> to vector<8x512xf32>
    %422 = arith.addf %420, %421 : vector<8x512xf32>
    %423 = vector.extract_strided_slice %422 {offsets = [0, 0], sizes = [8, 128], strides = [1, 1]} : vector<8x512xf32> to vector<8x128xf32>
    %424 = arith.negf %423 : vector<8x128xf32>
    %425 = math.exp %424 : vector<8x128xf32>
    %cst_112 = arith.constant 1.000000e+00 : f32
    %426 = vector.broadcast %cst_112 : f32 to vector<8x128xf32>
    %427 = arith.addf %426, %425 : vector<8x128xf32>
    %428 = arith.divf %426, %427 : vector<8x128xf32>
    %429 = vector.extract_strided_slice %422 {offsets = [0, 128], sizes = [8, 128], strides = [1, 1]} : vector<8x512xf32> to vector<8x128xf32>
    %430 = arith.negf %429 : vector<8x128xf32>
    %431 = math.exp %430 : vector<8x128xf32>
    %cst_113 = arith.constant 1.000000e+00 : f32
    %432 = vector.broadcast %cst_113 : f32 to vector<8x128xf32>
    %433 = arith.addf %432, %431 : vector<8x128xf32>
    %434 = arith.divf %432, %433 : vector<8x128xf32>
    %435 = vector.extract_strided_slice %422 {offsets = [0, 256], sizes = [8, 128], strides = [1, 1]} : vector<8x512xf32> to vector<8x128xf32>
    %436 = math.tanh %435 : vector<8x128xf32>
    %437 = vector.extract_strided_slice %422 {offsets = [0, 384], sizes = [8, 128], strides = [1, 1]} : vector<8x512xf32> to vector<8x128xf32>
    %438 = arith.negf %437 : vector<8x128xf32>
    %439 = math.exp %438 : vector<8x128xf32>
    %cst_114 = arith.constant 1.000000e+00 : f32
    %440 = vector.broadcast %cst_114 : f32 to vector<8x128xf32>
    %441 = arith.addf %440, %439 : vector<8x128xf32>
    %442 = arith.divf %440, %441 : vector<8x128xf32>
    %443 = arith.mulf %434, %414 : vector<8x128xf32>
    %444 = arith.mulf %428, %436 : vector<8x128xf32>
    %445 = arith.addf %443, %444 : vector<8x128xf32>
    %446 = math.tanh %445 : vector<8x128xf32>
    %447 = arith.mulf %442, %446 : vector<8x128xf32>
    %448 = vector.broadcast %c0_i32_107 : i32 to vector<8x1xi32>
    %449 = arith.cmpi slt, %448, %0 : vector<8x1xi32>
    %cst_115 = arith.constant 0.000000e+00 : f32
    %450 = vector.shape_cast %449 : vector<8x1xi1> to vector<8x1xi1>
    %451 = vector.broadcast %450 : vector<8x1xi1> to vector<8x128xi1>
    %452 = vector.broadcast %cst_115 : f32 to vector<8x128xf32>
    %453 = arith.select %451, %447, %452 : vector<8x128xi1>, vector<8x128xf32>
    %454 = arith.index_cast %c0_i32_107 : i32 to index
    %c0_116 = arith.constant 0 : index
    %c0_117 = arith.constant 0 : index
    %455 = vector.load %arg5[%454, %c0_116, %c0_117] : memref<8x8x128xf32, #tpu.memory_space<vmem>>, vector<1x8x128xf32>
    %456 = vector.shape_cast %455 : vector<1x8x128xf32> to vector<8x128xf32>
    %457 = vector.shape_cast %453 : vector<8x128xf32> to vector<1x8x128xf32>
    tpu.vector_store %arg5[%454, %c0_116, %c0_117], %457 {strides = array<i32>} : memref<8x8x128xf32, #tpu.memory_space<vmem>>, vector<1x8x128xf32>,
    %458 = vector.shape_cast %449 : vector<8x1xi1> to vector<8x1xi1>
    %459 = vector.broadcast %458 : vector<8x1xi1> to vector<8x128xi1>
    %460 = arith.select %459, %447, %413 : vector<8x128xi1>, vector<8x128xf32>
    %461 = vector.shape_cast %449 : vector<8x1xi1> to vector<8x1xi1>
    %462 = vector.broadcast %461 : vector<8x1xi1> to vector<8x128xi1>
    %463 = arith.select %462, %445, %414 : vector<8x128xi1>, vector<8x128xf32>
    %c1_i32_118 = arith.constant 1 : i32
    %464 = arith.index_cast %c1_i32_118 : i32 to index
    %c0_119 = arith.constant 0 : index
    %c0_120 = arith.constant 0 : index
    %465 = vector.load %arg5[%464, %c0_119, %c0_120] : memref<8x8x128xf32, #tpu.memory_space<vmem>>, vector<1x8x128xf32>
    %466 = vector.shape_cast %465 : vector<1x8x128xf32> to vector<8x128xf32>
    %cst_121 = arith.constant dense<0.000000e+00> : vector<8x512xf32>
    %467 = tpu.matmul %466, %408, %cst_121 {dimension_numbers = #tpu.dot_dimension_numbers<[1], [0], [0], [1], [0, 0, 1, 1], [], []>} : vector<8x128xf32>, vector<128x512xf32>, vector<8x512xf32> -> vector<8x512xf32>
    %cst_122 = arith.constant dense<0.000000e+00> : vector<8x512xf32>
    %468 = tpu.matmul %460, %410, %cst_122 {dimension_numbers = #tpu.dot_dimension_numbers<[1], [0], [0], [1], [0, 0, 1, 1], [], []>} : vector<8x128xf32>, vector<128x512xf32>, vector<8x512xf32> -> vector<8x512xf32>
    %469 = arith.addf %467, %468 : vector<8x512xf32>
    %470 = vector.broadcast %412 : vector<1x512xf32> to vector<8x512xf32>
    %471 = arith.addf %469, %470 : vector<8x512xf32>
    %472 = vector.extract_strided_slice %471 {offsets = [0, 0], sizes = [8, 128], strides = [1, 1]} : vector<8x512xf32> to vector<8x128xf32>
    %473 = arith.negf %472 : vector<8x128xf32>
    %474 = math.exp %473 : vector<8x128xf32>
    %cst_123 = arith.constant 1.000000e+00 : f32
    %475 = vector.broadcast %cst_123 : f32 to vector<8x128xf32>
    %476 = arith.addf %475, %474 : vector<8x128xf32>
    %477 = arith.divf %475, %476 : vector<8x128xf32>
    %478 = vector.extract_strided_slice %471 {offsets = [0, 128], sizes = [8, 128], strides = [1, 1]} : vector<8x512xf32> to vector<8x128xf32>
    %479 = arith.negf %478 : vector<8x128xf32>
    %480 = math.exp %479 : vector<8x128xf32>
    %cst_124 = arith.constant 1.000000e+00 : f32
    %481 = vector.broadcast %cst_124 : f32 to vector<8x128xf32>
    %482 = arith.addf %481, %480 : vector<8x128xf32>
    %483 = arith.divf %481, %482 : vector<8x128xf32>
    %484 = vector.extract_strided_slice %471 {offsets = [0, 256], sizes = [8, 128], strides = [1, 1]} : vector<8x512xf32> to vector<8x128xf32>
    %485 = math.tanh %484 : vector<8x128xf32>
    %486 = vector.extract_strided_slice %471 {offsets = [0, 384], sizes = [8, 128], strides = [1, 1]} : vector<8x512xf32> to vector<8x128xf32>
    %487 = arith.negf %486 : vector<8x128xf32>
    %488 = math.exp %487 : vector<8x128xf32>
    %cst_125 = arith.constant 1.000000e+00 : f32
    %489 = vector.broadcast %cst_125 : f32 to vector<8x128xf32>
    %490 = arith.addf %489, %488 : vector<8x128xf32>
    %491 = arith.divf %489, %490 : vector<8x128xf32>
    %492 = arith.mulf %483, %463 : vector<8x128xf32>
    %493 = arith.mulf %477, %485 : vector<8x128xf32>
    %494 = arith.addf %492, %493 : vector<8x128xf32>
    %495 = math.tanh %494 : vector<8x128xf32>
    %496 = arith.mulf %491, %495 : vector<8x128xf32>
    %497 = vector.broadcast %c1_i32_118 : i32 to vector<8x1xi32>
    %498 = arith.cmpi slt, %497, %0 : vector<8x1xi32>
    %cst_126 = arith.constant 0.000000e+00 : f32
    %499 = vector.shape_cast %498 : vector<8x1xi1> to vector<8x1xi1>
    %500 = vector.broadcast %499 : vector<8x1xi1> to vector<8x128xi1>
    %501 = vector.broadcast %cst_126 : f32 to vector<8x128xf32>
    %502 = arith.select %500, %496, %501 : vector<8x128xi1>, vector<8x128xf32>
    %503 = arith.index_cast %c1_i32_118 : i32 to index
    %c0_127 = arith.constant 0 : index
    %c0_128 = arith.constant 0 : index
    %504 = vector.load %arg5[%503, %c0_127, %c0_128] : memref<8x8x128xf32, #tpu.memory_space<vmem>>, vector<1x8x128xf32>
    %505 = vector.shape_cast %504 : vector<1x8x128xf32> to vector<8x128xf32>
    %506 = vector.shape_cast %502 : vector<8x128xf32> to vector<1x8x128xf32>
    tpu.vector_store %arg5[%503, %c0_127, %c0_128], %506 {strides = array<i32>} : memref<8x8x128xf32, #tpu.memory_space<vmem>>, vector<1x8x128xf32>,
    %507 = vector.shape_cast %498 : vector<8x1xi1> to vector<8x1xi1>
    %508 = vector.broadcast %507 : vector<8x1xi1> to vector<8x128xi1>
    %509 = arith.select %508, %496, %460 : vector<8x128xi1>, vector<8x128xf32>
    %510 = vector.shape_cast %498 : vector<8x1xi1> to vector<8x1xi1>
    %511 = vector.broadcast %510 : vector<8x1xi1> to vector<8x128xi1>
    %512 = arith.select %511, %494, %463 : vector<8x128xi1>, vector<8x128xf32>
    %c2_i32_129 = arith.constant 2 : i32
    %513 = arith.index_cast %c2_i32_129 : i32 to index
    %c0_130 = arith.constant 0 : index
    %c0_131 = arith.constant 0 : index
    %514 = vector.load %arg5[%513, %c0_130, %c0_131] : memref<8x8x128xf32, #tpu.memory_space<vmem>>, vector<1x8x128xf32>
    %515 = vector.shape_cast %514 : vector<1x8x128xf32> to vector<8x128xf32>
    %cst_132 = arith.constant dense<0.000000e+00> : vector<8x512xf32>
    %516 = tpu.matmul %515, %408, %cst_132 {dimension_numbers = #tpu.dot_dimension_numbers<[1], [0], [0], [1], [0, 0, 1, 1], [], []>} : vector<8x128xf32>, vector<128x512xf32>, vector<8x512xf32> -> vector<8x512xf32>
    %cst_133 = arith.constant dense<0.000000e+00> : vector<8x512xf32>
    %517 = tpu.matmul %509, %410, %cst_133 {dimension_numbers = #tpu.dot_dimension_numbers<[1], [0], [0], [1], [0, 0, 1, 1], [], []>} : vector<8x128xf32>, vector<128x512xf32>, vector<8x512xf32> -> vector<8x512xf32>
    %518 = arith.addf %516, %517 : vector<8x512xf32>
    %519 = vector.broadcast %412 : vector<1x512xf32> to vector<8x512xf32>
    %520 = arith.addf %518, %519 : vector<8x512xf32>
    %521 = vector.extract_strided_slice %520 {offsets = [0, 0], sizes = [8, 128], strides = [1, 1]} : vector<8x512xf32> to vector<8x128xf32>
    %522 = arith.negf %521 : vector<8x128xf32>
    %523 = math.exp %522 : vector<8x128xf32>
    %cst_134 = arith.constant 1.000000e+00 : f32
    %524 = vector.broadcast %cst_134 : f32 to vector<8x128xf32>
    %525 = arith.addf %524, %523 : vector<8x128xf32>
    %526 = arith.divf %524, %525 : vector<8x128xf32>
    %527 = vector.extract_strided_slice %520 {offsets = [0, 128], sizes = [8, 128], strides = [1, 1]} : vector<8x512xf32> to vector<8x128xf32>
    %528 = arith.negf %527 : vector<8x128xf32>
    %529 = math.exp %528 : vector<8x128xf32>
    %cst_135 = arith.constant 1.000000e+00 : f32
    %530 = vector.broadcast %cst_135 : f32 to vector<8x128xf32>
    %531 = arith.addf %530, %529 : vector<8x128xf32>
    %532 = arith.divf %530, %531 : vector<8x128xf32>
    %533 = vector.extract_strided_slice %520 {offsets = [0, 256], sizes = [8, 128], strides = [1, 1]} : vector<8x512xf32> to vector<8x128xf32>
    %534 = math.tanh %533 : vector<8x128xf32>
    %535 = vector.extract_strided_slice %520 {offsets = [0, 384], sizes = [8, 128], strides = [1, 1]} : vector<8x512xf32> to vector<8x128xf32>
    %536 = arith.negf %535 : vector<8x128xf32>
    %537 = math.exp %536 : vector<8x128xf32>
    %cst_136 = arith.constant 1.000000e+00 : f32
    %538 = vector.broadcast %cst_136 : f32 to vector<8x128xf32>
    %539 = arith.addf %538, %537 : vector<8x128xf32>
    %540 = arith.divf %538, %539 : vector<8x128xf32>
    %541 = arith.mulf %532, %512 : vector<8x128xf32>
    %542 = arith.mulf %526, %534 : vector<8x128xf32>
    %543 = arith.addf %541, %542 : vector<8x128xf32>
    %544 = math.tanh %543 : vector<8x128xf32>
    %545 = arith.mulf %540, %544 : vector<8x128xf32>
    %546 = vector.broadcast %c2_i32_129 : i32 to vector<8x1xi32>
    %547 = arith.cmpi slt, %546, %0 : vector<8x1xi32>
    %cst_137 = arith.constant 0.000000e+00 : f32
    %548 = vector.shape_cast %547 : vector<8x1xi1> to vector<8x1xi1>
    %549 = vector.broadcast %548 : vector<8x1xi1> to vector<8x128xi1>
    %550 = vector.broadcast %cst_137 : f32 to vector<8x128xf32>
    %551 = arith.select %549, %545, %550 : vector<8x128xi1>, vector<8x128xf32>
    %552 = arith.index_cast %c2_i32_129 : i32 to index
    %c0_138 = arith.constant 0 : index
    %c0_139 = arith.constant 0 : index
    %553 = vector.load %arg5[%552, %c0_138, %c0_139] : memref<8x8x128xf32, #tpu.memory_space<vmem>>, vector<1x8x128xf32>
    %554 = vector.shape_cast %553 : vector<1x8x128xf32> to vector<8x128xf32>
    %555 = vector.shape_cast %551 : vector<8x128xf32> to vector<1x8x128xf32>
    tpu.vector_store %arg5[%552, %c0_138, %c0_139], %555 {strides = array<i32>} : memref<8x8x128xf32, #tpu.memory_space<vmem>>, vector<1x8x128xf32>,
    %556 = vector.shape_cast %547 : vector<8x1xi1> to vector<8x1xi1>
    %557 = vector.broadcast %556 : vector<8x1xi1> to vector<8x128xi1>
    %558 = arith.select %557, %545, %509 : vector<8x128xi1>, vector<8x128xf32>
    %559 = vector.shape_cast %547 : vector<8x1xi1> to vector<8x1xi1>
    %560 = vector.broadcast %559 : vector<8x1xi1> to vector<8x128xi1>
    %561 = arith.select %560, %543, %512 : vector<8x128xi1>, vector<8x128xf32>
    %c3_i32_140 = arith.constant 3 : i32
    %562 = arith.index_cast %c3_i32_140 : i32 to index
    %c0_141 = arith.constant 0 : index
    %c0_142 = arith.constant 0 : index
    %563 = vector.load %arg5[%562, %c0_141, %c0_142] : memref<8x8x128xf32, #tpu.memory_space<vmem>>, vector<1x8x128xf32>
    %564 = vector.shape_cast %563 : vector<1x8x128xf32> to vector<8x128xf32>
    %cst_143 = arith.constant dense<0.000000e+00> : vector<8x512xf32>
    %565 = tpu.matmul %564, %408, %cst_143 {dimension_numbers = #tpu.dot_dimension_numbers<[1], [0], [0], [1], [0, 0, 1, 1], [], []>} : vector<8x128xf32>, vector<128x512xf32>, vector<8x512xf32> -> vector<8x512xf32>
    %cst_144 = arith.constant dense<0.000000e+00> : vector<8x512xf32>
    %566 = tpu.matmul %558, %410, %cst_144 {dimension_numbers = #tpu.dot_dimension_numbers<[1], [0], [0], [1], [0, 0, 1, 1], [], []>} : vector<8x128xf32>, vector<128x512xf32>, vector<8x512xf32> -> vector<8x512xf32>
    %567 = arith.addf %565, %566 : vector<8x512xf32>
    %568 = vector.broadcast %412 : vector<1x512xf32> to vector<8x512xf32>
    %569 = arith.addf %567, %568 : vector<8x512xf32>
    %570 = vector.extract_strided_slice %569 {offsets = [0, 0], sizes = [8, 128], strides = [1, 1]} : vector<8x512xf32> to vector<8x128xf32>
    %571 = arith.negf %570 : vector<8x128xf32>
    %572 = math.exp %571 : vector<8x128xf32>
    %cst_145 = arith.constant 1.000000e+00 : f32
    %573 = vector.broadcast %cst_145 : f32 to vector<8x128xf32>
    %574 = arith.addf %573, %572 : vector<8x128xf32>
    %575 = arith.divf %573, %574 : vector<8x128xf32>
    %576 = vector.extract_strided_slice %569 {offsets = [0, 128], sizes = [8, 128], strides = [1, 1]} : vector<8x512xf32> to vector<8x128xf32>
    %577 = arith.negf %576 : vector<8x128xf32>
    %578 = math.exp %577 : vector<8x128xf32>
    %cst_146 = arith.constant 1.000000e+00 : f32
    %579 = vector.broadcast %cst_146 : f32 to vector<8x128xf32>
    %580 = arith.addf %579, %578 : vector<8x128xf32>
    %581 = arith.divf %579, %580 : vector<8x128xf32>
    %582 = vector.extract_strided_slice %569 {offsets = [0, 256], sizes = [8, 128], strides = [1, 1]} : vector<8x512xf32> to vector<8x128xf32>
    %583 = math.tanh %582 : vector<8x128xf32>
    %584 = vector.extract_strided_slice %569 {offsets = [0, 384], sizes = [8, 128], strides = [1, 1]} : vector<8x512xf32> to vector<8x128xf32>
    %585 = arith.negf %584 : vector<8x128xf32>
    %586 = math.exp %585 : vector<8x128xf32>
    %cst_147 = arith.constant 1.000000e+00 : f32
    %587 = vector.broadcast %cst_147 : f32 to vector<8x128xf32>
    %588 = arith.addf %587, %586 : vector<8x128xf32>
    %589 = arith.divf %587, %588 : vector<8x128xf32>
    %590 = arith.mulf %581, %561 : vector<8x128xf32>
    %591 = arith.mulf %575, %583 : vector<8x128xf32>
    %592 = arith.addf %590, %591 : vector<8x128xf32>
    %593 = math.tanh %592 : vector<8x128xf32>
    %594 = arith.mulf %589, %593 : vector<8x128xf32>
    %595 = vector.broadcast %c3_i32_140 : i32 to vector<8x1xi32>
    %596 = arith.cmpi slt, %595, %0 : vector<8x1xi32>
    %cst_148 = arith.constant 0.000000e+00 : f32
    %597 = vector.shape_cast %596 : vector<8x1xi1> to vector<8x1xi1>
    %598 = vector.broadcast %597 : vector<8x1xi1> to vector<8x128xi1>
    %599 = vector.broadcast %cst_148 : f32 to vector<8x128xf32>
    %600 = arith.select %598, %594, %599 : vector<8x128xi1>, vector<8x128xf32>
    %601 = arith.index_cast %c3_i32_140 : i32 to index
    %c0_149 = arith.constant 0 : index
    %c0_150 = arith.constant 0 : index
    %602 = vector.load %arg5[%601, %c0_149, %c0_150] : memref<8x8x128xf32, #tpu.memory_space<vmem>>, vector<1x8x128xf32>
    %603 = vector.shape_cast %602 : vector<1x8x128xf32> to vector<8x128xf32>
    %604 = vector.shape_cast %600 : vector<8x128xf32> to vector<1x8x128xf32>
    tpu.vector_store %arg5[%601, %c0_149, %c0_150], %604 {strides = array<i32>} : memref<8x8x128xf32, #tpu.memory_space<vmem>>, vector<1x8x128xf32>,
    %605 = vector.shape_cast %596 : vector<8x1xi1> to vector<8x1xi1>
    %606 = vector.broadcast %605 : vector<8x1xi1> to vector<8x128xi1>
    %607 = arith.select %606, %594, %558 : vector<8x128xi1>, vector<8x128xf32>
    %608 = vector.shape_cast %596 : vector<8x1xi1> to vector<8x1xi1>
    %609 = vector.broadcast %608 : vector<8x1xi1> to vector<8x128xi1>
    %610 = arith.select %609, %592, %561 : vector<8x128xi1>, vector<8x128xf32>
    %c4_i32_151 = arith.constant 4 : i32
    %611 = arith.index_cast %c4_i32_151 : i32 to index
    %c0_152 = arith.constant 0 : index
    %c0_153 = arith.constant 0 : index
    %612 = vector.load %arg5[%611, %c0_152, %c0_153] : memref<8x8x128xf32, #tpu.memory_space<vmem>>, vector<1x8x128xf32>
    %613 = vector.shape_cast %612 : vector<1x8x128xf32> to vector<8x128xf32>
    %cst_154 = arith.constant dense<0.000000e+00> : vector<8x512xf32>
    %614 = tpu.matmul %613, %408, %cst_154 {dimension_numbers = #tpu.dot_dimension_numbers<[1], [0], [0], [1], [0, 0, 1, 1], [], []>} : vector<8x128xf32>, vector<128x512xf32>, vector<8x512xf32> -> vector<8x512xf32>
    %cst_155 = arith.constant dense<0.000000e+00> : vector<8x512xf32>
    %615 = tpu.matmul %607, %410, %cst_155 {dimension_numbers = #tpu.dot_dimension_numbers<[1], [0], [0], [1], [0, 0, 1, 1], [], []>} : vector<8x128xf32>, vector<128x512xf32>, vector<8x512xf32> -> vector<8x512xf32>
    %616 = arith.addf %614, %615 : vector<8x512xf32>
    %617 = vector.broadcast %412 : vector<1x512xf32> to vector<8x512xf32>
    %618 = arith.addf %616, %617 : vector<8x512xf32>
    %619 = vector.extract_strided_slice %618 {offsets = [0, 0], sizes = [8, 128], strides = [1, 1]} : vector<8x512xf32> to vector<8x128xf32>
    %620 = arith.negf %619 : vector<8x128xf32>
    %621 = math.exp %620 : vector<8x128xf32>
    %cst_156 = arith.constant 1.000000e+00 : f32
    %622 = vector.broadcast %cst_156 : f32 to vector<8x128xf32>
    %623 = arith.addf %622, %621 : vector<8x128xf32>
    %624 = arith.divf %622, %623 : vector<8x128xf32>
    %625 = vector.extract_strided_slice %618 {offsets = [0, 128], sizes = [8, 128], strides = [1, 1]} : vector<8x512xf32> to vector<8x128xf32>
    %626 = arith.negf %625 : vector<8x128xf32>
    %627 = math.exp %626 : vector<8x128xf32>
    %cst_157 = arith.constant 1.000000e+00 : f32
    %628 = vector.broadcast %cst_157 : f32 to vector<8x128xf32>
    %629 = arith.addf %628, %627 : vector<8x128xf32>
    %630 = arith.divf %628, %629 : vector<8x128xf32>
    %631 = vector.extract_strided_slice %618 {offsets = [0, 256], sizes = [8, 128], strides = [1, 1]} : vector<8x512xf32> to vector<8x128xf32>
    %632 = math.tanh %631 : vector<8x128xf32>
    %633 = vector.extract_strided_slice %618 {offsets = [0, 384], sizes = [8, 128], strides = [1, 1]} : vector<8x512xf32> to vector<8x128xf32>
    %634 = arith.negf %633 : vector<8x128xf32>
    %635 = math.exp %634 : vector<8x128xf32>
    %cst_158 = arith.constant 1.000000e+00 : f32
    %636 = vector.broadcast %cst_158 : f32 to vector<8x128xf32>
    %637 = arith.addf %636, %635 : vector<8x128xf32>
    %638 = arith.divf %636, %637 : vector<8x128xf32>
    %639 = arith.mulf %630, %610 : vector<8x128xf32>
    %640 = arith.mulf %624, %632 : vector<8x128xf32>
    %641 = arith.addf %639, %640 : vector<8x128xf32>
    %642 = math.tanh %641 : vector<8x128xf32>
    %643 = arith.mulf %638, %642 : vector<8x128xf32>
    %644 = vector.broadcast %c4_i32_151 : i32 to vector<8x1xi32>
    %645 = arith.cmpi slt, %644, %0 : vector<8x1xi32>
    %cst_159 = arith.constant 0.000000e+00 : f32
    %646 = vector.shape_cast %645 : vector<8x1xi1> to vector<8x1xi1>
    %647 = vector.broadcast %646 : vector<8x1xi1> to vector<8x128xi1>
    %648 = vector.broadcast %cst_159 : f32 to vector<8x128xf32>
    %649 = arith.select %647, %643, %648 : vector<8x128xi1>, vector<8x128xf32>
    %650 = arith.index_cast %c4_i32_151 : i32 to index
    %c0_160 = arith.constant 0 : index
    %c0_161 = arith.constant 0 : index
    %651 = vector.load %arg5[%650, %c0_160, %c0_161] : memref<8x8x128xf32, #tpu.memory_space<vmem>>, vector<1x8x128xf32>
    %652 = vector.shape_cast %651 : vector<1x8x128xf32> to vector<8x128xf32>
    %653 = vector.shape_cast %649 : vector<8x128xf32> to vector<1x8x128xf32>
    tpu.vector_store %arg5[%650, %c0_160, %c0_161], %653 {strides = array<i32>} : memref<8x8x128xf32, #tpu.memory_space<vmem>>, vector<1x8x128xf32>,
    %654 = vector.shape_cast %645 : vector<8x1xi1> to vector<8x1xi1>
    %655 = vector.broadcast %654 : vector<8x1xi1> to vector<8x128xi1>
    %656 = arith.select %655, %643, %607 : vector<8x128xi1>, vector<8x128xf32>
    %657 = vector.shape_cast %645 : vector<8x1xi1> to vector<8x1xi1>
    %658 = vector.broadcast %657 : vector<8x1xi1> to vector<8x128xi1>
    %659 = arith.select %658, %641, %610 : vector<8x128xi1>, vector<8x128xf32>
    %c5_i32_162 = arith.constant 5 : i32
    %660 = arith.index_cast %c5_i32_162 : i32 to index
    %c0_163 = arith.constant 0 : index
    %c0_164 = arith.constant 0 : index
    %661 = vector.load %arg5[%660, %c0_163, %c0_164] : memref<8x8x128xf32, #tpu.memory_space<vmem>>, vector<1x8x128xf32>
    %662 = vector.shape_cast %661 : vector<1x8x128xf32> to vector<8x128xf32>
    %cst_165 = arith.constant dense<0.000000e+00> : vector<8x512xf32>
    %663 = tpu.matmul %662, %408, %cst_165 {dimension_numbers = #tpu.dot_dimension_numbers<[1], [0], [0], [1], [0, 0, 1, 1], [], []>} : vector<8x128xf32>, vector<128x512xf32>, vector<8x512xf32> -> vector<8x512xf32>
    %cst_166 = arith.constant dense<0.000000e+00> : vector<8x512xf32>
    %664 = tpu.matmul %656, %410, %cst_166 {dimension_numbers = #tpu.dot_dimension_numbers<[1], [0], [0], [1], [0, 0, 1, 1], [], []>} : vector<8x128xf32>, vector<128x512xf32>, vector<8x512xf32> -> vector<8x512xf32>
    %665 = arith.addf %663, %664 : vector<8x512xf32>
    %666 = vector.broadcast %412 : vector<1x512xf32> to vector<8x512xf32>
    %667 = arith.addf %665, %666 : vector<8x512xf32>
    %668 = vector.extract_strided_slice %667 {offsets = [0, 0], sizes = [8, 128], strides = [1, 1]} : vector<8x512xf32> to vector<8x128xf32>
    %669 = arith.negf %668 : vector<8x128xf32>
    %670 = math.exp %669 : vector<8x128xf32>
    %cst_167 = arith.constant 1.000000e+00 : f32
    %671 = vector.broadcast %cst_167 : f32 to vector<8x128xf32>
    %672 = arith.addf %671, %670 : vector<8x128xf32>
    %673 = arith.divf %671, %672 : vector<8x128xf32>
    %674 = vector.extract_strided_slice %667 {offsets = [0, 128], sizes = [8, 128], strides = [1, 1]} : vector<8x512xf32> to vector<8x128xf32>
    %675 = arith.negf %674 : vector<8x128xf32>
    %676 = math.exp %675 : vector<8x128xf32>
    %cst_168 = arith.constant 1.000000e+00 : f32
    %677 = vector.broadcast %cst_168 : f32 to vector<8x128xf32>
    %678 = arith.addf %677, %676 : vector<8x128xf32>
    %679 = arith.divf %677, %678 : vector<8x128xf32>
    %680 = vector.extract_strided_slice %667 {offsets = [0, 256], sizes = [8, 128], strides = [1, 1]} : vector<8x512xf32> to vector<8x128xf32>
    %681 = math.tanh %680 : vector<8x128xf32>
    %682 = vector.extract_strided_slice %667 {offsets = [0, 384], sizes = [8, 128], strides = [1, 1]} : vector<8x512xf32> to vector<8x128xf32>
    %683 = arith.negf %682 : vector<8x128xf32>
    %684 = math.exp %683 : vector<8x128xf32>
    %cst_169 = arith.constant 1.000000e+00 : f32
    %685 = vector.broadcast %cst_169 : f32 to vector<8x128xf32>
    %686 = arith.addf %685, %684 : vector<8x128xf32>
    %687 = arith.divf %685, %686 : vector<8x128xf32>
    %688 = arith.mulf %679, %659 : vector<8x128xf32>
    %689 = arith.mulf %673, %681 : vector<8x128xf32>
    %690 = arith.addf %688, %689 : vector<8x128xf32>
    %691 = math.tanh %690 : vector<8x128xf32>
    %692 = arith.mulf %687, %691 : vector<8x128xf32>
    %693 = vector.broadcast %c5_i32_162 : i32 to vector<8x1xi32>
    %694 = arith.cmpi slt, %693, %0 : vector<8x1xi32>
    %cst_170 = arith.constant 0.000000e+00 : f32
    %695 = vector.shape_cast %694 : vector<8x1xi1> to vector<8x1xi1>
    %696 = vector.broadcast %695 : vector<8x1xi1> to vector<8x128xi1>
    %697 = vector.broadcast %cst_170 : f32 to vector<8x128xf32>
    %698 = arith.select %696, %692, %697 : vector<8x128xi1>, vector<8x128xf32>
    %699 = arith.index_cast %c5_i32_162 : i32 to index
    %c0_171 = arith.constant 0 : index
    %c0_172 = arith.constant 0 : index
    %700 = vector.load %arg5[%699, %c0_171, %c0_172] : memref<8x8x128xf32, #tpu.memory_space<vmem>>, vector<1x8x128xf32>
    %701 = vector.shape_cast %700 : vector<1x8x128xf32> to vector<8x128xf32>
    %702 = vector.shape_cast %698 : vector<8x128xf32> to vector<1x8x128xf32>
    tpu.vector_store %arg5[%699, %c0_171, %c0_172], %702 {strides = array<i32>} : memref<8x8x128xf32, #tpu.memory_space<vmem>>, vector<1x8x128xf32>,
    %703 = vector.shape_cast %694 : vector<8x1xi1> to vector<8x1xi1>
    %704 = vector.broadcast %703 : vector<8x1xi1> to vector<8x128xi1>
    %705 = arith.select %704, %692, %656 : vector<8x128xi1>, vector<8x128xf32>
    %706 = vector.shape_cast %694 : vector<8x1xi1> to vector<8x1xi1>
    %707 = vector.broadcast %706 : vector<8x1xi1> to vector<8x128xi1>
    %708 = arith.select %707, %690, %659 : vector<8x128xi1>, vector<8x128xf32>
    %c6_i32_173 = arith.constant 6 : i32
    %709 = arith.index_cast %c6_i32_173 : i32 to index
    %c0_174 = arith.constant 0 : index
    %c0_175 = arith.constant 0 : index
    %710 = vector.load %arg5[%709, %c0_174, %c0_175] : memref<8x8x128xf32, #tpu.memory_space<vmem>>, vector<1x8x128xf32>
    %711 = vector.shape_cast %710 : vector<1x8x128xf32> to vector<8x128xf32>
    %cst_176 = arith.constant dense<0.000000e+00> : vector<8x512xf32>
    %712 = tpu.matmul %711, %408, %cst_176 {dimension_numbers = #tpu.dot_dimension_numbers<[1], [0], [0], [1], [0, 0, 1, 1], [], []>} : vector<8x128xf32>, vector<128x512xf32>, vector<8x512xf32> -> vector<8x512xf32>
    %cst_177 = arith.constant dense<0.000000e+00> : vector<8x512xf32>
    %713 = tpu.matmul %705, %410, %cst_177 {dimension_numbers = #tpu.dot_dimension_numbers<[1], [0], [0], [1], [0, 0, 1, 1], [], []>} : vector<8x128xf32>, vector<128x512xf32>, vector<8x512xf32> -> vector<8x512xf32>
    %714 = arith.addf %712, %713 : vector<8x512xf32>
    %715 = vector.broadcast %412 : vector<1x512xf32> to vector<8x512xf32>
    %716 = arith.addf %714, %715 : vector<8x512xf32>
    %717 = vector.extract_strided_slice %716 {offsets = [0, 0], sizes = [8, 128], strides = [1, 1]} : vector<8x512xf32> to vector<8x128xf32>
    %718 = arith.negf %717 : vector<8x128xf32>
    %719 = math.exp %718 : vector<8x128xf32>
    %cst_178 = arith.constant 1.000000e+00 : f32
    %720 = vector.broadcast %cst_178 : f32 to vector<8x128xf32>
    %721 = arith.addf %720, %719 : vector<8x128xf32>
    %722 = arith.divf %720, %721 : vector<8x128xf32>
    %723 = vector.extract_strided_slice %716 {offsets = [0, 128], sizes = [8, 128], strides = [1, 1]} : vector<8x512xf32> to vector<8x128xf32>
    %724 = arith.negf %723 : vector<8x128xf32>
    %725 = math.exp %724 : vector<8x128xf32>
    %cst_179 = arith.constant 1.000000e+00 : f32
    %726 = vector.broadcast %cst_179 : f32 to vector<8x128xf32>
    %727 = arith.addf %726, %725 : vector<8x128xf32>
    %728 = arith.divf %726, %727 : vector<8x128xf32>
    %729 = vector.extract_strided_slice %716 {offsets = [0, 256], sizes = [8, 128], strides = [1, 1]} : vector<8x512xf32> to vector<8x128xf32>
    %730 = math.tanh %729 : vector<8x128xf32>
    %731 = vector.extract_strided_slice %716 {offsets = [0, 384], sizes = [8, 128], strides = [1, 1]} : vector<8x512xf32> to vector<8x128xf32>
    %732 = arith.negf %731 : vector<8x128xf32>
    %733 = math.exp %732 : vector<8x128xf32>
    %cst_180 = arith.constant 1.000000e+00 : f32
    %734 = vector.broadcast %cst_180 : f32 to vector<8x128xf32>
    %735 = arith.addf %734, %733 : vector<8x128xf32>
    %736 = arith.divf %734, %735 : vector<8x128xf32>
    %737 = arith.mulf %728, %708 : vector<8x128xf32>
    %738 = arith.mulf %722, %730 : vector<8x128xf32>
    %739 = arith.addf %737, %738 : vector<8x128xf32>
    %740 = math.tanh %739 : vector<8x128xf32>
    %741 = arith.mulf %736, %740 : vector<8x128xf32>
    %742 = vector.broadcast %c6_i32_173 : i32 to vector<8x1xi32>
    %743 = arith.cmpi slt, %742, %0 : vector<8x1xi32>
    %cst_181 = arith.constant 0.000000e+00 : f32
    %744 = vector.shape_cast %743 : vector<8x1xi1> to vector<8x1xi1>
    %745 = vector.broadcast %744 : vector<8x1xi1> to vector<8x128xi1>
    %746 = vector.broadcast %cst_181 : f32 to vector<8x128xf32>
    %747 = arith.select %745, %741, %746 : vector<8x128xi1>, vector<8x128xf32>
    %748 = arith.index_cast %c6_i32_173 : i32 to index
    %c0_182 = arith.constant 0 : index
    %c0_183 = arith.constant 0 : index
    %749 = vector.load %arg5[%748, %c0_182, %c0_183] : memref<8x8x128xf32, #tpu.memory_space<vmem>>, vector<1x8x128xf32>
    %750 = vector.shape_cast %749 : vector<1x8x128xf32> to vector<8x128xf32>
    %751 = vector.shape_cast %747 : vector<8x128xf32> to vector<1x8x128xf32>
    tpu.vector_store %arg5[%748, %c0_182, %c0_183], %751 {strides = array<i32>} : memref<8x8x128xf32, #tpu.memory_space<vmem>>, vector<1x8x128xf32>,
    %752 = vector.shape_cast %743 : vector<8x1xi1> to vector<8x1xi1>
    %753 = vector.broadcast %752 : vector<8x1xi1> to vector<8x128xi1>
    %754 = arith.select %753, %741, %705 : vector<8x128xi1>, vector<8x128xf32>
    %755 = vector.shape_cast %743 : vector<8x1xi1> to vector<8x1xi1>
    %756 = vector.broadcast %755 : vector<8x1xi1> to vector<8x128xi1>
    %757 = arith.select %756, %739, %708 : vector<8x128xi1>, vector<8x128xf32>
    %c7_i32_184 = arith.constant 7 : i32
    %758 = arith.index_cast %c7_i32_184 : i32 to index
    %c0_185 = arith.constant 0 : index
    %c0_186 = arith.constant 0 : index
    %759 = vector.load %arg5[%758, %c0_185, %c0_186] : memref<8x8x128xf32, #tpu.memory_space<vmem>>, vector<1x8x128xf32>
    %760 = vector.shape_cast %759 : vector<1x8x128xf32> to vector<8x128xf32>
    %cst_187 = arith.constant dense<0.000000e+00> : vector<8x512xf32>
    %761 = tpu.matmul %760, %408, %cst_187 {dimension_numbers = #tpu.dot_dimension_numbers<[1], [0], [0], [1], [0, 0, 1, 1], [], []>} : vector<8x128xf32>, vector<128x512xf32>, vector<8x512xf32> -> vector<8x512xf32>
    %cst_188 = arith.constant dense<0.000000e+00> : vector<8x512xf32>
    %762 = tpu.matmul %754, %410, %cst_188 {dimension_numbers = #tpu.dot_dimension_numbers<[1], [0], [0], [1], [0, 0, 1, 1], [], []>} : vector<8x128xf32>, vector<128x512xf32>, vector<8x512xf32> -> vector<8x512xf32>
    %763 = arith.addf %761, %762 : vector<8x512xf32>
    %764 = vector.broadcast %412 : vector<1x512xf32> to vector<8x512xf32>
    %765 = arith.addf %763, %764 : vector<8x512xf32>
    %766 = vector.extract_strided_slice %765 {offsets = [0, 0], sizes = [8, 128], strides = [1, 1]} : vector<8x512xf32> to vector<8x128xf32>
    %767 = arith.negf %766 : vector<8x128xf32>
    %768 = math.exp %767 : vector<8x128xf32>
    %cst_189 = arith.constant 1.000000e+00 : f32
    %769 = vector.broadcast %cst_189 : f32 to vector<8x128xf32>
    %770 = arith.addf %769, %768 : vector<8x128xf32>
    %771 = arith.divf %769, %770 : vector<8x128xf32>
    %772 = vector.extract_strided_slice %765 {offsets = [0, 128], sizes = [8, 128], strides = [1, 1]} : vector<8x512xf32> to vector<8x128xf32>
    %773 = arith.negf %772 : vector<8x128xf32>
    %774 = math.exp %773 : vector<8x128xf32>
    %cst_190 = arith.constant 1.000000e+00 : f32
    %775 = vector.broadcast %cst_190 : f32 to vector<8x128xf32>
    %776 = arith.addf %775, %774 : vector<8x128xf32>
    %777 = arith.divf %775, %776 : vector<8x128xf32>
    %778 = vector.extract_strided_slice %765 {offsets = [0, 256], sizes = [8, 128], strides = [1, 1]} : vector<8x512xf32> to vector<8x128xf32>
    %779 = math.tanh %778 : vector<8x128xf32>
    %780 = vector.extract_strided_slice %765 {offsets = [0, 384], sizes = [8, 128], strides = [1, 1]} : vector<8x512xf32> to vector<8x128xf32>
    %781 = arith.negf %780 : vector<8x128xf32>
    %782 = math.exp %781 : vector<8x128xf32>
    %cst_191 = arith.constant 1.000000e+00 : f32
    %783 = vector.broadcast %cst_191 : f32 to vector<8x128xf32>
    %784 = arith.addf %783, %782 : vector<8x128xf32>
    %785 = arith.divf %783, %784 : vector<8x128xf32>
    %786 = arith.mulf %777, %757 : vector<8x128xf32>
    %787 = arith.mulf %771, %779 : vector<8x128xf32>
    %788 = arith.addf %786, %787 : vector<8x128xf32>
    %789 = math.tanh %788 : vector<8x128xf32>
    %790 = arith.mulf %785, %789 : vector<8x128xf32>
    %791 = vector.broadcast %c7_i32_184 : i32 to vector<8x1xi32>
    %792 = arith.cmpi slt, %791, %0 : vector<8x1xi32>
    %cst_192 = arith.constant 0.000000e+00 : f32
    %793 = vector.shape_cast %792 : vector<8x1xi1> to vector<8x1xi1>
    %794 = vector.broadcast %793 : vector<8x1xi1> to vector<8x128xi1>
    %795 = vector.broadcast %cst_192 : f32 to vector<8x128xf32>
    %796 = arith.select %794, %790, %795 : vector<8x128xi1>, vector<8x128xf32>
    %797 = arith.index_cast %c7_i32_184 : i32 to index
    %c0_193 = arith.constant 0 : index
    %c0_194 = arith.constant 0 : index
    %798 = vector.load %arg5[%797, %c0_193, %c0_194] : memref<8x8x128xf32, #tpu.memory_space<vmem>>, vector<1x8x128xf32>
    %799 = vector.shape_cast %798 : vector<1x8x128xf32> to vector<8x128xf32>
    %800 = vector.shape_cast %796 : vector<8x128xf32> to vector<1x8x128xf32>
    tpu.vector_store %arg5[%797, %c0_193, %c0_194], %800 {strides = array<i32>} : memref<8x8x128xf32, #tpu.memory_space<vmem>>, vector<1x8x128xf32>,
    %801 = vector.shape_cast %792 : vector<8x1xi1> to vector<8x1xi1>
    %802 = vector.broadcast %801 : vector<8x1xi1> to vector<8x128xi1>
    %803 = arith.select %802, %790, %754 : vector<8x128xi1>, vector<8x128xf32>
    %804 = vector.shape_cast %792 : vector<8x1xi1> to vector<8x1xi1>
    %805 = vector.broadcast %804 : vector<8x1xi1> to vector<8x128xi1>
    %806 = arith.select %805, %788, %757 : vector<8x128xi1>, vector<8x128xf32>
    %c8_i32_195 = arith.constant 8 : i32
    %c1_196 = arith.constant 1 : index
    %c0_197 = arith.constant 0 : index
    %c0_198 = arith.constant 0 : index
    %807 = vector.load %arg6[%c1_196, %c0_197, %c0_198] : memref<2x8x128xf32, #tpu.memory_space<vmem>>, vector<1x8x128xf32>
    %808 = vector.shape_cast %807 : vector<1x8x128xf32> to vector<8x128xf32>
    %809 = vector.shape_cast %803 : vector<8x128xf32> to vector<1x8x128xf32>
    tpu.vector_store %arg6[%c1_196, %c0_197, %c0_198], %809 {strides = array<i32>} : memref<2x8x128xf32, #tpu.memory_space<vmem>>, vector<1x8x128xf32>,
    %c1_199 = arith.constant 1 : index
    %c0_200 = arith.constant 0 : index
    %c0_201 = arith.constant 0 : index
    %810 = vector.load %arg7[%c1_199, %c0_200, %c0_201] : memref<2x8x128xf32, #tpu.memory_space<vmem>>, vector<1x8x128xf32>
    %811 = vector.shape_cast %810 : vector<1x8x128xf32> to vector<8x128xf32>
    %812 = vector.shape_cast %806 : vector<8x128xf32> to vector<1x8x128xf32>
    tpu.vector_store %arg7[%c1_199, %c0_200, %c0_201], %812 {strides = array<i32>} : memref<2x8x128xf32, #tpu.memory_space<vmem>>, vector<1x8x128xf32>,
    return
  }
}

</mosaic_0001>

<llo_original>
// kernel: tpu_custom_call.1
$region0: #{tpu_custom_call.1}
  #allocation0 [shape = 'u32[]', space=smem, size = 0x4, offset = 0x4, fixed_abs, tag = 'smem constant byte address 0x4 - core index']
  #allocation1 [shape = 'u32[144,128]{1,0:T(1,128)}', space=vmem, size = 0x12000, scoped, tag = 'internal scratch']
  %s0 = inlined_call_operand.hbm [shape: f32[8,8,128], index: 0, kind: input, shape index: {}]
  %s1 = inlined_call_operand.vmem [shape: s32[8,1], index: 1, kind: input, shape index: {}]
  %s2 = inlined_call_operand.hbm [shape: f32[2,128,512], index: 2, kind: input, shape index: {}]
  %s3 = inlined_call_operand.hbm [shape: f32[2,128,512], index: 3, kind: input, shape index: {}]
  %s4 = inlined_call_operand.vmem [shape: f32[2,1,512], index: 4, kind: input, shape index: {}]
  %s5 = inlined_call_operand.hbm [shape: f32[8,8,128], index: 5, kind: output, shape index: {0}]
  %s6 = inlined_call_operand.hbm [shape: f32[2,8,128], index: 6, kind: output, shape index: {1}]
  %s7 = inlined_call_operand.hbm [shape: f32[2,8,128], index: 7, kind: output, shape index: {2}]
  %8 = xla_tuple %s5, %s6, %s7
  %s9 = sld [smem:[#allocation0]]
  $region58: #{tpu_custom_call.1} parent=0
    _
  %s11 = ssub.s32 1, %s9
  %s12 = scalar_select 0, %s11, %s9
  $region1: #{tpu_custom_call.1} parent=0
    #allocation2 [shape = 'u8[32768]{0}', space=vmem, size = 0x8000, scoped, tag = 'input window, operand 0, single buffered']
    #allocation3 [shape = 's32[1]{0}', space=sflag, size = 0x4, scoped, tag = 'scoped memory for tpu_custom_call.1']
    #allocation4 [shape = 's32[1]{0}', space=sflag, size = 0x4, scoped, tag = 'scoped memory for tpu_custom_call.1']
    #allocation5 [shape = 'u8[524288]{0}', space=vmem, size = 0x80000, scoped, tag = 'input window, operand 2, single buffered']
    #allocation6 [shape = 's32[1]{0}', space=sflag, size = 0x4, scoped, tag = 'scoped memory for tpu_custom_call.1']
    #allocation7 [shape = 'u8[524288]{0}', space=vmem, size = 0x80000, scoped, tag = 'input window, operand 3, single buffered']
    #allocation8 [shape = 'u8[32768]{0}', space=vmem, size = 0x8000, scoped, tag = 'output window, operand 0, single buffered']
    #allocation9 [shape = 'u8[8192]{0}', space=vmem, size = 0x2000, scoped, tag = 'output window, operand 1, single buffered']
    #allocation10 [shape = 's32[1]{0}', space=sflag, size = 0x4, scoped, tag = 'scoped memory for tpu_custom_call.1']
    #allocation11 [shape = 'u8[8192]{0}', space=vmem, size = 0x2000, scoped, tag = 'output window, operand 2, single buffered']
    %13 = vsyncpa [#allocation3], 0
    %14 = vsyncpa [#allocation6], 0
    %15 = vsyncpa [#allocation4], 0
    %16 = vsyncpa [#allocation10], 0
    // Predicated region
    $region2: #{tpu_custom_call.1} parent=1 // pred_check
      _
    $region3: #{tpu_custom_call.1} parent=1 // pred_check_branch
      %18 = sbr.rel (0) target = $region5
    $region4: #{tpu_custom_call.1} parent=1 // pred_region
      %s20 = ssub.s32 1024, 1024
      %21 = vsyncadd [#allocation3], %s20
      %s22 = sshll.u32 [#allocation2], 4
      %s23 = int_to_ptr.vmem [resolvable:$true] %s22
      %28 = dma.hbm_to_vmem [thread:$0]  %s0, 1024, %s23, [#allocation3], 128, 128, 8
    $region5: #{tpu_custom_call.1} parent=1 // pred_fallthru
      _
    // Predicated region
    $region6: #{tpu_custom_call.1} parent=1 // pred_check
      _
    $region7: #{tpu_custom_call.1} parent=1 // pred_check_branch
      %30 = sbr.rel (0) target = $region9
    $region8: #{tpu_custom_call.1} parent=1 // pred_region
      _
    $region9: #{tpu_custom_call.1} parent=1 // pred_fallthru
      _
    // Predicated region
    $region10: #{tpu_custom_call.1} parent=1 // pred_check
      _
    $region11: #{tpu_custom_call.1} parent=1 // pred_check_branch
      %32 = sbr.rel (0) target = $region13
    $region12: #{tpu_custom_call.1} parent=1 // pred_region
      %s34 = ssub.s32 16384, 16384
      %35 = vsyncadd [#allocation6], %s34
      %s36 = sshll.u32 [#allocation5], 4
      %s37 = int_to_ptr.vmem [resolvable:$true] %s36
      %42 = dma.hbm_to_vmem [thread:$0]  %s2, 16384, %s37, [#allocation6], 512, 512, 32
    $region13: #{tpu_custom_call.1} parent=1 // pred_fallthru
      _
    // Predicated region
    $region14: #{tpu_custom_call.1} parent=1 // pred_check
      _
    $region15: #{tpu_custom_call.1} parent=1 // pred_check_branch
      %44 = sbr.rel (0) target = $region17
    $region16: #{tpu_custom_call.1} parent=1 // pred_region
      %s46 = ssub.s32 16384, 16384
      %47 = vsyncadd [#allocation6], %s46
      %s48 = sshll.u32 [#allocation7], 4
      %s49 = int_to_ptr.vmem [resolvable:$true] %s48
      %54 = dma.hbm_to_vmem [thread:$0]  %s3, 16384, %s49, [#allocation6], 512, 512, 32
    $region17: #{tpu_custom_call.1} parent=1 // pred_fallthru
      _
    // Predicated region
    $region18: #{tpu_custom_call.1} parent=1 // pred_check
      _
    $region19: #{tpu_custom_call.1} parent=1 // pred_check_branch
      %56 = sbr.rel (0) target = $region21
    $region20: #{tpu_custom_call.1} parent=1 // pred_region
      _
    $region21: #{tpu_custom_call.1} parent=1 // pred_fallthru
      _
    // Predicated region
    $region22: #{tpu_custom_call.1} parent=1 // pred_check
      _
    $region23: #{tpu_custom_call.1} parent=1 // pred_check_branch
      %58 = sbr.rel (0) target = $region25
    $region24: #{tpu_custom_call.1} parent=1 // pred_region
      %59 = dma.done [#allocation3], 1024
    $region25: #{tpu_custom_call.1} parent=1 // pred_fallthru
      _
    // Predicated region
    $region26: #{tpu_custom_call.1} parent=1 // pred_check
      _
    $region27: #{tpu_custom_call.1} parent=1 // pred_check_branch
      %61 = sbr.rel (0) target = $region29
    $region28: #{tpu_custom_call.1} parent=1 // pred_region
      %62 = dma.done [#allocation6], 16384
    $region29: #{tpu_custom_call.1} parent=1 // pred_fallthru
      _
    // Predicated region
    $region30: #{tpu_custom_call.1} parent=1 // pred_check
      _
    $region31: #{tpu_custom_call.1} parent=1 // pred_check_branch
      %64 = sbr.rel (0) target = $region33
    $region32: #{tpu_custom_call.1} parent=1 // pred_region
      %65 = dma.done [#allocation6], 16384
    $region33: #{tpu_custom_call.1} parent=1 // pred_fallthru
      _
    %v66 = vld [vmem:[%s1] sm:$0xff]
    %v67 = vld [vmem:[#allocation5] sm:$0xff]
    %v68 = vld [vmem:[#allocation5 + $0x8] sm:$0xff]
    %v69 = vld [vmem:[#allocation5 + $0x10] sm:$0xff]
    %v70 = vld [vmem:[#allocation5 + $0x18] sm:$0xff]
    %v71 = vld [vmem:[#allocation5 + $0x20] sm:$0xff]
    %v72 = vld [vmem:[#allocation5 + $0x28] sm:$0xff]
    %v73 = vld [vmem:[#allocation5 + $0x30] sm:$0xff]
    %v74 = vld [vmem:[#allocation5 + $0x38] sm:$0xff]
    %v75 = vld [vmem:[#allocation5 + $0x40] sm:$0xff]
    %v76 = vld [vmem:[#allocation5 + $0x48] sm:$0xff]
    %v77 = vld [vmem:[#allocation5 + $0x50] sm:$0xff]
    %v78 = vld [vmem:[#allocation5 + $0x58] sm:$0xff]
    %v79 = vld [vmem:[#allocation5 + $0x60] sm:$0xff]
    %v80 = vld [vmem:[#allocation5 + $0x68] sm:$0xff]
    %v81 = vld [vmem:[#allocation5 + $0x70] sm:$0xff]
    %v82 = vld [vmem:[#allocation5 + $0x78] sm:$0xff]
    %v83 = vld [vmem:[#allocation5 + $0x80] sm:$0xff]
    %v84 = vld [vmem:[#allocation5 + $0x88] sm:$0xff]
    %v85 = vld [vmem:[#allocation5 + $0x90] sm:$0xff]
    %v86 = vld [vmem:[#allocation5 + $0x98] sm:$0xff]
    %v87 = vld [vmem:[#allocation5 + $0xa0] sm:$0xff]
    %v88 = vld [vmem:[#allocation5 + $0xa8] sm:$0xff]
    %v89 = vld [vmem:[#allocation5 + $0xb0] sm:$0xff]
    %v90 = vld [vmem:[#allocation5 + $0xb8] sm:$0xff]
    %v91 = vld [vmem:[#allocation5 + $0xc0] sm:$0xff]
    %v92 = vld [vmem:[#allocation5 + $0xc8] sm:$0xff]
    %v93 = vld [vmem:[#allocation5 + $0xd0] sm:$0xff]
    %v94 = vld [vmem:[#allocation5 + $0xd8] sm:$0xff]
    %v95 = vld [vmem:[#allocation5 + $0xe0] sm:$0xff]
    %v96 = vld [vmem:[#allocation5 + $0xe8] sm:$0xff]
    %v97 = vld [vmem:[#allocation5 + $0xf0] sm:$0xff]
    %v98 = vld [vmem:[#allocation5 + $0xf8] sm:$0xff]
    %v99 = vld [vmem:[#allocation5 + $0x100] sm:$0xff]
    %v100 = vld [vmem:[#allocation5 + $0x108] sm:$0xff]
    %v101 = vld [vmem:[#allocation5 + $0x110] sm:$0xff]
    %v102 = vld [vmem:[#allocation5 + $0x118] sm:$0xff]
    %v103 = vld [vmem:[#allocation5 + $0x120] sm:$0xff]
    %v104 = vld [vmem:[#allocation5 + $0x128] sm:$0xff]
    %v105 = vld [vmem:[#allocation5 + $0x130] sm:$0xff]
    %v106 = vld [vmem:[#allocation5 + $0x138] sm:$0xff]
    %v107 = vld [vmem:[#allocation5 + $0x140] sm:$0xff]
    %v108 = vld [vmem:[#allocation5 + $0x148] sm:$0xff]
    %v109 = vld [vmem:[#allocation5 + $0x150] sm:$0xff]
    %v110 = vld [vmem:[#allocation5 + $0x158] sm:$0xff]
    %v111 = vld [vmem:[#allocation5 + $0x160] sm:$0xff]
    %v112 = vld [vmem:[#allocation5 + $0x168] sm:$0xff]
    %v113 = vld [vmem:[#allocation5 + $0x170] sm:$0xff]
    %v114 = vld [vmem:[#allocation5 + $0x178] sm:$0xff]
    %v115 = vld [vmem:[#allocation5 + $0x180] sm:$0xff]
    %v116 = vld [vmem:[#allocation5 + $0x188] sm:$0xff]
    %v117 = vld [vmem:[#allocation5 + $0x190] sm:$0xff]
    %v118 = vld [vmem:[#allocation5 + $0x198] sm:$0xff]
    %v119 = vld [vmem:[#allocation5 + $0x1a0] sm:$0xff]
    %v120 = vld [vmem:[#allocation5 + $0x1a8] sm:$0xff]
    %v121 = vld [vmem:[#allocation5 + $0x1b0] sm:$0xff]
    %v122 = vld [vmem:[#allocation5 + $0x1b8] sm:$0xff]
    %v123 = vld [vmem:[#allocation5 + $0x1c0] sm:$0xff]
    %v124 = vld [vmem:[#allocation5 + $0x1c8] sm:$0xff]
    %v125 = vld [vmem:[#allocation5 + $0x1d0] sm:$0xff]
    %v126 = vld [vmem:[#allocation5 + $0x1d8] sm:$0xff]
    %v127 = vld [vmem:[#allocation5 + $0x1e0] sm:$0xff]
    %v128 = vld [vmem:[#allocation5 + $0x1e8] sm:$0xff]
    %v129 = vld [vmem:[#allocation5 + $0x1f0] sm:$0xff]
    %v130 = vld [vmem:[#allocation5 + $0x1f8] sm:$0xff]
    %v131 = vld [vmem:[#allocation7] sm:$0xff]
    %v132 = vld [vmem:[#allocation7 + $0x8] sm:$0xff]
    %v133 = vld [vmem:[#allocation7 + $0x10] sm:$0xff]
    %v134 = vld [vmem:[#allocation7 + $0x18] sm:$0xff]
    %v135 = vld [vmem:[#allocation7 + $0x20] sm:$0xff]
    %v136 = vld [vmem:[#allocation7 + $0x28] sm:$0xff]
    %v137 = vld [vmem:[#allocation7 + $0x30] sm:$0xff]
    %v138 = vld [vmem:[#allocation7 + $0x38] sm:$0xff]
    %v139 = vld [vmem:[#allocation7 + $0x40] sm:$0xff]
    %v140 = vld [vmem:[#allocation7 + $0x48] sm:$0xff]
    %v141 = vld [vmem:[#allocation7 + $0x50] sm:$0xff]
    %v142 = vld [vmem:[#allocation7 + $0x58] sm:$0xff]
    %v143 = vld [vmem:[#allocation7 + $0x60] sm:$0xff]
    %v144 = vld [vmem:[#allocation7 + $0x68] sm:$0xff]
    %v145 = vld [vmem:[#allocation7 + $0x70] sm:$0xff]
    %v146 = vld [vmem:[#allocation7 + $0x78] sm:$0xff]
    %v147 = vld [vmem:[#allocation7 + $0x80] sm:$0xff]
    %v148 = vld [vmem:[#allocation7 + $0x88] sm:$0xff]
    %v149 = vld [vmem:[#allocation7 + $0x90] sm:$0xff]
    %v150 = vld [vmem:[#allocation7 + $0x98] sm:$0xff]
    %v151 = vld [vmem:[#allocation7 + $0xa0] sm:$0xff]
    %v152 = vld [vmem:[#allocation7 + $0xa8] sm:$0xff]
    %v153 = vld [vmem:[#allocation7 + $0xb0] sm:$0xff]
    %v154 = vld [vmem:[#allocation7 + $0xb8] sm:$0xff]
    %v155 = vld [vmem:[#allocation7 + $0xc0] sm:$0xff]
    %v156 = vld [vmem:[#allocation7 + $0xc8] sm:$0xff]
    %v157 = vld [vmem:[#allocation7 + $0xd0] sm:$0xff]
    %v158 = vld [vmem:[#allocation7 + $0xd8] sm:$0xff]
    %v159 = vld [vmem:[#allocation7 + $0xe0] sm:$0xff]
    %v160 = vld [vmem:[#allocation7 + $0xe8] sm:$0xff]
    %v161 = vld [vmem:[#allocation7 + $0xf0] sm:$0xff]
    %v162 = vld [vmem:[#allocation7 + $0xf8] sm:$0xff]
    %v163 = vld [vmem:[#allocation7 + $0x100] sm:$0xff]
    %v164 = vld [vmem:[#allocation7 + $0x108] sm:$0xff]
    %v165 = vld [vmem:[#allocation7 + $0x110] sm:$0xff]
    %v166 = vld [vmem:[#allocation7 + $0x118] sm:$0xff]
    %v167 = vld [vmem:[#allocation7 + $0x120] sm:$0xff]
    %v168 = vld [vmem:[#allocation7 + $0x128] sm:$0xff]
    %v169 = vld [vmem:[#allocation7 + $0x130] sm:$0xff]
    %v170 = vld [vmem:[#allocation7 + $0x138] sm:$0xff]
    %v171 = vld [vmem:[#allocation7 + $0x140] sm:$0xff]
    %v172 = vld [vmem:[#allocation7 + $0x148] sm:$0xff]
    %v173 = vld [vmem:[#allocation7 + $0x150] sm:$0xff]
    %v174 = vld [vmem:[#allocation7 + $0x158] sm:$0xff]
    %v175 = vld [vmem:[#allocation7 + $0x160] sm:$0xff]
    %v176 = vld [vmem:[#allocation7 + $0x168] sm:$0xff]
    %v177 = vld [vmem:[#allocation7 + $0x170] sm:$0xff]
    %v178 = vld [vmem:[#allocation7 + $0x178] sm:$0xff]
    %v179 = vld [vmem:[#allocation7 + $0x180] sm:$0xff]
    %v180 = vld [vmem:[#allocation7 + $0x188] sm:$0xff]
    %v181 = vld [vmem:[#allocation7 + $0x190] sm:$0xff]
    %v182 = vld [vmem:[#allocation7 + $0x198] sm:$0xff]
    %v183 = vld [vmem:[#allocation7 + $0x1a0] sm:$0xff]
    %v184 = vld [vmem:[#allocation7 + $0x1a8] sm:$0xff]
    %v185 = vld [vmem:[#allocation7 + $0x1b0] sm:$0xff]
    %v186 = vld [vmem:[#allocation7 + $0x1b8] sm:$0xff]
    %v187 = vld [vmem:[#allocation7 + $0x1c0] sm:$0xff]
    %v188 = vld [vmem:[#allocation7 + $0x1c8] sm:$0xff]
    %v189 = vld [vmem:[#allocation7 + $0x1d0] sm:$0xff]
    %v190 = vld [vmem:[#allocation7 + $0x1d8] sm:$0xff]
    %v191 = vld [vmem:[#allocation7 + $0x1e0] sm:$0xff]
    %v192 = vld [vmem:[#allocation7 + $0x1e8] sm:$0xff]
    %v193 = vld [vmem:[#allocation7 + $0x1f0] sm:$0xff]
    %v194 = vld [vmem:[#allocation7 + $0x1f8] sm:$0xff]
    %v195 = vld [vmem:[%s4] sm:$0xf]
    %v196 = vld [vmem:[#allocation2] sm:$0xff]
    %197 = vmatprep.subr.mxu0 %v132
    %198 = vmatpush1.msra.mxu0 %v131
    %199 = vmatprep.subr.mxu0 %v136
    %200 = vmatpush1.msra.mxu0 %v135
    %201 = vmatprep.subr.mxu0 %v140
    %202 = vmatpush1.msra.mxu0 %v139
    %203 = vmatprep.subr.mxu0 %v144
    %204 = vmatpush1.msra.mxu0 %v143
    %205 = vmatprep.subr.mxu0 %v148
    %206 = vmatpush1.msra.mxu0 %v147
    %207 = vmatprep.subr.mxu0 %v152
    %208 = vmatpush1.msra.mxu0 %v151
    %209 = vmatprep.subr.mxu0 %v156
    %210 = vmatpush1.msra.mxu0 %v155
    %211 = vmatprep.subr.mxu0 %v160
    %212 = vmatpush1.msra.mxu0 %v159
    %213 = vmatprep.subr.mxu0 %v164
    %214 = vmatpush1.msra.mxu0 %v163
    %215 = vmatprep.subr.mxu0 %v168
    %216 = vmatpush1.msra.mxu0 %v167
    %217 = vmatprep.subr.mxu0 %v172
    %218 = vmatpush1.msra.mxu0 %v171
    %219 = vmatprep.subr.mxu0 %v176
    %220 = vmatpush1.msra.mxu0 %v175
    %221 = vmatprep.subr.mxu0 %v180
    %222 = vmatpush1.msra.mxu0 %v179
    %223 = vmatprep.subr.mxu0 %v184
    %224 = vmatpush1.msra.mxu0 %v183
    %225 = vmatprep.subr.mxu0 %v188
    %226 = vmatpush1.msra.mxu0 %v187
    %227 = vmatprep.subr.mxu0 %v192
    %228 = vmatpush1.msra.mxu0 %v191
    %229 = vmatprep.subr.mxu0 0.0
    %230 = vmatpush1.msra.mxu0 0.0
    %231 = vmatprep.subr.mxu0 0.0
    %232 = vmatpush1.msra.mxu0 0.0
    %233 = vmatprep.subr.mxu0 0.0
    %234 = vmatpush1.msra.mxu0 0.0
    %235 = vmatprep.subr.mxu0 0.0
    %236 = vmatpush1.msra.mxu0 0.0
    %237 = vmatprep.subr.mxu0 0.0
    %238 = vmatpush1.msra.mxu0 0.0
    %239 = vmatprep.subr.mxu0 0.0
    %240 = vmatpush1.msra.mxu0 0.0
    %241 = vmatprep.subr.mxu0 0.0
    %242 = vmatpush1.msra.mxu0 0.0
    %243 = vmatprep.subr.mxu0 0.0
    %244 = vmatpush1.msra.mxu0 0.0
    %245 = vmatprep.subr.mxu0 0.0
    %246 = vmatpush1.msra.mxu0 0.0
    %247 = vmatprep.subr.mxu0 0.0
    %248 = vmatpush1.msra.mxu0 0.0
    %249 = vmatprep.subr.mxu0 0.0
    %250 = vmatpush1.msra.mxu0 0.0
    %251 = vmatprep.subr.mxu0 0.0
    %252 = vmatpush1.msra.mxu0 0.0
    %253 = vmatprep.subr.mxu0 0.0
    %254 = vmatpush1.msra.mxu0 0.0
    %255 = vmatprep.subr.mxu0 0.0
    %256 = vmatpush1.msra.mxu0 0.0
    %257 = vmatprep.subr.mxu0 0.0
    %258 = vmatpush1.msra.mxu0 0.0
    %259 = vmatprep.subr.mxu0 0.0
    %260 = vmatpush1.msra.mxu0 0.0
    %261 = vmatprep.mubr.f32.mxu0 0.0
    %262 = vmatmul.mubr.f32.gmra.mrb[0].mxu0 0.0
    %v263 = vpop.f32.mrb[0].mxu0
    %v264 = vadd.f32 0.0, %v263
    %v265 = vpop.f32.mrb[0].mxu0
    %v266 = vadd.f32 0.0, %v265
    %267 = vdwg.mxu0
    %268 = vmatprep.subr.mxu0 %v134
    %269 = vmatpush1.msra.mxu0 %v133
    %270 = vmatprep.subr.mxu0 %v138
    %271 = vmatpush1.msra.mxu0 %v137
    %272 = vmatprep.subr.mxu0 %v142
    %273 = vmatpush1.msra.mxu0 %v141
    %274 = vmatprep.subr.mxu0 %v146
    %275 = vmatpush1.msra.mxu0 %v145
    %276 = vmatprep.subr.mxu0 %v150
    %277 = vmatpush1.msra.mxu0 %v149
    %278 = vmatprep.subr.mxu0 %v154
    %279 = vmatpush1.msra.mxu0 %v153
    %280 = vmatprep.subr.mxu0 %v158
    %281 = vmatpush1.msra.mxu0 %v157
    %282 = vmatprep.subr.mxu0 %v162
    %283 = vmatpush1.msra.mxu0 %v161
    %284 = vmatprep.subr.mxu0 %v166
    %285 = vmatpush1.msra.mxu0 %v165
    %286 = vmatprep.subr.mxu0 %v170
    %287 = vmatpush1.msra.mxu0 %v169
    %288 = vmatprep.subr.mxu0 %v174
    %289 = vmatpush1.msra.mxu0 %v173
    %290 = vmatprep.subr.mxu0 %v178
    %291 = vmatpush1.msra.mxu0 %v177
    %292 = vmatprep.subr.mxu0 %v182
    %293 = vmatpush1.msra.mxu0 %v181
    %294 = vmatprep.subr.mxu0 %v186
    %295 = vmatpush1.msra.mxu0 %v185
    %296 = vmatprep.subr.mxu0 %v190
    %297 = vmatpush1.msra.mxu0 %v189
    %298 = vmatprep.subr.mxu0 %v194
    %299 = vmatpush1.msra.mxu0 %v193
    %300 = vmatprep.subr.mxu0 0.0
    %301 = vmatpush1.msra.mxu0 0.0
    %302 = vmatprep.subr.mxu0 0.0
    %303 = vmatpush1.msra.mxu0 0.0
    %304 = vmatprep.subr.mxu0 0.0
    %305 = vmatpush1.msra.mxu0 0.0
    %306 = vmatprep.subr.mxu0 0.0
    %307 = vmatpush1.msra.mxu0 0.0
    %308 = vmatprep.subr.mxu0 0.0
    %309 = vmatpush1.msra.mxu0 0.0
    %310 = vmatprep.subr.mxu0 0.0
    %311 = vmatpush1.msra.mxu0 0.0
    %312 = vmatprep.subr.mxu0 0.0
    %313 = vmatpush1.msra.mxu0 0.0
    %314 = vmatprep.subr.mxu0 0.0
    %315 = vmatpush1.msra.mxu0 0.0
    %316 = vmatprep.subr.mxu0 0.0
    %317 = vmatpush1.msra.mxu0 0.0
    %318 = vmatprep.subr.mxu0 0.0
    %319 = vmatpush1.msra.mxu0 0.0
    %320 = vmatprep.subr.mxu0 0.0
    %321 = vmatpush1.msra.mxu0 0.0
    %322 = vmatprep.subr.mxu0 0.0
    %323 = vmatpush1.msra.mxu0 0.0
    %324 = vmatprep.subr.mxu0 0.0
    %325 = vmatpush1.msra.mxu0 0.0
    %326 = vmatprep.subr.mxu0 0.0
    %327 = vmatpush1.msra.mxu0 0.0
    %328 = vmatprep.subr.mxu0 0.0
    %329 = vmatpush1.msra.mxu0 0.0
    %330 = vmatprep.subr.mxu0 0.0
    %331 = vmatpush1.msra.mxu0 0.0
    %332 = vmatprep.mubr.f32.mxu0 0.0
    %333 = vmatmul.mubr.f32.gmra.mrb[0].mxu0 0.0
    %v334 = vpop.f32.mrb[0].mxu0
    %v335 = vadd.f32 0.0, %v334
    %v336 = vpop.f32.mrb[0].mxu0
    %v337 = vadd.f32 0.0, %v336
    %338 = vdwg.mxu0
    %339 = vmatprep.subr.mxu0 %v68
    %340 = vmatpush1.msra.mxu0 %v67
    %341 = vmatprep.subr.mxu0 %v72
    %342 = vmatpush1.msra.mxu0 %v71
    %343 = vmatprep.subr.mxu0 %v76
    %344 = vmatpush1.msra.mxu0 %v75
    %345 = vmatprep.subr.mxu0 %v80
    %346 = vmatpush1.msra.mxu0 %v79
    %347 = vmatprep.subr.mxu0 %v84
    %348 = vmatpush1.msra.mxu0 %v83
    %349 = vmatprep.subr.mxu0 %v88
    %350 = vmatpush1.msra.mxu0 %v87
    %351 = vmatprep.subr.mxu0 %v92
    %352 = vmatpush1.msra.mxu0 %v91
    %353 = vmatprep.subr.mxu0 %v96
    %354 = vmatpush1.msra.mxu0 %v95
    %355 = vmatprep.subr.mxu0 %v100
    %356 = vmatpush1.msra.mxu0 %v99
    %357 = vmatprep.subr.mxu0 %v104
    %358 = vmatpush1.msra.mxu0 %v103
    %359 = vmatprep.subr.mxu0 %v108
    %360 = vmatpush1.msra.mxu0 %v107
    %361 = vmatprep.subr.mxu0 %v112
    %362 = vmatpush1.msra.mxu0 %v111
    %363 = vmatprep.subr.mxu0 %v116
    %364 = vmatpush1.msra.mxu0 %v115
    %365 = vmatprep.subr.mxu0 %v120
    %366 = vmatpush1.msra.mxu0 %v119
    %367 = vmatprep.subr.mxu0 %v124
    %368 = vmatpush1.msra.mxu0 %v123
    %369 = vmatprep.subr.mxu0 %v128
    %370 = vmatpush1.msra.mxu0 %v127
    %371 = vmatprep.subr.mxu0 0.0
    %372 = vmatpush1.msra.mxu0 0.0
    %373 = vmatprep.subr.mxu0 0.0
    %374 = vmatpush1.msra.mxu0 0.0
    %375 = vmatprep.subr.mxu0 0.0
    %376 = vmatpush1.msra.mxu0 0.0
    %377 = vmatprep.subr.mxu0 0.0
    %378 = vmatpush1.msra.mxu0 0.0
    %379 = vmatprep.subr.mxu0 0.0
    %380 = vmatpush1.msra.mxu0 0.0
    %381 = vmatprep.subr.mxu0 0.0
    %382 = vmatpush1.msra.mxu0 0.0
    %383 = vmatprep.subr.mxu0 0.0
    %384 = vmatpush1.msra.mxu0 0.0
    %385 = vmatprep.subr.mxu0 0.0
    %386 = vmatpush1.msra.mxu0 0.0
    %387 = vmatprep.subr.mxu0 0.0
    %388 = vmatpush1.msra.mxu0 0.0
    %389 = vmatprep.subr.mxu0 0.0
    %390 = vmatpush1.msra.mxu0 0.0
    %391 = vmatprep.subr.mxu0 0.0
    %392 = vmatpush1.msra.mxu0 0.0
    %393 = vmatprep.subr.mxu0 0.0
    %394 = vmatpush1.msra.mxu0 0.0
    %395 = vmatprep.subr.mxu0 0.0
    %396 = vmatpush1.msra.mxu0 0.0
    %397 = vmatprep.subr.mxu0 0.0
    %398 = vmatpush1.msra.mxu0 0.0
    %399 = vmatprep.subr.mxu0 0.0
    %400 = vmatpush1.msra.mxu0 0.0
    %401 = vmatprep.subr.mxu0 0.0
    %402 = vmatpush1.msra.mxu0 0.0
    %403 = vmatprep.mubr.f32.mxu0 0.0
    %404 = vmatmul.mubr.f32.gmra.mrb[0].mxu0 %v196
    %v405 = vpop.f32.mrb[0].mxu0
    %v406 = vadd.f32 %v264, %v405
    %v407 = vpop.f32.mrb[0].mxu0
    %v408 = vadd.f32 %v266, %v407
    %409 = vdwg.mxu0
    %410 = vmatprep.subr.mxu0 %v70
    %411 = vmatpush1.msra.mxu0 %v69
    %412 = vmatprep.subr.mxu0 %v74
    %413 = vmatpush1.msra.mxu0 %v73
    %414 = vmatprep.subr.mxu0 %v78
    %415 = vmatpush1.msra.mxu0 %v77
    %416 = vmatprep.subr.mxu0 %v82
    %417 = vmatpush1.msra.mxu0 %v81
    %418 = vmatprep.subr.mxu0 %v86
    %419 = vmatpush1.msra.mxu0 %v85
    %420 = vmatprep.subr.mxu0 %v90
    %421 = vmatpush1.msra.mxu0 %v89
    %422 = vmatprep.subr.mxu0 %v94
    %423 = vmatpush1.msra.mxu0 %v93
    %424 = vmatprep.subr.mxu0 %v98
    %425 = vmatpush1.msra.mxu0 %v97
    %426 = vmatprep.subr.mxu0 %v102
    %427 = vmatpush1.msra.mxu0 %v101
    %428 = vmatprep.subr.mxu0 %v106
    %429 = vmatpush1.msra.mxu0 %v105
    %430 = vmatprep.subr.mxu0 %v110
    %431 = vmatpush1.msra.mxu0 %v109
    %432 = vmatprep.subr.mxu0 %v114
    %433 = vmatpush1.msra.mxu0 %v113
    %434 = vmatprep.subr.mxu0 %v118
    %435 = vmatpush1.msra.mxu0 %v117
    %436 = vmatprep.subr.mxu0 %v122
    %437 = vmatpush1.msra.mxu0 %v121
    %438 = vmatprep.subr.mxu0 %v126
    %439 = vmatpush1.msra.mxu0 %v125
    %440 = vmatprep.subr.mxu0 %v130
    %441 = vmatpush1.msra.mxu0 %v129
    %442 = vmatprep.subr.mxu0 0.0
    %443 = vmatpush1.msra.mxu0 0.0
    %444 = vmatprep.subr.mxu0 0.0
    %445 = vmatpush1.msra.mxu0 0.0
    %446 = vmatprep.subr.mxu0 0.0
    %447 = vmatpush1.msra.mxu0 0.0
    %448 = vmatprep.subr.mxu0 0.0
    %449 = vmatpush1.msra.mxu0 0.0
    %450 = vmatprep.subr.mxu0 0.0
    %451 = vmatpush1.msra.mxu0 0.0
    %452 = vmatprep.subr.mxu0 0.0
    %453 = vmatpush1.msra.mxu0 0.0
    %454 = vmatprep.subr.mxu0 0.0
    %455 = vmatpush1.msra.mxu0 0.0
    %456 = vmatprep.subr.mxu0 0.0
    %457 = vmatpush1.msra.mxu0 0.0
    %458 = vmatprep.subr.mxu0 0.0
    %459 = vmatpush1.msra.mxu0 0.0
    %460 = vmatprep.subr.mxu0 0.0
    %461 = vmatpush1.msra.mxu0 0.0
    %462 = vmatprep.subr.mxu0 0.0
    %463 = vmatpush1.msra.mxu0 0.0
    %464 = vmatprep.subr.mxu0 0.0
    %465 = vmatpush1.msra.mxu0 0.0
    %466 = vmatprep.subr.mxu0 0.0
    %467 = vmatpush1.msra.mxu0 0.0
    %468 = vmatprep.subr.mxu0 0.0
    %469 = vmatpush1.msra.mxu0 0.0
    %470 = vmatprep.subr.mxu0 0.0
    %471 = vmatpush1.msra.mxu0 0.0
    %472 = vmatprep.subr.mxu0 0.0
    %473 = vmatpush1.msra.mxu0 0.0
    %474 = vmatprep.mubr.f32.mxu0 0.0
    %475 = vmatmul.mubr.f32.gmra.mrb[0].mxu0 %v196
    %v476 = vpop.f32.mrb[0].mxu0
    %v477 = vadd.f32 %v335, %v476
    %v478 = vpop.f32.mrb[0].mxu0
    %v479 = vadd.f32 %v337, %v478
    %480 = vdwg.mxu0
    %v482 = vlaneseq
    %v483 = vshrl.u32 %v482, 7
    %v484 = vsub.s32 0, %v483
    %v485 = vrot.slane %v195, %v484
    %v486 = vlaneseq
    %v487 = vshrl.u32 %v486, 7
    %v488 = vsub.s32 1, %v487
    %v489 = vrot.slane %v195, %v488
    %v490 = vlaneseq
    %v491 = vshrl.u32 %v490, 7
    %v492 = vsub.s32 2, %v491
    %v493 = vrot.slane %v195, %v492
    %v494 = vlaneseq
    %v495 = vshrl.u32 %v494, 7
    %v496 = vsub.s32 3, %v495
    %v497 = vrot.slane %v195, %v496
    %v502 = vadd.f32 %v406, %v485
    %v503 = vadd.f32 %v408, %v489
    %v504 = vadd.f32 %v477, %v493
    %v505 = vadd.f32 %v479, %v497
    %v506 = vxor.u32 %v502, 2147483648
    %v507 = vmul.f32 %v506, 1.442695
    %v508 = vpow.pop %v507
    %v509 = vadd.f32 %v508, 1.0
    %v510 = vrcp.pop %v509
    %v511 = vmul.f32 1.0, %v510
    %v512 = vxor.u32 %v503, 2147483648
    %v513 = vmul.f32 %v512, 1.442695
    %v514 = vpow.pop %v513
    %v515 = vadd.f32 %v514, 1.0
    %v516 = vrcp.pop %v515
    %v517 = vmul.f32 1.0, %v516
    %v518 = vtanh.pop %v504
    %v519 = vxor.u32 %v505, 2147483648
    %v520 = vmul.f32 %v519, 1.442695
    %v521 = vpow.pop %v520
    %v522 = vadd.f32 %v521, 1.0
    %v523 = vrcp.pop %v522
    %v524 = vmul.f32 1.0, %v523
    %v525 = vmul.f32 %v517, 0.0
    %v526 = vmul.f32 %v511, %v518
    %v527 = vadd.f32 %v525, %v526
    %v528 = vtanh.pop %v527
    %v529 = vmul.f32 %v524, %v528
    %vm530 = vcmp.gt.s32.totalorder %v66, 0
    %v531 = vsel %vm530, 1, 0
    %532 = vset.pattern.permute.xlu0 0
    %533 = vperm.xlu0 %532, %v531
    %v534 = vpop.permute.xlu0 %533
    %vm535 = vcmp.eq.s32.totalorder %v534, 1
    %v536 = vsel %vm535, %v529, 0.0
    %537 = vst [vmem:[#allocation8] sm:$0xff] %v536
    %v538 = vsel %vm535, %v527, 0.0
    %s539 = scalar_lea.vmem [#allocation2], 8
    %v540 = vld [vmem:[%s539] sm:$0xff]
    %541 = vmatprep.subr.mxu0 %v132
    %542 = vmatpush1.msra.mxu0 %v131
    %543 = vmatprep.subr.mxu0 %v136
    %544 = vmatpush1.msra.mxu0 %v135
    %545 = vmatprep.subr.mxu0 %v140
    %546 = vmatpush1.msra.mxu0 %v139
    %547 = vmatprep.subr.mxu0 %v144
    %548 = vmatpush1.msra.mxu0 %v143
    %549 = vmatprep.subr.mxu0 %v148
    %550 = vmatpush1.msra.mxu0 %v147
    %551 = vmatprep.subr.mxu0 %v152
    %552 = vmatpush1.msra.mxu0 %v151
    %553 = vmatprep.subr.mxu0 %v156
    %554 = vmatpush1.msra.mxu0 %v155
    %555 = vmatprep.subr.mxu0 %v160
    %556 = vmatpush1.msra.mxu0 %v159
    %557 = vmatprep.subr.mxu0 %v164
    %558 = vmatpush1.msra.mxu0 %v163
    %559 = vmatprep.subr.mxu0 %v168
    %560 = vmatpush1.msra.mxu0 %v167
    %561 = vmatprep.subr.mxu0 %v172
    %562 = vmatpush1.msra.mxu0 %v171
    %563 = vmatprep.subr.mxu0 %v176
    %564 = vmatpush1.msra.mxu0 %v175
    %565 = vmatprep.subr.mxu0 %v180
    %566 = vmatpush1.msra.mxu0 %v179
    %567 = vmatprep.subr.mxu0 %v184
    %568 = vmatpush1.msra.mxu0 %v183
    %569 = vmatprep.subr.mxu0 %v188
    %570 = vmatpush1.msra.mxu0 %v187
    %571 = vmatprep.subr.mxu0 %v192
    %572 = vmatpush1.msra.mxu0 %v191
    %573 = vmatprep.subr.mxu0 0.0
    %574 = vmatpush1.msra.mxu0 0.0
    %575 = vmatprep.subr.mxu0 0.0
    %576 = vmatpush1.msra.mxu0 0.0
    %577 = vmatprep.subr.mxu0 0.0
    %578 = vmatpush1.msra.mxu0 0.0
    %579 = vmatprep.subr.mxu0 0.0
    %580 = vmatpush1.msra.mxu0 0.0
    %581 = vmatprep.subr.mxu0 0.0
    %582 = vmatpush1.msra.mxu0 0.0
    %583 = vmatprep.subr.mxu0 0.0
    %584 = vmatpush1.msra.mxu0 0.0
    %585 = vmatprep.subr.mxu0 0.0
    %586 = vmatpush1.msra.mxu0 0.0
    %587 = vmatprep.subr.mxu0 0.0
    %588 = vmatpush1.msra.mxu0 0.0
    %589 = vmatprep.subr.mxu0 0.0
    %590 = vmatpush1.msra.mxu0 0.0
    %591 = vmatprep.subr.mxu0 0.0
    %592 = vmatpush1.msra.mxu0 0.0
    %593 = vmatprep.subr.mxu0 0.0
    %594 = vmatpush1.msra.mxu0 0.0
    %595 = vmatprep.subr.mxu0 0.0
    %596 = vmatpush1.msra.mxu0 0.0
    %597 = vmatprep.subr.mxu0 0.0
    %598 = vmatpush1.msra.mxu0 0.0
    %599 = vmatprep.subr.mxu0 0.0
    %600 = vmatpush1.msra.mxu0 0.0
    %601 = vmatprep.subr.mxu0 0.0
    %602 = vmatpush1.msra.mxu0 0.0
    %603 = vmatprep.subr.mxu0 0.0
    %604 = vmatpush1.msra.mxu0 0.0
    %605 = vmatprep.mubr.f32.mxu0 0.0
    %606 = vmatmul.mubr.f32.gmra.mrb[0].mxu0 %v536
    %v607 = vpop.f32.mrb[0].mxu0
    %v608 = vadd.f32 0.0, %v607
    %v609 = vpop.f32.mrb[0].mxu0
    %v610 = vadd.f32 0.0, %v609
    %611 = vdwg.mxu0
    %612 = vmatprep.subr.mxu0 %v134
    %613 = vmatpush1.msra.mxu0 %v133
    %614 = vmatprep.subr.mxu0 %v138
    %615 = vmatpush1.msra.mxu0 %v137
    %616 = vmatprep.subr.mxu0 %v142
    %617 = vmatpush1.msra.mxu0 %v141
    %618 = vmatprep.subr.mxu0 %v146
    %619 = vmatpush1.msra.mxu0 %v145
    %620 = vmatprep.subr.mxu0 %v150
    %621 = vmatpush1.msra.mxu0 %v149
    %622 = vmatprep.subr.mxu0 %v154
    %623 = vmatpush1.msra.mxu0 %v153
    %624 = vmatprep.subr.mxu0 %v158
    %625 = vmatpush1.msra.mxu0 %v157
    %626 = vmatprep.subr.mxu0 %v162
    %627 = vmatpush1.msra.mxu0 %v161
    %628 = vmatprep.subr.mxu0 %v166
    %629 = vmatpush1.msra.mxu0 %v165
    %630 = vmatprep.subr.mxu0 %v170
    %631 = vmatpush1.msra.mxu0 %v169
    %632 = vmatprep.subr.mxu0 %v174
    %633 = vmatpush1.msra.mxu0 %v173
    %634 = vmatprep.subr.mxu0 %v178
    %635 = vmatpush1.msra.mxu0 %v177
    %636 = vmatprep.subr.mxu0 %v182
    %637 = vmatpush1.msra.mxu0 %v181
    %638 = vmatprep.subr.mxu0 %v186
    %639 = vmatpush1.msra.mxu0 %v185
    %640 = vmatprep.subr.mxu0 %v190
    %641 = vmatpush1.msra.mxu0 %v189
    %642 = vmatprep.subr.mxu0 %v194
    %643 = vmatpush1.msra.mxu0 %v193
    %644 = vmatprep.subr.mxu0 0.0
    %645 = vmatpush1.msra.mxu0 0.0
    %646 = vmatprep.subr.mxu0 0.0
    %647 = vmatpush1.msra.mxu0 0.0
    %648 = vmatprep.subr.mxu0 0.0
    %649 = vmatpush1.msra.mxu0 0.0
    %650 = vmatprep.subr.mxu0 0.0
    %651 = vmatpush1.msra.mxu0 0.0
    %652 = vmatprep.subr.mxu0 0.0
    %653 = vmatpush1.msra.mxu0 0.0
    %654 = vmatprep.subr.mxu0 0.0
    %655 = vmatpush1.msra.mxu0 0.0
    %656 = vmatprep.subr.mxu0 0.0
    %657 = vmatpush1.msra.mxu0 0.0
    %658 = vmatprep.subr.mxu0 0.0
    %659 = vmatpush1.msra.mxu0 0.0
    %660 = vmatprep.subr.mxu0 0.0
    %661 = vmatpush1.msra.mxu0 0.0
    %662 = vmatprep.subr.mxu0 0.0
    %663 = vmatpush1.msra.mxu0 0.0
    %664 = vmatprep.subr.mxu0 0.0
    %665 = vmatpush1.msra.mxu0 0.0
    %666 = vmatprep.subr.mxu0 0.0
    %667 = vmatpush1.msra.mxu0 0.0
    %668 = vmatprep.subr.mxu0 0.0
    %669 = vmatpush1.msra.mxu0 0.0
    %670 = vmatprep.subr.mxu0 0.0
    %671 = vmatpush1.msra.mxu0 0.0
    %672 = vmatprep.subr.mxu0 0.0
    %673 = vmatpush1.msra.mxu0 0.0
    %674 = vmatprep.subr.mxu0 0.0
    %675 = vmatpush1.msra.mxu0 0.0
    %676 = vmatprep.mubr.f32.mxu0 0.0
    %677 = vmatmul.mubr.f32.gmra.mrb[0].mxu0 %v536
    %v678 = vpop.f32.mrb[0].mxu0
    %v679 = vadd.f32 0.0, %v678
    %v680 = vpop.f32.mrb[0].mxu0
    %v681 = vadd.f32 0.0, %v680
    %682 = vdwg.mxu0
    %683 = vmatprep.subr.mxu0 %v68
    %684 = vmatpush1.msra.mxu0 %v67
    %685 = vmatprep.subr.mxu0 %v72
    %686 = vmatpush1.msra.mxu0 %v71
    %687 = vmatprep.subr.mxu0 %v76
    %688 = vmatpush1.msra.mxu0 %v75
    %689 = vmatprep.subr.mxu0 %v80
    %690 = vmatpush1.msra.mxu0 %v79
    %691 = vmatprep.subr.mxu0 %v84
    %692 = vmatpush1.msra.mxu0 %v83
    %693 = vmatprep.subr.mxu0 %v88
    %694 = vmatpush1.msra.mxu0 %v87
    %695 = vmatprep.subr.mxu0 %v92
    %696 = vmatpush1.msra.mxu0 %v91
    %697 = vmatprep.subr.mxu0 %v96
    %698 = vmatpush1.msra.mxu0 %v95
    %699 = vmatprep.subr.mxu0 %v100
    %700 = vmatpush1.msra.mxu0 %v99
    %701 = vmatprep.subr.mxu0 %v104
    %702 = vmatpush1.msra.mxu0 %v103
    %703 = vmatprep.subr.mxu0 %v108
    %704 = vmatpush1.msra.mxu0 %v107
    %705 = vmatprep.subr.mxu0 %v112
    %706 = vmatpush1.msra.mxu0 %v111
    %707 = vmatprep.subr.mxu0 %v116
    %708 = vmatpush1.msra.mxu0 %v115
    %709 = vmatprep.subr.mxu0 %v120
    %710 = vmatpush1.msra.mxu0 %v119
    %711 = vmatprep.subr.mxu0 %v124
    %712 = vmatpush1.msra.mxu0 %v123
    %713 = vmatprep.subr.mxu0 %v128
    %714 = vmatpush1.msra.mxu0 %v127
    %715 = vmatprep.subr.mxu0 0.0
    %716 = vmatpush1.msra.mxu0 0.0
    %717 = vmatprep.subr.mxu0 0.0
    %718 = vmatpush1.msra.mxu0 0.0
    %719 = vmatprep.subr.mxu0 0.0
    %720 = vmatpush1.msra.mxu0 0.0
    %721 = vmatprep.subr.mxu0 0.0
    %722 = vmatpush1.msra.mxu0 0.0
    %723 = vmatprep.subr.mxu0 0.0
    %724 = vmatpush1.msra.mxu0 0.0
    %725 = vmatprep.subr.mxu0 0.0
    %726 = vmatpush1.msra.mxu0 0.0
    %727 = vmatprep.subr.mxu0 0.0
    %728 = vmatpush1.msra.mxu0 0.0
    %729 = vmatprep.subr.mxu0 0.0
    %730 = vmatpush1.msra.mxu0 0.0
    %731 = vmatprep.subr.mxu0 0.0
    %732 = vmatpush1.msra.mxu0 0.0
    %733 = vmatprep.subr.mxu0 0.0
    %734 = vmatpush1.msra.mxu0 0.0
    %735 = vmatprep.subr.mxu0 0.0
    %736 = vmatpush1.msra.mxu0 0.0
    %737 = vmatprep.subr.mxu0 0.0
    %738 = vmatpush1.msra.mxu0 0.0
    %739 = vmatprep.subr.mxu0 0.0
    %740 = vmatpush1.msra.mxu0 0.0
    %741 = vmatprep.subr.mxu0 0.0
    %742 = vmatpush1.msra.mxu0 0.0
    %743 = vmatprep.subr.mxu0 0.0
    %744 = vmatpush1.msra.mxu0 0.0
    %745 = vmatprep.subr.mxu0 0.0
    %746 = vmatpush1.msra.mxu0 0.0
    %747 = vmatprep.mubr.f32.mxu0 0.0
    %748 = vmatmul.mubr.f32.gmra.mrb[0].mxu0 %v540
    %v749 = vpop.f32.mrb[0].mxu0
    %v750 = vadd.f32 %v608, %v749
    %v751 = vpop.f32.mrb[0].mxu0
    %v752 = vadd.f32 %v610, %v751
    %753 = vdwg.mxu0
    %754 = vmatprep.subr.mxu0 %v70
    %755 = vmatpush1.msra.mxu0 %v69
    %756 = vmatprep.subr.mxu0 %v74
    %757 = vmatpush1.msra.mxu0 %v73
    %758 = vmatprep.subr.mxu0 %v78
    %759 = vmatpush1.msra.mxu0 %v77
    %760 = vmatprep.subr.mxu0 %v82
    %761 = vmatpush1.msra.mxu0 %v81
    %762 = vmatprep.subr.mxu0 %v86
    %763 = vmatpush1.msra.mxu0 %v85
    %764 = vmatprep.subr.mxu0 %v90
    %765 = vmatpush1.msra.mxu0 %v89
    %766 = vmatprep.subr.mxu0 %v94
    %767 = vmatpush1.msra.mxu0 %v93
    %768 = vmatprep.subr.mxu0 %v98
    %769 = vmatpush1.msra.mxu0 %v97
    %770 = vmatprep.subr.mxu0 %v102
    %771 = vmatpush1.msra.mxu0 %v101
    %772 = vmatprep.subr.mxu0 %v106
    %773 = vmatpush1.msra.mxu0 %v105
    %774 = vmatprep.subr.mxu0 %v110
    %775 = vmatpush1.msra.mxu0 %v109
    %776 = vmatprep.subr.mxu0 %v114
    %777 = vmatpush1.msra.mxu0 %v113
    %778 = vmatprep.subr.mxu0 %v118
    %779 = vmatpush1.msra.mxu0 %v117
    %780 = vmatprep.subr.mxu0 %v122
    %781 = vmatpush1.msra.mxu0 %v121
    %782 = vmatprep.subr.mxu0 %v126
    %783 = vmatpush1.msra.mxu0 %v125
    %784 = vmatprep.subr.mxu0 %v130
    %785 = vmatpush1.msra.mxu0 %v129
    %786 = vmatprep.subr.mxu0 0.0
    %787 = vmatpush1.msra.mxu0 0.0
    %788 = vmatprep.subr.mxu0 0.0
    %789 = vmatpush1.msra.mxu0 0.0
    %790 = vmatprep.subr.mxu0 0.0
    %791 = vmatpush1.msra.mxu0 0.0
    %792 = vmatprep.subr.mxu0 0.0
    %793 = vmatpush1.msra.mxu0 0.0
    %794 = vmatprep.subr.mxu0 0.0
    %795 = vmatpush1.msra.mxu0 0.0
    %796 = vmatprep.subr.mxu0 0.0
    %797 = vmatpush1.msra.mxu0 0.0
    %798 = vmatprep.subr.mxu0 0.0
    %799 = vmatpush1.msra.mxu0 0.0
    %800 = vmatprep.subr.mxu0 0.0
    %801 = vmatpush1.msra.mxu0 0.0
    %802 = vmatprep.subr.mxu0 0.0
    %803 = vmatpush1.msra.mxu0 0.0
    %804 = vmatprep.subr.mxu0 0.0
    %805 = vmatpush1.msra.mxu0 0.0
    %806 = vmatprep.subr.mxu0 0.0
    %807 = vmatpush1.msra.mxu0 0.0
    %808 = vmatprep.subr.mxu0 0.0
    %809 = vmatpush1.msra.mxu0 0.0
    %810 = vmatprep.subr.mxu0 0.0
    %811 = vmatpush1.msra.mxu0 0.0
    %812 = vmatprep.subr.mxu0 0.0
    %813 = vmatpush1.msra.mxu0 0.0
    %814 = vmatprep.subr.mxu0 0.0
    %815 = vmatpush1.msra.mxu0 0.0
    %816 = vmatprep.subr.mxu0 0.0
    %817 = vmatpush1.msra.mxu0 0.0
    %818 = vmatprep.mubr.f32.mxu0 0.0
    %819 = vmatmul.mubr.f32.gmra.mrb[0].mxu0 %v540
    %v820 = vpop.f32.mrb[0].mxu0
    %v821 = vadd.f32 %v679, %v820
    %v822 = vpop.f32.mrb[0].mxu0
    %v823 = vadd.f32 %v681, %v822
    %824 = vdwg.mxu0
    %v825 = vadd.f32 %v750, %v485
    %v826 = vadd.f32 %v752, %v489
    %v827 = vadd.f32 %v821, %v493
    %v828 = vadd.f32 %v823, %v497
    %v829 = vxor.u32 %v825, 2147483648
    %v830 = vmul.f32 %v829, 1.442695
    %v831 = vpow.pop %v830
    %v832 = vadd.f32 %v831, 1.0
    %v833 = vrcp.pop %v832
    %v834 = vmul.f32 1.0, %v833
    %v835 = vxor.u32 %v826, 2147483648
    %v836 = vmul.f32 %v835, 1.442695
    %v837 = vpow.pop %v836
    %v838 = vadd.f32 %v837, 1.0
    %v839 = vrcp.pop %v838
    %v840 = vmul.f32 1.0, %v839
    %v841 = vtanh.pop %v827
    %v842 = vxor.u32 %v828, 2147483648
    %v843 = vmul.f32 %v842, 1.442695
    %v844 = vpow.pop %v843
    %v845 = vadd.f32 %v844, 1.0
    %v846 = vrcp.pop %v845
    %v847 = vmul.f32 1.0, %v846
    %v848 = vmul.f32 %v840, %v538
    %v849 = vmul.f32 %v834, %v841
    %v850 = vadd.f32 %v848, %v849
    %v851 = vtanh.pop %v850
    %v852 = vmul.f32 %v847, %v851
    %vm853 = vcmp.gt.s32.totalorder %v66, 1
    %v854 = vsel %vm853, 1, 0
    %855 = vset.pattern.permute.xlu0 0
    %856 = vperm.xlu0 %855, %v854
    %v857 = vpop.permute.xlu0 %856
    %vm858 = vcmp.eq.s32.totalorder %v857, 1
    %v859 = vsel %vm858, %v852, 0.0
    %s860 = scalar_lea.vmem [#allocation8], 8
    %861 = vst [vmem:[%s860] sm:$0xff] %v859
    %v862 = vsel %vm858, %v852, %v536
    %v863 = vsel %vm858, %v850, %v538
    %s864 = scalar_lea.vmem [#allocation2], 16
    %v865 = vld [vmem:[%s864] sm:$0xff]
    %866 = vmatprep.subr.mxu0 %v132
    %867 = vmatpush1.msra.mxu0 %v131
    %868 = vmatprep.subr.mxu0 %v136
    %869 = vmatpush1.msra.mxu0 %v135
    %870 = vmatprep.subr.mxu0 %v140
    %871 = vmatpush1.msra.mxu0 %v139
    %872 = vmatprep.subr.mxu0 %v144
    %873 = vmatpush1.msra.mxu0 %v143
    %874 = vmatprep.subr.mxu0 %v148
    %875 = vmatpush1.msra.mxu0 %v147
    %876 = vmatprep.subr.mxu0 %v152
    %877 = vmatpush1.msra.mxu0 %v151
    %878 = vmatprep.subr.mxu0 %v156
    %879 = vmatpush1.msra.mxu0 %v155
    %880 = vmatprep.subr.mxu0 %v160
    %881 = vmatpush1.msra.mxu0 %v159
    %882 = vmatprep.subr.mxu0 %v164
    %883 = vmatpush1.msra.mxu0 %v163
    %884 = vmatprep.subr.mxu0 %v168
    %885 = vmatpush1.msra.mxu0 %v167
    %886 = vmatprep.subr.mxu0 %v172
    %887 = vmatpush1.msra.mxu0 %v171
    %888 = vmatprep.subr.mxu0 %v176
    %889 = vmatpush1.msra.mxu0 %v175
    %890 = vmatprep.subr.mxu0 %v180
    %891 = vmatpush1.msra.mxu0 %v179
    %892 = vmatprep.subr.mxu0 %v184
    %893 = vmatpush1.msra.mxu0 %v183
    %894 = vmatprep.subr.mxu0 %v188
    %895 = vmatpush1.msra.mxu0 %v187
    %896 = vmatprep.subr.mxu0 %v192
    %897 = vmatpush1.msra.mxu0 %v191
    %898 = vmatprep.subr.mxu0 0.0
    %899 = vmatpush1.msra.mxu0 0.0
    %900 = vmatprep.subr.mxu0 0.0
    %901 = vmatpush1.msra.mxu0 0.0
    %902 = vmatprep.subr.mxu0 0.0
    %903 = vmatpush1.msra.mxu0 0.0
    %904 = vmatprep.subr.mxu0 0.0
    %905 = vmatpush1.msra.mxu0 0.0
    %906 = vmatprep.subr.mxu0 0.0
    %907 = vmatpush1.msra.mxu0 0.0
    %908 = vmatprep.subr.mxu0 0.0
    %909 = vmatpush1.msra.mxu0 0.0
    %910 = vmatprep.subr.mxu0 0.0
    %911 = vmatpush1.msra.mxu0 0.0
    %912 = vmatprep.subr.mxu0 0.0
    %913 = vmatpush1.msra.mxu0 0.0
    %914 = vmatprep.subr.mxu0 0.0
    %915 = vmatpush1.msra.mxu0 0.0
    %916 = vmatprep.subr.mxu0 0.0
    %917 = vmatpush1.msra.mxu0 0.0
    %918 = vmatprep.subr.mxu0 0.0
    %919 = vmatpush1.msra.mxu0 0.0
    %920 = vmatprep.subr.mxu0 0.0
    %921 = vmatpush1.msra.mxu0 0.0
    %922 = vmatprep.subr.mxu0 0.0
    %923 = vmatpush1.msra.mxu0 0.0
    %924 = vmatprep.subr.mxu0 0.0
    %925 = vmatpush1.msra.mxu0 0.0
    %926 = vmatprep.subr.mxu0 0.0
    %927 = vmatpush1.msra.mxu0 0.0
    %928 = vmatprep.subr.mxu0 0.0
    %929 = vmatpush1.msra.mxu0 0.0
    %930 = vmatprep.mubr.f32.mxu0 0.0
    %931 = vmatmul.mubr.f32.gmra.mrb[0].mxu0 %v862
    %v932 = vpop.f32.mrb[0].mxu0
    %v933 = vadd.f32 0.0, %v932
    %v934 = vpop.f32.mrb[0].mxu0
    %v935 = vadd.f32 0.0, %v934
    %936 = vdwg.mxu0
    %937 = vmatprep.subr.mxu0 %v134
    %938 = vmatpush1.msra.mxu0 %v133
    %939 = vmatprep.subr.mxu0 %v138
    %940 = vmatpush1.msra.mxu0 %v137
    %941 = vmatprep.subr.mxu0 %v142
    %942 = vmatpush1.msra.mxu0 %v141
    %943 = vmatprep.subr.mxu0 %v146
    %944 = vmatpush1.msra.mxu0 %v145
    %945 = vmatprep.subr.mxu0 %v150
    %946 = vmatpush1.msra.mxu0 %v149
    %947 = vmatprep.subr.mxu0 %v154
    %948 = vmatpush1.msra.mxu0 %v153
    %949 = vmatprep.subr.mxu0 %v158
    %950 = vmatpush1.msra.mxu0 %v157
    %951 = vmatprep.subr.mxu0 %v162
    %952 = vmatpush1.msra.mxu0 %v161
    %953 = vmatprep.subr.mxu0 %v166
    %954 = vmatpush1.msra.mxu0 %v165
    %955 = vmatprep.subr.mxu0 %v170
    %956 = vmatpush1.msra.mxu0 %v169
    %957 = vmatprep.subr.mxu0 %v174
    %958 = vmatpush1.msra.mxu0 %v173
    %959 = vmatprep.subr.mxu0 %v178
    %960 = vmatpush1.msra.mxu0 %v177
    %961 = vmatprep.subr.mxu0 %v182
    %962 = vmatpush1.msra.mxu0 %v181
    %963 = vmatprep.subr.mxu0 %v186
    %964 = vmatpush1.msra.mxu0 %v185
    %965 = vmatprep.subr.mxu0 %v190
    %966 = vmatpush1.msra.mxu0 %v189
    %967 = vmatprep.subr.mxu0 %v194
    %968 = vmatpush1.msra.mxu0 %v193
    %969 = vmatprep.subr.mxu0 0.0
    %970 = vmatpush1.msra.mxu0 0.0
    %971 = vmatprep.subr.mxu0 0.0
    %972 = vmatpush1.msra.mxu0 0.0
    %973 = vmatprep.subr.mxu0 0.0
    %974 = vmatpush1.msra.mxu0 0.0
    %975 = vmatprep.subr.mxu0 0.0
    %976 = vmatpush1.msra.mxu0 0.0
    %977 = vmatprep.subr.mxu0 0.0
    %978 = vmatpush1.msra.mxu0 0.0
    %979 = vmatprep.subr.mxu0 0.0
    %980 = vmatpush1.msra.mxu0 0.0
    %981 = vmatprep.subr.mxu0 0.0
    %982 = vmatpush1.msra.mxu0 0.0
    %983 = vmatprep.subr.mxu0 0.0
    %984 = vmatpush1.msra.mxu0 0.0
    %985 = vmatprep.subr.mxu0 0.0
    %986 = vmatpush1.msra.mxu0 0.0
    %987 = vmatprep.subr.mxu0 0.0
    %988 = vmatpush1.msra.mxu0 0.0
    %989 = vmatprep.subr.mxu0 0.0
    %990 = vmatpush1.msra.mxu0 0.0
    %991 = vmatprep.subr.mxu0 0.0
    %992 = vmatpush1.msra.mxu0 0.0
    %993 = vmatprep.subr.mxu0 0.0
    %994 = vmatpush1.msra.mxu0 0.0
    %995 = vmatprep.subr.mxu0 0.0
    %996 = vmatpush1.msra.mxu0 0.0
    %997 = vmatprep.subr.mxu0 0.0
    %998 = vmatpush1.msra.mxu0 0.0
    %999 = vmatprep.subr.mxu0 0.0
    %1000 = vmatpush1.msra.mxu0 0.0
    %1001 = vmatprep.mubr.f32.mxu0 0.0
    %1002 = vmatmul.mubr.f32.gmra.mrb[0].mxu0 %v862
    %v1003 = vpop.f32.mrb[0].mxu0
    %v1004 = vadd.f32 0.0, %v1003
    %v1005 = vpop.f32.mrb[0].mxu0
    %v1006 = vadd.f32 0.0, %v1005
    %1007 = vdwg.mxu0
    %1008 = vmatprep.subr.mxu0 %v68
    %1009 = vmatpush1.msra.mxu0 %v67
    %1010 = vmatprep.subr.mxu0 %v72
    %1011 = vmatpush1.msra.mxu0 %v71
    %1012 = vmatprep.subr.mxu0 %v76
    %1013 = vmatpush1.msra.mxu0 %v75
    %1014 = vmatprep.subr.mxu0 %v80
    %1015 = vmatpush1.msra.mxu0 %v79
    %1016 = vmatprep.subr.mxu0 %v84
    %1017 = vmatpush1.msra.mxu0 %v83
    %1018 = vmatprep.subr.mxu0 %v88
    %1019 = vmatpush1.msra.mxu0 %v87
    %1020 = vmatprep.subr.mxu0 %v92
    %1021 = vmatpush1.msra.mxu0 %v91
    %1022 = vmatprep.subr.mxu0 %v96
    %1023 = vmatpush1.msra.mxu0 %v95
    %1024 = vmatprep.subr.mxu0 %v100
    %1025 = vmatpush1.msra.mxu0 %v99
    %1026 = vmatprep.subr.mxu0 %v104
    %1027 = vmatpush1.msra.mxu0 %v103
    %1028 = vmatprep.subr.mxu0 %v108
    %1029 = vmatpush1.msra.mxu0 %v107
    %1030 = vmatprep.subr.mxu0 %v112
    %1031 = vmatpush1.msra.mxu0 %v111
    %1032 = vmatprep.subr.mxu0 %v116
    %1033 = vmatpush1.msra.mxu0 %v115
    %1034 = vmatprep.subr.mxu0 %v120
    %1035 = vmatpush1.msra.mxu0 %v119
    %1036 = vmatprep.subr.mxu0 %v124
    %1037 = vmatpush1.msra.mxu0 %v123
    %1038 = vmatprep.subr.mxu0 %v128
    %1039 = vmatpush1.msra.mxu0 %v127
    %1040 = vmatprep.subr.mxu0 0.0
    %1041 = vmatpush1.msra.mxu0 0.0
    %1042 = vmatprep.subr.mxu0 0.0
    %1043 = vmatpush1.msra.mxu0 0.0
    %1044 = vmatprep.subr.mxu0 0.0
    %1045 = vmatpush1.msra.mxu0 0.0
    %1046 = vmatprep.subr.mxu0 0.0
    %1047 = vmatpush1.msra.mxu0 0.0
    %1048 = vmatprep.subr.mxu0 0.0
    %1049 = vmatpush1.msra.mxu0 0.0
    %1050 = vmatprep.subr.mxu0 0.0
    %1051 = vmatpush1.msra.mxu0 0.0
    %1052 = vmatprep.subr.mxu0 0.0
    %1053 = vmatpush1.msra.mxu0 0.0
    %1054 = vmatprep.subr.mxu0 0.0
    %1055 = vmatpush1.msra.mxu0 0.0
    %1056 = vmatprep.subr.mxu0 0.0
    %1057 = vmatpush1.msra.mxu0 0.0
    %1058 = vmatprep.subr.mxu0 0.0
    %1059 = vmatpush1.msra.mxu0 0.0
    %1060 = vmatprep.subr.mxu0 0.0
    %1061 = vmatpush1.msra.mxu0 0.0
    %1062 = vmatprep.subr.mxu0 0.0
    %1063 = vmatpush1.msra.mxu0 0.0
    %1064 = vmatprep.subr.mxu0 0.0
    %1065 = vmatpush1.msra.mxu0 0.0
    %1066 = vmatprep.subr.mxu0 0.0
    %1067 = vmatpush1.msra.mxu0 0.0
    %1068 = vmatprep.subr.mxu0 0.0
    %1069 = vmatpush1.msra.mxu0 0.0
    %1070 = vmatprep.subr.mxu0 0.0
    %1071 = vmatpush1.msra.mxu0 0.0
    %1072 = vmatprep.mubr.f32.mxu0 0.0
    %1073 = vmatmul.mubr.f32.gmra.mrb[0].mxu0 %v865
    %v1074 = vpop.f32.mrb[0].mxu0
    %v1075 = vadd.f32 %v933, %v1074
    %v1076 = vpop.f32.mrb[0].mxu0
    %v1077 = vadd.f32 %v935, %v1076
    %1078 = vdwg.mxu0
    %1079 = vmatprep.subr.mxu0 %v70
    %1080 = vmatpush1.msra.mxu0 %v69
    %1081 = vmatprep.subr.mxu0 %v74
    %1082 = vmatpush1.msra.mxu0 %v73
    %1083 = vmatprep.subr.mxu0 %v78
    %1084 = vmatpush1.msra.mxu0 %v77
    %1085 = vmatprep.subr.mxu0 %v82
    %1086 = vmatpush1.msra.mxu0 %v81
    %1087 = vmatprep.subr.mxu0 %v86
    %1088 = vmatpush1.msra.mxu0 %v85
    %1089 = vmatprep.subr.mxu0 %v90
    %1090 = vmatpush1.msra.mxu0 %v89
    %1091 = vmatprep.subr.mxu0 %v94
    %1092 = vmatpush1.msra.mxu0 %v93
    %1093 = vmatprep.subr.mxu0 %v98
    %1094 = vmatpush1.msra.mxu0 %v97
    %1095 = vmatprep.subr.mxu0 %v102
    %1096 = vmatpush1.msra.mxu0 %v101
    %1097 = vmatprep.subr.mxu0 %v106
    %1098 = vmatpush1.msra.mxu0 %v105
    %1099 = vmatprep.subr.mxu0 %v110
    %1100 = vmatpush1.msra.mxu0 %v109
    %1101 = vmatprep.subr.mxu0 %v114
    %1102 = vmatpush1.msra.mxu0 %v113
    %1103 = vmatprep.subr.mxu0 %v118
    %1104 = vmatpush1.msra.mxu0 %v117
    %1105 = vmatprep.subr.mxu0 %v122
    %1106 = vmatpush1.msra.mxu0 %v121
    %1107 = vmatprep.subr.mxu0 %v126
    %1108 = vmatpush1.msra.mxu0 %v125
    %1109 = vmatprep.subr.mxu0 %v130
    %1110 = vmatpush1.msra.mxu0 %v129
    %1111 = vmatprep.subr.mxu0 0.0
    %1112 = vmatpush1.msra.mxu0 0.0
    %1113 = vmatprep.subr.mxu0 0.0
    %1114 = vmatpush1.msra.mxu0 0.0
    %1115 = vmatprep.subr.mxu0 0.0
    %1116 = vmatpush1.msra.mxu0 0.0
    %1117 = vmatprep.subr.mxu0 0.0
    %1118 = vmatpush1.msra.mxu0 0.0
    %1119 = vmatprep.subr.mxu0 0.0
    %1120 = vmatpush1.msra.mxu0 0.0
    %1121 = vmatprep.subr.mxu0 0.0
    %1122 = vmatpush1.msra.mxu0 0.0
    %1123 = vmatprep.subr.mxu0 0.0
    %1124 = vmatpush1.msra.mxu0 0.0
    %1125 = vmatprep.subr.mxu0 0.0
    %1126 = vmatpush1.msra.mxu0 0.0
    %1127 = vmatprep.subr.mxu0 0.0
    %1128 = vmatpush1.msra.mxu0 0.0
    %1129 = vmatprep.subr.mxu0 0.0
    %1130 = vmatpush1.msra.mxu0 0.0
    %1131 = vmatprep.subr.mxu0 0.0
    %1132 = vmatpush1.msra.mxu0 0.0
    %1133 = vmatprep.subr.mxu0 0.0
    %1134 = vmatpush1.msra.mxu0 0.0
    %1135 = vmatprep.subr.mxu0 0.0
    %1136 = vmatpush1.msra.mxu0 0.0
    %1137 = vmatprep.subr.mxu0 0.0
    %1138 = vmatpush1.msra.mxu0 0.0
    %1139 = vmatprep.subr.mxu0 0.0
    %1140 = vmatpush1.msra.mxu0 0.0
    %1141 = vmatprep.subr.mxu0 0.0
    %1142 = vmatpush1.msra.mxu0 0.0
    %1143 = vmatprep.mubr.f32.mxu0 0.0
    %1144 = vmatmul.mubr.f32.gmra.mrb[0].mxu0 %v865
    %v1145 = vpop.f32.mrb[0].mxu0
    %v1146 = vadd.f32 %v1004, %v1145
    %v1147 = vpop.f32.mrb[0].mxu0
    %v1148 = vadd.f32 %v1006, %v1147
    %1149 = vdwg.mxu0
    %v1150 = vadd.f32 %v1075, %v485
    %v1151 = vadd.f32 %v1077, %v489
    %v1152 = vadd.f32 %v1146, %v493
    %v1153 = vadd.f32 %v1148, %v497
    %v1154 = vxor.u32 %v1150, 2147483648
    %v1155 = vmul.f32 %v1154, 1.442695
    %v1156 = vpow.pop %v1155
    %v1157 = vadd.f32 %v1156, 1.0
    %v1158 = vrcp.pop %v1157
    %v1159 = vmul.f32 1.0, %v1158
    %v1160 = vxor.u32 %v1151, 2147483648
    %v1161 = vmul.f32 %v1160, 1.442695
    %v1162 = vpow.pop %v1161
    %v1163 = vadd.f32 %v1162, 1.0
    %v1164 = vrcp.pop %v1163
    %v1165 = vmul.f32 1.0, %v1164
    %v1166 = vtanh.pop %v1152
    %v1167 = vxor.u32 %v1153, 2147483648
    %v1168 = vmul.f32 %v1167, 1.442695
    %v1169 = vpow.pop %v1168
    %v1170 = vadd.f32 %v1169, 1.0
    %v1171 = vrcp.pop %v1170
    %v1172 = vmul.f32 1.0, %v1171
    %v1173 = vmul.f32 %v1165, %v863
    %v1174 = vmul.f32 %v1159, %v1166
    %v1175 = vadd.f32 %v1173, %v1174
    %v1176 = vtanh.pop %v1175
    %v1177 = vmul.f32 %v1172, %v1176
    %vm1178 = vcmp.gt.s32.totalorder %v66, 2
    %v1179 = vsel %vm1178, 1, 0
    %1180 = vset.pattern.permute.xlu0 0
    %1181 = vperm.xlu0 %1180, %v1179
    %v1182 = vpop.permute.xlu0 %1181
    %vm1183 = vcmp.eq.s32.totalorder %v1182, 1
    %v1184 = vsel %vm1183, %v1177, 0.0
    %s1185 = scalar_lea.vmem [#allocation8], 16
    %1186 = vst [vmem:[%s1185] sm:$0xff] %v1184
    %v1187 = vsel %vm1183, %v1177, %v862
    %v1188 = vsel %vm1183, %v1175, %v863
    %s1189 = scalar_lea.vmem [#allocation2], 24
    %v1190 = vld [vmem:[%s1189] sm:$0xff]
    %1191 = vmatprep.subr.mxu0 %v132
    %1192 = vmatpush1.msra.mxu0 %v131
    %1193 = vmatprep.subr.mxu0 %v136
    %1194 = vmatpush1.msra.mxu0 %v135
    %1195 = vmatprep.subr.mxu0 %v140
    %1196 = vmatpush1.msra.mxu0 %v139
    %1197 = vmatprep.subr.mxu0 %v144
    %1198 = vmatpush1.msra.mxu0 %v143
    %1199 = vmatprep.subr.mxu0 %v148
    %1200 = vmatpush1.msra.mxu0 %v147
    %1201 = vmatprep.subr.mxu0 %v152
    %1202 = vmatpush1.msra.mxu0 %v151
    %1203 = vmatprep.subr.mxu0 %v156
    %1204 = vmatpush1.msra.mxu0 %v155
    %1205 = vmatprep.subr.mxu0 %v160
    %1206 = vmatpush1.msra.mxu0 %v159
    %1207 = vmatprep.subr.mxu0 %v164
    %1208 = vmatpush1.msra.mxu0 %v163
    %1209 = vmatprep.subr.mxu0 %v168
    %1210 = vmatpush1.msra.mxu0 %v167
    %1211 = vmatprep.subr.mxu0 %v172
    %1212 = vmatpush1.msra.mxu0 %v171
    %1213 = vmatprep.subr.mxu0 %v176
    %1214 = vmatpush1.msra.mxu0 %v175
    %1215 = vmatprep.subr.mxu0 %v180
    %1216 = vmatpush1.msra.mxu0 %v179
    %1217 = vmatprep.subr.mxu0 %v184
    %1218 = vmatpush1.msra.mxu0 %v183
    %1219 = vmatprep.subr.mxu0 %v188
    %1220 = vmatpush1.msra.mxu0 %v187
    %1221 = vmatprep.subr.mxu0 %v192
    %1222 = vmatpush1.msra.mxu0 %v191
    %1223 = vmatprep.subr.mxu0 0.0
    %1224 = vmatpush1.msra.mxu0 0.0
    %1225 = vmatprep.subr.mxu0 0.0
    %1226 = vmatpush1.msra.mxu0 0.0
    %1227 = vmatprep.subr.mxu0 0.0
    %1228 = vmatpush1.msra.mxu0 0.0
    %1229 = vmatprep.subr.mxu0 0.0
    %1230 = vmatpush1.msra.mxu0 0.0
    %1231 = vmatprep.subr.mxu0 0.0
    %1232 = vmatpush1.msra.mxu0 0.0
    %1233 = vmatprep.subr.mxu0 0.0
    %1234 = vmatpush1.msra.mxu0 0.0
    %1235 = vmatprep.subr.mxu0 0.0
    %1236 = vmatpush1.msra.mxu0 0.0
    %1237 = vmatprep.subr.mxu0 0.0
    %1238 = vmatpush1.msra.mxu0 0.0
    %1239 = vmatprep.subr.mxu0 0.0
    %1240 = vmatpush1.msra.mxu0 0.0
    %1241 = vmatprep.subr.mxu0 0.0
    %1242 = vmatpush1.msra.mxu0 0.0
    %1243 = vmatprep.subr.mxu0 0.0
    %1244 = vmatpush1.msra.mxu0 0.0
    %1245 = vmatprep.subr.mxu0 0.0
    %1246 = vmatpush1.msra.mxu0 0.0
    %1247 = vmatprep.subr.mxu0 0.0
    %1248 = vmatpush1.msra.mxu0 0.0
    %1249 = vmatprep.subr.mxu0 0.0
    %1250 = vmatpush1.msra.mxu0 0.0
    %1251 = vmatprep.subr.mxu0 0.0
    %1252 = vmatpush1.msra.mxu0 0.0
    %1253 = vmatprep.subr.mxu0 0.0
    %1254 = vmatpush1.msra.mxu0 0.0
    %1255 = vmatprep.mubr.f32.mxu0 0.0
    %1256 = vmatmul.mubr.f32.gmra.mrb[0].mxu0 %v1187
    %v1257 = vpop.f32.mrb[0].mxu0
    %v1258 = vadd.f32 0.0, %v1257
    %v1259 = vpop.f32.mrb[0].mxu0
    %v1260 = vadd.f32 0.0, %v1259
    %1261 = vdwg.mxu0
    %1262 = vmatprep.subr.mxu0 %v134
    %1263 = vmatpush1.msra.mxu0 %v133
    %1264 = vmatprep.subr.mxu0 %v138
    %1265 = vmatpush1.msra.mxu0 %v137
    %1266 = vmatprep.subr.mxu0 %v142
    %1267 = vmatpush1.msra.mxu0 %v141
    %1268 = vmatprep.subr.mxu0 %v146
    %1269 = vmatpush1.msra.mxu0 %v145
    %1270 = vmatprep.subr.mxu0 %v150
    %1271 = vmatpush1.msra.mxu0 %v149
    %1272 = vmatprep.subr.mxu0 %v154
    %1273 = vmatpush1.msra.mxu0 %v153
    %1274 = vmatprep.subr.mxu0 %v158
    %1275 = vmatpush1.msra.mxu0 %v157
    %1276 = vmatprep.subr.mxu0 %v162
    %1277 = vmatpush1.msra.mxu0 %v161
    %1278 = vmatprep.subr.mxu0 %v166
    %1279 = vmatpush1.msra.mxu0 %v165
    %1280 = vmatprep.subr.mxu0 %v170
    %1281 = vmatpush1.msra.mxu0 %v169
    %1282 = vmatprep.subr.mxu0 %v174
    %1283 = vmatpush1.msra.mxu0 %v173
    %1284 = vmatprep.subr.mxu0 %v178
    %1285 = vmatpush1.msra.mxu0 %v177
    %1286 = vmatprep.subr.mxu0 %v182
    %1287 = vmatpush1.msra.mxu0 %v181
    %1288 = vmatprep.subr.mxu0 %v186
    %1289 = vmatpush1.msra.mxu0 %v185
    %1290 = vmatprep.subr.mxu0 %v190
    %1291 = vmatpush1.msra.mxu0 %v189
    %1292 = vmatprep.subr.mxu0 %v194
    %1293 = vmatpush1.msra.mxu0 %v193
    %1294 = vmatprep.subr.mxu0 0.0
    %1295 = vmatpush1.msra.mxu0 0.0
    %1296 = vmatprep.subr.mxu0 0.0
    %1297 = vmatpush1.msra.mxu0 0.0
    %1298 = vmatprep.subr.mxu0 0.0
    %1299 = vmatpush1.msra.mxu0 0.0
    %1300 = vmatprep.subr.mxu0 0.0
    %1301 = vmatpush1.msra.mxu0 0.0
    %1302 = vmatprep.subr.mxu0 0.0
    %1303 = vmatpush1.msra.mxu0 0.0
    %1304 = vmatprep.subr.mxu0 0.0
    %1305 = vmatpush1.msra.mxu0 0.0
    %1306 = vmatprep.subr.mxu0 0.0
    %1307 = vmatpush1.msra.mxu0 0.0
    %1308 = vmatprep.subr.mxu0 0.0
    %1309 = vmatpush1.msra.mxu0 0.0
    %1310 = vmatprep.subr.mxu0 0.0
    %1311 = vmatpush1.msra.mxu0 0.0
    %1312 = vmatprep.subr.mxu0 0.0
    %1313 = vmatpush1.msra.mxu0 0.0
    %1314 = vmatprep.subr.mxu0 0.0
    %1315 = vmatpush1.msra.mxu0 0.0
    %1316 = vmatprep.subr.mxu0 0.0
    %1317 = vmatpush1.msra.mxu0 0.0
    %1318 = vmatprep.subr.mxu0 0.0
    %1319 = vmatpush1.msra.mxu0 0.0
    %1320 = vmatprep.subr.mxu0 0.0
    %1321 = vmatpush1.msra.mxu0 0.0
    %1322 = vmatprep.subr.mxu0 0.0
    %1323 = vmatpush1.msra.mxu0 0.0
    %1324 = vmatprep.subr.mxu0 0.0
    %1325 = vmatpush1.msra.mxu0 0.0
    %1326 = vmatprep.mubr.f32.mxu0 0.0
    %1327 = vmatmul.mubr.f32.gmra.mrb[0].mxu0 %v1187
    %v1328 = vpop.f32.mrb[0].mxu0
    %v1329 = vadd.f32 0.0, %v1328
    %v1330 = vpop.f32.mrb[0].mxu0
    %v1331 = vadd.f32 0.0, %v1330
    %1332 = vdwg.mxu0
    %1333 = vmatprep.subr.mxu0 %v68
    %1334 = vmatpush1.msra.mxu0 %v67
    %1335 = vmatprep.subr.mxu0 %v72
    %1336 = vmatpush1.msra.mxu0 %v71
    %1337 = vmatprep.subr.mxu0 %v76
    %1338 = vmatpush1.msra.mxu0 %v75
    %1339 = vmatprep.subr.mxu0 %v80
    %1340 = vmatpush1.msra.mxu0 %v79
    %1341 = vmatprep.subr.mxu0 %v84
    %1342 = vmatpush1.msra.mxu0 %v83
    %1343 = vmatprep.subr.mxu0 %v88
    %1344 = vmatpush1.msra.mxu0 %v87
    %1345 = vmatprep.subr.mxu0 %v92
    %1346 = vmatpush1.msra.mxu0 %v91
    %1347 = vmatprep.subr.mxu0 %v96
    %1348 = vmatpush1.msra.mxu0 %v95
    %1349 = vmatprep.subr.mxu0 %v100
    %1350 = vmatpush1.msra.mxu0 %v99
    %1351 = vmatprep.subr.mxu0 %v104
    %1352 = vmatpush1.msra.mxu0 %v103
    %1353 = vmatprep.subr.mxu0 %v108
    %1354 = vmatpush1.msra.mxu0 %v107
    %1355 = vmatprep.subr.mxu0 %v112
    %1356 = vmatpush1.msra.mxu0 %v111
    %1357 = vmatprep.subr.mxu0 %v116
    %1358 = vmatpush1.msra.mxu0 %v115
    %1359 = vmatprep.subr.mxu0 %v120
    %1360 = vmatpush1.msra.mxu0 %v119
    %1361 = vmatprep.subr.mxu0 %v124
    %1362 = vmatpush1.msra.mxu0 %v123
    %1363 = vmatprep.subr.mxu0 %v128
    %1364 = vmatpush1.msra.mxu0 %v127
    %1365 = vmatprep.subr.mxu0 0.0
    %1366 = vmatpush1.msra.mxu0 0.0
    %1367 = vmatprep.subr.mxu0 0.0
    %1368 = vmatpush1.msra.mxu0 0.0
    %1369 = vmatprep.subr.mxu0 0.0
    %1370 = vmatpush1.msra.mxu0 0.0
    %1371 = vmatprep.subr.mxu0 0.0
    %1372 = vmatpush1.msra.mxu0 0.0
    %1373 = vmatprep.subr.mxu0 0.0
    %1374 = vmatpush1.msra.mxu0 0.0
    %1375 = vmatprep.subr.mxu0 0.0
    %1376 = vmatpush1.msra.mxu0 0.0
    %1377 = vmatprep.subr.mxu0 0.0
    %1378 = vmatpush1.msra.mxu0 0.0
    %1379 = vmatprep.subr.mxu0 0.0
    %1380 = vmatpush1.msra.mxu0 0.0
    %1381 = vmatprep.subr.mxu0 0.0
    %1382 = vmatpush1.msra.mxu0 0.0
    %1383 = vmatprep.subr.mxu0 0.0
    %1384 = vmatpush1.msra.mxu0 0.0
    %1385 = vmatprep.subr.mxu0 0.0
    %1386 = vmatpush1.msra.mxu0 0.0
    %1387 = vmatprep.subr.mxu0 0.0
    %1388 = vmatpush1.msra.mxu0 0.0
    %1389 = vmatprep.subr.mxu0 0.0
    %1390 = vmatpush1.msra.mxu0 0.0
    %1391 = vmatprep.subr.mxu0 0.0
    %1392 = vmatpush1.msra.mxu0 0.0
    %1393 = vmatprep.subr.mxu0 0.0
    %1394 = vmatpush1.msra.mxu0 0.0
    %1395 = vmatprep.subr.mxu0 0.0
    %1396 = vmatpush1.msra.mxu0 0.0
    %1397 = vmatprep.mubr.f32.mxu0 0.0
    %1398 = vmatmul.mubr.f32.gmra.mrb[0].mxu0 %v1190
    %v1399 = vpop.f32.mrb[0].mxu0
    %v1400 = vadd.f32 %v1258, %v1399
    %v1401 = vpop.f32.mrb[0].mxu0
    %v1402 = vadd.f32 %v1260, %v1401
    %1403 = vdwg.mxu0
    %1404 = vmatprep.subr.mxu0 %v70
    %1405 = vmatpush1.msra.mxu0 %v69
    %1406 = vmatprep.subr.mxu0 %v74
    %1407 = vmatpush1.msra.mxu0 %v73
    %1408 = vmatprep.subr.mxu0 %v78
    %1409 = vmatpush1.msra.mxu0 %v77
    %1410 = vmatprep.subr.mxu0 %v82
    %1411 = vmatpush1.msra.mxu0 %v81
    %1412 = vmatprep.subr.mxu0 %v86
    %1413 = vmatpush1.msra.mxu0 %v85
    %1414 = vmatprep.subr.mxu0 %v90
    %1415 = vmatpush1.msra.mxu0 %v89
    %1416 = vmatprep.subr.mxu0 %v94
    %1417 = vmatpush1.msra.mxu0 %v93
    %1418 = vmatprep.subr.mxu0 %v98
    %1419 = vmatpush1.msra.mxu0 %v97
    %1420 = vmatprep.subr.mxu0 %v102
    %1421 = vmatpush1.msra.mxu0 %v101
    %1422 = vmatprep.subr.mxu0 %v106
    %1423 = vmatpush1.msra.mxu0 %v105
    %1424 = vmatprep.subr.mxu0 %v110
    %1425 = vmatpush1.msra.mxu0 %v109
    %1426 = vmatprep.subr.mxu0 %v114
    %1427 = vmatpush1.msra.mxu0 %v113
    %1428 = vmatprep.subr.mxu0 %v118
    %1429 = vmatpush1.msra.mxu0 %v117
    %1430 = vmatprep.subr.mxu0 %v122
    %1431 = vmatpush1.msra.mxu0 %v121
    %1432 = vmatprep.subr.mxu0 %v126
    %1433 = vmatpush1.msra.mxu0 %v125
    %1434 = vmatprep.subr.mxu0 %v130
    %1435 = vmatpush1.msra.mxu0 %v129
    %1436 = vmatprep.subr.mxu0 0.0
    %1437 = vmatpush1.msra.mxu0 0.0
    %1438 = vmatprep.subr.mxu0 0.0
    %1439 = vmatpush1.msra.mxu0 0.0
    %1440 = vmatprep.subr.mxu0 0.0
    %1441 = vmatpush1.msra.mxu0 0.0
    %1442 = vmatprep.subr.mxu0 0.0
    %1443 = vmatpush1.msra.mxu0 0.0
    %1444 = vmatprep.subr.mxu0 0.0
    %1445 = vmatpush1.msra.mxu0 0.0
    %1446 = vmatprep.subr.mxu0 0.0
    %1447 = vmatpush1.msra.mxu0 0.0
    %1448 = vmatprep.subr.mxu0 0.0
    %1449 = vmatpush1.msra.mxu0 0.0
    %1450 = vmatprep.subr.mxu0 0.0
    %1451 = vmatpush1.msra.mxu0 0.0
    %1452 = vmatprep.subr.mxu0 0.0
    %1453 = vmatpush1.msra.mxu0 0.0
    %1454 = vmatprep.subr.mxu0 0.0
    %1455 = vmatpush1.msra.mxu0 0.0
    %1456 = vmatprep.subr.mxu0 0.0
    %1457 = vmatpush1.msra.mxu0 0.0
    %1458 = vmatprep.subr.mxu0 0.0
    %1459 = vmatpush1.msra.mxu0 0.0
    %1460 = vmatprep.subr.mxu0 0.0
    %1461 = vmatpush1.msra.mxu0 0.0
    %1462 = vmatprep.subr.mxu0 0.0
    %1463 = vmatpush1.msra.mxu0 0.0
    %1464 = vmatprep.subr.mxu0 0.0
    %1465 = vmatpush1.msra.mxu0 0.0
    %1466 = vmatprep.subr.mxu0 0.0
    %1467 = vmatpush1.msra.mxu0 0.0
    %1468 = vmatprep.mubr.f32.mxu0 0.0
    %1469 = vmatmul.mubr.f32.gmra.mrb[0].mxu0 %v1190
    %v1470 = vpop.f32.mrb[0].mxu0
    %v1471 = vadd.f32 %v1329, %v1470
    %v1472 = vpop.f32.mrb[0].mxu0
    %v1473 = vadd.f32 %v1331, %v1472
    %1474 = vdwg.mxu0
    %v1475 = vadd.f32 %v1400, %v485
    %v1476 = vadd.f32 %v1402, %v489
    %v1477 = vadd.f32 %v1471, %v493
    %v1478 = vadd.f32 %v1473, %v497
    %v1479 = vxor.u32 %v1475, 2147483648
    %v1480 = vmul.f32 %v1479, 1.442695
    %v1481 = vpow.pop %v1480
    %v1482 = vadd.f32 %v1481, 1.0
    %v1483 = vrcp.pop %v1482
    %v1484 = vmul.f32 1.0, %v1483
    %v1485 = vxor.u32 %v1476, 2147483648
    %v1486 = vmul.f32 %v1485, 1.442695
    %v1487 = vpow.pop %v1486
    %v1488 = vadd.f32 %v1487, 1.0
    %v1489 = vrcp.pop %v1488
    %v1490 = vmul.f32 1.0, %v1489
    %v1491 = vtanh.pop %v1477
    %v1492 = vxor.u32 %v1478, 2147483648
    %v1493 = vmul.f32 %v1492, 1.442695
    %v1494 = vpow.pop %v1493
    %v1495 = vadd.f32 %v1494, 1.0
    %v1496 = vrcp.pop %v1495
    %v1497 = vmul.f32 1.0, %v1496
    %v1498 = vmul.f32 %v1490, %v1188
    %v1499 = vmul.f32 %v1484, %v1491
    %v1500 = vadd.f32 %v1498, %v1499
    %v1501 = vtanh.pop %v1500
    %v1502 = vmul.f32 %v1497, %v1501
    %vm1503 = vcmp.gt.s32.totalorder %v66, 3
    %v1504 = vsel %vm1503, 1, 0
    %1505 = vset.pattern.permute.xlu0 0
    %1506 = vperm.xlu0 %1505, %v1504
    %v1507 = vpop.permute.xlu0 %1506
    %vm1508 = vcmp.eq.s32.totalorder %v1507, 1
    %v1509 = vsel %vm1508, %v1502, 0.0
    %s1510 = scalar_lea.vmem [#allocation8], 24
    %1511 = vst [vmem:[%s1510] sm:$0xff] %v1509
    %v1512 = vsel %vm1508, %v1502, %v1187
    %v1513 = vsel %vm1508, %v1500, %v1188
    %s1514 = scalar_lea.vmem [#allocation2], 32
    %v1515 = vld [vmem:[%s1514] sm:$0xff]
    %1516 = vmatprep.subr.mxu0 %v132
    %1517 = vmatpush1.msra.mxu0 %v131
    %1518 = vmatprep.subr.mxu0 %v136
    %1519 = vmatpush1.msra.mxu0 %v135
    %1520 = vmatprep.subr.mxu0 %v140
    %1521 = vmatpush1.msra.mxu0 %v139
    %1522 = vmatprep.subr.mxu0 %v144
    %1523 = vmatpush1.msra.mxu0 %v143
    %1524 = vmatprep.subr.mxu0 %v148
    %1525 = vmatpush1.msra.mxu0 %v147
    %1526 = vmatprep.subr.mxu0 %v152
    %1527 = vmatpush1.msra.mxu0 %v151
    %1528 = vmatprep.subr.mxu0 %v156
    %1529 = vmatpush1.msra.mxu0 %v155
    %1530 = vmatprep.subr.mxu0 %v160
    %1531 = vmatpush1.msra.mxu0 %v159
    %1532 = vmatprep.subr.mxu0 %v164
    %1533 = vmatpush1.msra.mxu0 %v163
    %1534 = vmatprep.subr.mxu0 %v168
    %1535 = vmatpush1.msra.mxu0 %v167
    %1536 = vmatprep.subr.mxu0 %v172
    %1537 = vmatpush1.msra.mxu0 %v171
    %1538 = vmatprep.subr.mxu0 %v176
    %1539 = vmatpush1.msra.mxu0 %v175
    %1540 = vmatprep.subr.mxu0 %v180
    %1541 = vmatpush1.msra.mxu0 %v179
    %1542 = vmatprep.subr.mxu0 %v184
    %1543 = vmatpush1.msra.mxu0 %v183
    %1544 = vmatprep.subr.mxu0 %v188
    %1545 = vmatpush1.msra.mxu0 %v187
    %1546 = vmatprep.subr.mxu0 %v192
    %1547 = vmatpush1.msra.mxu0 %v191
    %1548 = vmatprep.subr.mxu0 0.0
    %1549 = vmatpush1.msra.mxu0 0.0
    %1550 = vmatprep.subr.mxu0 0.0
    %1551 = vmatpush1.msra.mxu0 0.0
    %1552 = vmatprep.subr.mxu0 0.0
    %1553 = vmatpush1.msra.mxu0 0.0
    %1554 = vmatprep.subr.mxu0 0.0
    %1555 = vmatpush1.msra.mxu0 0.0
    %1556 = vmatprep.subr.mxu0 0.0
    %1557 = vmatpush1.msra.mxu0 0.0
    %1558 = vmatprep.subr.mxu0 0.0
    %1559 = vmatpush1.msra.mxu0 0.0
    %1560 = vmatprep.subr.mxu0 0.0
    %1561 = vmatpush1.msra.mxu0 0.0
    %1562 = vmatprep.subr.mxu0 0.0
    %1563 = vmatpush1.msra.mxu0 0.0
    %1564 = vmatprep.subr.mxu0 0.0
    %1565 = vmatpush1.msra.mxu0 0.0
    %1566 = vmatprep.subr.mxu0 0.0
    %1567 = vmatpush1.msra.mxu0 0.0
    %1568 = vmatprep.subr.mxu0 0.0
    %1569 = vmatpush1.msra.mxu0 0.0
    %1570 = vmatprep.subr.mxu0 0.0
    %1571 = vmatpush1.msra.mxu0 0.0
    %1572 = vmatprep.subr.mxu0 0.0
    %1573 = vmatpush1.msra.mxu0 0.0
    %1574 = vmatprep.subr.mxu0 0.0
    %1575 = vmatpush1.msra.mxu0 0.0
    %1576 = vmatprep.subr.mxu0 0.0
    %1577 = vmatpush1.msra.mxu0 0.0
    %1578 = vmatprep.subr.mxu0 0.0
    %1579 = vmatpush1.msra.mxu0 0.0
    %1580 = vmatprep.mubr.f32.mxu0 0.0
    %1581 = vmatmul.mubr.f32.gmra.mrb[0].mxu0 %v1512
    %v1582 = vpop.f32.mrb[0].mxu0
    %v1583 = vadd.f32 0.0, %v1582
    %v1584 = vpop.f32.mrb[0].mxu0
    %v1585 = vadd.f32 0.0, %v1584
    %1586 = vdwg.mxu0
    %1587 = vmatprep.subr.mxu0 %v134
    %1588 = vmatpush1.msra.mxu0 %v133
    %1589 = vmatprep.subr.mxu0 %v138
    %1590 = vmatpush1.msra.mxu0 %v137
    %1591 = vmatprep.subr.mxu0 %v142
    %1592 = vmatpush1.msra.mxu0 %v141
    %1593 = vmatprep.subr.mxu0 %v146
    %1594 = vmatpush1.msra.mxu0 %v145
    %1595 = vmatprep.subr.mxu0 %v150
    %1596 = vmatpush1.msra.mxu0 %v149
    %1597 = vmatprep.subr.mxu0 %v154
    %1598 = vmatpush1.msra.mxu0 %v153
    %1599 = vmatprep.subr.mxu0 %v158
    %1600 = vmatpush1.msra.mxu0 %v157
    %1601 = vmatprep.subr.mxu0 %v162
    %1602 = vmatpush1.msra.mxu0 %v161
    %1603 = vmatprep.subr.mxu0 %v166
    %1604 = vmatpush1.msra.mxu0 %v165
    %1605 = vmatprep.subr.mxu0 %v170
    %1606 = vmatpush1.msra.mxu0 %v169
    %1607 = vmatprep.subr.mxu0 %v174
    %1608 = vmatpush1.msra.mxu0 %v173
    %1609 = vmatprep.subr.mxu0 %v178
    %1610 = vmatpush1.msra.mxu0 %v177
    %1611 = vmatprep.subr.mxu0 %v182
    %1612 = vmatpush1.msra.mxu0 %v181
    %1613 = vmatprep.subr.mxu0 %v186
    %1614 = vmatpush1.msra.mxu0 %v185
    %1615 = vmatprep.subr.mxu0 %v190
    %1616 = vmatpush1.msra.mxu0 %v189
    %1617 = vmatprep.subr.mxu0 %v194
    %1618 = vmatpush1.msra.mxu0 %v193
    %1619 = vmatprep.subr.mxu0 0.0
    %1620 = vmatpush1.msra.mxu0 0.0
    %1621 = vmatprep.subr.mxu0 0.0
    %1622 = vmatpush1.msra.mxu0 0.0
    %1623 = vmatprep.subr.mxu0 0.0
    %1624 = vmatpush1.msra.mxu0 0.0
    %1625 = vmatprep.subr.mxu0 0.0
    %1626 = vmatpush1.msra.mxu0 0.0
    %1627 = vmatprep.subr.mxu0 0.0
    %1628 = vmatpush1.msra.mxu0 0.0
    %1629 = vmatprep.subr.mxu0 0.0
    %1630 = vmatpush1.msra.mxu0 0.0
    %1631 = vmatprep.subr.mxu0 0.0
    %1632 = vmatpush1.msra.mxu0 0.0
    %1633 = vmatprep.subr.mxu0 0.0
    %1634 = vmatpush1.msra.mxu0 0.0
    %1635 = vmatprep.subr.mxu0 0.0
    %1636 = vmatpush1.msra.mxu0 0.0
    %1637 = vmatprep.subr.mxu0 0.0
    %1638 = vmatpush1.msra.mxu0 0.0
    %1639 = vmatprep.subr.mxu0 0.0
    %1640 = vmatpush1.msra.mxu0 0.0
    %1641 = vmatprep.subr.mxu0 0.0
    %1642 = vmatpush1.msra.mxu0 0.0
    %1643 = vmatprep.subr.mxu0 0.0
    %1644 = vmatpush1.msra.mxu0 0.0
    %1645 = vmatprep.subr.mxu0 0.0
    %1646 = vmatpush1.msra.mxu0 0.0
    %1647 = vmatprep.subr.mxu0 0.0
    %1648 = vmatpush1.msra.mxu0 0.0
    %1649 = vmatprep.subr.mxu0 0.0
    %1650 = vmatpush1.msra.mxu0 0.0
    %1651 = vmatprep.mubr.f32.mxu0 0.0
    %1652 = vmatmul.mubr.f32.gmra.mrb[0].mxu0 %v1512
    %v1653 = vpop.f32.mrb[0].mxu0
    %v1654 = vadd.f32 0.0, %v1653
    %v1655 = vpop.f32.mrb[0].mxu0
    %v1656 = vadd.f32 0.0, %v1655
    %1657 = vdwg.mxu0
    %1658 = vmatprep.subr.mxu0 %v68
    %1659 = vmatpush1.msra.mxu0 %v67
    %1660 = vmatprep.subr.mxu0 %v72
    %1661 = vmatpush1.msra.mxu0 %v71
    %1662 = vmatprep.subr.mxu0 %v76
    %1663 = vmatpush1.msra.mxu0 %v75
    %1664 = vmatprep.subr.mxu0 %v80
    %1665 = vmatpush1.msra.mxu0 %v79
    %1666 = vmatprep.subr.mxu0 %v84
    %1667 = vmatpush1.msra.mxu0 %v83
    %1668 = vmatprep.subr.mxu0 %v88
    %1669 = vmatpush1.msra.mxu0 %v87
    %1670 = vmatprep.subr.mxu0 %v92
    %1671 = vmatpush1.msra.mxu0 %v91
    %1672 = vmatprep.subr.mxu0 %v96
    %1673 = vmatpush1.msra.mxu0 %v95
    %1674 = vmatprep.subr.mxu0 %v100
    %1675 = vmatpush1.msra.mxu0 %v99
    %1676 = vmatprep.subr.mxu0 %v104
    %1677 = vmatpush1.msra.mxu0 %v103
    %1678 = vmatprep.subr.mxu0 %v108
    %1679 = vmatpush1.msra.mxu0 %v107
    %1680 = vmatprep.subr.mxu0 %v112
    %1681 = vmatpush1.msra.mxu0 %v111
    %1682 = vmatprep.subr.mxu0 %v116
    %1683 = vmatpush1.msra.mxu0 %v115
    %1684 = vmatprep.subr.mxu0 %v120
    %1685 = vmatpush1.msra.mxu0 %v119
    %1686 = vmatprep.subr.mxu0 %v124
    %1687 = vmatpush1.msra.mxu0 %v123
    %1688 = vmatprep.subr.mxu0 %v128
    %1689 = vmatpush1.msra.mxu0 %v127
    %1690 = vmatprep.subr.mxu0 0.0
    %1691 = vmatpush1.msra.mxu0 0.0
    %1692 = vmatprep.subr.mxu0 0.0
    %1693 = vmatpush1.msra.mxu0 0.0
    %1694 = vmatprep.subr.mxu0 0.0
    %1695 = vmatpush1.msra.mxu0 0.0
    %1696 = vmatprep.subr.mxu0 0.0
    %1697 = vmatpush1.msra.mxu0 0.0
    %1698 = vmatprep.subr.mxu0 0.0
    %1699 = vmatpush1.msra.mxu0 0.0
    %1700 = vmatprep.subr.mxu0 0.0
    %1701 = vmatpush1.msra.mxu0 0.0
    %1702 = vmatprep.subr.mxu0 0.0
    %1703 = vmatpush1.msra.mxu0 0.0
    %1704 = vmatprep.subr.mxu0 0.0
    %1705 = vmatpush1.msra.mxu0 0.0
    %1706 = vmatprep.subr.mxu0 0.0
    %1707 = vmatpush1.msra.mxu0 0.0
    %1708 = vmatprep.subr.mxu0 0.0
    %1709 = vmatpush1.msra.mxu0 0.0
    %1710 = vmatprep.subr.mxu0 0.0
    %1711 = vmatpush1.msra.mxu0 0.0
    %1712 = vmatprep.subr.mxu0 0.0
    %1713 = vmatpush1.msra.mxu0 0.0
    %1714 = vmatprep.subr.mxu0 0.0
    %1715 = vmatpush1.msra.mxu0 0.0
    %1716 = vmatprep.subr.mxu0 0.0
    %1717 = vmatpush1.msra.mxu0 0.0
    %1718 = vmatprep.subr.mxu0 0.0
    %1719 = vmatpush1.msra.mxu0 0.0
    %1720 = vmatprep.subr.mxu0 0.0
    %1721 = vmatpush1.msra.mxu0 0.0
    %1722 = vmatprep.mubr.f32.mxu0 0.0
    %1723 = vmatmul.mubr.f32.gmra.mrb[0].mxu0 %v1515
    %v1724 = vpop.f32.mrb[0].mxu0
    %v1725 = vadd.f32 %v1583, %v1724
    %v1726 = vpop.f32.mrb[0].mxu0
    %v1727 = vadd.f32 %v1585, %v1726
    %1728 = vdwg.mxu0
    %1729 = vmatprep.subr.mxu0 %v70
    %1730 = vmatpush1.msra.mxu0 %v69
    %1731 = vmatprep.subr.mxu0 %v74
    %1732 = vmatpush1.msra.mxu0 %v73
    %1733 = vmatprep.subr.mxu0 %v78
    %1734 = vmatpush1.msra.mxu0 %v77
    %1735 = vmatprep.subr.mxu0 %v82
    %1736 = vmatpush1.msra.mxu0 %v81
    %1737 = vmatprep.subr.mxu0 %v86
    %1738 = vmatpush1.msra.mxu0 %v85
    %1739 = vmatprep.subr.mxu0 %v90
    %1740 = vmatpush1.msra.mxu0 %v89
    %1741 = vmatprep.subr.mxu0 %v94
    %1742 = vmatpush1.msra.mxu0 %v93
    %1743 = vmatprep.subr.mxu0 %v98
    %1744 = vmatpush1.msra.mxu0 %v97
    %1745 = vmatprep.subr.mxu0 %v102
    %1746 = vmatpush1.msra.mxu0 %v101
    %1747 = vmatprep.subr.mxu0 %v106
    %1748 = vmatpush1.msra.mxu0 %v105
    %1749 = vmatprep.subr.mxu0 %v110
    %1750 = vmatpush1.msra.mxu0 %v109
    %1751 = vmatprep.subr.mxu0 %v114
    %1752 = vmatpush1.msra.mxu0 %v113
    %1753 = vmatprep.subr.mxu0 %v118
    %1754 = vmatpush1.msra.mxu0 %v117
    %1755 = vmatprep.subr.mxu0 %v122
    %1756 = vmatpush1.msra.mxu0 %v121
    %1757 = vmatprep.subr.mxu0 %v126
    %1758 = vmatpush1.msra.mxu0 %v125
    %1759 = vmatprep.subr.mxu0 %v130
    %1760 = vmatpush1.msra.mxu0 %v129
    %1761 = vmatprep.subr.mxu0 0.0
    %1762 = vmatpush1.msra.mxu0 0.0
    %1763 = vmatprep.subr.mxu0 0.0
    %1764 = vmatpush1.msra.mxu0 0.0
    %1765 = vmatprep.subr.mxu0 0.0
    %1766 = vmatpush1.msra.mxu0 0.0
    %1767 = vmatprep.subr.mxu0 0.0
    %1768 = vmatpush1.msra.mxu0 0.0
    %1769 = vmatprep.subr.mxu0 0.0
    %1770 = vmatpush1.msra.mxu0 0.0
    %1771 = vmatprep.subr.mxu0 0.0
    %1772 = vmatpush1.msra.mxu0 0.0
    %1773 = vmatprep.subr.mxu0 0.0
    %1774 = vmatpush1.msra.mxu0 0.0
    %1775 = vmatprep.subr.mxu0 0.0
    %1776 = vmatpush1.msra.mxu0 0.0
    %1777 = vmatprep.subr.mxu0 0.0
    %1778 = vmatpush1.msra.mxu0 0.0
    %1779 = vmatprep.subr.mxu0 0.0
    %1780 = vmatpush1.msra.mxu0 0.0
    %1781 = vmatprep.subr.mxu0 0.0
    %1782 = vmatpush1.msra.mxu0 0.0
    %1783 = vmatprep.subr.mxu0 0.0
    %1784 = vmatpush1.msra.mxu0 0.0
    %1785 = vmatprep.subr.mxu0 0.0
    %1786 = vmatpush1.msra.mxu0 0.0
    %1787 = vmatprep.subr.mxu0 0.0
    %1788 = vmatpush1.msra.mxu0 0.0
    %1789 = vmatprep.subr.mxu0 0.0
    %1790 = vmatpush1.msra.mxu0 0.0
    %1791 = vmatprep.subr.mxu0 0.0
    %1792 = vmatpush1.msra.mxu0 0.0
    %1793 = vmatprep.mubr.f32.mxu0 0.0
    %1794 = vmatmul.mubr.f32.gmra.mrb[0].mxu0 %v1515
    %v1795 = vpop.f32.mrb[0].mxu0
    %v1796 = vadd.f32 %v1654, %v1795
    %v1797 = vpop.f32.mrb[0].mxu0
    %v1798 = vadd.f32 %v1656, %v1797
    %1799 = vdwg.mxu0
    %v1800 = vadd.f32 %v1725, %v485
    %v1801 = vadd.f32 %v1727, %v489
    %v1802 = vadd.f32 %v1796, %v493
    %v1803 = vadd.f32 %v1798, %v497
    %v1804 = vxor.u32 %v1800, 2147483648
    %v1805 = vmul.f32 %v1804, 1.442695
    %v1806 = vpow.pop %v1805
    %v1807 = vadd.f32 %v1806, 1.0
    %v1808 = vrcp.pop %v1807
    %v1809 = vmul.f32 1.0, %v1808
    %v1810 = vxor.u32 %v1801, 2147483648
    %v1811 = vmul.f32 %v1810, 1.442695
    %v1812 = vpow.pop %v1811
    %v1813 = vadd.f32 %v1812, 1.0
    %v1814 = vrcp.pop %v1813
    %v1815 = vmul.f32 1.0, %v1814
    %v1816 = vtanh.pop %v1802
    %v1817 = vxor.u32 %v1803, 2147483648
    %v1818 = vmul.f32 %v1817, 1.442695
    %v1819 = vpow.pop %v1818
    %v1820 = vadd.f32 %v1819, 1.0
    %v1821 = vrcp.pop %v1820
    %v1822 = vmul.f32 1.0, %v1821
    %v1823 = vmul.f32 %v1815, %v1513
    %v1824 = vmul.f32 %v1809, %v1816
    %v1825 = vadd.f32 %v1823, %v1824
    %v1826 = vtanh.pop %v1825
    %v1827 = vmul.f32 %v1822, %v1826
    %vm1828 = vcmp.gt.s32.totalorder %v66, 4
    %v1829 = vsel %vm1828, 1, 0
    %1830 = vset.pattern.permute.xlu0 0
    %1831 = vperm.xlu0 %1830, %v1829
    %v1832 = vpop.permute.xlu0 %1831
    %vm1833 = vcmp.eq.s32.totalorder %v1832, 1
    %v1834 = vsel %vm1833, %v1827, 0.0
    %s1835 = scalar_lea.vmem [#allocation8], 32
    %1836 = vst [vmem:[%s1835] sm:$0xff] %v1834
    %v1837 = vsel %vm1833, %v1827, %v1512
    %v1838 = vsel %vm1833, %v1825, %v1513
    %s1839 = scalar_lea.vmem [#allocation2], 40
    %v1840 = vld [vmem:[%s1839] sm:$0xff]
    %1841 = vmatprep.subr.mxu0 %v132
    %1842 = vmatpush1.msra.mxu0 %v131
    %1843 = vmatprep.subr.mxu0 %v136
    %1844 = vmatpush1.msra.mxu0 %v135
    %1845 = vmatprep.subr.mxu0 %v140
    %1846 = vmatpush1.msra.mxu0 %v139
    %1847 = vmatprep.subr.mxu0 %v144
    %1848 = vmatpush1.msra.mxu0 %v143
    %1849 = vmatprep.subr.mxu0 %v148
    %1850 = vmatpush1.msra.mxu0 %v147
    %1851 = vmatprep.subr.mxu0 %v152
    %1852 = vmatpush1.msra.mxu0 %v151
    %1853 = vmatprep.subr.mxu0 %v156
    %1854 = vmatpush1.msra.mxu0 %v155
    %1855 = vmatprep.subr.mxu0 %v160
    %1856 = vmatpush1.msra.mxu0 %v159
    %1857 = vmatprep.subr.mxu0 %v164
    %1858 = vmatpush1.msra.mxu0 %v163
    %1859 = vmatprep.subr.mxu0 %v168
    %1860 = vmatpush1.msra.mxu0 %v167
    %1861 = vmatprep.subr.mxu0 %v172
    %1862 = vmatpush1.msra.mxu0 %v171
    %1863 = vmatprep.subr.mxu0 %v176
    %1864 = vmatpush1.msra.mxu0 %v175
    %1865 = vmatprep.subr.mxu0 %v180
    %1866 = vmatpush1.msra.mxu0 %v179
    %1867 = vmatprep.subr.mxu0 %v184
    %1868 = vmatpush1.msra.mxu0 %v183
    %1869 = vmatprep.subr.mxu0 %v188
    %1870 = vmatpush1.msra.mxu0 %v187
    %1871 = vmatprep.subr.mxu0 %v192
    %1872 = vmatpush1.msra.mxu0 %v191
    %1873 = vmatprep.subr.mxu0 0.0
    %1874 = vmatpush1.msra.mxu0 0.0
    %1875 = vmatprep.subr.mxu0 0.0
    %1876 = vmatpush1.msra.mxu0 0.0
    %1877 = vmatprep.subr.mxu0 0.0
    %1878 = vmatpush1.msra.mxu0 0.0
    %1879 = vmatprep.subr.mxu0 0.0
    %1880 = vmatpush1.msra.mxu0 0.0
    %1881 = vmatprep.subr.mxu0 0.0
    %1882 = vmatpush1.msra.mxu0 0.0
    %1883 = vmatprep.subr.mxu0 0.0
    %1884 = vmatpush1.msra.mxu0 0.0
    %1885 = vmatprep.subr.mxu0 0.0
    %1886 = vmatpush1.msra.mxu0 0.0
    %1887 = vmatprep.subr.mxu0 0.0
    %1888 = vmatpush1.msra.mxu0 0.0
    %1889 = vmatprep.subr.mxu0 0.0
    %1890 = vmatpush1.msra.mxu0 0.0
    %1891 = vmatprep.subr.mxu0 0.0
    %1892 = vmatpush1.msra.mxu0 0.0
    %1893 = vmatprep.subr.mxu0 0.0
    %1894 = vmatpush1.msra.mxu0 0.0
    %1895 = vmatprep.subr.mxu0 0.0
    %1896 = vmatpush1.msra.mxu0 0.0
    %1897 = vmatprep.subr.mxu0 0.0
    %1898 = vmatpush1.msra.mxu0 0.0
    %1899 = vmatprep.subr.mxu0 0.0
    %1900 = vmatpush1.msra.mxu0 0.0
    %1901 = vmatprep.subr.mxu0 0.0
    %1902 = vmatpush1.msra.mxu0 0.0
    %1903 = vmatprep.subr.mxu0 0.0
    %1904 = vmatpush1.msra.mxu0 0.0
    %1905 = vmatprep.mubr.f32.mxu0 0.0
    %1906 = vmatmul.mubr.f32.gmra.mrb[0].mxu0 %v1837
    %v1907 = vpop.f32.mrb[0].mxu0
    %v1908 = vadd.f32 0.0, %v1907
    %v1909 = vpop.f32.mrb[0].mxu0
    %v1910 = vadd.f32 0.0, %v1909
    %1911 = vdwg.mxu0
    %1912 = vmatprep.subr.mxu0 %v134
    %1913 = vmatpush1.msra.mxu0 %v133
    %1914 = vmatprep.subr.mxu0 %v138
    %1915 = vmatpush1.msra.mxu0 %v137
    %1916 = vmatprep.subr.mxu0 %v142
    %1917 = vmatpush1.msra.mxu0 %v141
    %1918 = vmatprep.subr.mxu0 %v146
    %1919 = vmatpush1.msra.mxu0 %v145
    %1920 = vmatprep.subr.mxu0 %v150
    %1921 = vmatpush1.msra.mxu0 %v149
    %1922 = vmatprep.subr.mxu0 %v154
    %1923 = vmatpush1.msra.mxu0 %v153
    %1924 = vmatprep.subr.mxu0 %v158
    %1925 = vmatpush1.msra.mxu0 %v157
    %1926 = vmatprep.subr.mxu0 %v162
    %1927 = vmatpush1.msra.mxu0 %v161
    %1928 = vmatprep.subr.mxu0 %v166
    %1929 = vmatpush1.msra.mxu0 %v165
    %1930 = vmatprep.subr.mxu0 %v170
    %1931 = vmatpush1.msra.mxu0 %v169
    %1932 = vmatprep.subr.mxu0 %v174
    %1933 = vmatpush1.msra.mxu0 %v173
    %1934 = vmatprep.subr.mxu0 %v178
    %1935 = vmatpush1.msra.mxu0 %v177
    %1936 = vmatprep.subr.mxu0 %v182
    %1937 = vmatpush1.msra.mxu0 %v181
    %1938 = vmatprep.subr.mxu0 %v186
    %1939 = vmatpush1.msra.mxu0 %v185
    %1940 = vmatprep.subr.mxu0 %v190
    %1941 = vmatpush1.msra.mxu0 %v189
    %1942 = vmatprep.subr.mxu0 %v194
    %1943 = vmatpush1.msra.mxu0 %v193
    %1944 = vmatprep.subr.mxu0 0.0
    %1945 = vmatpush1.msra.mxu0 0.0
    %1946 = vmatprep.subr.mxu0 0.0
    %1947 = vmatpush1.msra.mxu0 0.0
    %1948 = vmatprep.subr.mxu0 0.0
    %1949 = vmatpush1.msra.mxu0 0.0
    %1950 = vmatprep.subr.mxu0 0.0
    %1951 = vmatpush1.msra.mxu0 0.0
    %1952 = vmatprep.subr.mxu0 0.0
    %1953 = vmatpush1.msra.mxu0 0.0
    %1954 = vmatprep.subr.mxu0 0.0
    %1955 = vmatpush1.msra.mxu0 0.0
    %1956 = vmatprep.subr.mxu0 0.0
    %1957 = vmatpush1.msra.mxu0 0.0
    %1958 = vmatprep.subr.mxu0 0.0
    %1959 = vmatpush1.msra.mxu0 0.0
    %1960 = vmatprep.subr.mxu0 0.0
    %1961 = vmatpush1.msra.mxu0 0.0
    %1962 = vmatprep.subr.mxu0 0.0
    %1963 = vmatpush1.msra.mxu0 0.0
    %1964 = vmatprep.subr.mxu0 0.0
    %1965 = vmatpush1.msra.mxu0 0.0
    %1966 = vmatprep.subr.mxu0 0.0
    %1967 = vmatpush1.msra.mxu0 0.0
    %1968 = vmatprep.subr.mxu0 0.0
    %1969 = vmatpush1.msra.mxu0 0.0
    %1970 = vmatprep.subr.mxu0 0.0
    %1971 = vmatpush1.msra.mxu0 0.0
    %1972 = vmatprep.subr.mxu0 0.0
    %1973 = vmatpush1.msra.mxu0 0.0
    %1974 = vmatprep.subr.mxu0 0.0
    %1975 = vmatpush1.msra.mxu0 0.0
    %1976 = vmatprep.mubr.f32.mxu0 0.0
    %1977 = vmatmul.mubr.f32.gmra.mrb[0].mxu0 %v1837
    %v1978 = vpop.f32.mrb[0].mxu0
    %v1979 = vadd.f32 0.0, %v1978
    %v1980 = vpop.f32.mrb[0].mxu0
    %v1981 = vadd.f32 0.0, %v1980
    %1982 = vdwg.mxu0
    %1983 = vmatprep.subr.mxu0 %v68
    %1984 = vmatpush1.msra.mxu0 %v67
    %1985 = vmatprep.subr.mxu0 %v72
    %1986 = vmatpush1.msra.mxu0 %v71
    %1987 = vmatprep.subr.mxu0 %v76
    %1988 = vmatpush1.msra.mxu0 %v75
    %1989 = vmatprep.subr.mxu0 %v80
    %1990 = vmatpush1.msra.mxu0 %v79
    %1991 = vmatprep.subr.mxu0 %v84
    %1992 = vmatpush1.msra.mxu0 %v83
    %1993 = vmatprep.subr.mxu0 %v88
    %1994 = vmatpush1.msra.mxu0 %v87
    %1995 = vmatprep.subr.mxu0 %v92
    %1996 = vmatpush1.msra.mxu0 %v91
    %1997 = vmatprep.subr.mxu0 %v96
    %1998 = vmatpush1.msra.mxu0 %v95
    %1999 = vmatprep.subr.mxu0 %v100
    %2000 = vmatpush1.msra.mxu0 %v99
    %2001 = vmatprep.subr.mxu0 %v104
    %2002 = vmatpush1.msra.mxu0 %v103
    %2003 = vmatprep.subr.mxu0 %v108
    %2004 = vmatpush1.msra.mxu0 %v107
    %2005 = vmatprep.subr.mxu0 %v112
    %2006 = vmatpush1.msra.mxu0 %v111
    %2007 = vmatprep.subr.mxu0 %v116
    %2008 = vmatpush1.msra.mxu0 %v115
    %2009 = vmatprep.subr.mxu0 %v120
    %2010 = vmatpush1.msra.mxu0 %v119
    %2011 = vmatprep.subr.mxu0 %v124
    %2012 = vmatpush1.msra.mxu0 %v123
    %2013 = vmatprep.subr.mxu0 %v128
    %2014 = vmatpush1.msra.mxu0 %v127
    %2015 = vmatprep.subr.mxu0 0.0
    %2016 = vmatpush1.msra.mxu0 0.0
    %2017 = vmatprep.subr.mxu0 0.0
    %2018 = vmatpush1.msra.mxu0 0.0
    %2019 = vmatprep.subr.mxu0 0.0
    %2020 = vmatpush1.msra.mxu0 0.0
    %2021 = vmatprep.subr.mxu0 0.0
    %2022 = vmatpush1.msra.mxu0 0.0
    %2023 = vmatprep.subr.mxu0 0.0
    %2024 = vmatpush1.msra.mxu0 0.0
    %2025 = vmatprep.subr.mxu0 0.0
    %2026 = vmatpush1.msra.mxu0 0.0
    %2027 = vmatprep.subr.mxu0 0.0
    %2028 = vmatpush1.msra.mxu0 0.0
    %2029 = vmatprep.subr.mxu0 0.0
    %2030 = vmatpush1.msra.mxu0 0.0
    %2031 = vmatprep.subr.mxu0 0.0
    %2032 = vmatpush1.msra.mxu0 0.0
    %2033 = vmatprep.subr.mxu0 0.0
    %2034 = vmatpush1.msra.mxu0 0.0
    %2035 = vmatprep.subr.mxu0 0.0
    %2036 = vmatpush1.msra.mxu0 0.0
    %2037 = vmatprep.subr.mxu0 0.0
    %2038 = vmatpush1.msra.mxu0 0.0
    %2039 = vmatprep.subr.mxu0 0.0
    %2040 = vmatpush1.msra.mxu0 0.0
    %2041 = vmatprep.subr.mxu0 0.0
    %2042 = vmatpush1.msra.mxu0 0.0
    %2043 = vmatprep.subr.mxu0 0.0
    %2044 = vmatpush1.msra.mxu0 0.0
    %2045 = vmatprep.subr.mxu0 0.0
    %2046 = vmatpush1.msra.mxu0 0.0
    %2047 = vmatprep.mubr.f32.mxu0 0.0
    %2048 = vmatmul.mubr.f32.gmra.mrb[0].mxu0 %v1840
    %v2049 = vpop.f32.mrb[0].mxu0
    %v2050 = vadd.f32 %v1908, %v2049
    %v2051 = vpop.f32.mrb[0].mxu0
    %v2052 = vadd.f32 %v1910, %v2051
    %2053 = vdwg.mxu0
    %2054 = vmatprep.subr.mxu0 %v70
    %2055 = vmatpush1.msra.mxu0 %v69
    %2056 = vmatprep.subr.mxu0 %v74
    %2057 = vmatpush1.msra.mxu0 %v73
    %2058 = vmatprep.subr.mxu0 %v78
    %2059 = vmatpush1.msra.mxu0 %v77
    %2060 = vmatprep.subr.mxu0 %v82
    %2061 = vmatpush1.msra.mxu0 %v81
    %2062 = vmatprep.subr.mxu0 %v86
    %2063 = vmatpush1.msra.mxu0 %v85
    %2064 = vmatprep.subr.mxu0 %v90
    %2065 = vmatpush1.msra.mxu0 %v89
    %2066 = vmatprep.subr.mxu0 %v94
    %2067 = vmatpush1.msra.mxu0 %v93
    %2068 = vmatprep.subr.mxu0 %v98
    %2069 = vmatpush1.msra.mxu0 %v97
    %2070 = vmatprep.subr.mxu0 %v102
    %2071 = vmatpush1.msra.mxu0 %v101
    %2072 = vmatprep.subr.mxu0 %v106
    %2073 = vmatpush1.msra.mxu0 %v105
    %2074 = vmatprep.subr.mxu0 %v110
    %2075 = vmatpush1.msra.mxu0 %v109
    %2076 = vmatprep.subr.mxu0 %v114
    %2077 = vmatpush1.msra.mxu0 %v113
    %2078 = vmatprep.subr.mxu0 %v118
    %2079 = vmatpush1.msra.mxu0 %v117
    %2080 = vmatprep.subr.mxu0 %v122
    %2081 = vmatpush1.msra.mxu0 %v121
    %2082 = vmatprep.subr.mxu0 %v126
    %2083 = vmatpush1.msra.mxu0 %v125
    %2084 = vmatprep.subr.mxu0 %v130
    %2085 = vmatpush1.msra.mxu0 %v129
    %2086 = vmatprep.subr.mxu0 0.0
    %2087 = vmatpush1.msra.mxu0 0.0
    %2088 = vmatprep.subr.mxu0 0.0
    %2089 = vmatpush1.msra.mxu0 0.0
    %2090 = vmatprep.subr.mxu0 0.0
    %2091 = vmatpush1.msra.mxu0 0.0
    %2092 = vmatprep.subr.mxu0 0.0
    %2093 = vmatpush1.msra.mxu0 0.0
    %2094 = vmatprep.subr.mxu0 0.0
    %2095 = vmatpush1.msra.mxu0 0.0
    %2096 = vmatprep.subr.mxu0 0.0
    %2097 = vmatpush1.msra.mxu0 0.0
    %2098 = vmatprep.subr.mxu0 0.0
    %2099 = vmatpush1.msra.mxu0 0.0
    %2100 = vmatprep.subr.mxu0 0.0
    %2101 = vmatpush1.msra.mxu0 0.0
    %2102 = vmatprep.subr.mxu0 0.0
    %2103 = vmatpush1.msra.mxu0 0.0
    %2104 = vmatprep.subr.mxu0 0.0
    %2105 = vmatpush1.msra.mxu0 0.0
    %2106 = vmatprep.subr.mxu0 0.0
    %2107 = vmatpush1.msra.mxu0 0.0
    %2108 = vmatprep.subr.mxu0 0.0
    %2109 = vmatpush1.msra.mxu0 0.0
    %2110 = vmatprep.subr.mxu0 0.0
    %2111 = vmatpush1.msra.mxu0 0.0
    %2112 = vmatprep.subr.mxu0 0.0
    %2113 = vmatpush1.msra.mxu0 0.0
    %2114 = vmatprep.subr.mxu0 0.0
    %2115 = vmatpush1.msra.mxu0 0.0
    %2116 = vmatprep.subr.mxu0 0.0
    %2117 = vmatpush1.msra.mxu0 0.0
    %2118 = vmatprep.mubr.f32.mxu0 0.0
    %2119 = vmatmul.mubr.f32.gmra.mrb[0].mxu0 %v1840
    %v2120 = vpop.f32.mrb[0].mxu0
    %v2121 = vadd.f32 %v1979, %v2120
    %v2122 = vpop.f32.mrb[0].mxu0
    %v2123 = vadd.f32 %v1981, %v2122
    %2124 = vdwg.mxu0
    %v2125 = vadd.f32 %v2050, %v485
    %v2126 = vadd.f32 %v2052, %v489
    %v2127 = vadd.f32 %v2121, %v493
    %v2128 = vadd.f32 %v2123, %v497
    %v2129 = vxor.u32 %v2125, 2147483648
    %v2130 = vmul.f32 %v2129, 1.442695
    %v2131 = vpow.pop %v2130
    %v2132 = vadd.f32 %v2131, 1.0
    %v2133 = vrcp.pop %v2132
    %v2134 = vmul.f32 1.0, %v2133
    %v2135 = vxor.u32 %v2126, 2147483648
    %v2136 = vmul.f32 %v2135, 1.442695
    %v2137 = vpow.pop %v2136
    %v2138 = vadd.f32 %v2137, 1.0
    %v2139 = vrcp.pop %v2138
    %v2140 = vmul.f32 1.0, %v2139
    %v2141 = vtanh.pop %v2127
    %v2142 = vxor.u32 %v2128, 2147483648
    %v2143 = vmul.f32 %v2142, 1.442695
    %v2144 = vpow.pop %v2143
    %v2145 = vadd.f32 %v2144, 1.0
    %v2146 = vrcp.pop %v2145
    %v2147 = vmul.f32 1.0, %v2146
    %v2148 = vmul.f32 %v2140, %v1838
    %v2149 = vmul.f32 %v2134, %v2141
    %v2150 = vadd.f32 %v2148, %v2149
    %v2151 = vtanh.pop %v2150
    %v2152 = vmul.f32 %v2147, %v2151
    %vm2153 = vcmp.gt.s32.totalorder %v66, 5
    %v2154 = vsel %vm2153, 1, 0
    %2155 = vset.pattern.permute.xlu0 0
    %2156 = vperm.xlu0 %2155, %v2154
    %v2157 = vpop.permute.xlu0 %2156
    %vm2158 = vcmp.eq.s32.totalorder %v2157, 1
    %v2159 = vsel %vm2158, %v2152, 0.0
    %s2160 = scalar_lea.vmem [#allocation8], 40
    %2161 = vst [vmem:[%s2160] sm:$0xff] %v2159
    %v2162 = vsel %vm2158, %v2152, %v1837
    %v2163 = vsel %vm2158, %v2150, %v1838
    %s2164 = scalar_lea.vmem [#allocation2], 48
    %v2165 = vld [vmem:[%s2164] sm:$0xff]
    %2166 = vmatprep.subr.mxu0 %v132
    %2167 = vmatpush1.msra.mxu0 %v131
    %2168 = vmatprep.subr.mxu0 %v136
    %2169 = vmatpush1.msra.mxu0 %v135
    %2170 = vmatprep.subr.mxu0 %v140
    %2171 = vmatpush1.msra.mxu0 %v139
    %2172 = vmatprep.subr.mxu0 %v144
    %2173 = vmatpush1.msra.mxu0 %v143
    %2174 = vmatprep.subr.mxu0 %v148
    %2175 = vmatpush1.msra.mxu0 %v147
    %2176 = vmatprep.subr.mxu0 %v152
    %2177 = vmatpush1.msra.mxu0 %v151
    %2178 = vmatprep.subr.mxu0 %v156
    %2179 = vmatpush1.msra.mxu0 %v155
    %2180 = vmatprep.subr.mxu0 %v160
    %2181 = vmatpush1.msra.mxu0 %v159
    %2182 = vmatprep.subr.mxu0 %v164
    %2183 = vmatpush1.msra.mxu0 %v163
    %2184 = vmatprep.subr.mxu0 %v168
    %2185 = vmatpush1.msra.mxu0 %v167
    %2186 = vmatprep.subr.mxu0 %v172
    %2187 = vmatpush1.msra.mxu0 %v171
    %2188 = vmatprep.subr.mxu0 %v176
    %2189 = vmatpush1.msra.mxu0 %v175
    %2190 = vmatprep.subr.mxu0 %v180
    %2191 = vmatpush1.msra.mxu0 %v179
    %2192 = vmatprep.subr.mxu0 %v184
    %2193 = vmatpush1.msra.mxu0 %v183
    %2194 = vmatprep.subr.mxu0 %v188
    %2195 = vmatpush1.msra.mxu0 %v187
    %2196 = vmatprep.subr.mxu0 %v192
    %2197 = vmatpush1.msra.mxu0 %v191
    %2198 = vmatprep.subr.mxu0 0.0
    %2199 = vmatpush1.msra.mxu0 0.0
    %2200 = vmatprep.subr.mxu0 0.0
    %2201 = vmatpush1.msra.mxu0 0.0
    %2202 = vmatprep.subr.mxu0 0.0
    %2203 = vmatpush1.msra.mxu0 0.0
    %2204 = vmatprep.subr.mxu0 0.0
    %2205 = vmatpush1.msra.mxu0 0.0
    %2206 = vmatprep.subr.mxu0 0.0
    %2207 = vmatpush1.msra.mxu0 0.0
    %2208 = vmatprep.subr.mxu0 0.0
    %2209 = vmatpush1.msra.mxu0 0.0
    %2210 = vmatprep.subr.mxu0 0.0
    %2211 = vmatpush1.msra.mxu0 0.0
    %2212 = vmatprep.subr.mxu0 0.0
    %2213 = vmatpush1.msra.mxu0 0.0
    %2214 = vmatprep.subr.mxu0 0.0
    %2215 = vmatpush1.msra.mxu0 0.0
    %2216 = vmatprep.subr.mxu0 0.0
    %2217 = vmatpush1.msra.mxu0 0.0
    %2218 = vmatprep.subr.mxu0 0.0
    %2219 = vmatpush1.msra.mxu0 0.0
    %2220 = vmatprep.subr.mxu0 0.0
    %2221 = vmatpush1.msra.mxu0 0.0
    %2222 = vmatprep.subr.mxu0 0.0
    %2223 = vmatpush1.msra.mxu0 0.0
    %2224 = vmatprep.subr.mxu0 0.0
    %2225 = vmatpush1.msra.mxu0 0.0
    %2226 = vmatprep.subr.mxu0 0.0
    %2227 = vmatpush1.msra.mxu0 0.0
    %2228 = vmatprep.subr.mxu0 0.0
    %2229 = vmatpush1.msra.mxu0 0.0
    %2230 = vmatprep.mubr.f32.mxu0 0.0
    %2231 = vmatmul.mubr.f32.gmra.mrb[0].mxu0 %v2162
    %v2232 = vpop.f32.mrb[0].mxu0
    %v2233 = vadd.f32 0.0, %v2232
    %v2234 = vpop.f32.mrb[0].mxu0
    %v2235 = vadd.f32 0.0, %v2234
    %2236 = vdwg.mxu0
    %2237 = vmatprep.subr.mxu0 %v134
    %2238 = vmatpush1.msra.mxu0 %v133
    %2239 = vmatprep.subr.mxu0 %v138
    %2240 = vmatpush1.msra.mxu0 %v137
    %2241 = vmatprep.subr.mxu0 %v142
    %2242 = vmatpush1.msra.mxu0 %v141
    %2243 = vmatprep.subr.mxu0 %v146
    %2244 = vmatpush1.msra.mxu0 %v145
    %2245 = vmatprep.subr.mxu0 %v150
    %2246 = vmatpush1.msra.mxu0 %v149
    %2247 = vmatprep.subr.mxu0 %v154
    %2248 = vmatpush1.msra.mxu0 %v153
    %2249 = vmatprep.subr.mxu0 %v158
    %2250 = vmatpush1.msra.mxu0 %v157
    %2251 = vmatprep.subr.mxu0 %v162
    %2252 = vmatpush1.msra.mxu0 %v161
    %2253 = vmatprep.subr.mxu0 %v166
    %2254 = vmatpush1.msra.mxu0 %v165
    %2255 = vmatprep.subr.mxu0 %v170
    %2256 = vmatpush1.msra.mxu0 %v169
    %2257 = vmatprep.subr.mxu0 %v174
    %2258 = vmatpush1.msra.mxu0 %v173
    %2259 = vmatprep.subr.mxu0 %v178
    %2260 = vmatpush1.msra.mxu0 %v177
    %2261 = vmatprep.subr.mxu0 %v182
    %2262 = vmatpush1.msra.mxu0 %v181
    %2263 = vmatprep.subr.mxu0 %v186
    %2264 = vmatpush1.msra.mxu0 %v185
    %2265 = vmatprep.subr.mxu0 %v190
    %2266 = vmatpush1.msra.mxu0 %v189
    %2267 = vmatprep.subr.mxu0 %v194
    %2268 = vmatpush1.msra.mxu0 %v193
    %2269 = vmatprep.subr.mxu0 0.0
    %2270 = vmatpush1.msra.mxu0 0.0
    %2271 = vmatprep.subr.mxu0 0.0
    %2272 = vmatpush1.msra.mxu0 0.0
    %2273 = vmatprep.subr.mxu0 0.0
    %2274 = vmatpush1.msra.mxu0 0.0
    %2275 = vmatprep.subr.mxu0 0.0
    %2276 = vmatpush1.msra.mxu0 0.0
    %2277 = vmatprep.subr.mxu0 0.0
    %2278 = vmatpush1.msra.mxu0 0.0
    %2279 = vmatprep.subr.mxu0 0.0
    %2280 = vmatpush1.msra.mxu0 0.0
    %2281 = vmatprep.subr.mxu0 0.0
    %2282 = vmatpush1.msra.mxu0 0.0
    %2283 = vmatprep.subr.mxu0 0.0
    %2284 = vmatpush1.msra.mxu0 0.0
    %2285 = vmatprep.subr.mxu0 0.0
    %2286 = vmatpush1.msra.mxu0 0.0
    %2287 = vmatprep.subr.mxu0 0.0
    %2288 = vmatpush1.msra.mxu0 0.0
    %2289 = vmatprep.subr.mxu0 0.0
    %2290 = vmatpush1.msra.mxu0 0.0
    %2291 = vmatprep.subr.mxu0 0.0
    %2292 = vmatpush1.msra.mxu0 0.0
    %2293 = vmatprep.subr.mxu0 0.0
    %2294 = vmatpush1.msra.mxu0 0.0
    %2295 = vmatprep.subr.mxu0 0.0
    %2296 = vmatpush1.msra.mxu0 0.0
    %2297 = vmatprep.subr.mxu0 0.0
    %2298 = vmatpush1.msra.mxu0 0.0
    %2299 = vmatprep.subr.mxu0 0.0
    %2300 = vmatpush1.msra.mxu0 0.0
    %2301 = vmatprep.mubr.f32.mxu0 0.0
    %2302 = vmatmul.mubr.f32.gmra.mrb[0].mxu0 %v2162
    %v2303 = vpop.f32.mrb[0].mxu0
    %v2304 = vadd.f32 0.0, %v2303
    %v2305 = vpop.f32.mrb[0].mxu0
    %v2306 = vadd.f32 0.0, %v2305
    %2307 = vdwg.mxu0
    %2308 = vmatprep.subr.mxu0 %v68
    %2309 = vmatpush1.msra.mxu0 %v67
    %2310 = vmatprep.subr.mxu0 %v72
    %2311 = vmatpush1.msra.mxu0 %v71
    %2312 = vmatprep.subr.mxu0 %v76
    %2313 = vmatpush1.msra.mxu0 %v75
    %2314 = vmatprep.subr.mxu0 %v80
    %2315 = vmatpush1.msra.mxu0 %v79
    %2316 = vmatprep.subr.mxu0 %v84
    %2317 = vmatpush1.msra.mxu0 %v83
    %2318 = vmatprep.subr.mxu0 %v88
    %2319 = vmatpush1.msra.mxu0 %v87
    %2320 = vmatprep.subr.mxu0 %v92
    %2321 = vmatpush1.msra.mxu0 %v91
    %2322 = vmatprep.subr.mxu0 %v96
    %2323 = vmatpush1.msra.mxu0 %v95
    %2324 = vmatprep.subr.mxu0 %v100
    %2325 = vmatpush1.msra.mxu0 %v99
    %2326 = vmatprep.subr.mxu0 %v104
    %2327 = vmatpush1.msra.mxu0 %v103
    %2328 = vmatprep.subr.mxu0 %v108
    %2329 = vmatpush1.msra.mxu0 %v107
    %2330 = vmatprep.subr.mxu0 %v112
    %2331 = vmatpush1.msra.mxu0 %v111
    %2332 = vmatprep.subr.mxu0 %v116
    %2333 = vmatpush1.msra.mxu0 %v115
    %2334 = vmatprep.subr.mxu0 %v120
    %2335 = vmatpush1.msra.mxu0 %v119
    %2336 = vmatprep.subr.mxu0 %v124
    %2337 = vmatpush1.msra.mxu0 %v123
    %2338 = vmatprep.subr.mxu0 %v128
    %2339 = vmatpush1.msra.mxu0 %v127
    %2340 = vmatprep.subr.mxu0 0.0
    %2341 = vmatpush1.msra.mxu0 0.0
    %2342 = vmatprep.subr.mxu0 0.0
    %2343 = vmatpush1.msra.mxu0 0.0
    %2344 = vmatprep.subr.mxu0 0.0
    %2345 = vmatpush1.msra.mxu0 0.0
    %2346 = vmatprep.subr.mxu0 0.0
    %2347 = vmatpush1.msra.mxu0 0.0
    %2348 = vmatprep.subr.mxu0 0.0
    %2349 = vmatpush1.msra.mxu0 0.0
    %2350 = vmatprep.subr.mxu0 0.0
    %2351 = vmatpush1.msra.mxu0 0.0
    %2352 = vmatprep.subr.mxu0 0.0
    %2353 = vmatpush1.msra.mxu0 0.0
    %2354 = vmatprep.subr.mxu0 0.0
    %2355 = vmatpush1.msra.mxu0 0.0
    %2356 = vmatprep.subr.mxu0 0.0
    %2357 = vmatpush1.msra.mxu0 0.0
    %2358 = vmatprep.subr.mxu0 0.0
    %2359 = vmatpush1.msra.mxu0 0.0
    %2360 = vmatprep.subr.mxu0 0.0
    %2361 = vmatpush1.msra.mxu0 0.0
    %2362 = vmatprep.subr.mxu0 0.0
    %2363 = vmatpush1.msra.mxu0 0.0
    %2364 = vmatprep.subr.mxu0 0.0
    %2365 = vmatpush1.msra.mxu0 0.0
    %2366 = vmatprep.subr.mxu0 0.0
    %2367 = vmatpush1.msra.mxu0 0.0
    %2368 = vmatprep.subr.mxu0 0.0
    %2369 = vmatpush1.msra.mxu0 0.0
    %2370 = vmatprep.subr.mxu0 0.0
    %2371 = vmatpush1.msra.mxu0 0.0
    %2372 = vmatprep.mubr.f32.mxu0 0.0
    %2373 = vmatmul.mubr.f32.gmra.mrb[0].mxu0 %v2165
    %v2374 = vpop.f32.mrb[0].mxu0
    %v2375 = vadd.f32 %v2233, %v2374
    %v2376 = vpop.f32.mrb[0].mxu0
    %v2377 = vadd.f32 %v2235, %v2376
    %2378 = vdwg.mxu0
    %2379 = vmatprep.subr.mxu0 %v70
    %2380 = vmatpush1.msra.mxu0 %v69
    %2381 = vmatprep.subr.mxu0 %v74
    %2382 = vmatpush1.msra.mxu0 %v73
    %2383 = vmatprep.subr.mxu0 %v78
    %2384 = vmatpush1.msra.mxu0 %v77
    %2385 = vmatprep.subr.mxu0 %v82
    %2386 = vmatpush1.msra.mxu0 %v81
    %2387 = vmatprep.subr.mxu0 %v86
    %2388 = vmatpush1.msra.mxu0 %v85
    %2389 = vmatprep.subr.mxu0 %v90
    %2390 = vmatpush1.msra.mxu0 %v89
    %2391 = vmatprep.subr.mxu0 %v94
    %2392 = vmatpush1.msra.mxu0 %v93
    %2393 = vmatprep.subr.mxu0 %v98
    %2394 = vmatpush1.msra.mxu0 %v97
    %2395 = vmatprep.subr.mxu0 %v102
    %2396 = vmatpush1.msra.mxu0 %v101
    %2397 = vmatprep.subr.mxu0 %v106
    %2398 = vmatpush1.msra.mxu0 %v105
    %2399 = vmatprep.subr.mxu0 %v110
    %2400 = vmatpush1.msra.mxu0 %v109
    %2401 = vmatprep.subr.mxu0 %v114
    %2402 = vmatpush1.msra.mxu0 %v113
    %2403 = vmatprep.subr.mxu0 %v118
    %2404 = vmatpush1.msra.mxu0 %v117
    %2405 = vmatprep.subr.mxu0 %v122
    %2406 = vmatpush1.msra.mxu0 %v121
    %2407 = vmatprep.subr.mxu0 %v126
    %2408 = vmatpush1.msra.mxu0 %v125
    %2409 = vmatprep.subr.mxu0 %v130
    %2410 = vmatpush1.msra.mxu0 %v129
    %2411 = vmatprep.subr.mxu0 0.0
    %2412 = vmatpush1.msra.mxu0 0.0
    %2413 = vmatprep.subr.mxu0 0.0
    %2414 = vmatpush1.msra.mxu0 0.0
    %2415 = vmatprep.subr.mxu0 0.0
    %2416 = vmatpush1.msra.mxu0 0.0
    %2417 = vmatprep.subr.mxu0 0.0
    %2418 = vmatpush1.msra.mxu0 0.0
    %2419 = vmatprep.subr.mxu0 0.0
    %2420 = vmatpush1.msra.mxu0 0.0
    %2421 = vmatprep.subr.mxu0 0.0
    %2422 = vmatpush1.msra.mxu0 0.0
    %2423 = vmatprep.subr.mxu0 0.0
    %2424 = vmatpush1.msra.mxu0 0.0
    %2425 = vmatprep.subr.mxu0 0.0
    %2426 = vmatpush1.msra.mxu0 0.0
    %2427 = vmatprep.subr.mxu0 0.0
    %2428 = vmatpush1.msra.mxu0 0.0
    %2429 = vmatprep.subr.mxu0 0.0
    %2430 = vmatpush1.msra.mxu0 0.0
    %2431 = vmatprep.subr.mxu0 0.0
    %2432 = vmatpush1.msra.mxu0 0.0
    %2433 = vmatprep.subr.mxu0 0.0
    %2434 = vmatpush1.msra.mxu0 0.0
    %2435 = vmatprep.subr.mxu0 0.0
    %2436 = vmatpush1.msra.mxu0 0.0
    %2437 = vmatprep.subr.mxu0 0.0
    %2438 = vmatpush1.msra.mxu0 0.0
    %2439 = vmatprep.subr.mxu0 0.0
    %2440 = vmatpush1.msra.mxu0 0.0
    %2441 = vmatprep.subr.mxu0 0.0
    %2442 = vmatpush1.msra.mxu0 0.0
    %2443 = vmatprep.mubr.f32.mxu0 0.0
    %2444 = vmatmul.mubr.f32.gmra.mrb[0].mxu0 %v2165
    %v2445 = vpop.f32.mrb[0].mxu0
    %v2446 = vadd.f32 %v2304, %v2445
    %v2447 = vpop.f32.mrb[0].mxu0
    %v2448 = vadd.f32 %v2306, %v2447
    %2449 = vdwg.mxu0
    %v2450 = vadd.f32 %v2375, %v485
    %v2451 = vadd.f32 %v2377, %v489
    %v2452 = vadd.f32 %v2446, %v493
    %v2453 = vadd.f32 %v2448, %v497
    %v2454 = vxor.u32 %v2450, 2147483648
    %v2455 = vmul.f32 %v2454, 1.442695
    %v2456 = vpow.pop %v2455
    %v2457 = vadd.f32 %v2456, 1.0
    %v2458 = vrcp.pop %v2457
    %v2459 = vmul.f32 1.0, %v2458
    %v2460 = vxor.u32 %v2451, 2147483648
    %v2461 = vmul.f32 %v2460, 1.442695
    %v2462 = vpow.pop %v2461
    %v2463 = vadd.f32 %v2462, 1.0
    %v2464 = vrcp.pop %v2463
    %v2465 = vmul.f32 1.0, %v2464
    %v2466 = vtanh.pop %v2452
    %v2467 = vxor.u32 %v2453, 2147483648
    %v2468 = vmul.f32 %v2467, 1.442695
    %v2469 = vpow.pop %v2468
    %v2470 = vadd.f32 %v2469, 1.0
    %v2471 = vrcp.pop %v2470
    %v2472 = vmul.f32 1.0, %v2471
    %v2473 = vmul.f32 %v2465, %v2163
    %v2474 = vmul.f32 %v2459, %v2466
    %v2475 = vadd.f32 %v2473, %v2474
    %v2476 = vtanh.pop %v2475
    %v2477 = vmul.f32 %v2472, %v2476
    %vm2478 = vcmp.gt.s32.totalorder %v66, 6
    %v2479 = vsel %vm2478, 1, 0
    %2480 = vset.pattern.permute.xlu0 0
    %2481 = vperm.xlu0 %2480, %v2479
    %v2482 = vpop.permute.xlu0 %2481
    %vm2483 = vcmp.eq.s32.totalorder %v2482, 1
    %v2484 = vsel %vm2483, %v2477, 0.0
    %s2485 = scalar_lea.vmem [#allocation8], 48
    %2486 = vst [vmem:[%s2485] sm:$0xff] %v2484
    %v2487 = vsel %vm2483, %v2477, %v2162
    %v2488 = vsel %vm2483, %v2475, %v2163
    %s2489 = scalar_lea.vmem [#allocation2], 56
    %v2490 = vld [vmem:[%s2489] sm:$0xff]
    %2491 = vmatprep.subr.mxu0 %v132
    %2492 = vmatpush1.msra.mxu0 %v131
    %2493 = vmatprep.subr.mxu0 %v136
    %2494 = vmatpush1.msra.mxu0 %v135
    %2495 = vmatprep.subr.mxu0 %v140
    %2496 = vmatpush1.msra.mxu0 %v139
    %2497 = vmatprep.subr.mxu0 %v144
    %2498 = vmatpush1.msra.mxu0 %v143
    %2499 = vmatprep.subr.mxu0 %v148
    %2500 = vmatpush1.msra.mxu0 %v147
    %2501 = vmatprep.subr.mxu0 %v152
    %2502 = vmatpush1.msra.mxu0 %v151
    %2503 = vmatprep.subr.mxu0 %v156
    %2504 = vmatpush1.msra.mxu0 %v155
    %2505 = vmatprep.subr.mxu0 %v160
    %2506 = vmatpush1.msra.mxu0 %v159
    %2507 = vmatprep.subr.mxu0 %v164
    %2508 = vmatpush1.msra.mxu0 %v163
    %2509 = vmatprep.subr.mxu0 %v168
    %2510 = vmatpush1.msra.mxu0 %v167
    %2511 = vmatprep.subr.mxu0 %v172
    %2512 = vmatpush1.msra.mxu0 %v171
    %2513 = vmatprep.subr.mxu0 %v176
    %2514 = vmatpush1.msra.mxu0 %v175
    %2515 = vmatprep.subr.mxu0 %v180
    %2516 = vmatpush1.msra.mxu0 %v179
    %2517 = vmatprep.subr.mxu0 %v184
    %2518 = vmatpush1.msra.mxu0 %v183
    %2519 = vmatprep.subr.mxu0 %v188
    %2520 = vmatpush1.msra.mxu0 %v187
    %2521 = vmatprep.subr.mxu0 %v192
    %2522 = vmatpush1.msra.mxu0 %v191
    %2523 = vmatprep.subr.mxu0 0.0
    %2524 = vmatpush1.msra.mxu0 0.0
    %2525 = vmatprep.subr.mxu0 0.0
    %2526 = vmatpush1.msra.mxu0 0.0
    %2527 = vmatprep.subr.mxu0 0.0
    %2528 = vmatpush1.msra.mxu0 0.0
    %2529 = vmatprep.subr.mxu0 0.0
    %2530 = vmatpush1.msra.mxu0 0.0
    %2531 = vmatprep.subr.mxu0 0.0
    %2532 = vmatpush1.msra.mxu0 0.0
    %2533 = vmatprep.subr.mxu0 0.0
    %2534 = vmatpush1.msra.mxu0 0.0
    %2535 = vmatprep.subr.mxu0 0.0
    %2536 = vmatpush1.msra.mxu0 0.0
    %2537 = vmatprep.subr.mxu0 0.0
    %2538 = vmatpush1.msra.mxu0 0.0
    %2539 = vmatprep.subr.mxu0 0.0
    %2540 = vmatpush1.msra.mxu0 0.0
    %2541 = vmatprep.subr.mxu0 0.0
    %2542 = vmatpush1.msra.mxu0 0.0
    %2543 = vmatprep.subr.mxu0 0.0
    %2544 = vmatpush1.msra.mxu0 0.0
    %2545 = vmatprep.subr.mxu0 0.0
    %2546 = vmatpush1.msra.mxu0 0.0
    %2547 = vmatprep.subr.mxu0 0.0
    %2548 = vmatpush1.msra.mxu0 0.0
    %2549 = vmatprep.subr.mxu0 0.0
    %2550 = vmatpush1.msra.mxu0 0.0
    %2551 = vmatprep.subr.mxu0 0.0
    %2552 = vmatpush1.msra.mxu0 0.0
    %2553 = vmatprep.subr.mxu0 0.0
    %2554 = vmatpush1.msra.mxu0 0.0
    %2555 = vmatprep.mubr.f32.mxu0 0.0
    %2556 = vmatmul.mubr.f32.gmra.mrb[0].mxu0 %v2487
    %v2557 = vpop.f32.mrb[0].mxu0
    %v2558 = vadd.f32 0.0, %v2557
    %v2559 = vpop.f32.mrb[0].mxu0
    %v2560 = vadd.f32 0.0, %v2559
    %2561 = vdwg.mxu0
    %2562 = vmatprep.subr.mxu0 %v134
    %2563 = vmatpush1.msra.mxu0 %v133
    %2564 = vmatprep.subr.mxu0 %v138
    %2565 = vmatpush1.msra.mxu0 %v137
    %2566 = vmatprep.subr.mxu0 %v142
    %2567 = vmatpush1.msra.mxu0 %v141
    %2568 = vmatprep.subr.mxu0 %v146
    %2569 = vmatpush1.msra.mxu0 %v145
    %2570 = vmatprep.subr.mxu0 %v150
    %2571 = vmatpush1.msra.mxu0 %v149
    %2572 = vmatprep.subr.mxu0 %v154
    %2573 = vmatpush1.msra.mxu0 %v153
    %2574 = vmatprep.subr.mxu0 %v158
    %2575 = vmatpush1.msra.mxu0 %v157
    %2576 = vmatprep.subr.mxu0 %v162
    %2577 = vmatpush1.msra.mxu0 %v161
    %2578 = vmatprep.subr.mxu0 %v166
    %2579 = vmatpush1.msra.mxu0 %v165
    %2580 = vmatprep.subr.mxu0 %v170
    %2581 = vmatpush1.msra.mxu0 %v169
    %2582 = vmatprep.subr.mxu0 %v174
    %2583 = vmatpush1.msra.mxu0 %v173
    %2584 = vmatprep.subr.mxu0 %v178
    %2585 = vmatpush1.msra.mxu0 %v177
    %2586 = vmatprep.subr.mxu0 %v182
    %2587 = vmatpush1.msra.mxu0 %v181
    %2588 = vmatprep.subr.mxu0 %v186
    %2589 = vmatpush1.msra.mxu0 %v185
    %2590 = vmatprep.subr.mxu0 %v190
    %2591 = vmatpush1.msra.mxu0 %v189
    %2592 = vmatprep.subr.mxu0 %v194
    %2593 = vmatpush1.msra.mxu0 %v193
    %2594 = vmatprep.subr.mxu0 0.0
    %2595 = vmatpush1.msra.mxu0 0.0
    %2596 = vmatprep.subr.mxu0 0.0
    %2597 = vmatpush1.msra.mxu0 0.0
    %2598 = vmatprep.subr.mxu0 0.0
    %2599 = vmatpush1.msra.mxu0 0.0
    %2600 = vmatprep.subr.mxu0 0.0
    %2601 = vmatpush1.msra.mxu0 0.0
    %2602 = vmatprep.subr.mxu0 0.0
    %2603 = vmatpush1.msra.mxu0 0.0
    %2604 = vmatprep.subr.mxu0 0.0
    %2605 = vmatpush1.msra.mxu0 0.0
    %2606 = vmatprep.subr.mxu0 0.0
    %2607 = vmatpush1.msra.mxu0 0.0
    %2608 = vmatprep.subr.mxu0 0.0
    %2609 = vmatpush1.msra.mxu0 0.0
    %2610 = vmatprep.subr.mxu0 0.0
    %2611 = vmatpush1.msra.mxu0 0.0
    %2612 = vmatprep.subr.mxu0 0.0
    %2613 = vmatpush1.msra.mxu0 0.0
    %2614 = vmatprep.subr.mxu0 0.0
    %2615 = vmatpush1.msra.mxu0 0.0
    %2616 = vmatprep.subr.mxu0 0.0
    %2617 = vmatpush1.msra.mxu0 0.0
    %2618 = vmatprep.subr.mxu0 0.0
    %2619 = vmatpush1.msra.mxu0 0.0
    %2620 = vmatprep.subr.mxu0 0.0
    %2621 = vmatpush1.msra.mxu0 0.0
    %2622 = vmatprep.subr.mxu0 0.0
    %2623 = vmatpush1.msra.mxu0 0.0
    %2624 = vmatprep.subr.mxu0 0.0
    %2625 = vmatpush1.msra.mxu0 0.0
    %2626 = vmatprep.mubr.f32.mxu0 0.0
    %2627 = vmatmul.mubr.f32.gmra.mrb[0].mxu0 %v2487
    %v2628 = vpop.f32.mrb[0].mxu0
    %v2629 = vadd.f32 0.0, %v2628
    %v2630 = vpop.f32.mrb[0].mxu0
    %v2631 = vadd.f32 0.0, %v2630
    %2632 = vdwg.mxu0
    %2633 = vmatprep.subr.mxu0 %v68
    %2634 = vmatpush1.msra.mxu0 %v67
    %2635 = vmatprep.subr.mxu0 %v72
    %2636 = vmatpush1.msra.mxu0 %v71
    %2637 = vmatprep.subr.mxu0 %v76
    %2638 = vmatpush1.msra.mxu0 %v75
    %2639 = vmatprep.subr.mxu0 %v80
    %2640 = vmatpush1.msra.mxu0 %v79
    %2641 = vmatprep.subr.mxu0 %v84
    %2642 = vmatpush1.msra.mxu0 %v83
    %2643 = vmatprep.subr.mxu0 %v88
    %2644 = vmatpush1.msra.mxu0 %v87
    %2645 = vmatprep.subr.mxu0 %v92
    %2646 = vmatpush1.msra.mxu0 %v91
    %2647 = vmatprep.subr.mxu0 %v96
    %2648 = vmatpush1.msra.mxu0 %v95
    %2649 = vmatprep.subr.mxu0 %v100
    %2650 = vmatpush1.msra.mxu0 %v99
    %2651 = vmatprep.subr.mxu0 %v104
    %2652 = vmatpush1.msra.mxu0 %v103
    %2653 = vmatprep.subr.mxu0 %v108
    %2654 = vmatpush1.msra.mxu0 %v107
    %2655 = vmatprep.subr.mxu0 %v112
    %2656 = vmatpush1.msra.mxu0 %v111
    %2657 = vmatprep.subr.mxu0 %v116
    %2658 = vmatpush1.msra.mxu0 %v115
    %2659 = vmatprep.subr.mxu0 %v120
    %2660 = vmatpush1.msra.mxu0 %v119
    %2661 = vmatprep.subr.mxu0 %v124
    %2662 = vmatpush1.msra.mxu0 %v123
    %2663 = vmatprep.subr.mxu0 %v128
    %2664 = vmatpush1.msra.mxu0 %v127
    %2665 = vmatprep.subr.mxu0 0.0
    %2666 = vmatpush1.msra.mxu0 0.0
    %2667 = vmatprep.subr.mxu0 0.0
    %2668 = vmatpush1.msra.mxu0 0.0
    %2669 = vmatprep.subr.mxu0 0.0
    %2670 = vmatpush1.msra.mxu0 0.0
    %2671 = vmatprep.subr.mxu0 0.0
    %2672 = vmatpush1.msra.mxu0 0.0
    %2673 = vmatprep.subr.mxu0 0.0
    %2674 = vmatpush1.msra.mxu0 0.0
    %2675 = vmatprep.subr.mxu0 0.0
    %2676 = vmatpush1.msra.mxu0 0.0
    %2677 = vmatprep.subr.mxu0 0.0
    %2678 = vmatpush1.msra.mxu0 0.0
    %2679 = vmatprep.subr.mxu0 0.0
    %2680 = vmatpush1.msra.mxu0 0.0
    %2681 = vmatprep.subr.mxu0 0.0
    %2682 = vmatpush1.msra.mxu0 0.0
    %2683 = vmatprep.subr.mxu0 0.0
    %2684 = vmatpush1.msra.mxu0 0.0
    %2685 = vmatprep.subr.mxu0 0.0
    %2686 = vmatpush1.msra.mxu0 0.0
    %2687 = vmatprep.subr.mxu0 0.0
    %2688 = vmatpush1.msra.mxu0 0.0
    %2689 = vmatprep.subr.mxu0 0.0
    %2690 = vmatpush1.msra.mxu0 0.0
    %2691 = vmatprep.subr.mxu0 0.0
    %2692 = vmatpush1.msra.mxu0 0.0
    %2693 = vmatprep.subr.mxu0 0.0
    %2694 = vmatpush1.msra.mxu0 0.0
    %2695 = vmatprep.subr.mxu0 0.0
    %2696 = vmatpush1.msra.mxu0 0.0
    %2697 = vmatprep.mubr.f32.mxu0 0.0
    %2698 = vmatmul.mubr.f32.gmra.mrb[0].mxu0 %v2490
    %v2699 = vpop.f32.mrb[0].mxu0
    %v2700 = vadd.f32 %v2558, %v2699
    %v2701 = vpop.f32.mrb[0].mxu0
    %v2702 = vadd.f32 %v2560, %v2701
    %2703 = vdwg.mxu0
    %2704 = vmatprep.subr.mxu0 %v70
    %2705 = vmatpush1.msra.mxu0 %v69
    %2706 = vmatprep.subr.mxu0 %v74
    %2707 = vmatpush1.msra.mxu0 %v73
    %2708 = vmatprep.subr.mxu0 %v78
    %2709 = vmatpush1.msra.mxu0 %v77
    %2710 = vmatprep.subr.mxu0 %v82
    %2711 = vmatpush1.msra.mxu0 %v81
    %2712 = vmatprep.subr.mxu0 %v86
    %2713 = vmatpush1.msra.mxu0 %v85
    %2714 = vmatprep.subr.mxu0 %v90
    %2715 = vmatpush1.msra.mxu0 %v89
    %2716 = vmatprep.subr.mxu0 %v94
    %2717 = vmatpush1.msra.mxu0 %v93
    %2718 = vmatprep.subr.mxu0 %v98
    %2719 = vmatpush1.msra.mxu0 %v97
    %2720 = vmatprep.subr.mxu0 %v102
    %2721 = vmatpush1.msra.mxu0 %v101
    %2722 = vmatprep.subr.mxu0 %v106
    %2723 = vmatpush1.msra.mxu0 %v105
    %2724 = vmatprep.subr.mxu0 %v110
    %2725 = vmatpush1.msra.mxu0 %v109
    %2726 = vmatprep.subr.mxu0 %v114
    %2727 = vmatpush1.msra.mxu0 %v113
    %2728 = vmatprep.subr.mxu0 %v118
    %2729 = vmatpush1.msra.mxu0 %v117
    %2730 = vmatprep.subr.mxu0 %v122
    %2731 = vmatpush1.msra.mxu0 %v121
    %2732 = vmatprep.subr.mxu0 %v126
    %2733 = vmatpush1.msra.mxu0 %v125
    %2734 = vmatprep.subr.mxu0 %v130
    %2735 = vmatpush1.msra.mxu0 %v129
    %2736 = vmatprep.subr.mxu0 0.0
    %2737 = vmatpush1.msra.mxu0 0.0
    %2738 = vmatprep.subr.mxu0 0.0
    %2739 = vmatpush1.msra.mxu0 0.0
    %2740 = vmatprep.subr.mxu0 0.0
    %2741 = vmatpush1.msra.mxu0 0.0
    %2742 = vmatprep.subr.mxu0 0.0
    %2743 = vmatpush1.msra.mxu0 0.0
    %2744 = vmatprep.subr.mxu0 0.0
    %2745 = vmatpush1.msra.mxu0 0.0
    %2746 = vmatprep.subr.mxu0 0.0
    %2747 = vmatpush1.msra.mxu0 0.0
    %2748 = vmatprep.subr.mxu0 0.0
    %2749 = vmatpush1.msra.mxu0 0.0
    %2750 = vmatprep.subr.mxu0 0.0
    %2751 = vmatpush1.msra.mxu0 0.0
    %2752 = vmatprep.subr.mxu0 0.0
    %2753 = vmatpush1.msra.mxu0 0.0
    %2754 = vmatprep.subr.mxu0 0.0
    %2755 = vmatpush1.msra.mxu0 0.0
    %2756 = vmatprep.subr.mxu0 0.0
    %2757 = vmatpush1.msra.mxu0 0.0
    %2758 = vmatprep.subr.mxu0 0.0
    %2759 = vmatpush1.msra.mxu0 0.0
    %2760 = vmatprep.subr.mxu0 0.0
    %2761 = vmatpush1.msra.mxu0 0.0
    %2762 = vmatprep.subr.mxu0 0.0
    %2763 = vmatpush1.msra.mxu0 0.0
    %2764 = vmatprep.subr.mxu0 0.0
    %2765 = vmatpush1.msra.mxu0 0.0
    %2766 = vmatprep.subr.mxu0 0.0
    %2767 = vmatpush1.msra.mxu0 0.0
    %2768 = vmatprep.mubr.f32.mxu0 0.0
    %2769 = vmatmul.mubr.f32.gmra.mrb[0].mxu0 %v2490
    %v2770 = vpop.f32.mrb[0].mxu0
    %v2771 = vadd.f32 %v2629, %v2770
    %v2772 = vpop.f32.mrb[0].mxu0
    %v2773 = vadd.f32 %v2631, %v2772
    %2774 = vdwg.mxu0
    %v2775 = vadd.f32 %v2700, %v485
    %v2776 = vadd.f32 %v2702, %v489
    %v2777 = vadd.f32 %v2771, %v493
    %v2778 = vadd.f32 %v2773, %v497
    %v2779 = vxor.u32 %v2775, 2147483648
    %v2780 = vmul.f32 %v2779, 1.442695
    %v2781 = vpow.pop %v2780
    %v2782 = vadd.f32 %v2781, 1.0
    %v2783 = vrcp.pop %v2782
    %v2784 = vmul.f32 1.0, %v2783
    %v2785 = vxor.u32 %v2776, 2147483648
    %v2786 = vmul.f32 %v2785, 1.442695
    %v2787 = vpow.pop %v2786
    %v2788 = vadd.f32 %v2787, 1.0
    %v2789 = vrcp.pop %v2788
    %v2790 = vmul.f32 1.0, %v2789
    %v2791 = vtanh.pop %v2777
    %v2792 = vxor.u32 %v2778, 2147483648
    %v2793 = vmul.f32 %v2792, 1.442695
    %v2794 = vpow.pop %v2793
    %v2795 = vadd.f32 %v2794, 1.0
    %v2796 = vrcp.pop %v2795
    %v2797 = vmul.f32 1.0, %v2796
    %v2798 = vmul.f32 %v2790, %v2488
    %v2799 = vmul.f32 %v2784, %v2791
    %v2800 = vadd.f32 %v2798, %v2799
    %v2801 = vtanh.pop %v2800
    %v2802 = vmul.f32 %v2797, %v2801
    %vm2803 = vcmp.gt.s32.totalorder %v66, 7
    %v2804 = vsel %vm2803, 1, 0
    %2805 = vset.pattern.permute.xlu0 0
    %2806 = vperm.xlu0 %2805, %v2804
    %v2807 = vpop.permute.xlu0 %2806
    %vm2808 = vcmp.eq.s32.totalorder %v2807, 1
    %v2809 = vsel %vm2808, %v2802, 0.0
    %s2810 = scalar_lea.vmem [#allocation8], 56
    %2811 = vst [vmem:[%s2810] sm:$0xff] %v2809
    %v2812 = vsel %vm2808, %v2802, %v2487
    %v2813 = vsel %vm2808, %v2800, %v2488
    %2814 = vst [vmem:[#allocation9] sm:$0xff] %v2812
    %2815 = vst [vmem:[#allocation11] sm:$0xff] %v2813
    %s2816 = scalar_lea.vmem [#allocation5], 512
    %v2817 = vld [vmem:[%s2816] sm:$0xff]
    %v2818 = vld [vmem:[%s2816 + $0x8] sm:$0xff]
    %v2819 = vld [vmem:[%s2816 + $0x10] sm:$0xff]
    %v2820 = vld [vmem:[%s2816 + $0x18] sm:$0xff]
    %v2821 = vld [vmem:[%s2816 + $0x20] sm:$0xff]
    %v2822 = vld [vmem:[%s2816 + $0x28] sm:$0xff]
    %v2823 = vld [vmem:[%s2816 + $0x30] sm:$0xff]
    %v2824 = vld [vmem:[%s2816 + $0x38] sm:$0xff]
    %v2825 = vld [vmem:[%s2816 + $0x40] sm:$0xff]
    %v2826 = vld [vmem:[%s2816 + $0x48] sm:$0xff]
    %v2827 = vld [vmem:[%s2816 + $0x50] sm:$0xff]
    %v2828 = vld [vmem:[%s2816 + $0x58] sm:$0xff]
    %v2829 = vld [vmem:[%s2816 + $0x60] sm:$0xff]
    %v2830 = vld [vmem:[%s2816 + $0x68] sm:$0xff]
    %v2831 = vld [vmem:[%s2816 + $0x70] sm:$0xff]
    %v2832 = vld [vmem:[%s2816 + $0x78] sm:$0xff]
    %v2833 = vld [vmem:[%s2816 + $0x80] sm:$0xff]
    %v2834 = vld [vmem:[%s2816 + $0x88] sm:$0xff]
    %v2835 = vld [vmem:[%s2816 + $0x90] sm:$0xff]
    %v2836 = vld [vmem:[%s2816 + $0x98] sm:$0xff]
    %v2837 = vld [vmem:[%s2816 + $0xa0] sm:$0xff]
    %v2838 = vld [vmem:[%s2816 + $0xa8] sm:$0xff]
    %v2839 = vld [vmem:[%s2816 + $0xb0] sm:$0xff]
    %v2840 = vld [vmem:[%s2816 + $0xb8] sm:$0xff]
    %v2841 = vld [vmem:[%s2816 + $0xc0] sm:$0xff]
    %v2842 = vld [vmem:[%s2816 + $0xc8] sm:$0xff]
    %v2843 = vld [vmem:[%s2816 + $0xd0] sm:$0xff]
    %v2844 = vld [vmem:[%s2816 + $0xd8] sm:$0xff]
    %v2845 = vld [vmem:[%s2816 + $0xe0] sm:$0xff]
    %v2846 = vld [vmem:[%s2816 + $0xe8] sm:$0xff]
    %v2847 = vld [vmem:[%s2816 + $0xf0] sm:$0xff]
    %v2848 = vld [vmem:[%s2816 + $0xf8] sm:$0xff]
    %v2849 = vld [vmem:[%s2816 + $0x100] sm:$0xff]
    %v2850 = vld [vmem:[%s2816 + $0x108] sm:$0xff]
    %v2851 = vld [vmem:[%s2816 + $0x110] sm:$0xff]
    %v2852 = vld [vmem:[%s2816 + $0x118] sm:$0xff]
    %v2853 = vld [vmem:[%s2816 + $0x120] sm:$0xff]
    %v2854 = vld [vmem:[%s2816 + $0x128] sm:$0xff]
    %v2855 = vld [vmem:[%s2816 + $0x130] sm:$0xff]
    %v2856 = vld [vmem:[%s2816 + $0x138] sm:$0xff]
    %v2857 = vld [vmem:[%s2816 + $0x140] sm:$0xff]
    %v2858 = vld [vmem:[%s2816 + $0x148] sm:$0xff]
    %v2859 = vld [vmem:[%s2816 + $0x150] sm:$0xff]
    %v2860 = vld [vmem:[%s2816 + $0x158] sm:$0xff]
    %v2861 = vld [vmem:[%s2816 + $0x160] sm:$0xff]
    %v2862 = vld [vmem:[%s2816 + $0x168] sm:$0xff]
    %v2863 = vld [vmem:[%s2816 + $0x170] sm:$0xff]
    %v2864 = vld [vmem:[%s2816 + $0x178] sm:$0xff]
    %v2865 = vld [vmem:[%s2816 + $0x180] sm:$0xff]
    %v2866 = vld [vmem:[%s2816 + $0x188] sm:$0xff]
    %v2867 = vld [vmem:[%s2816 + $0x190] sm:$0xff]
    %v2868 = vld [vmem:[%s2816 + $0x198] sm:$0xff]
    %v2869 = vld [vmem:[%s2816 + $0x1a0] sm:$0xff]
    %v2870 = vld [vmem:[%s2816 + $0x1a8] sm:$0xff]
    %v2871 = vld [vmem:[%s2816 + $0x1b0] sm:$0xff]
    %v2872 = vld [vmem:[%s2816 + $0x1b8] sm:$0xff]
    %v2873 = vld [vmem:[%s2816 + $0x1c0] sm:$0xff]
    %v2874 = vld [vmem:[%s2816 + $0x1c8] sm:$0xff]
    %v2875 = vld [vmem:[%s2816 + $0x1d0] sm:$0xff]
    %v2876 = vld [vmem:[%s2816 + $0x1d8] sm:$0xff]
    %v2877 = vld [vmem:[%s2816 + $0x1e0] sm:$0xff]
    %v2878 = vld [vmem:[%s2816 + $0x1e8] sm:$0xff]
    %v2879 = vld [vmem:[%s2816 + $0x1f0] sm:$0xff]
    %v2880 = vld [vmem:[%s2816 + $0x1f8] sm:$0xff]
    %s2881 = scalar_lea.vmem [#allocation7], 512
    %v2882 = vld [vmem:[%s2881] sm:$0xff]
    %v2883 = vld [vmem:[%s2881 + $0x8] sm:$0xff]
    %v2884 = vld [vmem:[%s2881 + $0x10] sm:$0xff]
    %v2885 = vld [vmem:[%s2881 + $0x18] sm:$0xff]
    %v2886 = vld [vmem:[%s2881 + $0x20] sm:$0xff]
    %v2887 = vld [vmem:[%s2881 + $0x28] sm:$0xff]
    %v2888 = vld [vmem:[%s2881 + $0x30] sm:$0xff]
    %v2889 = vld [vmem:[%s2881 + $0x38] sm:$0xff]
    %v2890 = vld [vmem:[%s2881 + $0x40] sm:$0xff]
    %v2891 = vld [vmem:[%s2881 + $0x48] sm:$0xff]
    %v2892 = vld [vmem:[%s2881 + $0x50] sm:$0xff]
    %v2893 = vld [vmem:[%s2881 + $0x58] sm:$0xff]
    %v2894 = vld [vmem:[%s2881 + $0x60] sm:$0xff]
    %v2895 = vld [vmem:[%s2881 + $0x68] sm:$0xff]
    %v2896 = vld [vmem:[%s2881 + $0x70] sm:$0xff]
    %v2897 = vld [vmem:[%s2881 + $0x78] sm:$0xff]
    %v2898 = vld [vmem:[%s2881 + $0x80] sm:$0xff]
    %v2899 = vld [vmem:[%s2881 + $0x88] sm:$0xff]
    %v2900 = vld [vmem:[%s2881 + $0x90] sm:$0xff]
    %v2901 = vld [vmem:[%s2881 + $0x98] sm:$0xff]
    %v2902 = vld [vmem:[%s2881 + $0xa0] sm:$0xff]
    %v2903 = vld [vmem:[%s2881 + $0xa8] sm:$0xff]
    %v2904 = vld [vmem:[%s2881 + $0xb0] sm:$0xff]
    %v2905 = vld [vmem:[%s2881 + $0xb8] sm:$0xff]
    %v2906 = vld [vmem:[%s2881 + $0xc0] sm:$0xff]
    %v2907 = vld [vmem:[%s2881 + $0xc8] sm:$0xff]
    %v2908 = vld [vmem:[%s2881 + $0xd0] sm:$0xff]
    %v2909 = vld [vmem:[%s2881 + $0xd8] sm:$0xff]
    %v2910 = vld [vmem:[%s2881 + $0xe0] sm:$0xff]
    %v2911 = vld [vmem:[%s2881 + $0xe8] sm:$0xff]
    %v2912 = vld [vmem:[%s2881 + $0xf0] sm:$0xff]
    %v2913 = vld [vmem:[%s2881 + $0xf8] sm:$0xff]
    %v2914 = vld [vmem:[%s2881 + $0x100] sm:$0xff]
    %v2915 = vld [vmem:[%s2881 + $0x108] sm:$0xff]
    %v2916 = vld [vmem:[%s2881 + $0x110] sm:$0xff]
    %v2917 = vld [vmem:[%s2881 + $0x118] sm:$0xff]
    %v2918 = vld [vmem:[%s2881 + $0x120] sm:$0xff]
    %v2919 = vld [vmem:[%s2881 + $0x128] sm:$0xff]
    %v2920 = vld [vmem:[%s2881 + $0x130] sm:$0xff]
    %v2921 = vld [vmem:[%s2881 + $0x138] sm:$0xff]
    %v2922 = vld [vmem:[%s2881 + $0x140] sm:$0xff]
    %v2923 = vld [vmem:[%s2881 + $0x148] sm:$0xff]
    %v2924 = vld [vmem:[%s2881 + $0x150] sm:$0xff]
    %v2925 = vld [vmem:[%s2881 + $0x158] sm:$0xff]
    %v2926 = vld [vmem:[%s2881 + $0x160] sm:$0xff]
    %v2927 = vld [vmem:[%s2881 + $0x168] sm:$0xff]
    %v2928 = vld [vmem:[%s2881 + $0x170] sm:$0xff]
    %v2929 = vld [vmem:[%s2881 + $0x178] sm:$0xff]
    %v2930 = vld [vmem:[%s2881 + $0x180] sm:$0xff]
    %v2931 = vld [vmem:[%s2881 + $0x188] sm:$0xff]
    %v2932 = vld [vmem:[%s2881 + $0x190] sm:$0xff]
    %v2933 = vld [vmem:[%s2881 + $0x198] sm:$0xff]
    %v2934 = vld [vmem:[%s2881 + $0x1a0] sm:$0xff]
    %v2935 = vld [vmem:[%s2881 + $0x1a8] sm:$0xff]
    %v2936 = vld [vmem:[%s2881 + $0x1b0] sm:$0xff]
    %v2937 = vld [vmem:[%s2881 + $0x1b8] sm:$0xff]
    %v2938 = vld [vmem:[%s2881 + $0x1c0] sm:$0xff]
    %v2939 = vld [vmem:[%s2881 + $0x1c8] sm:$0xff]
    %v2940 = vld [vmem:[%s2881 + $0x1d0] sm:$0xff]
    %v2941 = vld [vmem:[%s2881 + $0x1d8] sm:$0xff]
    %v2942 = vld [vmem:[%s2881 + $0x1e0] sm:$0xff]
    %v2943 = vld [vmem:[%s2881 + $0x1e8] sm:$0xff]
    %v2944 = vld [vmem:[%s2881 + $0x1f0] sm:$0xff]
    %v2945 = vld [vmem:[%s2881 + $0x1f8] sm:$0xff]
    %s2946 = scalar_lea.vmem %s4, 4
    %v2947 = vld [vmem:[%s2946] sm:$0xf]
    %v2948 = vld [vmem:[#allocation8] sm:$0xff]
    %2949 = vmatprep.subr.mxu0 %v2883
    %2950 = vmatpush1.msra.mxu0 %v2882
    %2951 = vmatprep.subr.mxu0 %v2887
    %2952 = vmatpush1.msra.mxu0 %v2886
    %2953 = vmatprep.subr.mxu0 %v2891
    %2954 = vmatpush1.msra.mxu0 %v2890
    %2955 = vmatprep.subr.mxu0 %v2895
    %2956 = vmatpush1.msra.mxu0 %v2894
    %2957 = vmatprep.subr.mxu0 %v2899
    %2958 = vmatpush1.msra.mxu0 %v2898
    %2959 = vmatprep.subr.mxu0 %v2903
    %2960 = vmatpush1.msra.mxu0 %v2902
    %2961 = vmatprep.subr.mxu0 %v2907
    %2962 = vmatpush1.msra.mxu0 %v2906
    %2963 = vmatprep.subr.mxu0 %v2911
    %2964 = vmatpush1.msra.mxu0 %v2910
    %2965 = vmatprep.subr.mxu0 %v2915
    %2966 = vmatpush1.msra.mxu0 %v2914
    %2967 = vmatprep.subr.mxu0 %v2919
    %2968 = vmatpush1.msra.mxu0 %v2918
    %2969 = vmatprep.subr.mxu0 %v2923
    %2970 = vmatpush1.msra.mxu0 %v2922
    %2971 = vmatprep.subr.mxu0 %v2927
    %2972 = vmatpush1.msra.mxu0 %v2926
    %2973 = vmatprep.subr.mxu0 %v2931
    %2974 = vmatpush1.msra.mxu0 %v2930
    %2975 = vmatprep.subr.mxu0 %v2935
    %2976 = vmatpush1.msra.mxu0 %v2934
    %2977 = vmatprep.subr.mxu0 %v2939
    %2978 = vmatpush1.msra.mxu0 %v2938
    %2979 = vmatprep.subr.mxu0 %v2943
    %2980 = vmatpush1.msra.mxu0 %v2942
    %2981 = vmatprep.subr.mxu0 0.0
    %2982 = vmatpush1.msra.mxu0 0.0
    %2983 = vmatprep.subr.mxu0 0.0
    %2984 = vmatpush1.msra.mxu0 0.0
    %2985 = vmatprep.subr.mxu0 0.0
    %2986 = vmatpush1.msra.mxu0 0.0
    %2987 = vmatprep.subr.mxu0 0.0
    %2988 = vmatpush1.msra.mxu0 0.0
    %2989 = vmatprep.subr.mxu0 0.0
    %2990 = vmatpush1.msra.mxu0 0.0
    %2991 = vmatprep.subr.mxu0 0.0
    %2992 = vmatpush1.msra.mxu0 0.0
    %2993 = vmatprep.subr.mxu0 0.0
    %2994 = vmatpush1.msra.mxu0 0.0
    %2995 = vmatprep.subr.mxu0 0.0
    %2996 = vmatpush1.msra.mxu0 0.0
    %2997 = vmatprep.subr.mxu0 0.0
    %2998 = vmatpush1.msra.mxu0 0.0
    %2999 = vmatprep.subr.mxu0 0.0
    %3000 = vmatpush1.msra.mxu0 0.0
    %3001 = vmatprep.subr.mxu0 0.0
    %3002 = vmatpush1.msra.mxu0 0.0
    %3003 = vmatprep.subr.mxu0 0.0
    %3004 = vmatpush1.msra.mxu0 0.0
    %3005 = vmatprep.subr.mxu0 0.0
    %3006 = vmatpush1.msra.mxu0 0.0
    %3007 = vmatprep.subr.mxu0 0.0
    %3008 = vmatpush1.msra.mxu0 0.0
    %3009 = vmatprep.subr.mxu0 0.0
    %3010 = vmatpush1.msra.mxu0 0.0
    %3011 = vmatprep.subr.mxu0 0.0
    %3012 = vmatpush1.msra.mxu0 0.0
    %3013 = vmatprep.mubr.f32.mxu0 0.0
    %3014 = vmatmul.mubr.f32.gmra.mrb[0].mxu0 0.0
    %v3015 = vpop.f32.mrb[0].mxu0
    %v3016 = vadd.f32 0.0, %v3015
    %v3017 = vpop.f32.mrb[0].mxu0
    %v3018 = vadd.f32 0.0, %v3017
    %3019 = vdwg.mxu0
    %3020 = vmatprep.subr.mxu0 %v2885
    %3021 = vmatpush1.msra.mxu0 %v2884
    %3022 = vmatprep.subr.mxu0 %v2889
    %3023 = vmatpush1.msra.mxu0 %v2888
    %3024 = vmatprep.subr.mxu0 %v2893
    %3025 = vmatpush1.msra.mxu0 %v2892
    %3026 = vmatprep.subr.mxu0 %v2897
    %3027 = vmatpush1.msra.mxu0 %v2896
    %3028 = vmatprep.subr.mxu0 %v2901
    %3029 = vmatpush1.msra.mxu0 %v2900
    %3030 = vmatprep.subr.mxu0 %v2905
    %3031 = vmatpush1.msra.mxu0 %v2904
    %3032 = vmatprep.subr.mxu0 %v2909
    %3033 = vmatpush1.msra.mxu0 %v2908
    %3034 = vmatprep.subr.mxu0 %v2913
    %3035 = vmatpush1.msra.mxu0 %v2912
    %3036 = vmatprep.subr.mxu0 %v2917
    %3037 = vmatpush1.msra.mxu0 %v2916
    %3038 = vmatprep.subr.mxu0 %v2921
    %3039 = vmatpush1.msra.mxu0 %v2920
    %3040 = vmatprep.subr.mxu0 %v2925
    %3041 = vmatpush1.msra.mxu0 %v2924
    %3042 = vmatprep.subr.mxu0 %v2929
    %3043 = vmatpush1.msra.mxu0 %v2928
    %3044 = vmatprep.subr.mxu0 %v2933
    %3045 = vmatpush1.msra.mxu0 %v2932
    %3046 = vmatprep.subr.mxu0 %v2937
    %3047 = vmatpush1.msra.mxu0 %v2936
    %3048 = vmatprep.subr.mxu0 %v2941
    %3049 = vmatpush1.msra.mxu0 %v2940
    %3050 = vmatprep.subr.mxu0 %v2945
    %3051 = vmatpush1.msra.mxu0 %v2944
    %3052 = vmatprep.subr.mxu0 0.0
    %3053 = vmatpush1.msra.mxu0 0.0
    %3054 = vmatprep.subr.mxu0 0.0
    %3055 = vmatpush1.msra.mxu0 0.0
    %3056 = vmatprep.subr.mxu0 0.0
    %3057 = vmatpush1.msra.mxu0 0.0
    %3058 = vmatprep.subr.mxu0 0.0
    %3059 = vmatpush1.msra.mxu0 0.0
    %3060 = vmatprep.subr.mxu0 0.0
    %3061 = vmatpush1.msra.mxu0 0.0
    %3062 = vmatprep.subr.mxu0 0.0
    %3063 = vmatpush1.msra.mxu0 0.0
    %3064 = vmatprep.subr.mxu0 0.0
    %3065 = vmatpush1.msra.mxu0 0.0
    %3066 = vmatprep.subr.mxu0 0.0
    %3067 = vmatpush1.msra.mxu0 0.0
    %3068 = vmatprep.subr.mxu0 0.0
    %3069 = vmatpush1.msra.mxu0 0.0
    %3070 = vmatprep.subr.mxu0 0.0
    %3071 = vmatpush1.msra.mxu0 0.0
    %3072 = vmatprep.subr.mxu0 0.0
    %3073 = vmatpush1.msra.mxu0 0.0
    %3074 = vmatprep.subr.mxu0 0.0
    %3075 = vmatpush1.msra.mxu0 0.0
    %3076 = vmatprep.subr.mxu0 0.0
    %3077 = vmatpush1.msra.mxu0 0.0
    %3078 = vmatprep.subr.mxu0 0.0
    %3079 = vmatpush1.msra.mxu0 0.0
    %3080 = vmatprep.subr.mxu0 0.0
    %3081 = vmatpush1.msra.mxu0 0.0
    %3082 = vmatprep.subr.mxu0 0.0
    %3083 = vmatpush1.msra.mxu0 0.0
    %3084 = vmatprep.mubr.f32.mxu0 0.0
    %3085 = vmatmul.mubr.f32.gmra.mrb[0].mxu0 0.0
    %v3086 = vpop.f32.mrb[0].mxu0
    %v3087 = vadd.f32 0.0, %v3086
    %v3088 = vpop.f32.mrb[0].mxu0
    %v3089 = vadd.f32 0.0, %v3088
    %3090 = vdwg.mxu0
    %3091 = vmatprep.subr.mxu0 %v2818
    %3092 = vmatpush1.msra.mxu0 %v2817
    %3093 = vmatprep.subr.mxu0 %v2822
    %3094 = vmatpush1.msra.mxu0 %v2821
    %3095 = vmatprep.subr.mxu0 %v2826
    %3096 = vmatpush1.msra.mxu0 %v2825
    %3097 = vmatprep.subr.mxu0 %v2830
    %3098 = vmatpush1.msra.mxu0 %v2829
    %3099 = vmatprep.subr.mxu0 %v2834
    %3100 = vmatpush1.msra.mxu0 %v2833
    %3101 = vmatprep.subr.mxu0 %v2838
    %3102 = vmatpush1.msra.mxu0 %v2837
    %3103 = vmatprep.subr.mxu0 %v2842
    %3104 = vmatpush1.msra.mxu0 %v2841
    %3105 = vmatprep.subr.mxu0 %v2846
    %3106 = vmatpush1.msra.mxu0 %v2845
    %3107 = vmatprep.subr.mxu0 %v2850
    %3108 = vmatpush1.msra.mxu0 %v2849
    %3109 = vmatprep.subr.mxu0 %v2854
    %3110 = vmatpush1.msra.mxu0 %v2853
    %3111 = vmatprep.subr.mxu0 %v2858
    %3112 = vmatpush1.msra.mxu0 %v2857
    %3113 = vmatprep.subr.mxu0 %v2862
    %3114 = vmatpush1.msra.mxu0 %v2861
    %3115 = vmatprep.subr.mxu0 %v2866
    %3116 = vmatpush1.msra.mxu0 %v2865
    %3117 = vmatprep.subr.mxu0 %v2870
    %3118 = vmatpush1.msra.mxu0 %v2869
    %3119 = vmatprep.subr.mxu0 %v2874
    %3120 = vmatpush1.msra.mxu0 %v2873
    %3121 = vmatprep.subr.mxu0 %v2878
    %3122 = vmatpush1.msra.mxu0 %v2877
    %3123 = vmatprep.subr.mxu0 0.0
    %3124 = vmatpush1.msra.mxu0 0.0
    %3125 = vmatprep.subr.mxu0 0.0
    %3126 = vmatpush1.msra.mxu0 0.0
    %3127 = vmatprep.subr.mxu0 0.0
    %3128 = vmatpush1.msra.mxu0 0.0
    %3129 = vmatprep.subr.mxu0 0.0
    %3130 = vmatpush1.msra.mxu0 0.0
    %3131 = vmatprep.subr.mxu0 0.0
    %3132 = vmatpush1.msra.mxu0 0.0
    %3133 = vmatprep.subr.mxu0 0.0
    %3134 = vmatpush1.msra.mxu0 0.0
    %3135 = vmatprep.subr.mxu0 0.0
    %3136 = vmatpush1.msra.mxu0 0.0
    %3137 = vmatprep.subr.mxu0 0.0
    %3138 = vmatpush1.msra.mxu0 0.0
    %3139 = vmatprep.subr.mxu0 0.0
    %3140 = vmatpush1.msra.mxu0 0.0
    %3141 = vmatprep.subr.mxu0 0.0
    %3142 = vmatpush1.msra.mxu0 0.0
    %3143 = vmatprep.subr.mxu0 0.0
    %3144 = vmatpush1.msra.mxu0 0.0
    %3145 = vmatprep.subr.mxu0 0.0
    %3146 = vmatpush1.msra.mxu0 0.0
    %3147 = vmatprep.subr.mxu0 0.0
    %3148 = vmatpush1.msra.mxu0 0.0
    %3149 = vmatprep.subr.mxu0 0.0
    %3150 = vmatpush1.msra.mxu0 0.0
    %3151 = vmatprep.subr.mxu0 0.0
    %3152 = vmatpush1.msra.mxu0 0.0
    %3153 = vmatprep.subr.mxu0 0.0
    %3154 = vmatpush1.msra.mxu0 0.0
    %3155 = vmatprep.mubr.f32.mxu0 0.0
    %3156 = vmatmul.mubr.f32.gmra.mrb[0].mxu0 %v2948
    %v3157 = vpop.f32.mrb[0].mxu0
    %v3158 = vadd.f32 %v3016, %v3157
    %v3159 = vpop.f32.mrb[0].mxu0
    %v3160 = vadd.f32 %v3018, %v3159
    %3161 = vdwg.mxu0
    %3162 = vmatprep.subr.mxu0 %v2820
    %3163 = vmatpush1.msra.mxu0 %v2819
    %3164 = vmatprep.subr.mxu0 %v2824
    %3165 = vmatpush1.msra.mxu0 %v2823
    %3166 = vmatprep.subr.mxu0 %v2828
    %3167 = vmatpush1.msra.mxu0 %v2827
    %3168 = vmatprep.subr.mxu0 %v2832
    %3169 = vmatpush1.msra.mxu0 %v2831
    %3170 = vmatprep.subr.mxu0 %v2836
    %3171 = vmatpush1.msra.mxu0 %v2835
    %3172 = vmatprep.subr.mxu0 %v2840
    %3173 = vmatpush1.msra.mxu0 %v2839
    %3174 = vmatprep.subr.mxu0 %v2844
    %3175 = vmatpush1.msra.mxu0 %v2843
    %3176 = vmatprep.subr.mxu0 %v2848
    %3177 = vmatpush1.msra.mxu0 %v2847
    %3178 = vmatprep.subr.mxu0 %v2852
    %3179 = vmatpush1.msra.mxu0 %v2851
    %3180 = vmatprep.subr.mxu0 %v2856
    %3181 = vmatpush1.msra.mxu0 %v2855
    %3182 = vmatprep.subr.mxu0 %v2860
    %3183 = vmatpush1.msra.mxu0 %v2859
    %3184 = vmatprep.subr.mxu0 %v2864
    %3185 = vmatpush1.msra.mxu0 %v2863
    %3186 = vmatprep.subr.mxu0 %v2868
    %3187 = vmatpush1.msra.mxu0 %v2867
    %3188 = vmatprep.subr.mxu0 %v2872
    %3189 = vmatpush1.msra.mxu0 %v2871
    %3190 = vmatprep.subr.mxu0 %v2876
    %3191 = vmatpush1.msra.mxu0 %v2875
    %3192 = vmatprep.subr.mxu0 %v2880
    %3193 = vmatpush1.msra.mxu0 %v2879
    %3194 = vmatprep.subr.mxu0 0.0
    %3195 = vmatpush1.msra.mxu0 0.0
    %3196 = vmatprep.subr.mxu0 0.0
    %3197 = vmatpush1.msra.mxu0 0.0
    %3198 = vmatprep.subr.mxu0 0.0
    %3199 = vmatpush1.msra.mxu0 0.0
    %3200 = vmatprep.subr.mxu0 0.0
    %3201 = vmatpush1.msra.mxu0 0.0
    %3202 = vmatprep.subr.mxu0 0.0
    %3203 = vmatpush1.msra.mxu0 0.0
    %3204 = vmatprep.subr.mxu0 0.0
    %3205 = vmatpush1.msra.mxu0 0.0
    %3206 = vmatprep.subr.mxu0 0.0
    %3207 = vmatpush1.msra.mxu0 0.0
    %3208 = vmatprep.subr.mxu0 0.0
    %3209 = vmatpush1.msra.mxu0 0.0
    %3210 = vmatprep.subr.mxu0 0.0
    %3211 = vmatpush1.msra.mxu0 0.0
    %3212 = vmatprep.subr.mxu0 0.0
    %3213 = vmatpush1.msra.mxu0 0.0
    %3214 = vmatprep.subr.mxu0 0.0
    %3215 = vmatpush1.msra.mxu0 0.0
    %3216 = vmatprep.subr.mxu0 0.0
    %3217 = vmatpush1.msra.mxu0 0.0
    %3218 = vmatprep.subr.mxu0 0.0
    %3219 = vmatpush1.msra.mxu0 0.0
    %3220 = vmatprep.subr.mxu0 0.0
    %3221 = vmatpush1.msra.mxu0 0.0
    %3222 = vmatprep.subr.mxu0 0.0
    %3223 = vmatpush1.msra.mxu0 0.0
    %3224 = vmatprep.subr.mxu0 0.0
    %3225 = vmatpush1.msra.mxu0 0.0
    %3226 = vmatprep.mubr.f32.mxu0 0.0
    %3227 = vmatmul.mubr.f32.gmra.mrb[0].mxu0 %v2948
    %v3228 = vpop.f32.mrb[0].mxu0
    %v3229 = vadd.f32 %v3087, %v3228
    %v3230 = vpop.f32.mrb[0].mxu0
    %v3231 = vadd.f32 %v3089, %v3230
    %3232 = vdwg.mxu0
    %v3234 = vlaneseq
    %v3235 = vshrl.u32 %v3234, 7
    %v3236 = vsub.s32 0, %v3235
    %v3237 = vrot.slane %v2947, %v3236
    %v3238 = vlaneseq
    %v3239 = vshrl.u32 %v3238, 7
    %v3240 = vsub.s32 1, %v3239
    %v3241 = vrot.slane %v2947, %v3240
    %v3242 = vlaneseq
    %v3243 = vshrl.u32 %v3242, 7
    %v3244 = vsub.s32 2, %v3243
    %v3245 = vrot.slane %v2947, %v3244
    %v3246 = vlaneseq
    %v3247 = vshrl.u32 %v3246, 7
    %v3248 = vsub.s32 3, %v3247
    %v3249 = vrot.slane %v2947, %v3248
    %v3254 = vadd.f32 %v3158, %v3237
    %v3255 = vadd.f32 %v3160, %v3241
    %v3256 = vadd.f32 %v3229, %v3245
    %v3257 = vadd.f32 %v3231, %v3249
    %v3258 = vxor.u32 %v3254, 2147483648
    %v3259 = vmul.f32 %v3258, 1.442695
    %v3260 = vpow.pop %v3259
    %v3261 = vadd.f32 %v3260, 1.0
    %v3262 = vrcp.pop %v3261
    %v3263 = vmul.f32 1.0, %v3262
    %v3264 = vxor.u32 %v3255, 2147483648
    %v3265 = vmul.f32 %v3264, 1.442695
    %v3266 = vpow.pop %v3265
    %v3267 = vadd.f32 %v3266, 1.0
    %v3268 = vrcp.pop %v3267
    %v3269 = vmul.f32 1.0, %v3268
    %v3270 = vtanh.pop %v3256
    %v3271 = vxor.u32 %v3257, 2147483648
    %v3272 = vmul.f32 %v3271, 1.442695
    %v3273 = vpow.pop %v3272
    %v3274 = vadd.f32 %v3273, 1.0
    %v3275 = vrcp.pop %v3274
    %v3276 = vmul.f32 1.0, %v3275
    %v3277 = vmul.f32 %v3269, 0.0
    %v3278 = vmul.f32 %v3263, %v3270
    %v3279 = vadd.f32 %v3277, %v3278
    %v3280 = vtanh.pop %v3279
    %v3281 = vmul.f32 %v3276, %v3280
    %v3282 = vsel %vm535, %v3281, 0.0
    %3283 = vst [vmem:[#allocation8] sm:$0xff] %v3282
    %v3284 = vsel %vm535, %v3279, 0.0
    %v3285 = vld [vmem:[%s860] sm:$0xff]
    %3286 = vmatprep.subr.mxu0 %v2883
    %3287 = vmatpush1.msra.mxu0 %v2882
    %3288 = vmatprep.subr.mxu0 %v2887
    %3289 = vmatpush1.msra.mxu0 %v2886
    %3290 = vmatprep.subr.mxu0 %v2891
    %3291 = vmatpush1.msra.mxu0 %v2890
    %3292 = vmatprep.subr.mxu0 %v2895
    %3293 = vmatpush1.msra.mxu0 %v2894
    %3294 = vmatprep.subr.mxu0 %v2899
    %3295 = vmatpush1.msra.mxu0 %v2898
    %3296 = vmatprep.subr.mxu0 %v2903
    %3297 = vmatpush1.msra.mxu0 %v2902
    %3298 = vmatprep.subr.mxu0 %v2907
    %3299 = vmatpush1.msra.mxu0 %v2906
    %3300 = vmatprep.subr.mxu0 %v2911
    %3301 = vmatpush1.msra.mxu0 %v2910
    %3302 = vmatprep.subr.mxu0 %v2915
    %3303 = vmatpush1.msra.mxu0 %v2914
    %3304 = vmatprep.subr.mxu0 %v2919
    %3305 = vmatpush1.msra.mxu0 %v2918
    %3306 = vmatprep.subr.mxu0 %v2923
    %3307 = vmatpush1.msra.mxu0 %v2922
    %3308 = vmatprep.subr.mxu0 %v2927
    %3309 = vmatpush1.msra.mxu0 %v2926
    %3310 = vmatprep.subr.mxu0 %v2931
    %3311 = vmatpush1.msra.mxu0 %v2930
    %3312 = vmatprep.subr.mxu0 %v2935
    %3313 = vmatpush1.msra.mxu0 %v2934
    %3314 = vmatprep.subr.mxu0 %v2939
    %3315 = vmatpush1.msra.mxu0 %v2938
    %3316 = vmatprep.subr.mxu0 %v2943
    %3317 = vmatpush1.msra.mxu0 %v2942
    %3318 = vmatprep.subr.mxu0 0.0
    %3319 = vmatpush1.msra.mxu0 0.0
    %3320 = vmatprep.subr.mxu0 0.0
    %3321 = vmatpush1.msra.mxu0 0.0
    %3322 = vmatprep.subr.mxu0 0.0
    %3323 = vmatpush1.msra.mxu0 0.0
    %3324 = vmatprep.subr.mxu0 0.0
    %3325 = vmatpush1.msra.mxu0 0.0
    %3326 = vmatprep.subr.mxu0 0.0
    %3327 = vmatpush1.msra.mxu0 0.0
    %3328 = vmatprep.subr.mxu0 0.0
    %3329 = vmatpush1.msra.mxu0 0.0
    %3330 = vmatprep.subr.mxu0 0.0
    %3331 = vmatpush1.msra.mxu0 0.0
    %3332 = vmatprep.subr.mxu0 0.0
    %3333 = vmatpush1.msra.mxu0 0.0
    %3334 = vmatprep.subr.mxu0 0.0
    %3335 = vmatpush1.msra.mxu0 0.0
    %3336 = vmatprep.subr.mxu0 0.0
    %3337 = vmatpush1.msra.mxu0 0.0
    %3338 = vmatprep.subr.mxu0 0.0
    %3339 = vmatpush1.msra.mxu0 0.0
    %3340 = vmatprep.subr.mxu0 0.0
    %3341 = vmatpush1.msra.mxu0 0.0
    %3342 = vmatprep.subr.mxu0 0.0
    %3343 = vmatpush1.msra.mxu0 0.0
    %3344 = vmatprep.subr.mxu0 0.0
    %3345 = vmatpush1.msra.mxu0 0.0
    %3346 = vmatprep.subr.mxu0 0.0
    %3347 = vmatpush1.msra.mxu0 0.0
    %3348 = vmatprep.subr.mxu0 0.0
    %3349 = vmatpush1.msra.mxu0 0.0
    %3350 = vmatprep.mubr.f32.mxu0 0.0
    %3351 = vmatmul.mubr.f32.gmra.mrb[0].mxu0 %v3282
    %v3352 = vpop.f32.mrb[0].mxu0
    %v3353 = vadd.f32 0.0, %v3352
    %v3354 = vpop.f32.mrb[0].mxu0
    %v3355 = vadd.f32 0.0, %v3354
    %3356 = vdwg.mxu0
    %3357 = vmatprep.subr.mxu0 %v2885
    %3358 = vmatpush1.msra.mxu0 %v2884
    %3359 = vmatprep.subr.mxu0 %v2889
    %3360 = vmatpush1.msra.mxu0 %v2888
    %3361 = vmatprep.subr.mxu0 %v2893
    %3362 = vmatpush1.msra.mxu0 %v2892
    %3363 = vmatprep.subr.mxu0 %v2897
    %3364 = vmatpush1.msra.mxu0 %v2896
    %3365 = vmatprep.subr.mxu0 %v2901
    %3366 = vmatpush1.msra.mxu0 %v2900
    %3367 = vmatprep.subr.mxu0 %v2905
    %3368 = vmatpush1.msra.mxu0 %v2904
    %3369 = vmatprep.subr.mxu0 %v2909
    %3370 = vmatpush1.msra.mxu0 %v2908
    %3371 = vmatprep.subr.mxu0 %v2913
    %3372 = vmatpush1.msra.mxu0 %v2912
    %3373 = vmatprep.subr.mxu0 %v2917
    %3374 = vmatpush1.msra.mxu0 %v2916
    %3375 = vmatprep.subr.mxu0 %v2921
    %3376 = vmatpush1.msra.mxu0 %v2920
    %3377 = vmatprep.subr.mxu0 %v2925
    %3378 = vmatpush1.msra.mxu0 %v2924
    %3379 = vmatprep.subr.mxu0 %v2929
    %3380 = vmatpush1.msra.mxu0 %v2928
    %3381 = vmatprep.subr.mxu0 %v2933
    %3382 = vmatpush1.msra.mxu0 %v2932
    %3383 = vmatprep.subr.mxu0 %v2937
    %3384 = vmatpush1.msra.mxu0 %v2936
    %3385 = vmatprep.subr.mxu0 %v2941
    %3386 = vmatpush1.msra.mxu0 %v2940
    %3387 = vmatprep.subr.mxu0 %v2945
    %3388 = vmatpush1.msra.mxu0 %v2944
    %3389 = vmatprep.subr.mxu0 0.0
    %3390 = vmatpush1.msra.mxu0 0.0
    %3391 = vmatprep.subr.mxu0 0.0
    %3392 = vmatpush1.msra.mxu0 0.0
    %3393 = vmatprep.subr.mxu0 0.0
    %3394 = vmatpush1.msra.mxu0 0.0
    %3395 = vmatprep.subr.mxu0 0.0
    %3396 = vmatpush1.msra.mxu0 0.0
    %3397 = vmatprep.subr.mxu0 0.0
    %3398 = vmatpush1.msra.mxu0 0.0
    %3399 = vmatprep.subr.mxu0 0.0
    %3400 = vmatpush1.msra.mxu0 0.0
    %3401 = vmatprep.subr.mxu0 0.0
    %3402 = vmatpush1.msra.mxu0 0.0
    %3403 = vmatprep.subr.mxu0 0.0
    %3404 = vmatpush1.msra.mxu0 0.0
    %3405 = vmatprep.subr.mxu0 0.0
    %3406 = vmatpush1.msra.mxu0 0.0
    %3407 = vmatprep.subr.mxu0 0.0
    %3408 = vmatpush1.msra.mxu0 0.0
    %3409 = vmatprep.subr.mxu0 0.0
    %3410 = vmatpush1.msra.mxu0 0.0
    %3411 = vmatprep.subr.mxu0 0.0
    %3412 = vmatpush1.msra.mxu0 0.0
    %3413 = vmatprep.subr.mxu0 0.0
    %3414 = vmatpush1.msra.mxu0 0.0
    %3415 = vmatprep.subr.mxu0 0.0
    %3416 = vmatpush1.msra.mxu0 0.0
    %3417 = vmatprep.subr.mxu0 0.0
    %3418 = vmatpush1.msra.mxu0 0.0
    %3419 = vmatprep.subr.mxu0 0.0
    %3420 = vmatpush1.msra.mxu0 0.0
    %3421 = vmatprep.mubr.f32.mxu0 0.0
    %3422 = vmatmul.mubr.f32.gmra.mrb[0].mxu0 %v3282
    %v3423 = vpop.f32.mrb[0].mxu0
    %v3424 = vadd.f32 0.0, %v3423
    %v3425 = vpop.f32.mrb[0].mxu0
    %v3426 = vadd.f32 0.0, %v3425
    %3427 = vdwg.mxu0
    %3428 = vmatprep.subr.mxu0 %v2818
    %3429 = vmatpush1.msra.mxu0 %v2817
    %3430 = vmatprep.subr.mxu0 %v2822
    %3431 = vmatpush1.msra.mxu0 %v2821
    %3432 = vmatprep.subr.mxu0 %v2826
    %3433 = vmatpush1.msra.mxu0 %v2825
    %3434 = vmatprep.subr.mxu0 %v2830
    %3435 = vmatpush1.msra.mxu0 %v2829
    %3436 = vmatprep.subr.mxu0 %v2834
    %3437 = vmatpush1.msra.mxu0 %v2833
    %3438 = vmatprep.subr.mxu0 %v2838
    %3439 = vmatpush1.msra.mxu0 %v2837
    %3440 = vmatprep.subr.mxu0 %v2842
    %3441 = vmatpush1.msra.mxu0 %v2841
    %3442 = vmatprep.subr.mxu0 %v2846
    %3443 = vmatpush1.msra.mxu0 %v2845
    %3444 = vmatprep.subr.mxu0 %v2850
    %3445 = vmatpush1.msra.mxu0 %v2849
    %3446 = vmatprep.subr.mxu0 %v2854
    %3447 = vmatpush1.msra.mxu0 %v2853
    %3448 = vmatprep.subr.mxu0 %v2858
    %3449 = vmatpush1.msra.mxu0 %v2857
    %3450 = vmatprep.subr.mxu0 %v2862
    %3451 = vmatpush1.msra.mxu0 %v2861
    %3452 = vmatprep.subr.mxu0 %v2866
    %3453 = vmatpush1.msra.mxu0 %v2865
    %3454 = vmatprep.subr.mxu0 %v2870
    %3455 = vmatpush1.msra.mxu0 %v2869
    %3456 = vmatprep.subr.mxu0 %v2874
    %3457 = vmatpush1.msra.mxu0 %v2873
    %3458 = vmatprep.subr.mxu0 %v2878
    %3459 = vmatpush1.msra.mxu0 %v2877
    %3460 = vmatprep.subr.mxu0 0.0
    %3461 = vmatpush1.msra.mxu0 0.0
    %3462 = vmatprep.subr.mxu0 0.0
    %3463 = vmatpush1.msra.mxu0 0.0
    %3464 = vmatprep.subr.mxu0 0.0
    %3465 = vmatpush1.msra.mxu0 0.0
    %3466 = vmatprep.subr.mxu0 0.0
    %3467 = vmatpush1.msra.mxu0 0.0
    %3468 = vmatprep.subr.mxu0 0.0
    %3469 = vmatpush1.msra.mxu0 0.0
    %3470 = vmatprep.subr.mxu0 0.0
    %3471 = vmatpush1.msra.mxu0 0.0
    %3472 = vmatprep.subr.mxu0 0.0
    %3473 = vmatpush1.msra.mxu0 0.0
    %3474 = vmatprep.subr.mxu0 0.0
    %3475 = vmatpush1.msra.mxu0 0.0
    %3476 = vmatprep.subr.mxu0 0.0
    %3477 = vmatpush1.msra.mxu0 0.0
    %3478 = vmatprep.subr.mxu0 0.0
    %3479 = vmatpush1.msra.mxu0 0.0
    %3480 = vmatprep.subr.mxu0 0.0
    %3481 = vmatpush1.msra.mxu0 0.0
    %3482 = vmatprep.subr.mxu0 0.0
    %3483 = vmatpush1.msra.mxu0 0.0
    %3484 = vmatprep.subr.mxu0 0.0
    %3485 = vmatpush1.msra.mxu0 0.0
    %3486 = vmatprep.subr.mxu0 0.0
    %3487 = vmatpush1.msra.mxu0 0.0
    %3488 = vmatprep.subr.mxu0 0.0
    %3489 = vmatpush1.msra.mxu0 0.0
    %3490 = vmatprep.subr.mxu0 0.0
    %3491 = vmatpush1.msra.mxu0 0.0
    %3492 = vmatprep.mubr.f32.mxu0 0.0
    %3493 = vmatmul.mubr.f32.gmra.mrb[0].mxu0 %v3285
    %v3494 = vpop.f32.mrb[0].mxu0
    %v3495 = vadd.f32 %v3353, %v3494
    %v3496 = vpop.f32.mrb[0].mxu0
    %v3497 = vadd.f32 %v3355, %v3496
    %3498 = vdwg.mxu0
    %3499 = vmatprep.subr.mxu0 %v2820
    %3500 = vmatpush1.msra.mxu0 %v2819
    %3501 = vmatprep.subr.mxu0 %v2824
    %3502 = vmatpush1.msra.mxu0 %v2823
    %3503 = vmatprep.subr.mxu0 %v2828
    %3504 = vmatpush1.msra.mxu0 %v2827
    %3505 = vmatprep.subr.mxu0 %v2832
    %3506 = vmatpush1.msra.mxu0 %v2831
    %3507 = vmatprep.subr.mxu0 %v2836
    %3508 = vmatpush1.msra.mxu0 %v2835
    %3509 = vmatprep.subr.mxu0 %v2840
    %3510 = vmatpush1.msra.mxu0 %v2839
    %3511 = vmatprep.subr.mxu0 %v2844
    %3512 = vmatpush1.msra.mxu0 %v2843
    %3513 = vmatprep.subr.mxu0 %v2848
    %3514 = vmatpush1.msra.mxu0 %v2847
    %3515 = vmatprep.subr.mxu0 %v2852
    %3516 = vmatpush1.msra.mxu0 %v2851
    %3517 = vmatprep.subr.mxu0 %v2856
    %3518 = vmatpush1.msra.mxu0 %v2855
    %3519 = vmatprep.subr.mxu0 %v2860
    %3520 = vmatpush1.msra.mxu0 %v2859
    %3521 = vmatprep.subr.mxu0 %v2864
    %3522 = vmatpush1.msra.mxu0 %v2863
    %3523 = vmatprep.subr.mxu0 %v2868
    %3524 = vmatpush1.msra.mxu0 %v2867
    %3525 = vmatprep.subr.mxu0 %v2872
    %3526 = vmatpush1.msra.mxu0 %v2871
    %3527 = vmatprep.subr.mxu0 %v2876
    %3528 = vmatpush1.msra.mxu0 %v2875
    %3529 = vmatprep.subr.mxu0 %v2880
    %3530 = vmatpush1.msra.mxu0 %v2879
    %3531 = vmatprep.subr.mxu0 0.0
    %3532 = vmatpush1.msra.mxu0 0.0
    %3533 = vmatprep.subr.mxu0 0.0
    %3534 = vmatpush1.msra.mxu0 0.0
    %3535 = vmatprep.subr.mxu0 0.0
    %3536 = vmatpush1.msra.mxu0 0.0
    %3537 = vmatprep.subr.mxu0 0.0
    %3538 = vmatpush1.msra.mxu0 0.0
    %3539 = vmatprep.subr.mxu0 0.0
    %3540 = vmatpush1.msra.mxu0 0.0
    %3541 = vmatprep.subr.mxu0 0.0
    %3542 = vmatpush1.msra.mxu0 0.0
    %3543 = vmatprep.subr.mxu0 0.0
    %3544 = vmatpush1.msra.mxu0 0.0
    %3545 = vmatprep.subr.mxu0 0.0
    %3546 = vmatpush1.msra.mxu0 0.0
    %3547 = vmatprep.subr.mxu0 0.0
    %3548 = vmatpush1.msra.mxu0 0.0
    %3549 = vmatprep.subr.mxu0 0.0
    %3550 = vmatpush1.msra.mxu0 0.0
    %3551 = vmatprep.subr.mxu0 0.0
    %3552 = vmatpush1.msra.mxu0 0.0
    %3553 = vmatprep.subr.mxu0 0.0
    %3554 = vmatpush1.msra.mxu0 0.0
    %3555 = vmatprep.subr.mxu0 0.0
    %3556 = vmatpush1.msra.mxu0 0.0
    %3557 = vmatprep.subr.mxu0 0.0
    %3558 = vmatpush1.msra.mxu0 0.0
    %3559 = vmatprep.subr.mxu0 0.0
    %3560 = vmatpush1.msra.mxu0 0.0
    %3561 = vmatprep.subr.mxu0 0.0
    %3562 = vmatpush1.msra.mxu0 0.0
    %3563 = vmatprep.mubr.f32.mxu0 0.0
    %3564 = vmatmul.mubr.f32.gmra.mrb[0].mxu0 %v3285
    %v3565 = vpop.f32.mrb[0].mxu0
    %v3566 = vadd.f32 %v3424, %v3565
    %v3567 = vpop.f32.mrb[0].mxu0
    %v3568 = vadd.f32 %v3426, %v3567
    %3569 = vdwg.mxu0
    %v3570 = vadd.f32 %v3495, %v3237
    %v3571 = vadd.f32 %v3497, %v3241
    %v3572 = vadd.f32 %v3566, %v3245
    %v3573 = vadd.f32 %v3568, %v3249
    %v3574 = vxor.u32 %v3570, 2147483648
    %v3575 = vmul.f32 %v3574, 1.442695
    %v3576 = vpow.pop %v3575
    %v3577 = vadd.f32 %v3576, 1.0
    %v3578 = vrcp.pop %v3577
    %v3579 = vmul.f32 1.0, %v3578
    %v3580 = vxor.u32 %v3571, 2147483648
    %v3581 = vmul.f32 %v3580, 1.442695
    %v3582 = vpow.pop %v3581
    %v3583 = vadd.f32 %v3582, 1.0
    %v3584 = vrcp.pop %v3583
    %v3585 = vmul.f32 1.0, %v3584
    %v3586 = vtanh.pop %v3572
    %v3587 = vxor.u32 %v3573, 2147483648
    %v3588 = vmul.f32 %v3587, 1.442695
    %v3589 = vpow.pop %v3588
    %v3590 = vadd.f32 %v3589, 1.0
    %v3591 = vrcp.pop %v3590
    %v3592 = vmul.f32 1.0, %v3591
    %v3593 = vmul.f32 %v3585, %v3284
    %v3594 = vmul.f32 %v3579, %v3586
    %v3595 = vadd.f32 %v3593, %v3594
    %v3596 = vtanh.pop %v3595
    %v3597 = vmul.f32 %v3592, %v3596
    %v3598 = vsel %vm858, %v3597, 0.0
    %3599 = vst [vmem:[%s860] sm:$0xff] %v3598
    %v3600 = vsel %vm858, %v3597, %v3282
    %v3601 = vsel %vm858, %v3595, %v3284
    %v3602 = vld [vmem:[%s1185] sm:$0xff]
    %3603 = vmatprep.subr.mxu0 %v2883
    %3604 = vmatpush1.msra.mxu0 %v2882
    %3605 = vmatprep.subr.mxu0 %v2887
    %3606 = vmatpush1.msra.mxu0 %v2886
    %3607 = vmatprep.subr.mxu0 %v2891
    %3608 = vmatpush1.msra.mxu0 %v2890
    %3609 = vmatprep.subr.mxu0 %v2895
    %3610 = vmatpush1.msra.mxu0 %v2894
    %3611 = vmatprep.subr.mxu0 %v2899
    %3612 = vmatpush1.msra.mxu0 %v2898
    %3613 = vmatprep.subr.mxu0 %v2903
    %3614 = vmatpush1.msra.mxu0 %v2902
    %3615 = vmatprep.subr.mxu0 %v2907
    %3616 = vmatpush1.msra.mxu0 %v2906
    %3617 = vmatprep.subr.mxu0 %v2911
    %3618 = vmatpush1.msra.mxu0 %v2910
    %3619 = vmatprep.subr.mxu0 %v2915
    %3620 = vmatpush1.msra.mxu0 %v2914
    %3621 = vmatprep.subr.mxu0 %v2919
    %3622 = vmatpush1.msra.mxu0 %v2918
    %3623 = vmatprep.subr.mxu0 %v2923
    %3624 = vmatpush1.msra.mxu0 %v2922
    %3625 = vmatprep.subr.mxu0 %v2927
    %3626 = vmatpush1.msra.mxu0 %v2926
    %3627 = vmatprep.subr.mxu0 %v2931
    %3628 = vmatpush1.msra.mxu0 %v2930
    %3629 = vmatprep.subr.mxu0 %v2935
    %3630 = vmatpush1.msra.mxu0 %v2934
    %3631 = vmatprep.subr.mxu0 %v2939
    %3632 = vmatpush1.msra.mxu0 %v2938
    %3633 = vmatprep.subr.mxu0 %v2943
    %3634 = vmatpush1.msra.mxu0 %v2942
    %3635 = vmatprep.subr.mxu0 0.0
    %3636 = vmatpush1.msra.mxu0 0.0
    %3637 = vmatprep.subr.mxu0 0.0
    %3638 = vmatpush1.msra.mxu0 0.0
    %3639 = vmatprep.subr.mxu0 0.0
    %3640 = vmatpush1.msra.mxu0 0.0
    %3641 = vmatprep.subr.mxu0 0.0
    %3642 = vmatpush1.msra.mxu0 0.0
    %3643 = vmatprep.subr.mxu0 0.0
    %3644 = vmatpush1.msra.mxu0 0.0
    %3645 = vmatprep.subr.mxu0 0.0
    %3646 = vmatpush1.msra.mxu0 0.0
    %3647 = vmatprep.subr.mxu0 0.0
    %3648 = vmatpush1.msra.mxu0 0.0
    %3649 = vmatprep.subr.mxu0 0.0
    %3650 = vmatpush1.msra.mxu0 0.0
    %3651 = vmatprep.subr.mxu0 0.0
    %3652 = vmatpush1.msra.mxu0 0.0
    %3653 = vmatprep.subr.mxu0 0.0
    %3654 = vmatpush1.msra.mxu0 0.0
    %3655 = vmatprep.subr.mxu0 0.0
    %3656 = vmatpush1.msra.mxu0 0.0
    %3657 = vmatprep.subr.mxu0 0.0
    %3658 = vmatpush1.msra.mxu0 0.0
    %3659 = vmatprep.subr.mxu0 0.0
    %3660 = vmatpush1.msra.mxu0 0.0
    %3661 = vmatprep.subr.mxu0 0.0
    %3662 = vmatpush1.msra.mxu0 0.0
    %3663 = vmatprep.subr.mxu0 0.0
    %3664 = vmatpush1.msra.mxu0 0.0
    %3665 = vmatprep.subr.mxu0 0.0
    %3666 = vmatpush1.msra.mxu0 0.0
    %3667 = vmatprep.mubr.f32.mxu0 0.0
    %3668 = vmatmul.mubr.f32.gmra.mrb[0].mxu0 %v3600
    %v3669 = vpop.f32.mrb[0].mxu0
    %v3670 = vadd.f32 0.0, %v3669
    %v3671 = vpop.f32.mrb[0].mxu0
    %v3672 = vadd.f32 0.0, %v3671
    %3673 = vdwg.mxu0
    %3674 = vmatprep.subr.mxu0 %v2885
    %3675 = vmatpush1.msra.mxu0 %v2884
    %3676 = vmatprep.subr.mxu0 %v2889
    %3677 = vmatpush1.msra.mxu0 %v2888
    %3678 = vmatprep.subr.mxu0 %v2893
    %3679 = vmatpush1.msra.mxu0 %v2892
    %3680 = vmatprep.subr.mxu0 %v2897
    %3681 = vmatpush1.msra.mxu0 %v2896
    %3682 = vmatprep.subr.mxu0 %v2901
    %3683 = vmatpush1.msra.mxu0 %v2900
    %3684 = vmatprep.subr.mxu0 %v2905
    %3685 = vmatpush1.msra.mxu0 %v2904
    %3686 = vmatprep.subr.mxu0 %v2909
    %3687 = vmatpush1.msra.mxu0 %v2908
    %3688 = vmatprep.subr.mxu0 %v2913
    %3689 = vmatpush1.msra.mxu0 %v2912
    %3690 = vmatprep.subr.mxu0 %v2917
    %3691 = vmatpush1.msra.mxu0 %v2916
    %3692 = vmatprep.subr.mxu0 %v2921
    %3693 = vmatpush1.msra.mxu0 %v2920
    %3694 = vmatprep.subr.mxu0 %v2925
    %3695 = vmatpush1.msra.mxu0 %v2924
    %3696 = vmatprep.subr.mxu0 %v2929
    %3697 = vmatpush1.msra.mxu0 %v2928
    %3698 = vmatprep.subr.mxu0 %v2933
    %3699 = vmatpush1.msra.mxu0 %v2932
    %3700 = vmatprep.subr.mxu0 %v2937
    %3701 = vmatpush1.msra.mxu0 %v2936
    %3702 = vmatprep.subr.mxu0 %v2941
    %3703 = vmatpush1.msra.mxu0 %v2940
    %3704 = vmatprep.subr.mxu0 %v2945
    %3705 = vmatpush1.msra.mxu0 %v2944
    %3706 = vmatprep.subr.mxu0 0.0
    %3707 = vmatpush1.msra.mxu0 0.0
    %3708 = vmatprep.subr.mxu0 0.0
    %3709 = vmatpush1.msra.mxu0 0.0
    %3710 = vmatprep.subr.mxu0 0.0
    %3711 = vmatpush1.msra.mxu0 0.0
    %3712 = vmatprep.subr.mxu0 0.0
    %3713 = vmatpush1.msra.mxu0 0.0
    %3714 = vmatprep.subr.mxu0 0.0
    %3715 = vmatpush1.msra.mxu0 0.0
    %3716 = vmatprep.subr.mxu0 0.0
    %3717 = vmatpush1.msra.mxu0 0.0
    %3718 = vmatprep.subr.mxu0 0.0
    %3719 = vmatpush1.msra.mxu0 0.0
    %3720 = vmatprep.subr.mxu0 0.0
    %3721 = vmatpush1.msra.mxu0 0.0
    %3722 = vmatprep.subr.mxu0 0.0
    %3723 = vmatpush1.msra.mxu0 0.0
    %3724 = vmatprep.subr.mxu0 0.0
    %3725 = vmatpush1.msra.mxu0 0.0
    %3726 = vmatprep.subr.mxu0 0.0
    %3727 = vmatpush1.msra.mxu0 0.0
    %3728 = vmatprep.subr.mxu0 0.0
    %3729 = vmatpush1.msra.mxu0 0.0
    %3730 = vmatprep.subr.mxu0 0.0
    %3731 = vmatpush1.msra.mxu0 0.0
    %3732 = vmatprep.subr.mxu0 0.0
    %3733 = vmatpush1.msra.mxu0 0.0
    %3734 = vmatprep.subr.mxu0 0.0
    %3735 = vmatpush1.msra.mxu0 0.0
    %3736 = vmatprep.subr.mxu0 0.0
    %3737 = vmatpush1.msra.mxu0 0.0
    %3738 = vmatprep.mubr.f32.mxu0 0.0
    %3739 = vmatmul.mubr.f32.gmra.mrb[0].mxu0 %v3600
    %v3740 = vpop.f32.mrb[0].mxu0
    %v3741 = vadd.f32 0.0, %v3740
    %v3742 = vpop.f32.mrb[0].mxu0
    %v3743 = vadd.f32 0.0, %v3742
    %3744 = vdwg.mxu0
    %3745 = vmatprep.subr.mxu0 %v2818
    %3746 = vmatpush1.msra.mxu0 %v2817
    %3747 = vmatprep.subr.mxu0 %v2822
    %3748 = vmatpush1.msra.mxu0 %v2821
    %3749 = vmatprep.subr.mxu0 %v2826
    %3750 = vmatpush1.msra.mxu0 %v2825
    %3751 = vmatprep.subr.mxu0 %v2830
    %3752 = vmatpush1.msra.mxu0 %v2829
    %3753 = vmatprep.subr.mxu0 %v2834
    %3754 = vmatpush1.msra.mxu0 %v2833
    %3755 = vmatprep.subr.mxu0 %v2838
    %3756 = vmatpush1.msra.mxu0 %v2837
    %3757 = vmatprep.subr.mxu0 %v2842
    %3758 = vmatpush1.msra.mxu0 %v2841
    %3759 = vmatprep.subr.mxu0 %v2846
    %3760 = vmatpush1.msra.mxu0 %v2845
    %3761 = vmatprep.subr.mxu0 %v2850
    %3762 = vmatpush1.msra.mxu0 %v2849
    %3763 = vmatprep.subr.mxu0 %v2854
    %3764 = vmatpush1.msra.mxu0 %v2853
    %3765 = vmatprep.subr.mxu0 %v2858
    %3766 = vmatpush1.msra.mxu0 %v2857
    %3767 = vmatprep.subr.mxu0 %v2862
    %3768 = vmatpush1.msra.mxu0 %v2861
    %3769 = vmatprep.subr.mxu0 %v2866
    %3770 = vmatpush1.msra.mxu0 %v2865
    %3771 = vmatprep.subr.mxu0 %v2870
    %3772 = vmatpush1.msra.mxu0 %v2869
    %3773 = vmatprep.subr.mxu0 %v2874
    %3774 = vmatpush1.msra.mxu0 %v2873
    %3775 = vmatprep.subr.mxu0 %v2878
    %3776 = vmatpush1.msra.mxu0 %v2877
    %3777 = vmatprep.subr.mxu0 0.0
    %3778 = vmatpush1.msra.mxu0 0.0
    %3779 = vmatprep.subr.mxu0 0.0
    %3780 = vmatpush1.msra.mxu0 0.0
    %3781 = vmatprep.subr.mxu0 0.0
    %3782 = vmatpush1.msra.mxu0 0.0
    %3783 = vmatprep.subr.mxu0 0.0
    %3784 = vmatpush1.msra.mxu0 0.0
    %3785 = vmatprep.subr.mxu0 0.0
    %3786 = vmatpush1.msra.mxu0 0.0
    %3787 = vmatprep.subr.mxu0 0.0
    %3788 = vmatpush1.msra.mxu0 0.0
    %3789 = vmatprep.subr.mxu0 0.0
    %3790 = vmatpush1.msra.mxu0 0.0
    %3791 = vmatprep.subr.mxu0 0.0
    %3792 = vmatpush1.msra.mxu0 0.0
    %3793 = vmatprep.subr.mxu0 0.0
    %3794 = vmatpush1.msra.mxu0 0.0
    %3795 = vmatprep.subr.mxu0 0.0
    %3796 = vmatpush1.msra.mxu0 0.0
    %3797 = vmatprep.subr.mxu0 0.0
    %3798 = vmatpush1.msra.mxu0 0.0
    %3799 = vmatprep.subr.mxu0 0.0
    %3800 = vmatpush1.msra.mxu0 0.0
    %3801 = vmatprep.subr.mxu0 0.0
    %3802 = vmatpush1.msra.mxu0 0.0
    %3803 = vmatprep.subr.mxu0 0.0
    %3804 = vmatpush1.msra.mxu0 0.0
    %3805 = vmatprep.subr.mxu0 0.0
    %3806 = vmatpush1.msra.mxu0 0.0
    %3807 = vmatprep.subr.mxu0 0.0
    %3808 = vmatpush1.msra.mxu0 0.0
    %3809 = vmatprep.mubr.f32.mxu0 0.0
    %3810 = vmatmul.mubr.f32.gmra.mrb[0].mxu0 %v3602
    %v3811 = vpop.f32.mrb[0].mxu0
    %v3812 = vadd.f32 %v3670, %v3811
    %v3813 = vpop.f32.mrb[0].mxu0
    %v3814 = vadd.f32 %v3672, %v3813
    %3815 = vdwg.mxu0
    %3816 = vmatprep.subr.mxu0 %v2820
    %3817 = vmatpush1.msra.mxu0 %v2819
    %3818 = vmatprep.subr.mxu0 %v2824
    %3819 = vmatpush1.msra.mxu0 %v2823
    %3820 = vmatprep.subr.mxu0 %v2828
    %3821 = vmatpush1.msra.mxu0 %v2827
    %3822 = vmatprep.subr.mxu0 %v2832
    %3823 = vmatpush1.msra.mxu0 %v2831
    %3824 = vmatprep.subr.mxu0 %v2836
    %3825 = vmatpush1.msra.mxu0 %v2835
    %3826 = vmatprep.subr.mxu0 %v2840
    %3827 = vmatpush1.msra.mxu0 %v2839
    %3828 = vmatprep.subr.mxu0 %v2844
    %3829 = vmatpush1.msra.mxu0 %v2843
    %3830 = vmatprep.subr.mxu0 %v2848
    %3831 = vmatpush1.msra.mxu0 %v2847
    %3832 = vmatprep.subr.mxu0 %v2852
    %3833 = vmatpush1.msra.mxu0 %v2851
    %3834 = vmatprep.subr.mxu0 %v2856
    %3835 = vmatpush1.msra.mxu0 %v2855
    %3836 = vmatprep.subr.mxu0 %v2860
    %3837 = vmatpush1.msra.mxu0 %v2859
    %3838 = vmatprep.subr.mxu0 %v2864
    %3839 = vmatpush1.msra.mxu0 %v2863
    %3840 = vmatprep.subr.mxu0 %v2868
    %3841 = vmatpush1.msra.mxu0 %v2867
    %3842 = vmatprep.subr.mxu0 %v2872
    %3843 = vmatpush1.msra.mxu0 %v2871
    %3844 = vmatprep.subr.mxu0 %v2876
    %3845 = vmatpush1.msra.mxu0 %v2875
    %3846 = vmatprep.subr.mxu0 %v2880
    %3847 = vmatpush1.msra.mxu0 %v2879
    %3848 = vmatprep.subr.mxu0 0.0
    %3849 = vmatpush1.msra.mxu0 0.0
    %3850 = vmatprep.subr.mxu0 0.0
    %3851 = vmatpush1.msra.mxu0 0.0
    %3852 = vmatprep.subr.mxu0 0.0
    %3853 = vmatpush1.msra.mxu0 0.0
    %3854 = vmatprep.subr.mxu0 0.0
    %3855 = vmatpush1.msra.mxu0 0.0
    %3856 = vmatprep.subr.mxu0 0.0
    %3857 = vmatpush1.msra.mxu0 0.0
    %3858 = vmatprep.subr.mxu0 0.0
    %3859 = vmatpush1.msra.mxu0 0.0
    %3860 = vmatprep.subr.mxu0 0.0
    %3861 = vmatpush1.msra.mxu0 0.0
    %3862 = vmatprep.subr.mxu0 0.0
    %3863 = vmatpush1.msra.mxu0 0.0
    %3864 = vmatprep.subr.mxu0 0.0
    %3865 = vmatpush1.msra.mxu0 0.0
    %3866 = vmatprep.subr.mxu0 0.0
    %3867 = vmatpush1.msra.mxu0 0.0
    %3868 = vmatprep.subr.mxu0 0.0
    %3869 = vmatpush1.msra.mxu0 0.0
    %3870 = vmatprep.subr.mxu0 0.0
    %3871 = vmatpush1.msra.mxu0 0.0
    %3872 = vmatprep.subr.mxu0 0.0
    %3873 = vmatpush1.msra.mxu0 0.0
    %3874 = vmatprep.subr.mxu0 0.0
    %3875 = vmatpush1.msra.mxu0 0.0
    %3876 = vmatprep.subr.mxu0 0.0
    %3877 = vmatpush1.msra.mxu0 0.0
    %3878 = vmatprep.subr.mxu0 0.0
    %3879 = vmatpush1.msra.mxu0 0.0
    %3880 = vmatprep.mubr.f32.mxu0 0.0
    %3881 = vmatmul.mubr.f32.gmra.mrb[0].mxu0 %v3602
    %v3882 = vpop.f32.mrb[0].mxu0
    %v3883 = vadd.f32 %v3741, %v3882
    %v3884 = vpop.f32.mrb[0].mxu0
    %v3885 = vadd.f32 %v3743, %v3884
    %3886 = vdwg.mxu0
    %v3887 = vadd.f32 %v3812, %v3237
    %v3888 = vadd.f32 %v3814, %v3241
    %v3889 = vadd.f32 %v3883, %v3245
    %v3890 = vadd.f32 %v3885, %v3249
    %v3891 = vxor.u32 %v3887, 2147483648
    %v3892 = vmul.f32 %v3891, 1.442695
    %v3893 = vpow.pop %v3892
    %v3894 = vadd.f32 %v3893, 1.0
    %v3895 = vrcp.pop %v3894
    %v3896 = vmul.f32 1.0, %v3895
    %v3897 = vxor.u32 %v3888, 2147483648
    %v3898 = vmul.f32 %v3897, 1.442695
    %v3899 = vpow.pop %v3898
    %v3900 = vadd.f32 %v3899, 1.0
    %v3901 = vrcp.pop %v3900
    %v3902 = vmul.f32 1.0, %v3901
    %v3903 = vtanh.pop %v3889
    %v3904 = vxor.u32 %v3890, 2147483648
    %v3905 = vmul.f32 %v3904, 1.442695
    %v3906 = vpow.pop %v3905
    %v3907 = vadd.f32 %v3906, 1.0
    %v3908 = vrcp.pop %v3907
    %v3909 = vmul.f32 1.0, %v3908
    %v3910 = vmul.f32 %v3902, %v3601
    %v3911 = vmul.f32 %v3896, %v3903
    %v3912 = vadd.f32 %v3910, %v3911
    %v3913 = vtanh.pop %v3912
    %v3914 = vmul.f32 %v3909, %v3913
    %v3915 = vsel %vm1183, %v3914, 0.0
    %3916 = vst [vmem:[%s1185] sm:$0xff] %v3915
    %v3917 = vsel %vm1183, %v3914, %v3600
    %v3918 = vsel %vm1183, %v3912, %v3601
    %v3919 = vld [vmem:[%s1510] sm:$0xff]
    %3920 = vmatprep.subr.mxu0 %v2883
    %3921 = vmatpush1.msra.mxu0 %v2882
    %3922 = vmatprep.subr.mxu0 %v2887
    %3923 = vmatpush1.msra.mxu0 %v2886
    %3924 = vmatprep.subr.mxu0 %v2891
    %3925 = vmatpush1.msra.mxu0 %v2890
    %3926 = vmatprep.subr.mxu0 %v2895
    %3927 = vmatpush1.msra.mxu0 %v2894
    %3928 = vmatprep.subr.mxu0 %v2899
    %3929 = vmatpush1.msra.mxu0 %v2898
    %3930 = vmatprep.subr.mxu0 %v2903
    %3931 = vmatpush1.msra.mxu0 %v2902
    %3932 = vmatprep.subr.mxu0 %v2907
    %3933 = vmatpush1.msra.mxu0 %v2906
    %3934 = vmatprep.subr.mxu0 %v2911
    %3935 = vmatpush1.msra.mxu0 %v2910
    %3936 = vmatprep.subr.mxu0 %v2915
    %3937 = vmatpush1.msra.mxu0 %v2914
    %3938 = vmatprep.subr.mxu0 %v2919
    %3939 = vmatpush1.msra.mxu0 %v2918
    %3940 = vmatprep.subr.mxu0 %v2923
    %3941 = vmatpush1.msra.mxu0 %v2922
    %3942 = vmatprep.subr.mxu0 %v2927
    %3943 = vmatpush1.msra.mxu0 %v2926
    %3944 = vmatprep.subr.mxu0 %v2931
    %3945 = vmatpush1.msra.mxu0 %v2930
    %3946 = vmatprep.subr.mxu0 %v2935
    %3947 = vmatpush1.msra.mxu0 %v2934
    %3948 = vmatprep.subr.mxu0 %v2939
    %3949 = vmatpush1.msra.mxu0 %v2938
    %3950 = vmatprep.subr.mxu0 %v2943
    %3951 = vmatpush1.msra.mxu0 %v2942
    %3952 = vmatprep.subr.mxu0 0.0
    %3953 = vmatpush1.msra.mxu0 0.0
    %3954 = vmatprep.subr.mxu0 0.0
    %3955 = vmatpush1.msra.mxu0 0.0
    %3956 = vmatprep.subr.mxu0 0.0
    %3957 = vmatpush1.msra.mxu0 0.0
    %3958 = vmatprep.subr.mxu0 0.0
    %3959 = vmatpush1.msra.mxu0 0.0
    %3960 = vmatprep.subr.mxu0 0.0
    %3961 = vmatpush1.msra.mxu0 0.0
    %3962 = vmatprep.subr.mxu0 0.0
    %3963 = vmatpush1.msra.mxu0 0.0
    %3964 = vmatprep.subr.mxu0 0.0
    %3965 = vmatpush1.msra.mxu0 0.0
    %3966 = vmatprep.subr.mxu0 0.0
    %3967 = vmatpush1.msra.mxu0 0.0
    %3968 = vmatprep.subr.mxu0 0.0
    %3969 = vmatpush1.msra.mxu0 0.0
    %3970 = vmatprep.subr.mxu0 0.0
    %3971 = vmatpush1.msra.mxu0 0.0
    %3972 = vmatprep.subr.mxu0 0.0
    %3973 = vmatpush1.msra.mxu0 0.0
    %3974 = vmatprep.subr.mxu0 0.0
    %3975 = vmatpush1.msra.mxu0 0.0
    %3976 = vmatprep.subr.mxu0 0.0
    %3977 = vmatpush1.msra.mxu0 0.0
    %3978 = vmatprep.subr.mxu0 0.0
    %3979 = vmatpush1.msra.mxu0 0.0
    %3980 = vmatprep.subr.mxu0 0.0
    %3981 = vmatpush1.msra.mxu0 0.0
    %3982 = vmatprep.subr.mxu0 0.0
    %3983 = vmatpush1.msra.mxu0 0.0
    %3984 = vmatprep.mubr.f32.mxu0 0.0
    %3985 = vmatmul.mubr.f32.gmra.mrb[0].mxu0 %v3917
    %v3986 = vpop.f32.mrb[0].mxu0
    %v3987 = vadd.f32 0.0, %v3986
    %v3988 = vpop.f32.mrb[0].mxu0
    %v3989 = vadd.f32 0.0, %v3988
    %3990 = vdwg.mxu0
    %3991 = vmatprep.subr.mxu0 %v2885
    %3992 = vmatpush1.msra.mxu0 %v2884
    %3993 = vmatprep.subr.mxu0 %v2889
    %3994 = vmatpush1.msra.mxu0 %v2888
    %3995 = vmatprep.subr.mxu0 %v2893
    %3996 = vmatpush1.msra.mxu0 %v2892
    %3997 = vmatprep.subr.mxu0 %v2897
    %3998 = vmatpush1.msra.mxu0 %v2896
    %3999 = vmatprep.subr.mxu0 %v2901
    %4000 = vmatpush1.msra.mxu0 %v2900
    %4001 = vmatprep.subr.mxu0 %v2905
    %4002 = vmatpush1.msra.mxu0 %v2904
    %4003 = vmatprep.subr.mxu0 %v2909
    %4004 = vmatpush1.msra.mxu0 %v2908
    %4005 = vmatprep.subr.mxu0 %v2913
    %4006 = vmatpush1.msra.mxu0 %v2912
    %4007 = vmatprep.subr.mxu0 %v2917
    %4008 = vmatpush1.msra.mxu0 %v2916
    %4009 = vmatprep.subr.mxu0 %v2921
    %4010 = vmatpush1.msra.mxu0 %v2920
    %4011 = vmatprep.subr.mxu0 %v2925
    %4012 = vmatpush1.msra.mxu0 %v2924
    %4013 = vmatprep.subr.mxu0 %v2929
    %4014 = vmatpush1.msra.mxu0 %v2928
    %4015 = vmatprep.subr.mxu0 %v2933
    %4016 = vmatpush1.msra.mxu0 %v2932
    %4017 = vmatprep.subr.mxu0 %v2937
    %4018 = vmatpush1.msra.mxu0 %v2936
    %4019 = vmatprep.subr.mxu0 %v2941
    %4020 = vmatpush1.msra.mxu0 %v2940
    %4021 = vmatprep.subr.mxu0 %v2945
    %4022 = vmatpush1.msra.mxu0 %v2944
    %4023 = vmatprep.subr.mxu0 0.0
    %4024 = vmatpush1.msra.mxu0 0.0
    %4025 = vmatprep.subr.mxu0 0.0
    %4026 = vmatpush1.msra.mxu0 0.0
    %4027 = vmatprep.subr.mxu0 0.0
    %4028 = vmatpush1.msra.mxu0 0.0
    %4029 = vmatprep.subr.mxu0 0.0
    %4030 = vmatpush1.msra.mxu0 0.0
    %4031 = vmatprep.subr.mxu0 0.0
    %4032 = vmatpush1.msra.mxu0 0.0
    %4033 = vmatprep.subr.mxu0 0.0
    %4034 = vmatpush1.msra.mxu0 0.0
    %4035 = vmatprep.subr.mxu0 0.0
    %4036 = vmatpush1.msra.mxu0 0.0
    %4037 = vmatprep.subr.mxu0 0.0
    %4038 = vmatpush1.msra.mxu0 0.0
    %4039 = vmatprep.subr.mxu0 0.0
    %4040 = vmatpush1.msra.mxu0 0.0
    %4041 = vmatprep.subr.mxu0 0.0
    %4042 = vmatpush1.msra.mxu0 0.0
    %4043 = vmatprep.subr.mxu0 0.0
    %4044 = vmatpush1.msra.mxu0 0.0
    %4045 = vmatprep.subr.mxu0 0.0
    %4046 = vmatpush1.msra.mxu0 0.0
    %4047 = vmatprep.subr.mxu0 0.0
    %4048 = vmatpush1.msra.mxu0 0.0
    %4049 = vmatprep.subr.mxu0 0.0
    %4050 = vmatpush1.msra.mxu0 0.0
    %4051 = vmatprep.subr.mxu0 0.0
    %4052 = vmatpush1.msra.mxu0 0.0
    %4053 = vmatprep.subr.mxu0 0.0
    %4054 = vmatpush1.msra.mxu0 0.0
    %4055 = vmatprep.mubr.f32.mxu0 0.0
    %4056 = vmatmul.mubr.f32.gmra.mrb[0].mxu0 %v3917
    %v4057 = vpop.f32.mrb[0].mxu0
    %v4058 = vadd.f32 0.0, %v4057
    %v4059 = vpop.f32.mrb[0].mxu0
    %v4060 = vadd.f32 0.0, %v4059
    %4061 = vdwg.mxu0
    %4062 = vmatprep.subr.mxu0 %v2818
    %4063 = vmatpush1.msra.mxu0 %v2817
    %4064 = vmatprep.subr.mxu0 %v2822
    %4065 = vmatpush1.msra.mxu0 %v2821
    %4066 = vmatprep.subr.mxu0 %v2826
    %4067 = vmatpush1.msra.mxu0 %v2825
    %4068 = vmatprep.subr.mxu0 %v2830
    %4069 = vmatpush1.msra.mxu0 %v2829
    %4070 = vmatprep.subr.mxu0 %v2834
    %4071 = vmatpush1.msra.mxu0 %v2833
    %4072 = vmatprep.subr.mxu0 %v2838
    %4073 = vmatpush1.msra.mxu0 %v2837
    %4074 = vmatprep.subr.mxu0 %v2842
    %4075 = vmatpush1.msra.mxu0 %v2841
    %4076 = vmatprep.subr.mxu0 %v2846
    %4077 = vmatpush1.msra.mxu0 %v2845
    %4078 = vmatprep.subr.mxu0 %v2850
    %4079 = vmatpush1.msra.mxu0 %v2849
    %4080 = vmatprep.subr.mxu0 %v2854
    %4081 = vmatpush1.msra.mxu0 %v2853
    %4082 = vmatprep.subr.mxu0 %v2858
    %4083 = vmatpush1.msra.mxu0 %v2857
    %4084 = vmatprep.subr.mxu0 %v2862
    %4085 = vmatpush1.msra.mxu0 %v2861
    %4086 = vmatprep.subr.mxu0 %v2866
    %4087 = vmatpush1.msra.mxu0 %v2865
    %4088 = vmatprep.subr.mxu0 %v2870
    %4089 = vmatpush1.msra.mxu0 %v2869
    %4090 = vmatprep.subr.mxu0 %v2874
    %4091 = vmatpush1.msra.mxu0 %v2873
    %4092 = vmatprep.subr.mxu0 %v2878
    %4093 = vmatpush1.msra.mxu0 %v2877
    %4094 = vmatprep.subr.mxu0 0.0
    %4095 = vmatpush1.msra.mxu0 0.0
    %4096 = vmatprep.subr.mxu0 0.0
    %4097 = vmatpush1.msra.mxu0 0.0
    %4098 = vmatprep.subr.mxu0 0.0
    %4099 = vmatpush1.msra.mxu0 0.0
    %4100 = vmatprep.subr.mxu0 0.0
    %4101 = vmatpush1.msra.mxu0 0.0
    %4102 = vmatprep.subr.mxu0 0.0
    %4103 = vmatpush1.msra.mxu0 0.0
    %4104 = vmatprep.subr.mxu0 0.0
    %4105 = vmatpush1.msra.mxu0 0.0
    %4106 = vmatprep.subr.mxu0 0.0
    %4107 = vmatpush1.msra.mxu0 0.0
    %4108 = vmatprep.subr.mxu0 0.0
    %4109 = vmatpush1.msra.mxu0 0.0
    %4110 = vmatprep.subr.mxu0 0.0
    %4111 = vmatpush1.msra.mxu0 0.0
    %4112 = vmatprep.subr.mxu0 0.0
    %4113 = vmatpush1.msra.mxu0 0.0
    %4114 = vmatprep.subr.mxu0 0.0
    %4115 = vmatpush1.msra.mxu0 0.0
    %4116 = vmatprep.subr.mxu0 0.0
    %4117 = vmatpush1.msra.mxu0 0.0
    %4118 = vmatprep.subr.mxu0 0.0
    %4119 = vmatpush1.msra.mxu0 0.0
    %4120 = vmatprep.subr.mxu0 0.0
    %4121 = vmatpush1.msra.mxu0 0.0
    %4122 = vmatprep.subr.mxu0 0.0
    %4123 = vmatpush1.msra.mxu0 0.0
    %4124 = vmatprep.subr.mxu0 0.0
    %4125 = vmatpush1.msra.mxu0 0.0
    %4126 = vmatprep.mubr.f32.mxu0 0.0
    %4127 = vmatmul.mubr.f32.gmra.mrb[0].mxu0 %v3919
    %v4128 = vpop.f32.mrb[0].mxu0
    %v4129 = vadd.f32 %v3987, %v4128
    %v4130 = vpop.f32.mrb[0].mxu0
    %v4131 = vadd.f32 %v3989, %v4130
    %4132 = vdwg.mxu0
    %4133 = vmatprep.subr.mxu0 %v2820
    %4134 = vmatpush1.msra.mxu0 %v2819
    %4135 = vmatprep.subr.mxu0 %v2824
    %4136 = vmatpush1.msra.mxu0 %v2823
    %4137 = vmatprep.subr.mxu0 %v2828
    %4138 = vmatpush1.msra.mxu0 %v2827
    %4139 = vmatprep.subr.mxu0 %v2832
    %4140 = vmatpush1.msra.mxu0 %v2831
    %4141 = vmatprep.subr.mxu0 %v2836
    %4142 = vmatpush1.msra.mxu0 %v2835
    %4143 = vmatprep.subr.mxu0 %v2840
    %4144 = vmatpush1.msra.mxu0 %v2839
    %4145 = vmatprep.subr.mxu0 %v2844
    %4146 = vmatpush1.msra.mxu0 %v2843
    %4147 = vmatprep.subr.mxu0 %v2848
    %4148 = vmatpush1.msra.mxu0 %v2847
    %4149 = vmatprep.subr.mxu0 %v2852
    %4150 = vmatpush1.msra.mxu0 %v2851
    %4151 = vmatprep.subr.mxu0 %v2856
    %4152 = vmatpush1.msra.mxu0 %v2855
    %4153 = vmatprep.subr.mxu0 %v2860
    %4154 = vmatpush1.msra.mxu0 %v2859
    %4155 = vmatprep.subr.mxu0 %v2864
    %4156 = vmatpush1.msra.mxu0 %v2863
    %4157 = vmatprep.subr.mxu0 %v2868
    %4158 = vmatpush1.msra.mxu0 %v2867
    %4159 = vmatprep.subr.mxu0 %v2872
    %4160 = vmatpush1.msra.mxu0 %v2871
    %4161 = vmatprep.subr.mxu0 %v2876
    %4162 = vmatpush1.msra.mxu0 %v2875
    %4163 = vmatprep.subr.mxu0 %v2880
    %4164 = vmatpush1.msra.mxu0 %v2879
    %4165 = vmatprep.subr.mxu0 0.0
    %4166 = vmatpush1.msra.mxu0 0.0
    %4167 = vmatprep.subr.mxu0 0.0
    %4168 = vmatpush1.msra.mxu0 0.0
    %4169 = vmatprep.subr.mxu0 0.0
    %4170 = vmatpush1.msra.mxu0 0.0
    %4171 = vmatprep.subr.mxu0 0.0
    %4172 = vmatpush1.msra.mxu0 0.0
    %4173 = vmatprep.subr.mxu0 0.0
    %4174 = vmatpush1.msra.mxu0 0.0
    %4175 = vmatprep.subr.mxu0 0.0
    %4176 = vmatpush1.msra.mxu0 0.0
    %4177 = vmatprep.subr.mxu0 0.0
    %4178 = vmatpush1.msra.mxu0 0.0
    %4179 = vmatprep.subr.mxu0 0.0
    %4180 = vmatpush1.msra.mxu0 0.0
    %4181 = vmatprep.subr.mxu0 0.0
    %4182 = vmatpush1.msra.mxu0 0.0
    %4183 = vmatprep.subr.mxu0 0.0
    %4184 = vmatpush1.msra.mxu0 0.0
    %4185 = vmatprep.subr.mxu0 0.0
    %4186 = vmatpush1.msra.mxu0 0.0
    %4187 = vmatprep.subr.mxu0 0.0
    %4188 = vmatpush1.msra.mxu0 0.0
    %4189 = vmatprep.subr.mxu0 0.0
    %4190 = vmatpush1.msra.mxu0 0.0
    %4191 = vmatprep.subr.mxu0 0.0
    %4192 = vmatpush1.msra.mxu0 0.0
    %4193 = vmatprep.subr.mxu0 0.0
    %4194 = vmatpush1.msra.mxu0 0.0
    %4195 = vmatprep.subr.mxu0 0.0
    %4196 = vmatpush1.msra.mxu0 0.0
    %4197 = vmatprep.mubr.f32.mxu0 0.0
    %4198 = vmatmul.mubr.f32.gmra.mrb[0].mxu0 %v3919
    %v4199 = vpop.f32.mrb[0].mxu0
    %v4200 = vadd.f32 %v4058, %v4199
    %v4201 = vpop.f32.mrb[0].mxu0
    %v4202 = vadd.f32 %v4060, %v4201
    %4203 = vdwg.mxu0
    %v4204 = vadd.f32 %v4129, %v3237
    %v4205 = vadd.f32 %v4131, %v3241
    %v4206 = vadd.f32 %v4200, %v3245
    %v4207 = vadd.f32 %v4202, %v3249
    %v4208 = vxor.u32 %v4204, 2147483648
    %v4209 = vmul.f32 %v4208, 1.442695
    %v4210 = vpow.pop %v4209
    %v4211 = vadd.f32 %v4210, 1.0
    %v4212 = vrcp.pop %v4211
    %v4213 = vmul.f32 1.0, %v4212
    %v4214 = vxor.u32 %v4205, 2147483648
    %v4215 = vmul.f32 %v4214, 1.442695
    %v4216 = vpow.pop %v4215
    %v4217 = vadd.f32 %v4216, 1.0
    %v4218 = vrcp.pop %v4217
    %v4219 = vmul.f32 1.0, %v4218
    %v4220 = vtanh.pop %v4206
    %v4221 = vxor.u32 %v4207, 2147483648
    %v4222 = vmul.f32 %v4221, 1.442695
    %v4223 = vpow.pop %v4222
    %v4224 = vadd.f32 %v4223, 1.0
    %v4225 = vrcp.pop %v4224
    %v4226 = vmul.f32 1.0, %v4225
    %v4227 = vmul.f32 %v4219, %v3918
    %v4228 = vmul.f32 %v4213, %v4220
    %v4229 = vadd.f32 %v4227, %v4228
    %v4230 = vtanh.pop %v4229
    %v4231 = vmul.f32 %v4226, %v4230
    %v4232 = vsel %vm1508, %v4231, 0.0
    %4233 = vst [vmem:[%s1510] sm:$0xff] %v4232
    %v4234 = vsel %vm1508, %v4231, %v3917
    %v4235 = vsel %vm1508, %v4229, %v3918
    %v4236 = vld [vmem:[%s1835] sm:$0xff]
    %4237 = vmatprep.subr.mxu0 %v2883
    %4238 = vmatpush1.msra.mxu0 %v2882
    %4239 = vmatprep.subr.mxu0 %v2887
    %4240 = vmatpush1.msra.mxu0 %v2886
    %4241 = vmatprep.subr.mxu0 %v2891
    %4242 = vmatpush1.msra.mxu0 %v2890
    %4243 = vmatprep.subr.mxu0 %v2895
    %4244 = vmatpush1.msra.mxu0 %v2894
    %4245 = vmatprep.subr.mxu0 %v2899
    %4246 = vmatpush1.msra.mxu0 %v2898
    %4247 = vmatprep.subr.mxu0 %v2903
    %4248 = vmatpush1.msra.mxu0 %v2902
    %4249 = vmatprep.subr.mxu0 %v2907
    %4250 = vmatpush1.msra.mxu0 %v2906
    %4251 = vmatprep.subr.mxu0 %v2911
    %4252 = vmatpush1.msra.mxu0 %v2910
    %4253 = vmatprep.subr.mxu0 %v2915
    %4254 = vmatpush1.msra.mxu0 %v2914
    %4255 = vmatprep.subr.mxu0 %v2919
    %4256 = vmatpush1.msra.mxu0 %v2918
    %4257 = vmatprep.subr.mxu0 %v2923
    %4258 = vmatpush1.msra.mxu0 %v2922
    %4259 = vmatprep.subr.mxu0 %v2927
    %4260 = vmatpush1.msra.mxu0 %v2926
    %4261 = vmatprep.subr.mxu0 %v2931
    %4262 = vmatpush1.msra.mxu0 %v2930
    %4263 = vmatprep.subr.mxu0 %v2935
    %4264 = vmatpush1.msra.mxu0 %v2934
    %4265 = vmatprep.subr.mxu0 %v2939
    %4266 = vmatpush1.msra.mxu0 %v2938
    %4267 = vmatprep.subr.mxu0 %v2943
    %4268 = vmatpush1.msra.mxu0 %v2942
    %4269 = vmatprep.subr.mxu0 0.0
    %4270 = vmatpush1.msra.mxu0 0.0
    %4271 = vmatprep.subr.mxu0 0.0
    %4272 = vmatpush1.msra.mxu0 0.0
    %4273 = vmatprep.subr.mxu0 0.0
    %4274 = vmatpush1.msra.mxu0 0.0
    %4275 = vmatprep.subr.mxu0 0.0
    %4276 = vmatpush1.msra.mxu0 0.0
    %4277 = vmatprep.subr.mxu0 0.0
    %4278 = vmatpush1.msra.mxu0 0.0
    %4279 = vmatprep.subr.mxu0 0.0
    %4280 = vmatpush1.msra.mxu0 0.0
    %4281 = vmatprep.subr.mxu0 0.0
    %4282 = vmatpush1.msra.mxu0 0.0
    %4283 = vmatprep.subr.mxu0 0.0
    %4284 = vmatpush1.msra.mxu0 0.0
    %4285 = vmatprep.subr.mxu0 0.0
    %4286 = vmatpush1.msra.mxu0 0.0
    %4287 = vmatprep.subr.mxu0 0.0
    %4288 = vmatpush1.msra.mxu0 0.0
    %4289 = vmatprep.subr.mxu0 0.0
    %4290 = vmatpush1.msra.mxu0 0.0
    %4291 = vmatprep.subr.mxu0 0.0
    %4292 = vmatpush1.msra.mxu0 0.0
    %4293 = vmatprep.subr.mxu0 0.0
    %4294 = vmatpush1.msra.mxu0 0.0
    %4295 = vmatprep.subr.mxu0 0.0
    %4296 = vmatpush1.msra.mxu0 0.0
    %4297 = vmatprep.subr.mxu0 0.0
    %4298 = vmatpush1.msra.mxu0 0.0
    %4299 = vmatprep.subr.mxu0 0.0
    %4300 = vmatpush1.msra.mxu0 0.0
    %4301 = vmatprep.mubr.f32.mxu0 0.0
    %4302 = vmatmul.mubr.f32.gmra.mrb[0].mxu0 %v4234
    %v4303 = vpop.f32.mrb[0].mxu0
    %v4304 = vadd.f32 0.0, %v4303
    %v4305 = vpop.f32.mrb[0].mxu0
    %v4306 = vadd.f32 0.0, %v4305
    %4307 = vdwg.mxu0
    %4308 = vmatprep.subr.mxu0 %v2885
    %4309 = vmatpush1.msra.mxu0 %v2884
    %4310 = vmatprep.subr.mxu0 %v2889
    %4311 = vmatpush1.msra.mxu0 %v2888
    %4312 = vmatprep.subr.mxu0 %v2893
    %4313 = vmatpush1.msra.mxu0 %v2892
    %4314 = vmatprep.subr.mxu0 %v2897
    %4315 = vmatpush1.msra.mxu0 %v2896
    %4316 = vmatprep.subr.mxu0 %v2901
    %4317 = vmatpush1.msra.mxu0 %v2900
    %4318 = vmatprep.subr.mxu0 %v2905
    %4319 = vmatpush1.msra.mxu0 %v2904
    %4320 = vmatprep.subr.mxu0 %v2909
    %4321 = vmatpush1.msra.mxu0 %v2908
    %4322 = vmatprep.subr.mxu0 %v2913
    %4323 = vmatpush1.msra.mxu0 %v2912
    %4324 = vmatprep.subr.mxu0 %v2917
    %4325 = vmatpush1.msra.mxu0 %v2916
    %4326 = vmatprep.subr.mxu0 %v2921
    %4327 = vmatpush1.msra.mxu0 %v2920
    %4328 = vmatprep.subr.mxu0 %v2925
    %4329 = vmatpush1.msra.mxu0 %v2924
    %4330 = vmatprep.subr.mxu0 %v2929
    %4331 = vmatpush1.msra.mxu0 %v2928
    %4332 = vmatprep.subr.mxu0 %v2933
    %4333 = vmatpush1.msra.mxu0 %v2932
    %4334 = vmatprep.subr.mxu0 %v2937
    %4335 = vmatpush1.msra.mxu0 %v2936
    %4336 = vmatprep.subr.mxu0 %v2941
    %4337 = vmatpush1.msra.mxu0 %v2940
    %4338 = vmatprep.subr.mxu0 %v2945
    %4339 = vmatpush1.msra.mxu0 %v2944
    %4340 = vmatprep.subr.mxu0 0.0
    %4341 = vmatpush1.msra.mxu0 0.0
    %4342 = vmatprep.subr.mxu0 0.0
    %4343 = vmatpush1.msra.mxu0 0.0
    %4344 = vmatprep.subr.mxu0 0.0
    %4345 = vmatpush1.msra.mxu0 0.0
    %4346 = vmatprep.subr.mxu0 0.0
    %4347 = vmatpush1.msra.mxu0 0.0
    %4348 = vmatprep.subr.mxu0 0.0
    %4349 = vmatpush1.msra.mxu0 0.0
    %4350 = vmatprep.subr.mxu0 0.0
    %4351 = vmatpush1.msra.mxu0 0.0
    %4352 = vmatprep.subr.mxu0 0.0
    %4353 = vmatpush1.msra.mxu0 0.0
    %4354 = vmatprep.subr.mxu0 0.0
    %4355 = vmatpush1.msra.mxu0 0.0
    %4356 = vmatprep.subr.mxu0 0.0
    %4357 = vmatpush1.msra.mxu0 0.0
    %4358 = vmatprep.subr.mxu0 0.0
    %4359 = vmatpush1.msra.mxu0 0.0
    %4360 = vmatprep.subr.mxu0 0.0
    %4361 = vmatpush1.msra.mxu0 0.0
    %4362 = vmatprep.subr.mxu0 0.0
    %4363 = vmatpush1.msra.mxu0 0.0
    %4364 = vmatprep.subr.mxu0 0.0
    %4365 = vmatpush1.msra.mxu0 0.0
    %4366 = vmatprep.subr.mxu0 0.0
    %4367 = vmatpush1.msra.mxu0 0.0
    %4368 = vmatprep.subr.mxu0 0.0
    %4369 = vmatpush1.msra.mxu0 0.0
    %4370 = vmatprep.subr.mxu0 0.0
    %4371 = vmatpush1.msra.mxu0 0.0
    %4372 = vmatprep.mubr.f32.mxu0 0.0
    %4373 = vmatmul.mubr.f32.gmra.mrb[0].mxu0 %v4234
    %v4374 = vpop.f32.mrb[0].mxu0
    %v4375 = vadd.f32 0.0, %v4374
    %v4376 = vpop.f32.mrb[0].mxu0
    %v4377 = vadd.f32 0.0, %v4376
    %4378 = vdwg.mxu0
    %4379 = vmatprep.subr.mxu0 %v2818
    %4380 = vmatpush1.msra.mxu0 %v2817
    %4381 = vmatprep.subr.mxu0 %v2822
    %4382 = vmatpush1.msra.mxu0 %v2821
    %4383 = vmatprep.subr.mxu0 %v2826
    %4384 = vmatpush1.msra.mxu0 %v2825
    %4385 = vmatprep.subr.mxu0 %v2830
    %4386 = vmatpush1.msra.mxu0 %v2829
    %4387 = vmatprep.subr.mxu0 %v2834
    %4388 = vmatpush1.msra.mxu0 %v2833
    %4389 = vmatprep.subr.mxu0 %v2838
    %4390 = vmatpush1.msra.mxu0 %v2837
    %4391 = vmatprep.subr.mxu0 %v2842
    %4392 = vmatpush1.msra.mxu0 %v2841
    %4393 = vmatprep.subr.mxu0 %v2846
    %4394 = vmatpush1.msra.mxu0 %v2845
    %4395 = vmatprep.subr.mxu0 %v2850
    %4396 = vmatpush1.msra.mxu0 %v2849
    %4397 = vmatprep.subr.mxu0 %v2854
    %4398 = vmatpush1.msra.mxu0 %v2853
    %4399 = vmatprep.subr.mxu0 %v2858
    %4400 = vmatpush1.msra.mxu0 %v2857
    %4401 = vmatprep.subr.mxu0 %v2862
    %4402 = vmatpush1.msra.mxu0 %v2861
    %4403 = vmatprep.subr.mxu0 %v2866
    %4404 = vmatpush1.msra.mxu0 %v2865
    %4405 = vmatprep.subr.mxu0 %v2870
    %4406 = vmatpush1.msra.mxu0 %v2869
    %4407 = vmatprep.subr.mxu0 %v2874
    %4408 = vmatpush1.msra.mxu0 %v2873
    %4409 = vmatprep.subr.mxu0 %v2878
    %4410 = vmatpush1.msra.mxu0 %v2877
    %4411 = vmatprep.subr.mxu0 0.0
    %4412 = vmatpush1.msra.mxu0 0.0
    %4413 = vmatprep.subr.mxu0 0.0
    %4414 = vmatpush1.msra.mxu0 0.0
    %4415 = vmatprep.subr.mxu0 0.0
    %4416 = vmatpush1.msra.mxu0 0.0
    %4417 = vmatprep.subr.mxu0 0.0
    %4418 = vmatpush1.msra.mxu0 0.0
    %4419 = vmatprep.subr.mxu0 0.0
    %4420 = vmatpush1.msra.mxu0 0.0
    %4421 = vmatprep.subr.mxu0 0.0
    %4422 = vmatpush1.msra.mxu0 0.0
    %4423 = vmatprep.subr.mxu0 0.0
    %4424 = vmatpush1.msra.mxu0 0.0
    %4425 = vmatprep.subr.mxu0 0.0
    %4426 = vmatpush1.msra.mxu0 0.0
    %4427 = vmatprep.subr.mxu0 0.0
    %4428 = vmatpush1.msra.mxu0 0.0
    %4429 = vmatprep.subr.mxu0 0.0
    %4430 = vmatpush1.msra.mxu0 0.0
    %4431 = vmatprep.subr.mxu0 0.0
    %4432 = vmatpush1.msra.mxu0 0.0
    %4433 = vmatprep.subr.mxu0 0.0
    %4434 = vmatpush1.msra.mxu0 0.0
    %4435 = vmatprep.subr.mxu0 0.0
    %4436 = vmatpush1.msra.mxu0 0.0
    %4437 = vmatprep.subr.mxu0 0.0
    %4438 = vmatpush1.msra.mxu0 0.0
    %4439 = vmatprep.subr.mxu0 0.0
    %4440 = vmatpush1.msra.mxu0 0.0
    %4441 = vmatprep.subr.mxu0 0.0
    %4442 = vmatpush1.msra.mxu0 0.0
    %4443 = vmatprep.mubr.f32.mxu0 0.0
    %4444 = vmatmul.mubr.f32.gmra.mrb[0].mxu0 %v4236
    %v4445 = vpop.f32.mrb[0].mxu0
    %v4446 = vadd.f32 %v4304, %v4445
    %v4447 = vpop.f32.mrb[0].mxu0
    %v4448 = vadd.f32 %v4306, %v4447
    %4449 = vdwg.mxu0
    %4450 = vmatprep.subr.mxu0 %v2820
    %4451 = vmatpush1.msra.mxu0 %v2819
    %4452 = vmatprep.subr.mxu0 %v2824
    %4453 = vmatpush1.msra.mxu0 %v2823
    %4454 = vmatprep.subr.mxu0 %v2828
    %4455 = vmatpush1.msra.mxu0 %v2827
    %4456 = vmatprep.subr.mxu0 %v2832
    %4457 = vmatpush1.msra.mxu0 %v2831
    %4458 = vmatprep.subr.mxu0 %v2836
    %4459 = vmatpush1.msra.mxu0 %v2835
    %4460 = vmatprep.subr.mxu0 %v2840
    %4461 = vmatpush1.msra.mxu0 %v2839
    %4462 = vmatprep.subr.mxu0 %v2844
    %4463 = vmatpush1.msra.mxu0 %v2843
    %4464 = vmatprep.subr.mxu0 %v2848
    %4465 = vmatpush1.msra.mxu0 %v2847
    %4466 = vmatprep.subr.mxu0 %v2852
    %4467 = vmatpush1.msra.mxu0 %v2851
    %4468 = vmatprep.subr.mxu0 %v2856
    %4469 = vmatpush1.msra.mxu0 %v2855
    %4470 = vmatprep.subr.mxu0 %v2860
    %4471 = vmatpush1.msra.mxu0 %v2859
    %4472 = vmatprep.subr.mxu0 %v2864
    %4473 = vmatpush1.msra.mxu0 %v2863
    %4474 = vmatprep.subr.mxu0 %v2868
    %4475 = vmatpush1.msra.mxu0 %v2867
    %4476 = vmatprep.subr.mxu0 %v2872
    %4477 = vmatpush1.msra.mxu0 %v2871
    %4478 = vmatprep.subr.mxu0 %v2876
    %4479 = vmatpush1.msra.mxu0 %v2875
    %4480 = vmatprep.subr.mxu0 %v2880
    %4481 = vmatpush1.msra.mxu0 %v2879
    %4482 = vmatprep.subr.mxu0 0.0
    %4483 = vmatpush1.msra.mxu0 0.0
    %4484 = vmatprep.subr.mxu0 0.0
    %4485 = vmatpush1.msra.mxu0 0.0
    %4486 = vmatprep.subr.mxu0 0.0
    %4487 = vmatpush1.msra.mxu0 0.0
    %4488 = vmatprep.subr.mxu0 0.0
    %4489 = vmatpush1.msra.mxu0 0.0
    %4490 = vmatprep.subr.mxu0 0.0
    %4491 = vmatpush1.msra.mxu0 0.0
    %4492 = vmatprep.subr.mxu0 0.0
    %4493 = vmatpush1.msra.mxu0 0.0
    %4494 = vmatprep.subr.mxu0 0.0
    %4495 = vmatpush1.msra.mxu0 0.0
    %4496 = vmatprep.subr.mxu0 0.0
    %4497 = vmatpush1.msra.mxu0 0.0
    %4498 = vmatprep.subr.mxu0 0.0
    %4499 = vmatpush1.msra.mxu0 0.0
    %4500 = vmatprep.subr.mxu0 0.0
    %4501 = vmatpush1.msra.mxu0 0.0
    %4502 = vmatprep.subr.mxu0 0.0
    %4503 = vmatpush1.msra.mxu0 0.0
    %4504 = vmatprep.subr.mxu0 0.0
    %4505 = vmatpush1.msra.mxu0 0.0
    %4506 = vmatprep.subr.mxu0 0.0
    %4507 = vmatpush1.msra.mxu0 0.0
    %4508 = vmatprep.subr.mxu0 0.0
    %4509 = vmatpush1.msra.mxu0 0.0
    %4510 = vmatprep.subr.mxu0 0.0
    %4511 = vmatpush1.msra.mxu0 0.0
    %4512 = vmatprep.subr.mxu0 0.0
    %4513 = vmatpush1.msra.mxu0 0.0
    %4514 = vmatprep.mubr.f32.mxu0 0.0
    %4515 = vmatmul.mubr.f32.gmra.mrb[0].mxu0 %v4236
    %v4516 = vpop.f32.mrb[0].mxu0
    %v4517 = vadd.f32 %v4375, %v4516
    %v4518 = vpop.f32.mrb[0].mxu0
    %v4519 = vadd.f32 %v4377, %v4518
    %4520 = vdwg.mxu0
    %v4521 = vadd.f32 %v4446, %v3237
    %v4522 = vadd.f32 %v4448, %v3241
    %v4523 = vadd.f32 %v4517, %v3245
    %v4524 = vadd.f32 %v4519, %v3249
    %v4525 = vxor.u32 %v4521, 2147483648
    %v4526 = vmul.f32 %v4525, 1.442695
    %v4527 = vpow.pop %v4526
    %v4528 = vadd.f32 %v4527, 1.0
    %v4529 = vrcp.pop %v4528
    %v4530 = vmul.f32 1.0, %v4529
    %v4531 = vxor.u32 %v4522, 2147483648
    %v4532 = vmul.f32 %v4531, 1.442695
    %v4533 = vpow.pop %v4532
    %v4534 = vadd.f32 %v4533, 1.0
    %v4535 = vrcp.pop %v4534
    %v4536 = vmul.f32 1.0, %v4535
    %v4537 = vtanh.pop %v4523
    %v4538 = vxor.u32 %v4524, 2147483648
    %v4539 = vmul.f32 %v4538, 1.442695
    %v4540 = vpow.pop %v4539
    %v4541 = vadd.f32 %v4540, 1.0
    %v4542 = vrcp.pop %v4541
    %v4543 = vmul.f32 1.0, %v4542
    %v4544 = vmul.f32 %v4536, %v4235
    %v4545 = vmul.f32 %v4530, %v4537
    %v4546 = vadd.f32 %v4544, %v4545
    %v4547 = vtanh.pop %v4546
    %v4548 = vmul.f32 %v4543, %v4547
    %v4549 = vsel %vm1833, %v4548, 0.0
    %4550 = vst [vmem:[%s1835] sm:$0xff] %v4549
    %v4551 = vsel %vm1833, %v4548, %v4234
    %v4552 = vsel %vm1833, %v4546, %v4235
    %v4553 = vld [vmem:[%s2160] sm:$0xff]
    %4554 = vmatprep.subr.mxu0 %v2883
    %4555 = vmatpush1.msra.mxu0 %v2882
    %4556 = vmatprep.subr.mxu0 %v2887
    %4557 = vmatpush1.msra.mxu0 %v2886
    %4558 = vmatprep.subr.mxu0 %v2891
    %4559 = vmatpush1.msra.mxu0 %v2890
    %4560 = vmatprep.subr.mxu0 %v2895
    %4561 = vmatpush1.msra.mxu0 %v2894
    %4562 = vmatprep.subr.mxu0 %v2899
    %4563 = vmatpush1.msra.mxu0 %v2898
    %4564 = vmatprep.subr.mxu0 %v2903
    %4565 = vmatpush1.msra.mxu0 %v2902
    %4566 = vmatprep.subr.mxu0 %v2907
    %4567 = vmatpush1.msra.mxu0 %v2906
    %4568 = vmatprep.subr.mxu0 %v2911
    %4569 = vmatpush1.msra.mxu0 %v2910
    %4570 = vmatprep.subr.mxu0 %v2915
    %4571 = vmatpush1.msra.mxu0 %v2914
    %4572 = vmatprep.subr.mxu0 %v2919
    %4573 = vmatpush1.msra.mxu0 %v2918
    %4574 = vmatprep.subr.mxu0 %v2923
    %4575 = vmatpush1.msra.mxu0 %v2922
    %4576 = vmatprep.subr.mxu0 %v2927
    %4577 = vmatpush1.msra.mxu0 %v2926
    %4578 = vmatprep.subr.mxu0 %v2931
    %4579 = vmatpush1.msra.mxu0 %v2930
    %4580 = vmatprep.subr.mxu0 %v2935
    %4581 = vmatpush1.msra.mxu0 %v2934
    %4582 = vmatprep.subr.mxu0 %v2939
    %4583 = vmatpush1.msra.mxu0 %v2938
    %4584 = vmatprep.subr.mxu0 %v2943
    %4585 = vmatpush1.msra.mxu0 %v2942
    %4586 = vmatprep.subr.mxu0 0.0
    %4587 = vmatpush1.msra.mxu0 0.0
    %4588 = vmatprep.subr.mxu0 0.0
    %4589 = vmatpush1.msra.mxu0 0.0
    %4590 = vmatprep.subr.mxu0 0.0
    %4591 = vmatpush1.msra.mxu0 0.0
    %4592 = vmatprep.subr.mxu0 0.0
    %4593 = vmatpush1.msra.mxu0 0.0
    %4594 = vmatprep.subr.mxu0 0.0
    %4595 = vmatpush1.msra.mxu0 0.0
    %4596 = vmatprep.subr.mxu0 0.0
    %4597 = vmatpush1.msra.mxu0 0.0
    %4598 = vmatprep.subr.mxu0 0.0
    %4599 = vmatpush1.msra.mxu0 0.0
    %4600 = vmatprep.subr.mxu0 0.0
    %4601 = vmatpush1.msra.mxu0 0.0
    %4602 = vmatprep.subr.mxu0 0.0
    %4603 = vmatpush1.msra.mxu0 0.0
    %4604 = vmatprep.subr.mxu0 0.0
    %4605 = vmatpush1.msra.mxu0 0.0
    %4606 = vmatprep.subr.mxu0 0.0
    %4607 = vmatpush1.msra.mxu0 0.0
    %4608 = vmatprep.subr.mxu0 0.0
    %4609 = vmatpush1.msra.mxu0 0.0
    %4610 = vmatprep.subr.mxu0 0.0
    %4611 = vmatpush1.msra.mxu0 0.0
    %4612 = vmatprep.subr.mxu0 0.0
    %4613 = vmatpush1.msra.mxu0 0.0
    %4614 = vmatprep.subr.mxu0 0.0
    %4615 = vmatpush1.msra.mxu0 0.0
    %4616 = vmatprep.subr.mxu0 0.0
    %4617 = vmatpush1.msra.mxu0 0.0
    %4618 = vmatprep.mubr.f32.mxu0 0.0
    %4619 = vmatmul.mubr.f32.gmra.mrb[0].mxu0 %v4551
    %v4620 = vpop.f32.mrb[0].mxu0
    %v4621 = vadd.f32 0.0, %v4620
    %v4622 = vpop.f32.mrb[0].mxu0
    %v4623 = vadd.f32 0.0, %v4622
    %4624 = vdwg.mxu0
    %4625 = vmatprep.subr.mxu0 %v2885
    %4626 = vmatpush1.msra.mxu0 %v2884
    %4627 = vmatprep.subr.mxu0 %v2889
    %4628 = vmatpush1.msra.mxu0 %v2888
    %4629 = vmatprep.subr.mxu0 %v2893
    %4630 = vmatpush1.msra.mxu0 %v2892
    %4631 = vmatprep.subr.mxu0 %v2897
    %4632 = vmatpush1.msra.mxu0 %v2896
    %4633 = vmatprep.subr.mxu0 %v2901
    %4634 = vmatpush1.msra.mxu0 %v2900
    %4635 = vmatprep.subr.mxu0 %v2905
    %4636 = vmatpush1.msra.mxu0 %v2904
    %4637 = vmatprep.subr.mxu0 %v2909
    %4638 = vmatpush1.msra.mxu0 %v2908
    %4639 = vmatprep.subr.mxu0 %v2913
    %4640 = vmatpush1.msra.mxu0 %v2912
    %4641 = vmatprep.subr.mxu0 %v2917
    %4642 = vmatpush1.msra.mxu0 %v2916
    %4643 = vmatprep.subr.mxu0 %v2921
    %4644 = vmatpush1.msra.mxu0 %v2920
    %4645 = vmatprep.subr.mxu0 %v2925
    %4646 = vmatpush1.msra.mxu0 %v2924
    %4647 = vmatprep.subr.mxu0 %v2929
    %4648 = vmatpush1.msra.mxu0 %v2928
    %4649 = vmatprep.subr.mxu0 %v2933
    %4650 = vmatpush1.msra.mxu0 %v2932
    %4651 = vmatprep.subr.mxu0 %v2937
    %4652 = vmatpush1.msra.mxu0 %v2936
    %4653 = vmatprep.subr.mxu0 %v2941
    %4654 = vmatpush1.msra.mxu0 %v2940
    %4655 = vmatprep.subr.mxu0 %v2945
    %4656 = vmatpush1.msra.mxu0 %v2944
    %4657 = vmatprep.subr.mxu0 0.0
    %4658 = vmatpush1.msra.mxu0 0.0
    %4659 = vmatprep.subr.mxu0 0.0
    %4660 = vmatpush1.msra.mxu0 0.0
    %4661 = vmatprep.subr.mxu0 0.0
    %4662 = vmatpush1.msra.mxu0 0.0
    %4663 = vmatprep.subr.mxu0 0.0
    %4664 = vmatpush1.msra.mxu0 0.0
    %4665 = vmatprep.subr.mxu0 0.0
    %4666 = vmatpush1.msra.mxu0 0.0
    %4667 = vmatprep.subr.mxu0 0.0
    %4668 = vmatpush1.msra.mxu0 0.0
    %4669 = vmatprep.subr.mxu0 0.0
    %4670 = vmatpush1.msra.mxu0 0.0
    %4671 = vmatprep.subr.mxu0 0.0
    %4672 = vmatpush1.msra.mxu0 0.0
    %4673 = vmatprep.subr.mxu0 0.0
    %4674 = vmatpush1.msra.mxu0 0.0
    %4675 = vmatprep.subr.mxu0 0.0
    %4676 = vmatpush1.msra.mxu0 0.0
    %4677 = vmatprep.subr.mxu0 0.0
    %4678 = vmatpush1.msra.mxu0 0.0
    %4679 = vmatprep.subr.mxu0 0.0
    %4680 = vmatpush1.msra.mxu0 0.0
    %4681 = vmatprep.subr.mxu0 0.0
    %4682 = vmatpush1.msra.mxu0 0.0
    %4683 = vmatprep.subr.mxu0 0.0
    %4684 = vmatpush1.msra.mxu0 0.0
    %4685 = vmatprep.subr.mxu0 0.0
    %4686 = vmatpush1.msra.mxu0 0.0
    %4687 = vmatprep.subr.mxu0 0.0
    %4688 = vmatpush1.msra.mxu0 0.0
    %4689 = vmatprep.mubr.f32.mxu0 0.0
    %4690 = vmatmul.mubr.f32.gmra.mrb[0].mxu0 %v4551
    %v4691 = vpop.f32.mrb[0].mxu0
    %v4692 = vadd.f32 0.0, %v4691
    %v4693 = vpop.f32.mrb[0].mxu0
    %v4694 = vadd.f32 0.0, %v4693
    %4695 = vdwg.mxu0
    %4696 = vmatprep.subr.mxu0 %v2818
    %4697 = vmatpush1.msra.mxu0 %v2817
    %4698 = vmatprep.subr.mxu0 %v2822
    %4699 = vmatpush1.msra.mxu0 %v2821
    %4700 = vmatprep.subr.mxu0 %v2826
    %4701 = vmatpush1.msra.mxu0 %v2825
    %4702 = vmatprep.subr.mxu0 %v2830
    %4703 = vmatpush1.msra.mxu0 %v2829
    %4704 = vmatprep.subr.mxu0 %v2834
    %4705 = vmatpush1.msra.mxu0 %v2833
    %4706 = vmatprep.subr.mxu0 %v2838
    %4707 = vmatpush1.msra.mxu0 %v2837
    %4708 = vmatprep.subr.mxu0 %v2842
    %4709 = vmatpush1.msra.mxu0 %v2841
    %4710 = vmatprep.subr.mxu0 %v2846
    %4711 = vmatpush1.msra.mxu0 %v2845
    %4712 = vmatprep.subr.mxu0 %v2850
    %4713 = vmatpush1.msra.mxu0 %v2849
    %4714 = vmatprep.subr.mxu0 %v2854
    %4715 = vmatpush1.msra.mxu0 %v2853
    %4716 = vmatprep.subr.mxu0 %v2858
    %4717 = vmatpush1.msra.mxu0 %v2857
    %4718 = vmatprep.subr.mxu0 %v2862
    %4719 = vmatpush1.msra.mxu0 %v2861
    %4720 = vmatprep.subr.mxu0 %v2866
    %4721 = vmatpush1.msra.mxu0 %v2865
    %4722 = vmatprep.subr.mxu0 %v2870
    %4723 = vmatpush1.msra.mxu0 %v2869
    %4724 = vmatprep.subr.mxu0 %v2874
    %4725 = vmatpush1.msra.mxu0 %v2873
    %4726 = vmatprep.subr.mxu0 %v2878
    %4727 = vmatpush1.msra.mxu0 %v2877
    %4728 = vmatprep.subr.mxu0 0.0
    %4729 = vmatpush1.msra.mxu0 0.0
    %4730 = vmatprep.subr.mxu0 0.0
    %4731 = vmatpush1.msra.mxu0 0.0
    %4732 = vmatprep.subr.mxu0 0.0
    %4733 = vmatpush1.msra.mxu0 0.0
    %4734 = vmatprep.subr.mxu0 0.0
    %4735 = vmatpush1.msra.mxu0 0.0
    %4736 = vmatprep.subr.mxu0 0.0
    %4737 = vmatpush1.msra.mxu0 0.0
    %4738 = vmatprep.subr.mxu0 0.0
    %4739 = vmatpush1.msra.mxu0 0.0
    %4740 = vmatprep.subr.mxu0 0.0
    %4741 = vmatpush1.msra.mxu0 0.0
    %4742 = vmatprep.subr.mxu0 0.0
    %4743 = vmatpush1.msra.mxu0 0.0
    %4744 = vmatprep.subr.mxu0 0.0
    %4745 = vmatpush1.msra.mxu0 0.0
    %4746 = vmatprep.subr.mxu0 0.0
    %4747 = vmatpush1.msra.mxu0 0.0
    %4748 = vmatprep.subr.mxu0 0.0
    %4749 = vmatpush1.msra.mxu0 0.0
    %4750 = vmatprep.subr.mxu0 0.0
    %4751 = vmatpush1.msra.mxu0 0.0
    %4752 = vmatprep.subr.mxu0 0.0
    %4753 = vmatpush1.msra.mxu0 0.0
    %4754 = vmatprep.subr.mxu0 0.0
    %4755 = vmatpush1.msra.mxu0 0.0
    %4756 = vmatprep.subr.mxu0 0.0
    %4757 = vmatpush1.msra.mxu0 0.0
    %4758 = vmatprep.subr.mxu0 0.0
    %4759 = vmatpush1.msra.mxu0 0.0
    %4760 = vmatprep.mubr.f32.mxu0 0.0
    %4761 = vmatmul.mubr.f32.gmra.mrb[0].mxu0 %v4553
    %v4762 = vpop.f32.mrb[0].mxu0
    %v4763 = vadd.f32 %v4621, %v4762
    %v4764 = vpop.f32.mrb[0].mxu0
    %v4765 = vadd.f32 %v4623, %v4764
    %4766 = vdwg.mxu0
    %4767 = vmatprep.subr.mxu0 %v2820
    %4768 = vmatpush1.msra.mxu0 %v2819
    %4769 = vmatprep.subr.mxu0 %v2824
    %4770 = vmatpush1.msra.mxu0 %v2823
    %4771 = vmatprep.subr.mxu0 %v2828
    %4772 = vmatpush1.msra.mxu0 %v2827
    %4773 = vmatprep.subr.mxu0 %v2832
    %4774 = vmatpush1.msra.mxu0 %v2831
    %4775 = vmatprep.subr.mxu0 %v2836
    %4776 = vmatpush1.msra.mxu0 %v2835
    %4777 = vmatprep.subr.mxu0 %v2840
    %4778 = vmatpush1.msra.mxu0 %v2839
    %4779 = vmatprep.subr.mxu0 %v2844
    %4780 = vmatpush1.msra.mxu0 %v2843
    %4781 = vmatprep.subr.mxu0 %v2848
    %4782 = vmatpush1.msra.mxu0 %v2847
    %4783 = vmatprep.subr.mxu0 %v2852
    %4784 = vmatpush1.msra.mxu0 %v2851
    %4785 = vmatprep.subr.mxu0 %v2856
    %4786 = vmatpush1.msra.mxu0 %v2855
    %4787 = vmatprep.subr.mxu0 %v2860
    %4788 = vmatpush1.msra.mxu0 %v2859
    %4789 = vmatprep.subr.mxu0 %v2864
    %4790 = vmatpush1.msra.mxu0 %v2863
    %4791 = vmatprep.subr.mxu0 %v2868
    %4792 = vmatpush1.msra.mxu0 %v2867
    %4793 = vmatprep.subr.mxu0 %v2872
    %4794 = vmatpush1.msra.mxu0 %v2871
    %4795 = vmatprep.subr.mxu0 %v2876
    %4796 = vmatpush1.msra.mxu0 %v2875
    %4797 = vmatprep.subr.mxu0 %v2880
    %4798 = vmatpush1.msra.mxu0 %v2879
    %4799 = vmatprep.subr.mxu0 0.0
    %4800 = vmatpush1.msra.mxu0 0.0
    %4801 = vmatprep.subr.mxu0 0.0
    %4802 = vmatpush1.msra.mxu0 0.0
    %4803 = vmatprep.subr.mxu0 0.0
    %4804 = vmatpush1.msra.mxu0 0.0
    %4805 = vmatprep.subr.mxu0 0.0
    %4806 = vmatpush1.msra.mxu0 0.0
    %4807 = vmatprep.subr.mxu0 0.0
    %4808 = vmatpush1.msra.mxu0 0.0
    %4809 = vmatprep.subr.mxu0 0.0
    %4810 = vmatpush1.msra.mxu0 0.0
    %4811 = vmatprep.subr.mxu0 0.0
    %4812 = vmatpush1.msra.mxu0 0.0
    %4813 = vmatprep.subr.mxu0 0.0
    %4814 = vmatpush1.msra.mxu0 0.0
    %4815 = vmatprep.subr.mxu0 0.0
    %4816 = vmatpush1.msra.mxu0 0.0
    %4817 = vmatprep.subr.mxu0 0.0
    %4818 = vmatpush1.msra.mxu0 0.0
    %4819 = vmatprep.subr.mxu0 0.0
    %4820 = vmatpush1.msra.mxu0 0.0
    %4821 = vmatprep.subr.mxu0 0.0
    %4822 = vmatpush1.msra.mxu0 0.0
    %4823 = vmatprep.subr.mxu0 0.0
    %4824 = vmatpush1.msra.mxu0 0.0
    %4825 = vmatprep.subr.mxu0 0.0
    %4826 = vmatpush1.msra.mxu0 0.0
    %4827 = vmatprep.subr.mxu0 0.0
    %4828 = vmatpush1.msra.mxu0 0.0
    %4829 = vmatprep.subr.mxu0 0.0
    %4830 = vmatpush1.msra.mxu0 0.0
    %4831 = vmatprep.mubr.f32.mxu0 0.0
    %4832 = vmatmul.mubr.f32.gmra.mrb[0].mxu0 %v4553
    %v4833 = vpop.f32.mrb[0].mxu0
    %v4834 = vadd.f32 %v4692, %v4833
    %v4835 = vpop.f32.mrb[0].mxu0
    %v4836 = vadd.f32 %v4694, %v4835
    %4837 = vdwg.mxu0
    %v4838 = vadd.f32 %v4763, %v3237
    %v4839 = vadd.f32 %v4765, %v3241
    %v4840 = vadd.f32 %v4834, %v3245
    %v4841 = vadd.f32 %v4836, %v3249
    %v4842 = vxor.u32 %v4838, 2147483648
    %v4843 = vmul.f32 %v4842, 1.442695
    %v4844 = vpow.pop %v4843
    %v4845 = vadd.f32 %v4844, 1.0
    %v4846 = vrcp.pop %v4845
    %v4847 = vmul.f32 1.0, %v4846
    %v4848 = vxor.u32 %v4839, 2147483648
    %v4849 = vmul.f32 %v4848, 1.442695
    %v4850 = vpow.pop %v4849
    %v4851 = vadd.f32 %v4850, 1.0
    %v4852 = vrcp.pop %v4851
    %v4853 = vmul.f32 1.0, %v4852
    %v4854 = vtanh.pop %v4840
    %v4855 = vxor.u32 %v4841, 2147483648
    %v4856 = vmul.f32 %v4855, 1.442695
    %v4857 = vpow.pop %v4856
    %v4858 = vadd.f32 %v4857, 1.0
    %v4859 = vrcp.pop %v4858
    %v4860 = vmul.f32 1.0, %v4859
    %v4861 = vmul.f32 %v4853, %v4552
    %v4862 = vmul.f32 %v4847, %v4854
    %v4863 = vadd.f32 %v4861, %v4862
    %v4864 = vtanh.pop %v4863
    %v4865 = vmul.f32 %v4860, %v4864
    %v4866 = vsel %vm2158, %v4865, 0.0
    %4867 = vst [vmem:[%s2160] sm:$0xff] %v4866
    %v4868 = vsel %vm2158, %v4865, %v4551
    %v4869 = vsel %vm2158, %v4863, %v4552
    %v4870 = vld [vmem:[%s2485] sm:$0xff]
    %4871 = vmatprep.subr.mxu0 %v2883
    %4872 = vmatpush1.msra.mxu0 %v2882
    %4873 = vmatprep.subr.mxu0 %v2887
    %4874 = vmatpush1.msra.mxu0 %v2886
    %4875 = vmatprep.subr.mxu0 %v2891
    %4876 = vmatpush1.msra.mxu0 %v2890
    %4877 = vmatprep.subr.mxu0 %v2895
    %4878 = vmatpush1.msra.mxu0 %v2894
    %4879 = vmatprep.subr.mxu0 %v2899
    %4880 = vmatpush1.msra.mxu0 %v2898
    %4881 = vmatprep.subr.mxu0 %v2903
    %4882 = vmatpush1.msra.mxu0 %v2902
    %4883 = vmatprep.subr.mxu0 %v2907
    %4884 = vmatpush1.msra.mxu0 %v2906
    %4885 = vmatprep.subr.mxu0 %v2911
    %4886 = vmatpush1.msra.mxu0 %v2910
    %4887 = vmatprep.subr.mxu0 %v2915
    %4888 = vmatpush1.msra.mxu0 %v2914
    %4889 = vmatprep.subr.mxu0 %v2919
    %4890 = vmatpush1.msra.mxu0 %v2918
    %4891 = vmatprep.subr.mxu0 %v2923
    %4892 = vmatpush1.msra.mxu0 %v2922
    %4893 = vmatprep.subr.mxu0 %v2927
    %4894 = vmatpush1.msra.mxu0 %v2926
    %4895 = vmatprep.subr.mxu0 %v2931
    %4896 = vmatpush1.msra.mxu0 %v2930
    %4897 = vmatprep.subr.mxu0 %v2935
    %4898 = vmatpush1.msra.mxu0 %v2934
    %4899 = vmatprep.subr.mxu0 %v2939
    %4900 = vmatpush1.msra.mxu0 %v2938
    %4901 = vmatprep.subr.mxu0 %v2943
    %4902 = vmatpush1.msra.mxu0 %v2942
    %4903 = vmatprep.subr.mxu0 0.0
    %4904 = vmatpush1.msra.mxu0 0.0
    %4905 = vmatprep.subr.mxu0 0.0
    %4906 = vmatpush1.msra.mxu0 0.0
    %4907 = vmatprep.subr.mxu0 0.0
    %4908 = vmatpush1.msra.mxu0 0.0
    %4909 = vmatprep.subr.mxu0 0.0
    %4910 = vmatpush1.msra.mxu0 0.0
    %4911 = vmatprep.subr.mxu0 0.0
    %4912 = vmatpush1.msra.mxu0 0.0
    %4913 = vmatprep.subr.mxu0 0.0
    %4914 = vmatpush1.msra.mxu0 0.0
    %4915 = vmatprep.subr.mxu0 0.0
    %4916 = vmatpush1.msra.mxu0 0.0
    %4917 = vmatprep.subr.mxu0 0.0
    %4918 = vmatpush1.msra.mxu0 0.0
    %4919 = vmatprep.subr.mxu0 0.0
    %4920 = vmatpush1.msra.mxu0 0.0
    %4921 = vmatprep.subr.mxu0 0.0
    %4922 = vmatpush1.msra.mxu0 0.0
    %4923 = vmatprep.subr.mxu0 0.0
    %4924 = vmatpush1.msra.mxu0 0.0
    %4925 = vmatprep.subr.mxu0 0.0
    %4926 = vmatpush1.msra.mxu0 0.0
    %4927 = vmatprep.subr.mxu0 0.0
    %4928 = vmatpush1.msra.mxu0 0.0
    %4929 = vmatprep.subr.mxu0 0.0
    %4930 = vmatpush1.msra.mxu0 0.0
    %4931 = vmatprep.subr.mxu0 0.0
    %4932 = vmatpush1.msra.mxu0 0.0
    %4933 = vmatprep.subr.mxu0 0.0
    %4934 = vmatpush1.msra.mxu0 0.0
    %4935 = vmatprep.mubr.f32.mxu0 0.0
    %4936 = vmatmul.mubr.f32.gmra.mrb[0].mxu0 %v4868
    %v4937 = vpop.f32.mrb[0].mxu0
    %v4938 = vadd.f32 0.0, %v4937
    %v4939 = vpop.f32.mrb[0].mxu0
    %v4940 = vadd.f32 0.0, %v4939
    %4941 = vdwg.mxu0
    %4942 = vmatprep.subr.mxu0 %v2885
    %4943 = vmatpush1.msra.mxu0 %v2884
    %4944 = vmatprep.subr.mxu0 %v2889
    %4945 = vmatpush1.msra.mxu0 %v2888
    %4946 = vmatprep.subr.mxu0 %v2893
    %4947 = vmatpush1.msra.mxu0 %v2892
    %4948 = vmatprep.subr.mxu0 %v2897
    %4949 = vmatpush1.msra.mxu0 %v2896
    %4950 = vmatprep.subr.mxu0 %v2901
    %4951 = vmatpush1.msra.mxu0 %v2900
    %4952 = vmatprep.subr.mxu0 %v2905
    %4953 = vmatpush1.msra.mxu0 %v2904
    %4954 = vmatprep.subr.mxu0 %v2909
    %4955 = vmatpush1.msra.mxu0 %v2908
    %4956 = vmatprep.subr.mxu0 %v2913
    %4957 = vmatpush1.msra.mxu0 %v2912
    %4958 = vmatprep.subr.mxu0 %v2917
    %4959 = vmatpush1.msra.mxu0 %v2916
    %4960 = vmatprep.subr.mxu0 %v2921
    %4961 = vmatpush1.msra.mxu0 %v2920
    %4962 = vmatprep.subr.mxu0 %v2925
    %4963 = vmatpush1.msra.mxu0 %v2924
    %4964 = vmatprep.subr.mxu0 %v2929
    %4965 = vmatpush1.msra.mxu0 %v2928
    %4966 = vmatprep.subr.mxu0 %v2933
    %4967 = vmatpush1.msra.mxu0 %v2932
    %4968 = vmatprep.subr.mxu0 %v2937
    %4969 = vmatpush1.msra.mxu0 %v2936
    %4970 = vmatprep.subr.mxu0 %v2941
    %4971 = vmatpush1.msra.mxu0 %v2940
    %4972 = vmatprep.subr.mxu0 %v2945
    %4973 = vmatpush1.msra.mxu0 %v2944
    %4974 = vmatprep.subr.mxu0 0.0
    %4975 = vmatpush1.msra.mxu0 0.0
    %4976 = vmatprep.subr.mxu0 0.0
    %4977 = vmatpush1.msra.mxu0 0.0
    %4978 = vmatprep.subr.mxu0 0.0
    %4979 = vmatpush1.msra.mxu0 0.0
    %4980 = vmatprep.subr.mxu0 0.0
    %4981 = vmatpush1.msra.mxu0 0.0
    %4982 = vmatprep.subr.mxu0 0.0
    %4983 = vmatpush1.msra.mxu0 0.0
    %4984 = vmatprep.subr.mxu0 0.0
    %4985 = vmatpush1.msra.mxu0 0.0
    %4986 = vmatprep.subr.mxu0 0.0
    %4987 = vmatpush1.msra.mxu0 0.0
    %4988 = vmatprep.subr.mxu0 0.0
    %4989 = vmatpush1.msra.mxu0 0.0
    %4990 = vmatprep.subr.mxu0 0.0
    %4991 = vmatpush1.msra.mxu0 0.0
    %4992 = vmatprep.subr.mxu0 0.0
    %4993 = vmatpush1.msra.mxu0 0.0
    %4994 = vmatprep.subr.mxu0 0.0
    %4995 = vmatpush1.msra.mxu0 0.0
    %4996 = vmatprep.subr.mxu0 0.0
    %4997 = vmatpush1.msra.mxu0 0.0
    %4998 = vmatprep.subr.mxu0 0.0
    %4999 = vmatpush1.msra.mxu0 0.0
    %5000 = vmatprep.subr.mxu0 0.0
    %5001 = vmatpush1.msra.mxu0 0.0
    %5002 = vmatprep.subr.mxu0 0.0
    %5003 = vmatpush1.msra.mxu0 0.0
    %5004 = vmatprep.subr.mxu0 0.0
    %5005 = vmatpush1.msra.mxu0 0.0
    %5006 = vmatprep.mubr.f32.mxu0 0.0
    %5007 = vmatmul.mubr.f32.gmra.mrb[0].mxu0 %v4868
    %v5008 = vpop.f32.mrb[0].mxu0
    %v5009 = vadd.f32 0.0, %v5008
    %v5010 = vpop.f32.mrb[0].mxu0
    %v5011 = vadd.f32 0.0, %v5010
    %5012 = vdwg.mxu0
    %5013 = vmatprep.subr.mxu0 %v2818
    %5014 = vmatpush1.msra.mxu0 %v2817
    %5015 = vmatprep.subr.mxu0 %v2822
    %5016 = vmatpush1.msra.mxu0 %v2821
    %5017 = vmatprep.subr.mxu0 %v2826
    %5018 = vmatpush1.msra.mxu0 %v2825
    %5019 = vmatprep.subr.mxu0 %v2830
    %5020 = vmatpush1.msra.mxu0 %v2829
    %5021 = vmatprep.subr.mxu0 %v2834
    %5022 = vmatpush1.msra.mxu0 %v2833
    %5023 = vmatprep.subr.mxu0 %v2838
    %5024 = vmatpush1.msra.mxu0 %v2837
    %5025 = vmatprep.subr.mxu0 %v2842
    %5026 = vmatpush1.msra.mxu0 %v2841
    %5027 = vmatprep.subr.mxu0 %v2846
    %5028 = vmatpush1.msra.mxu0 %v2845
    %5029 = vmatprep.subr.mxu0 %v2850
    %5030 = vmatpush1.msra.mxu0 %v2849
    %5031 = vmatprep.subr.mxu0 %v2854
    %5032 = vmatpush1.msra.mxu0 %v2853
    %5033 = vmatprep.subr.mxu0 %v2858
    %5034 = vmatpush1.msra.mxu0 %v2857
    %5035 = vmatprep.subr.mxu0 %v2862
    %5036 = vmatpush1.msra.mxu0 %v2861
    %5037 = vmatprep.subr.mxu0 %v2866
    %5038 = vmatpush1.msra.mxu0 %v2865
    %5039 = vmatprep.subr.mxu0 %v2870
    %5040 = vmatpush1.msra.mxu0 %v2869
    %5041 = vmatprep.subr.mxu0 %v2874
    %5042 = vmatpush1.msra.mxu0 %v2873
    %5043 = vmatprep.subr.mxu0 %v2878
    %5044 = vmatpush1.msra.mxu0 %v2877
    %5045 = vmatprep.subr.mxu0 0.0
    %5046 = vmatpush1.msra.mxu0 0.0
    %5047 = vmatprep.subr.mxu0 0.0
    %5048 = vmatpush1.msra.mxu0 0.0
    %5049 = vmatprep.subr.mxu0 0.0
    %5050 = vmatpush1.msra.mxu0 0.0
    %5051 = vmatprep.subr.mxu0 0.0
    %5052 = vmatpush1.msra.mxu0 0.0
    %5053 = vmatprep.subr.mxu0 0.0
    %5054 = vmatpush1.msra.mxu0 0.0
    %5055 = vmatprep.subr.mxu0 0.0
    %5056 = vmatpush1.msra.mxu0 0.0
    %5057 = vmatprep.subr.mxu0 0.0
    %5058 = vmatpush1.msra.mxu0 0.0
    %5059 = vmatprep.subr.mxu0 0.0
    %5060 = vmatpush1.msra.mxu0 0.0
    %5061 = vmatprep.subr.mxu0 0.0
    %5062 = vmatpush1.msra.mxu0 0.0
    %5063 = vmatprep.subr.mxu0 0.0
    %5064 = vmatpush1.msra.mxu0 0.0
    %5065 = vmatprep.subr.mxu0 0.0
    %5066 = vmatpush1.msra.mxu0 0.0
    %5067 = vmatprep.subr.mxu0 0.0
    %5068 = vmatpush1.msra.mxu0 0.0
    %5069 = vmatprep.subr.mxu0 0.0
    %5070 = vmatpush1.msra.mxu0 0.0
    %5071 = vmatprep.subr.mxu0 0.0
    %5072 = vmatpush1.msra.mxu0 0.0
    %5073 = vmatprep.subr.mxu0 0.0
    %5074 = vmatpush1.msra.mxu0 0.0
    %5075 = vmatprep.subr.mxu0 0.0
    %5076 = vmatpush1.msra.mxu0 0.0
    %5077 = vmatprep.mubr.f32.mxu0 0.0
    %5078 = vmatmul.mubr.f32.gmra.mrb[0].mxu0 %v4870
    %v5079 = vpop.f32.mrb[0].mxu0
    %v5080 = vadd.f32 %v4938, %v5079
    %v5081 = vpop.f32.mrb[0].mxu0
    %v5082 = vadd.f32 %v4940, %v5081
    %5083 = vdwg.mxu0
    %5084 = vmatprep.subr.mxu0 %v2820
    %5085 = vmatpush1.msra.mxu0 %v2819
    %5086 = vmatprep.subr.mxu0 %v2824
    %5087 = vmatpush1.msra.mxu0 %v2823
    %5088 = vmatprep.subr.mxu0 %v2828
    %5089 = vmatpush1.msra.mxu0 %v2827
    %5090 = vmatprep.subr.mxu0 %v2832
    %5091 = vmatpush1.msra.mxu0 %v2831
    %5092 = vmatprep.subr.mxu0 %v2836
    %5093 = vmatpush1.msra.mxu0 %v2835
    %5094 = vmatprep.subr.mxu0 %v2840
    %5095 = vmatpush1.msra.mxu0 %v2839
    %5096 = vmatprep.subr.mxu0 %v2844
    %5097 = vmatpush1.msra.mxu0 %v2843
    %5098 = vmatprep.subr.mxu0 %v2848
    %5099 = vmatpush1.msra.mxu0 %v2847
    %5100 = vmatprep.subr.mxu0 %v2852
    %5101 = vmatpush1.msra.mxu0 %v2851
    %5102 = vmatprep.subr.mxu0 %v2856
    %5103 = vmatpush1.msra.mxu0 %v2855
    %5104 = vmatprep.subr.mxu0 %v2860
    %5105 = vmatpush1.msra.mxu0 %v2859
    %5106 = vmatprep.subr.mxu0 %v2864
    %5107 = vmatpush1.msra.mxu0 %v2863
    %5108 = vmatprep.subr.mxu0 %v2868
    %5109 = vmatpush1.msra.mxu0 %v2867
    %5110 = vmatprep.subr.mxu0 %v2872
    %5111 = vmatpush1.msra.mxu0 %v2871
    %5112 = vmatprep.subr.mxu0 %v2876
    %5113 = vmatpush1.msra.mxu0 %v2875
    %5114 = vmatprep.subr.mxu0 %v2880
    %5115 = vmatpush1.msra.mxu0 %v2879
    %5116 = vmatprep.subr.mxu0 0.0
    %5117 = vmatpush1.msra.mxu0 0.0
    %5118 = vmatprep.subr.mxu0 0.0
    %5119 = vmatpush1.msra.mxu0 0.0
    %5120 = vmatprep.subr.mxu0 0.0
    %5121 = vmatpush1.msra.mxu0 0.0
    %5122 = vmatprep.subr.mxu0 0.0
    %5123 = vmatpush1.msra.mxu0 0.0
    %5124 = vmatprep.subr.mxu0 0.0
    %5125 = vmatpush1.msra.mxu0 0.0
    %5126 = vmatprep.subr.mxu0 0.0
    %5127 = vmatpush1.msra.mxu0 0.0
    %5128 = vmatprep.subr.mxu0 0.0
    %5129 = vmatpush1.msra.mxu0 0.0
    %5130 = vmatprep.subr.mxu0 0.0
    %5131 = vmatpush1.msra.mxu0 0.0
    %5132 = vmatprep.subr.mxu0 0.0
    %5133 = vmatpush1.msra.mxu0 0.0
    %5134 = vmatprep.subr.mxu0 0.0
    %5135 = vmatpush1.msra.mxu0 0.0
    %5136 = vmatprep.subr.mxu0 0.0
    %5137 = vmatpush1.msra.mxu0 0.0
    %5138 = vmatprep.subr.mxu0 0.0
    %5139 = vmatpush1.msra.mxu0 0.0
    %5140 = vmatprep.subr.mxu0 0.0
    %5141 = vmatpush1.msra.mxu0 0.0
    %5142 = vmatprep.subr.mxu0 0.0
    %5143 = vmatpush1.msra.mxu0 0.0
    %5144 = vmatprep.subr.mxu0 0.0
    %5145 = vmatpush1.msra.mxu0 0.0
    %5146 = vmatprep.subr.mxu0 0.0
    %5147 = vmatpush1.msra.mxu0 0.0
    %5148 = vmatprep.mubr.f32.mxu0 0.0
    %5149 = vmatmul.mubr.f32.gmra.mrb[0].mxu0 %v4870
    %v5150 = vpop.f32.mrb[0].mxu0
    %v5151 = vadd.f32 %v5009, %v5150
    %v5152 = vpop.f32.mrb[0].mxu0
    %v5153 = vadd.f32 %v5011, %v5152
    %5154 = vdwg.mxu0
    %v5155 = vadd.f32 %v5080, %v3237
    %v5156 = vadd.f32 %v5082, %v3241
    %v5157 = vadd.f32 %v5151, %v3245
    %v5158 = vadd.f32 %v5153, %v3249
    %v5159 = vxor.u32 %v5155, 2147483648
    %v5160 = vmul.f32 %v5159, 1.442695
    %v5161 = vpow.pop %v5160
    %v5162 = vadd.f32 %v5161, 1.0
    %v5163 = vrcp.pop %v5162
    %v5164 = vmul.f32 1.0, %v5163
    %v5165 = vxor.u32 %v5156, 2147483648
    %v5166 = vmul.f32 %v5165, 1.442695
    %v5167 = vpow.pop %v5166
    %v5168 = vadd.f32 %v5167, 1.0
    %v5169 = vrcp.pop %v5168
    %v5170 = vmul.f32 1.0, %v5169
    %v5171 = vtanh.pop %v5157
    %v5172 = vxor.u32 %v5158, 2147483648
    %v5173 = vmul.f32 %v5172, 1.442695
    %v5174 = vpow.pop %v5173
    %v5175 = vadd.f32 %v5174, 1.0
    %v5176 = vrcp.pop %v5175
    %v5177 = vmul.f32 1.0, %v5176
    %v5178 = vmul.f32 %v5170, %v4869
    %v5179 = vmul.f32 %v5164, %v5171
    %v5180 = vadd.f32 %v5178, %v5179
    %v5181 = vtanh.pop %v5180
    %v5182 = vmul.f32 %v5177, %v5181
    %v5183 = vsel %vm2483, %v5182, 0.0
    %5184 = vst [vmem:[%s2485] sm:$0xff] %v5183
    %v5185 = vsel %vm2483, %v5182, %v4868
    %v5186 = vsel %vm2483, %v5180, %v4869
    %v5187 = vld [vmem:[%s2810] sm:$0xff]
    %5188 = vmatprep.subr.mxu0 %v2883
    %5189 = vmatpush1.msra.mxu0 %v2882
    %5190 = vmatprep.subr.mxu0 %v2887
    %5191 = vmatpush1.msra.mxu0 %v2886
    %5192 = vmatprep.subr.mxu0 %v2891
    %5193 = vmatpush1.msra.mxu0 %v2890
    %5194 = vmatprep.subr.mxu0 %v2895
    %5195 = vmatpush1.msra.mxu0 %v2894
    %5196 = vmatprep.subr.mxu0 %v2899
    %5197 = vmatpush1.msra.mxu0 %v2898
    %5198 = vmatprep.subr.mxu0 %v2903
    %5199 = vmatpush1.msra.mxu0 %v2902
    %5200 = vmatprep.subr.mxu0 %v2907
    %5201 = vmatpush1.msra.mxu0 %v2906
    %5202 = vmatprep.subr.mxu0 %v2911
    %5203 = vmatpush1.msra.mxu0 %v2910
    %5204 = vmatprep.subr.mxu0 %v2915
    %5205 = vmatpush1.msra.mxu0 %v2914
    %5206 = vmatprep.subr.mxu0 %v2919
    %5207 = vmatpush1.msra.mxu0 %v2918
    %5208 = vmatprep.subr.mxu0 %v2923
    %5209 = vmatpush1.msra.mxu0 %v2922
    %5210 = vmatprep.subr.mxu0 %v2927
    %5211 = vmatpush1.msra.mxu0 %v2926
    %5212 = vmatprep.subr.mxu0 %v2931
    %5213 = vmatpush1.msra.mxu0 %v2930
    %5214 = vmatprep.subr.mxu0 %v2935
    %5215 = vmatpush1.msra.mxu0 %v2934
    %5216 = vmatprep.subr.mxu0 %v2939
    %5217 = vmatpush1.msra.mxu0 %v2938
    %5218 = vmatprep.subr.mxu0 %v2943
    %5219 = vmatpush1.msra.mxu0 %v2942
    %5220 = vmatprep.subr.mxu0 0.0
    %5221 = vmatpush1.msra.mxu0 0.0
    %5222 = vmatprep.subr.mxu0 0.0
    %5223 = vmatpush1.msra.mxu0 0.0
    %5224 = vmatprep.subr.mxu0 0.0
    %5225 = vmatpush1.msra.mxu0 0.0
    %5226 = vmatprep.subr.mxu0 0.0
    %5227 = vmatpush1.msra.mxu0 0.0
    %5228 = vmatprep.subr.mxu0 0.0
    %5229 = vmatpush1.msra.mxu0 0.0
    %5230 = vmatprep.subr.mxu0 0.0
    %5231 = vmatpush1.msra.mxu0 0.0
    %5232 = vmatprep.subr.mxu0 0.0
    %5233 = vmatpush1.msra.mxu0 0.0
    %5234 = vmatprep.subr.mxu0 0.0
    %5235 = vmatpush1.msra.mxu0 0.0
    %5236 = vmatprep.subr.mxu0 0.0
    %5237 = vmatpush1.msra.mxu0 0.0
    %5238 = vmatprep.subr.mxu0 0.0
    %5239 = vmatpush1.msra.mxu0 0.0
    %5240 = vmatprep.subr.mxu0 0.0
    %5241 = vmatpush1.msra.mxu0 0.0
    %5242 = vmatprep.subr.mxu0 0.0
    %5243 = vmatpush1.msra.mxu0 0.0
    %5244 = vmatprep.subr.mxu0 0.0
    %5245 = vmatpush1.msra.mxu0 0.0
    %5246 = vmatprep.subr.mxu0 0.0
    %5247 = vmatpush1.msra.mxu0 0.0
    %5248 = vmatprep.subr.mxu0 0.0
    %5249 = vmatpush1.msra.mxu0 0.0
    %5250 = vmatprep.subr.mxu0 0.0
    %5251 = vmatpush1.msra.mxu0 0.0
    %5252 = vmatprep.mubr.f32.mxu0 0.0
    %5253 = vmatmul.mubr.f32.gmra.mrb[0].mxu0 %v5185
    %v5254 = vpop.f32.mrb[0].mxu0
    %v5255 = vadd.f32 0.0, %v5254
    %v5256 = vpop.f32.mrb[0].mxu0
    %v5257 = vadd.f32 0.0, %v5256
    %5258 = vdwg.mxu0
    %5259 = vmatprep.subr.mxu0 %v2885
    %5260 = vmatpush1.msra.mxu0 %v2884
    %5261 = vmatprep.subr.mxu0 %v2889
    %5262 = vmatpush1.msra.mxu0 %v2888
    %5263 = vmatprep.subr.mxu0 %v2893
    %5264 = vmatpush1.msra.mxu0 %v2892
    %5265 = vmatprep.subr.mxu0 %v2897
    %5266 = vmatpush1.msra.mxu0 %v2896
    %5267 = vmatprep.subr.mxu0 %v2901
    %5268 = vmatpush1.msra.mxu0 %v2900
    %5269 = vmatprep.subr.mxu0 %v2905
    %5270 = vmatpush1.msra.mxu0 %v2904
    %5271 = vmatprep.subr.mxu0 %v2909
    %5272 = vmatpush1.msra.mxu0 %v2908
    %5273 = vmatprep.subr.mxu0 %v2913
    %5274 = vmatpush1.msra.mxu0 %v2912
    %5275 = vmatprep.subr.mxu0 %v2917
    %5276 = vmatpush1.msra.mxu0 %v2916
    %5277 = vmatprep.subr.mxu0 %v2921
    %5278 = vmatpush1.msra.mxu0 %v2920
    %5279 = vmatprep.subr.mxu0 %v2925
    %5280 = vmatpush1.msra.mxu0 %v2924
    %5281 = vmatprep.subr.mxu0 %v2929
    %5282 = vmatpush1.msra.mxu0 %v2928
    %5283 = vmatprep.subr.mxu0 %v2933
    %5284 = vmatpush1.msra.mxu0 %v2932
    %5285 = vmatprep.subr.mxu0 %v2937
    %5286 = vmatpush1.msra.mxu0 %v2936
    %5287 = vmatprep.subr.mxu0 %v2941
    %5288 = vmatpush1.msra.mxu0 %v2940
    %5289 = vmatprep.subr.mxu0 %v2945
    %5290 = vmatpush1.msra.mxu0 %v2944
    %5291 = vmatprep.subr.mxu0 0.0
    %5292 = vmatpush1.msra.mxu0 0.0
    %5293 = vmatprep.subr.mxu0 0.0
    %5294 = vmatpush1.msra.mxu0 0.0
    %5295 = vmatprep.subr.mxu0 0.0
    %5296 = vmatpush1.msra.mxu0 0.0
    %5297 = vmatprep.subr.mxu0 0.0
    %5298 = vmatpush1.msra.mxu0 0.0
    %5299 = vmatprep.subr.mxu0 0.0
    %5300 = vmatpush1.msra.mxu0 0.0
    %5301 = vmatprep.subr.mxu0 0.0
    %5302 = vmatpush1.msra.mxu0 0.0
    %5303 = vmatprep.subr.mxu0 0.0
    %5304 = vmatpush1.msra.mxu0 0.0
    %5305 = vmatprep.subr.mxu0 0.0
    %5306 = vmatpush1.msra.mxu0 0.0
    %5307 = vmatprep.subr.mxu0 0.0
    %5308 = vmatpush1.msra.mxu0 0.0
    %5309 = vmatprep.subr.mxu0 0.0
    %5310 = vmatpush1.msra.mxu0 0.0
    %5311 = vmatprep.subr.mxu0 0.0
    %5312 = vmatpush1.msra.mxu0 0.0
    %5313 = vmatprep.subr.mxu0 0.0
    %5314 = vmatpush1.msra.mxu0 0.0
    %5315 = vmatprep.subr.mxu0 0.0
    %5316 = vmatpush1.msra.mxu0 0.0
    %5317 = vmatprep.subr.mxu0 0.0
    %5318 = vmatpush1.msra.mxu0 0.0
    %5319 = vmatprep.subr.mxu0 0.0
    %5320 = vmatpush1.msra.mxu0 0.0
    %5321 = vmatprep.subr.mxu0 0.0
    %5322 = vmatpush1.msra.mxu0 0.0
    %5323 = vmatprep.mubr.f32.mxu0 0.0
    %5324 = vmatmul.mubr.f32.gmra.mrb[0].mxu0 %v5185
    %v5325 = vpop.f32.mrb[0].mxu0
    %v5326 = vadd.f32 0.0, %v5325
    %v5327 = vpop.f32.mrb[0].mxu0
    %v5328 = vadd.f32 0.0, %v5327
    %5329 = vdwg.mxu0
    %5330 = vmatprep.subr.mxu0 %v2818
    %5331 = vmatpush1.msra.mxu0 %v2817
    %5332 = vmatprep.subr.mxu0 %v2822
    %5333 = vmatpush1.msra.mxu0 %v2821
    %5334 = vmatprep.subr.mxu0 %v2826
    %5335 = vmatpush1.msra.mxu0 %v2825
    %5336 = vmatprep.subr.mxu0 %v2830
    %5337 = vmatpush1.msra.mxu0 %v2829
    %5338 = vmatprep.subr.mxu0 %v2834
    %5339 = vmatpush1.msra.mxu0 %v2833
    %5340 = vmatprep.subr.mxu0 %v2838
    %5341 = vmatpush1.msra.mxu0 %v2837
    %5342 = vmatprep.subr.mxu0 %v2842
    %5343 = vmatpush1.msra.mxu0 %v2841
    %5344 = vmatprep.subr.mxu0 %v2846
    %5345 = vmatpush1.msra.mxu0 %v2845
    %5346 = vmatprep.subr.mxu0 %v2850
    %5347 = vmatpush1.msra.mxu0 %v2849
    %5348 = vmatprep.subr.mxu0 %v2854
    %5349 = vmatpush1.msra.mxu0 %v2853
    %5350 = vmatprep.subr.mxu0 %v2858
    %5351 = vmatpush1.msra.mxu0 %v2857
    %5352 = vmatprep.subr.mxu0 %v2862
    %5353 = vmatpush1.msra.mxu0 %v2861
    %5354 = vmatprep.subr.mxu0 %v2866
    %5355 = vmatpush1.msra.mxu0 %v2865
    %5356 = vmatprep.subr.mxu0 %v2870
    %5357 = vmatpush1.msra.mxu0 %v2869
    %5358 = vmatprep.subr.mxu0 %v2874
    %5359 = vmatpush1.msra.mxu0 %v2873
    %5360 = vmatprep.subr.mxu0 %v2878
    %5361 = vmatpush1.msra.mxu0 %v2877
    %5362 = vmatprep.subr.mxu0 0.0
    %5363 = vmatpush1.msra.mxu0 0.0
    %5364 = vmatprep.subr.mxu0 0.0
    %5365 = vmatpush1.msra.mxu0 0.0
    %5366 = vmatprep.subr.mxu0 0.0
    %5367 = vmatpush1.msra.mxu0 0.0
    %5368 = vmatprep.subr.mxu0 0.0
    %5369 = vmatpush1.msra.mxu0 0.0
    %5370 = vmatprep.subr.mxu0 0.0
    %5371 = vmatpush1.msra.mxu0 0.0
    %5372 = vmatprep.subr.mxu0 0.0
    %5373 = vmatpush1.msra.mxu0 0.0
    %5374 = vmatprep.subr.mxu0 0.0
    %5375 = vmatpush1.msra.mxu0 0.0
    %5376 = vmatprep.subr.mxu0 0.0
    %5377 = vmatpush1.msra.mxu0 0.0
    %5378 = vmatprep.subr.mxu0 0.0
    %5379 = vmatpush1.msra.mxu0 0.0
    %5380 = vmatprep.subr.mxu0 0.0
    %5381 = vmatpush1.msra.mxu0 0.0
    %5382 = vmatprep.subr.mxu0 0.0
    %5383 = vmatpush1.msra.mxu0 0.0
    %5384 = vmatprep.subr.mxu0 0.0
    %5385 = vmatpush1.msra.mxu0 0.0
    %5386 = vmatprep.subr.mxu0 0.0
    %5387 = vmatpush1.msra.mxu0 0.0
    %5388 = vmatprep.subr.mxu0 0.0
    %5389 = vmatpush1.msra.mxu0 0.0
    %5390 = vmatprep.subr.mxu0 0.0
    %5391 = vmatpush1.msra.mxu0 0.0
    %5392 = vmatprep.subr.mxu0 0.0
    %5393 = vmatpush1.msra.mxu0 0.0
    %5394 = vmatprep.mubr.f32.mxu0 0.0
    %5395 = vmatmul.mubr.f32.gmra.mrb[0].mxu0 %v5187
    %v5396 = vpop.f32.mrb[0].mxu0
    %v5397 = vadd.f32 %v5255, %v5396
    %v5398 = vpop.f32.mrb[0].mxu0
    %v5399 = vadd.f32 %v5257, %v5398
    %5400 = vdwg.mxu0
    %5401 = vmatprep.subr.mxu0 %v2820
    %5402 = vmatpush1.msra.mxu0 %v2819
    %5403 = vmatprep.subr.mxu0 %v2824
    %5404 = vmatpush1.msra.mxu0 %v2823
    %5405 = vmatprep.subr.mxu0 %v2828
    %5406 = vmatpush1.msra.mxu0 %v2827
    %5407 = vmatprep.subr.mxu0 %v2832
    %5408 = vmatpush1.msra.mxu0 %v2831
    %5409 = vmatprep.subr.mxu0 %v2836
    %5410 = vmatpush1.msra.mxu0 %v2835
    %5411 = vmatprep.subr.mxu0 %v2840
    %5412 = vmatpush1.msra.mxu0 %v2839
    %5413 = vmatprep.subr.mxu0 %v2844
    %5414 = vmatpush1.msra.mxu0 %v2843
    %5415 = vmatprep.subr.mxu0 %v2848
    %5416 = vmatpush1.msra.mxu0 %v2847
    %5417 = vmatprep.subr.mxu0 %v2852
    %5418 = vmatpush1.msra.mxu0 %v2851
    %5419 = vmatprep.subr.mxu0 %v2856
    %5420 = vmatpush1.msra.mxu0 %v2855
    %5421 = vmatprep.subr.mxu0 %v2860
    %5422 = vmatpush1.msra.mxu0 %v2859
    %5423 = vmatprep.subr.mxu0 %v2864
    %5424 = vmatpush1.msra.mxu0 %v2863
    %5425 = vmatprep.subr.mxu0 %v2868
    %5426 = vmatpush1.msra.mxu0 %v2867
    %5427 = vmatprep.subr.mxu0 %v2872
    %5428 = vmatpush1.msra.mxu0 %v2871
    %5429 = vmatprep.subr.mxu0 %v2876
    %5430 = vmatpush1.msra.mxu0 %v2875
    %5431 = vmatprep.subr.mxu0 %v2880
    %5432 = vmatpush1.msra.mxu0 %v2879
    %5433 = vmatprep.subr.mxu0 0.0
    %5434 = vmatpush1.msra.mxu0 0.0
    %5435 = vmatprep.subr.mxu0 0.0
    %5436 = vmatpush1.msra.mxu0 0.0
    %5437 = vmatprep.subr.mxu0 0.0
    %5438 = vmatpush1.msra.mxu0 0.0
    %5439 = vmatprep.subr.mxu0 0.0
    %5440 = vmatpush1.msra.mxu0 0.0
    %5441 = vmatprep.subr.mxu0 0.0
    %5442 = vmatpush1.msra.mxu0 0.0
    %5443 = vmatprep.subr.mxu0 0.0
    %5444 = vmatpush1.msra.mxu0 0.0
    %5445 = vmatprep.subr.mxu0 0.0
    %5446 = vmatpush1.msra.mxu0 0.0
    %5447 = vmatprep.subr.mxu0 0.0
    %5448 = vmatpush1.msra.mxu0 0.0
    %5449 = vmatprep.subr.mxu0 0.0
    %5450 = vmatpush1.msra.mxu0 0.0
    %5451 = vmatprep.subr.mxu0 0.0
    %5452 = vmatpush1.msra.mxu0 0.0
    %5453 = vmatprep.subr.mxu0 0.0
    %5454 = vmatpush1.msra.mxu0 0.0
    %5455 = vmatprep.subr.mxu0 0.0
    %5456 = vmatpush1.msra.mxu0 0.0
    %5457 = vmatprep.subr.mxu0 0.0
    %5458 = vmatpush1.msra.mxu0 0.0
    %5459 = vmatprep.subr.mxu0 0.0
    %5460 = vmatpush1.msra.mxu0 0.0
    %5461 = vmatprep.subr.mxu0 0.0
    %5462 = vmatpush1.msra.mxu0 0.0
    %5463 = vmatprep.subr.mxu0 0.0
    %5464 = vmatpush1.msra.mxu0 0.0
    %5465 = vmatprep.mubr.f32.mxu0 0.0
    %5466 = vmatmul.mubr.f32.gmra.mrb[0].mxu0 %v5187
    %v5467 = vpop.f32.mrb[0].mxu0
    %v5468 = vadd.f32 %v5326, %v5467
    %v5469 = vpop.f32.mrb[0].mxu0
    %v5470 = vadd.f32 %v5328, %v5469
    %5471 = vdwg.mxu0
    %v5472 = vadd.f32 %v5397, %v3237
    %v5473 = vadd.f32 %v5399, %v3241
    %v5474 = vadd.f32 %v5468, %v3245
    %v5475 = vadd.f32 %v5470, %v3249
    %v5476 = vxor.u32 %v5472, 2147483648
    %v5477 = vmul.f32 %v5476, 1.442695
    %v5478 = vpow.pop %v5477
    %v5479 = vadd.f32 %v5478, 1.0
    %v5480 = vrcp.pop %v5479
    %v5481 = vmul.f32 1.0, %v5480
    %v5482 = vxor.u32 %v5473, 2147483648
    %v5483 = vmul.f32 %v5482, 1.442695
    %v5484 = vpow.pop %v5483
    %v5485 = vadd.f32 %v5484, 1.0
    %v5486 = vrcp.pop %v5485
    %v5487 = vmul.f32 1.0, %v5486
    %v5488 = vtanh.pop %v5474
    %v5489 = vxor.u32 %v5475, 2147483648
    %v5490 = vmul.f32 %v5489, 1.442695
    %v5491 = vpow.pop %v5490
    %v5492 = vadd.f32 %v5491, 1.0
    %v5493 = vrcp.pop %v5492
    %v5494 = vmul.f32 1.0, %v5493
    %v5495 = vmul.f32 %v5487, %v5186
    %v5496 = vmul.f32 %v5481, %v5488
    %v5497 = vadd.f32 %v5495, %v5496
    %v5498 = vtanh.pop %v5497
    %v5499 = vmul.f32 %v5494, %v5498
    %v5500 = vsel %vm2808, %v5499, 0.0
    %5501 = vst [vmem:[%s2810] sm:$0xff] %v5500
    %v5502 = vsel %vm2808, %v5499, %v5185
    %v5503 = vsel %vm2808, %v5497, %v5186
    %s5504 = scalar_lea.vmem [#allocation9], 8
    %5505 = vst [vmem:[%s5504] sm:$0xff] %v5502
    %s5506 = scalar_lea.vmem [#allocation11], 8
    %5507 = vst [vmem:[%s5506] sm:$0xff] %v5503
    // Predicated region
    $region34: #{tpu_custom_call.1} parent=1 // pred_check
      _
    $region35: #{tpu_custom_call.1} parent=1 // pred_check_branch
      %5509 = sbr.rel (0) target = $region37
    $region36: #{tpu_custom_call.1} parent=1 // pred_region
      %s5511 = ssub.s32 1024, 1024
      %5512 = vsyncadd [#allocation4], %s5511
      %s5513 = sshll.u32 [#allocation8], 4
      %s5514 = int_to_ptr.vmem [resolvable:$true] %s5513
      %5519 = dma.vmem_to_hbm [thread:$0]  %s5514, 1024, %s5, [#allocation4], 128, 128, 8
    $region37: #{tpu_custom_call.1} parent=1 // pred_fallthru
      _
    // Predicated region
    $region38: #{tpu_custom_call.1} parent=1 // pred_check
      _
    $region39: #{tpu_custom_call.1} parent=1 // pred_check_branch
      %5521 = sbr.rel (0) target = $region41
    $region40: #{tpu_custom_call.1} parent=1 // pred_region
      %s5523 = ssub.s32 256, 256
      %5524 = vsyncadd [#allocation10], %s5523
      %s5525 = sshll.u32 [#allocation9], 4
      %s5526 = int_to_ptr.vmem [resolvable:$true] %s5525
      %5531 = dma.vmem_to_hbm [thread:$0]  %s5526, 256, %s6, [#allocation10], 128, 128, 8
    $region41: #{tpu_custom_call.1} parent=1 // pred_fallthru
      _
    // Predicated region
    $region42: #{tpu_custom_call.1} parent=1 // pred_check
      _
    $region43: #{tpu_custom_call.1} parent=1 // pred_check_branch
      %5533 = sbr.rel (0) target = $region45
    $region44: #{tpu_custom_call.1} parent=1 // pred_region
      %s5535 = ssub.s32 256, 256
      %5536 = vsyncadd [#allocation10], %s5535
      %s5537 = sshll.u32 [#allocation11], 4
      %s5538 = int_to_ptr.vmem [resolvable:$true] %s5537
      %5543 = dma.vmem_to_hbm [thread:$0]  %s5538, 256, %s7, [#allocation10], 128, 128, 8
    $region45: #{tpu_custom_call.1} parent=1 // pred_fallthru
      _
    // Predicated region
    $region46: #{tpu_custom_call.1} parent=1 // pred_check
      _
    $region47: #{tpu_custom_call.1} parent=1 // pred_check_branch
      %5545 = sbr.rel (0) target = $region49
    $region48: #{tpu_custom_call.1} parent=1 // pred_region
      %5546 = dma.done [#allocation4], 1024
    $region49: #{tpu_custom_call.1} parent=1 // pred_fallthru
      _
    // Predicated region
    $region50: #{tpu_custom_call.1} parent=1 // pred_check
      _
    $region51: #{tpu_custom_call.1} parent=1 // pred_check_branch
      %5548 = sbr.rel (0) target = $region53
    $region52: #{tpu_custom_call.1} parent=1 // pred_region
      %5549 = dma.done [#allocation10], 256
    $region53: #{tpu_custom_call.1} parent=1 // pred_fallthru
      _
    // Predicated region
    $region54: #{tpu_custom_call.1} parent=1 // pred_check
      _
    $region55: #{tpu_custom_call.1} parent=1 // pred_check_branch
      %5551 = sbr.rel (0) target = $region57
    $region56: #{tpu_custom_call.1} parent=1 // pred_region
      %5552 = dma.done [#allocation10], 256
    $region57: #{tpu_custom_call.1} parent=1 // pred_fallthru
      _
    %5553 = vsyncpa [#allocation3], 1
    %5554 = vsyncpa [#allocation6], 1
    %5555 = vsyncpa [#allocation4], 1
    %5556 = vsyncpa [#allocation10], 1

</llo_original>
